<compile_context>
chip_gen: v7x
topology: tpu7x:2x2x1
jax: 0.10.0
libtpu: 0.0.40
codegen_flags: <defaults>
</compile_context>

<pallas_src>
import functools

import jax
import jax.numpy as jnp
from jax.experimental import pallas as pl
from jax.experimental.pallas import tpu as pltpu

LANE = 128
TILE_M = 512   # rows of A / output per grid step (sublane-aligned)
TILE_K = 512   # reduction (columns of A) per grid step (lane-aligned)


def _round_up(x, m):
    return (x + m - 1) // m * m


# ----------------------------------------------------------------------------
# Pallas kernel: one NGCF propagation layer (tiled; bf16 A@E stream, f32 accum)
# ----------------------------------------------------------------------------
def ngcf_layer_kernel(a_ref, ego_k_ref, ego_i_ref, wgc_ref, wbi_ref, b_ref,
                      ego_f32_ref, ego_bf16_ref, norm_ref, side_acc_ref):
    k = pl.program_id(1)

    @pl.when(k == 0)
    def _init():
        side_acc_ref[...] = jnp.zeros_like(side_acc_ref)

    # side[i_block] += A[i_block, k_block] @ ego[k_block]   (bf16 MXU, f32 accum)
    side_acc_ref[...] += jnp.dot(a_ref[...], ego_k_ref[...],
                                 preferred_element_type=jnp.float32)

    @pl.when(k == pl.num_programs(1) - 1)
    def _finalize():
        side = side_acc_ref[...]                       # (tm, d_in_pad) f32
        ego_i = ego_i_ref[...]                         # (tm, d_in_pad) f32
        # sum_emb + bi_emb:  side @ W_gc + (ego * side) @ W_bi + (b_gc + b_bi)
        x = (jnp.dot(side, wgc_ref[...], preferred_element_type=jnp.float32)
             + jnp.dot(ego_i * side, wbi_ref[...],
                       preferred_element_type=jnp.float32)
             + b_ref[...])
        # LeakyReLU(negative_slope=0.2)
        ego_new = jnp.where(x >= 0, x, 0.2 * x)
        # F.normalize(p=2, dim=1): x / max(||x||, 1e-12) == x * rsqrt(max(||x||^2, 1e-24))
        ssq = jnp.sum(ego_new * ego_new, axis=1, keepdims=True)
        inv = jax.lax.rsqrt(jnp.maximum(ssq, 1e-24))
        ego_f32_ref[...] = ego_new
        ego_bf16_ref[...] = ego_new.astype(jnp.bfloat16)
        norm_ref[...] = ego_new * inv


def ngcf_layer(a_bf16, ego_f32, ego_bf16, w_gc, w_bi, b, *, tm=TILE_M, tk=TILE_K):
    """One NGCF propagation layer on padded, lane-dense tensors."""
    n_pad = a_bf16.shape[0]
    d_in_pad = ego_f32.shape[1]
    d_out_pad = w_gc.shape[1]
    tm = min(tm, n_pad)
    tk = min(tk, n_pad)
    assert n_pad % tm == 0 and n_pad % tk == 0
    assert d_in_pad % LANE == 0 and d_out_pad % LANE == 0

    grid = (n_pad // tm, n_pad // tk)

    return pl.pallas_call(
        ngcf_layer_kernel,
        out_shape=(jax.ShapeDtypeStruct((n_pad, d_out_pad), jnp.float32),
                   jax.ShapeDtypeStruct((n_pad, d_out_pad), jnp.bfloat16),
                   jax.ShapeDtypeStruct((n_pad, d_out_pad), jnp.float32)),
        grid_spec=pltpu.PrefetchScalarGridSpec(
            num_scalar_prefetch=0,
            grid=grid,
            in_specs=[
                pl.BlockSpec((tm, tk), lambda i, k: (i, k)),             # A tile (bf16)
                pl.BlockSpec((tk, d_in_pad), lambda i, k: (k, 0)),       # ego K-block (bf16)
                pl.BlockSpec((tm, d_in_pad), lambda i, k: (i, 0)),       # ego row-block (f32)
                pl.BlockSpec((d_in_pad, d_out_pad), lambda i, k: (0, 0)),  # W_gc (padded)
                pl.BlockSpec((d_in_pad, d_out_pad), lambda i, k: (0, 0)),  # W_bi (padded)
                pl.BlockSpec((1, d_out_pad), lambda i, k: (0, 0)),       # b_gc + b_bi
            ],
            out_specs=(pl.BlockSpec((tm, d_out_pad), lambda i, k: (i, 0)),
                       pl.BlockSpec((tm, d_out_pad), lambda i, k: (i, 0)),
                       pl.BlockSpec((tm, d_out_pad), lambda i, k: (i, 0))),
            scratch_shapes=[pltpu.VMEM((tm, d_in_pad), jnp.float32)],
        ),
        compiler_params=pltpu.CompilerParams(
            dimension_semantics=("parallel", "arbitrary"),
            vmem_limit_bytes=32 * 1024 * 1024,
        ),
    )(a_bf16, ego_bf16, ego_f32, w_gc, w_bi, b)


# ----------------------------------------------------------------------------
# NGCF model (parameters + forward) in JAX, hot path in Pallas
# ----------------------------------------------------------------------------
def xavier_uniform(key, shape):
    fan_in, fan_out = shape[0], shape[1]
    bound = (6.0 / (fan_in + fan_out)) ** 0.5
    return jax.random.uniform(key, shape, jnp.float32, -bound, bound)


def init_ngcf_params(key, n_user, n_item, emb_size, layer_sizes):
    keys = jax.random.split(key, 2 + 4 * len(layer_sizes))
    params = {
        "user_emb": xavier_uniform(keys[0], (n_user, emb_size)),
        "item_emb": xavier_uniform(keys[1], (n_item, emb_size)),
    }
    dims = [emb_size] + list(layer_sizes)
    ki = 2
    for k in range(len(layer_sizes)):
        params[f"W_gc_{k}"] = xavier_uniform(keys[ki], (dims[k], dims[k + 1])); ki += 1
        params[f"b_gc_{k}"] = xavier_uniform(keys[ki], (1, dims[k + 1]));        ki += 1
        params[f"W_bi_{k}"] = xavier_uniform(keys[ki], (dims[k], dims[k + 1])); ki += 1
        params[f"b_bi_{k}"] = xavier_uniform(keys[ki], (1, dims[k + 1]));        ki += 1
    return params


def build_norm_adj(key, n_user, n_item):
    """Deterministic dense symmetric-normalized bipartite adjacency."""
    r = jax.random.bernoulli(key, p=0.3, shape=(n_user, n_item)).astype(jnp.float32)
    n = n_user + n_item
    adj = jnp.zeros((n, n), jnp.float32)
    adj = adj.at[:n_user, n_user:].set(r)
    adj = adj.at[n_user:, :n_user].set(r.T)
    deg = jnp.sum(adj, axis=1)
    d_inv_sqrt = jnp.where(deg > 0, 1.0 / jnp.sqrt(jnp.maximum(deg, 1.0)), 0.0)
    return adj * d_inv_sqrt[:, None] * d_inv_sqrt[None, :]


@functools.partial(jax.jit, static_argnames=("n_user", "layer_dims"))
def ngcf_forward(params, a_hat, users, pos_items, neg_items, *, n_user, layer_dims):
    """layer_dims = (emb_size, d1, d2, ...)."""
    n = a_hat.shape[0]
    n_pad = _round_up(n, max(TILE_M, TILE_K))

    # Pad + cast the (static-per-forward) adjacency once; it is streamed every layer.
    a_bf16 = jnp.zeros((n_pad, n_pad), jnp.bfloat16)
    a_bf16 = a_bf16.at[:n, :n].set(a_hat.astype(jnp.bfloat16))

    ego0 = jnp.concatenate([params["user_emb"], params["item_emb"]], axis=0)  # (n, d0)
    d0 = ego0.shape[1]
    d0_pad = _round_up(d0, LANE)
    ego_f32 = jnp.zeros((n_pad, d0_pad), jnp.float32).at[:n, :d0].set(ego0)
    ego_bf16 = ego_f32.astype(jnp.bfloat16)

    all_embeddings = [ego0]
    d_in, d_in_pad = d0, d0_pad
    for k, d_out in enumerate(layer_dims[1:]):
        d_out_pad = _round_up(d_out, LANE)
        # Zero-padded weights; padded output cols stay exactly 0 through LeakyReLU
        # and therefore never perturb the row L2 norm.
        w_gc = jnp.zeros((d_in_pad, d_out_pad), jnp.float32)
        w_gc = w_gc.at[:d_in, :d_out].set(params[f"W_gc_{k}"])
        w_bi = jnp.zeros((d_in_pad, d_out_pad), jnp.float32)
        w_bi = w_bi.at[:d_in, :d_out].set(params[f"W_bi_{k}"])
        b = jnp.zeros((1, d_out_pad), jnp.float32)
        b = b.at[:, :d_out].set(params[f"b_gc_{k}"] + params[f"b_bi_{k}"])

        ego_f32, ego_bf16, norm_emb = ngcf_layer(a_bf16, ego_f32, ego_bf16,
                                                 w_gc, w_bi, b)
        all_embeddings.append(norm_emb[:n, :d_out])
        d_in, d_in_pad = d_out, d_out_pad

    all_embeddings = jnp.concatenate(all_embeddings, axis=1)
    u_g = all_embeddings[:n_user, :]
    i_g = all_embeddings[n_user:, :]
    return (jnp.take(u_g, users, axis=0),
            jnp.take(i_g, pos_items, axis=0),
            jnp.take(i_g, neg_items, axis=0))


# ----------------------------------------------------------------------------
# Pure-JAX reference (f32, un-tiled) for correctness checking
# ----------------------------------------------------------------------------
def ngcf_reference(params, a_hat, users, pos_items, neg_items, n_user, n_layers):
    ego = jnp.concatenate([params["user_emb"], params["item_emb"]], axis=0)
    all_emb = [ego]
    for k in range(n_layers):
        side = a_hat @ ego
        sum_emb = side @ params[f"W_gc_{k}"] + params[f"b_gc_{k}"]
        bi_emb = (ego * side) @ params[f"W_bi_{k}"] + params[f"b_bi_{k}"]
        x = sum_emb + bi_emb
        ego = jnp.where(x >= 0, x, 0.2 * x)
        nrm = jnp.sqrt(jnp.sum(ego * ego, axis=1, keepdims=True))
        all_emb.append(ego / jnp.maximum(nrm, 1e-12))
    all_emb = jnp.concatenate(all_emb, axis=1)
    u_g, i_g = all_emb[:n_user], all_emb[n_user:]
    return u_g[users], i_g[pos_items], i_g[neg_items]


if __name__ == "__main__":
    n_user, n_item = 8, 24          # N = 32 nodes
    emb_size = 16
    layer_sizes = [16, 16]          # two NGCF propagation layers
    batch = 4

    root = jax.random.PRNGKey(0)
    k_params, k_adj, k_u, k_p, k_n = jax.random.split(root, 5)

    params = init_ngcf_params(k_params, n_user, n_item, emb_size, layer_sizes)
    a_hat = build_norm_adj(k_adj, n_user, n_item)

    users = jax.random.randint(k_u, (batch,), 0, n_user)
    pos_items = jax.random.randint(k_p, (batch,), 0, n_item)
    neg_items = jax.random.randint(k_n, (batch,), 0, n_item)

    layer_dims = tuple([emb_size] + layer_sizes)
    u_e, pos_e, neg_e = ngcf_forward(params, a_hat, users, pos_items, neg_items,
                                     n_user=n_user, layer_dims=layer_dims)
    jax.block_until_ready((u_e, pos_e, neg_e))

    # Shape / finiteness checks
    expected_dim = emb_size + sum(layer_sizes)
    assert u_e.shape == (batch, expected_dim)
    assert pos_e.shape == (batch, expected_dim)
    assert neg_e.shape == (batch, expected_dim)
    assert jnp.all(jnp.isfinite(u_e)) and jnp.all(jnp.isfinite(pos_e)) and jnp.all(jnp.isfinite(neg_e))

    # Numerical check vs. pure-JAX f32 reference (bf16 A/E stream -> loose tol)
    u_r, pos_r, neg_r = ngcf_reference(params, a_hat, users, pos_items, neg_items,
                                       n_user, len(layer_sizes))
    for got, ref in ((u_e, u_r), (pos_e, pos_r), (neg_e, neg_r)):
        assert jnp.allclose(got, ref, rtol=5e-2, atol=2e-2), \
            f"max abs err {jnp.max(jnp.abs(got - ref))}"

    print("KERNEL_OK")
</pallas_src>

<mosaic_0001>
module attributes {stable_mosaic.version = 11 : i64} {
  func.func @ngcf_layer_kernel(%arg0: i32, %arg1: i32, %arg2: memref<512x512xbf16, #tpu.memory_space<vmem>>, %arg3: memref<512x128xbf16, #tpu.memory_space<vmem>>, %arg4: memref<512x128xf32, #tpu.memory_space<vmem>>, %arg5: memref<128x128xf32, #tpu.memory_space<vmem>>, %arg6: memref<128x128xf32, #tpu.memory_space<vmem>>, %arg7: memref<1x128xf32, #tpu.memory_space<vmem>>, %arg8: memref<512x128xf32, #tpu.memory_space<vmem>>, %arg9: memref<512x128xbf16, #tpu.memory_space<vmem>>, %arg10: memref<512x128xf32, #tpu.memory_space<vmem>>, %arg11: memref<512x128xf32, #tpu.memory_space<vmem>>) attributes {dimension_semantics = [#tpu.dimension_semantics<parallel>, #tpu.dimension_semantics<arbitrary>], iteration_bounds = array<i64: 1, 1>, scalar_prefetch = 0 : i64, scratch_operands = 1 : i64, tpu.core_type = #tpu.core_type<tc>, window_params = [{transform_indices = @transform_0, window_bounds = array<i64: 512, 512>}, {transform_indices = @transform_1, window_bounds = array<i64: 512, 128>}, {transform_indices = @transform_2, window_bounds = array<i64: 512, 128>}, {pipeline_mode = #tpu.pipeline_mode<synchronous>, transform_indices = @transform_3, window_bounds = array<i64: 128, 128>}, {pipeline_mode = #tpu.pipeline_mode<synchronous>, transform_indices = @transform_4, window_bounds = array<i64: 128, 128>}, {pipeline_mode = #tpu.pipeline_mode<synchronous>, transform_indices = @transform_5, window_bounds = array<i64: 1, 128>}, {transform_indices = @transform_6, window_bounds = array<i64: 512, 128>}, {transform_indices = @transform_7, window_bounds = array<i64: 512, 128>}, {transform_indices = @transform_8, window_bounds = array<i64: 512, 128>}]} {
    %c0_i32 = arith.constant 0 : i32
    %0 = arith.cmpi eq, %arg1, %c0_i32 : i32
    %1 = arith.extui %0 : i1 to i32
    %c0_i32_0 = arith.constant 0 : i32
    %2 = arith.cmpi ne, %1, %c0_i32_0 : i32
    scf.if %2 {
      %cst_10 = arith.constant 0.000000e+00 : f32
      %12 = vector.broadcast %cst_10 : f32 to vector<512x128xf32>
      %c0_11 = arith.constant 0 : index
      %c0_12 = arith.constant 0 : index
      %13 = vector.load %arg11[%c0_11, %c0_12] : memref<512x128xf32, #tpu.memory_space<vmem>>, vector<512x128xf32>
      tpu.vector_store %arg11[%c0_11, %c0_12], %12 {strides = array<i32>} : memref<512x128xf32, #tpu.memory_space<vmem>>, vector<512x128xf32>,
    } else {
    }
    %c0 = arith.constant 0 : index
    %c0_1 = arith.constant 0 : index
    %3 = vector.load %arg11[%c0, %c0_1] : memref<512x128xf32, #tpu.memory_space<vmem>>, vector<512x128xf32>
    %c0_2 = arith.constant 0 : index
    %c0_3 = arith.constant 0 : index
    %4 = vector.load %arg2[%c0_2, %c0_3] : memref<512x512xbf16, #tpu.memory_space<vmem>>, vector<512x512xbf16>
    %c0_4 = arith.constant 0 : index
    %c0_5 = arith.constant 0 : index
    %5 = vector.load %arg3[%c0_4, %c0_5] : memref<512x128xbf16, #tpu.memory_space<vmem>>, vector<512x128xbf16>
    %cst = arith.constant dense<0.000000e+00> : vector<512x128xf32>
    %6 = tpu.matmul %4, %5, %cst {dimension_numbers = #tpu.dot_dimension_numbers<[1], [0], [0], [1], [0, 0, 1, 1], [], []>} : vector<512x512xbf16>, vector<512x128xbf16>, vector<512x128xf32> -> vector<512x128xf32>
    %7 = arith.addf %3, %6 : vector<512x128xf32>
    %c0_6 = arith.constant 0 : index
    %c0_7 = arith.constant 0 : index
    %8 = vector.load %arg11[%c0_6, %c0_7] : memref<512x128xf32, #tpu.memory_space<vmem>>, vector<512x128xf32>
    tpu.vector_store %arg11[%c0_6, %c0_7], %7 {strides = array<i32>} : memref<512x128xf32, #tpu.memory_space<vmem>>, vector<512x128xf32>,
    %c0_i32_8 = arith.constant 0 : i32
    %9 = arith.cmpi eq, %arg1, %c0_i32_8 : i32
    %10 = arith.extui %9 : i1 to i32
    %c0_i32_9 = arith.constant 0 : i32
    %11 = arith.cmpi ne, %10, %c0_i32_9 : i32
    scf.if %11 {
      %c0_10 = arith.constant 0 : index
      %c0_11 = arith.constant 0 : index
      %12 = vector.load %arg11[%c0_10, %c0_11] : memref<512x128xf32, #tpu.memory_space<vmem>>, vector<512x128xf32>
      %c0_12 = arith.constant 0 : index
      %c0_13 = arith.constant 0 : index
      %13 = vector.load %arg4[%c0_12, %c0_13] : memref<512x128xf32, #tpu.memory_space<vmem>>, vector<512x128xf32>
      %c0_14 = arith.constant 0 : index
      %c0_15 = arith.constant 0 : index
      %14 = vector.load %arg5[%c0_14, %c0_15] : memref<128x128xf32, #tpu.memory_space<vmem>>, vector<128x128xf32>
      %cst_16 = arith.constant dense<0.000000e+00> : vector<512x128xf32>
      %15 = tpu.matmul %12, %14, %cst_16 {dimension_numbers = #tpu.dot_dimension_numbers<[1], [0], [0], [1], [0, 0, 1, 1], [], []>} : vector<512x128xf32>, vector<128x128xf32>, vector<512x128xf32> -> vector<512x128xf32>
      %16 = arith.mulf %13, %12 : vector<512x128xf32>
      %c0_17 = arith.constant 0 : index
      %c0_18 = arith.constant 0 : index
      %17 = vector.load %arg6[%c0_17, %c0_18] : memref<128x128xf32, #tpu.memory_space<vmem>>, vector<128x128xf32>
      %cst_19 = arith.constant dense<0.000000e+00> : vector<512x128xf32>
      %18 = tpu.matmul %16, %17, %cst_19 {dimension_numbers = #tpu.dot_dimension_numbers<[1], [0], [0], [1], [0, 0, 1, 1], [], []>} : vector<512x128xf32>, vector<128x128xf32>, vector<512x128xf32> -> vector<512x128xf32>
      %19 = arith.addf %15, %18 : vector<512x128xf32>
      %c0_20 = arith.constant 0 : index
      %c0_21 = arith.constant 0 : index
      %20 = vector.load %arg7[%c0_20, %c0_21] : memref<1x128xf32, #tpu.memory_space<vmem>>, vector<1x128xf32>
      %21 = vector.broadcast %20 : vector<1x128xf32> to vector<512x128xf32>
      %22 = arith.addf %19, %21 : vector<512x128xf32>
      %cst_22 = arith.constant 0.000000e+00 : f32
      %23 = vector.broadcast %cst_22 : f32 to vector<512x128xf32>
      %24 = arith.cmpf oge, %22, %23 : vector<512x128xf32>
      %cst_23 = arith.constant 2.000000e-01 : f32
      %25 = vector.broadcast %cst_23 : f32 to vector<512x128xf32>
      %26 = arith.mulf %25, %22 : vector<512x128xf32>
      %27 = arith.select %24, %22, %26 : vector<512x128xi1>, vector<512x128xf32>
      %28 = arith.mulf %27, %27 : vector<512x128xf32>
      %cst_24 = arith.constant dense<0.000000e+00> : vector<512xf32>
      %29 = vector.multi_reduction <add>, %28, %cst_24 [1] : vector<512x128xf32> to vector<512xf32>
      %30 = vector.shape_cast %29 : vector<512xf32> to vector<512x1xf32>
      %cst_25 = arith.constant 1.000000e-24 : f32
      %31 = vector.broadcast %cst_25 : f32 to vector<512x1xf32>
      %32 = arith.maximumf %30, %31 : vector<512x1xf32>
      %33 = math.rsqrt %32 : vector<512x1xf32>
      %c0_26 = arith.constant 0 : index
      %c0_27 = arith.constant 0 : index
      %34 = vector.load %arg8[%c0_26, %c0_27] : memref<512x128xf32, #tpu.memory_space<vmem>>, vector<512x128xf32>
      tpu.vector_store %arg8[%c0_26, %c0_27], %27 {strides = array<i32>} : memref<512x128xf32, #tpu.memory_space<vmem>>, vector<512x128xf32>,
      %35 = arith.truncf %27 : vector<512x128xf32> to vector<512x128xbf16>
      %c0_28 = arith.constant 0 : index
      %c0_29 = arith.constant 0 : index
      %36 = vector.load %arg9[%c0_28, %c0_29] : memref<512x128xbf16, #tpu.memory_space<vmem>>, vector<512x128xbf16>
      tpu.vector_store %arg9[%c0_28, %c0_29], %35 {strides = array<i32>} : memref<512x128xbf16, #tpu.memory_space<vmem>>, vector<512x128xbf16>,
      %37 = vector.broadcast %33 : vector<512x1xf32> to vector<512x128xf32>
      %38 = arith.mulf %27, %37 : vector<512x128xf32>
      %c0_30 = arith.constant 0 : index
      %c0_31 = arith.constant 0 : index
      %39 = vector.load %arg10[%c0_30, %c0_31] : memref<512x128xf32, #tpu.memory_space<vmem>>, vector<512x128xf32>
      tpu.vector_store %arg10[%c0_30, %c0_31], %38 {strides = array<i32>} : memref<512x128xf32, #tpu.memory_space<vmem>>, vector<512x128xf32>,
    } else {
    }
    return
  }
  func.func @transform_0(%arg0: i32, %arg1: i32) -> (i32, i32) {
    %c0_i32 = arith.constant 0 : i32
    return %arg0, %arg1 : i32, i32
  }
  func.func @transform_1(%arg0: i32, %arg1: i32) -> (i32, i32) {
    %c0_i32 = arith.constant 0 : i32
    %c0_i32_0 = arith.constant 0 : i32
    return %arg1, %c0_i32 : i32, i32
  }
  func.func @transform_2(%arg0: i32, %arg1: i32) -> (i32, i32) {
    %c0_i32 = arith.constant 0 : i32
    %c0_i32_0 = arith.constant 0 : i32
    return %arg0, %c0_i32 : i32, i32
  }
  func.func @transform_3(%arg0: i32, %arg1: i32) -> (i32, i32) {
    %c0_i32 = arith.constant 0 : i32
    %c0_i32_0 = arith.constant 0 : i32
    %c0_i32_1 = arith.constant 0 : i32
    return %c0_i32, %c0_i32_0 : i32, i32
  }
  func.func @transform_4(%arg0: i32, %arg1: i32) -> (i32, i32) {
    %c0_i32 = arith.constant 0 : i32
    %c0_i32_0 = arith.constant 0 : i32
    %c0_i32_1 = arith.constant 0 : i32
    return %c0_i32, %c0_i32_0 : i32, i32
  }
  func.func @transform_5(%arg0: i32, %arg1: i32) -> (i32, i32) {
    %c0_i32 = arith.constant 0 : i32
    %c0_i32_0 = arith.constant 0 : i32
    %c0_i32_1 = arith.constant 0 : i32
    return %c0_i32, %c0_i32_0 : i32, i32
  }
  func.func @transform_6(%arg0: i32, %arg1: i32) -> (i32, i32) {
    %c0_i32 = arith.constant 0 : i32
    %c0_i32_0 = arith.constant 0 : i32
    return %arg0, %c0_i32 : i32, i32
  }
  func.func @transform_7(%arg0: i32, %arg1: i32) -> (i32, i32) {
    %c0_i32 = arith.constant 0 : i32
    %c0_i32_0 = arith.constant 0 : i32
    return %arg0, %c0_i32 : i32, i32
  }
  func.func @transform_8(%arg0: i32, %arg1: i32) -> (i32, i32) {
    %c0_i32 = arith.constant 0 : i32
    %c0_i32_0 = arith.constant 0 : i32
    return %arg0, %c0_i32 : i32, i32
  }
}

module attributes {stable_mosaic.version = 11 : i64} {
  func.func @ngcf_layer_kernel(%arg0: i32, %arg1: i32, %arg2: memref<512x512xbf16, #tpu.memory_space<vmem>>, %arg3: memref<512x128xbf16, #tpu.memory_space<vmem>>, %arg4: memref<512x128xf32, #tpu.memory_space<vmem>>, %arg5: memref<128x128xf32, #tpu.memory_space<vmem>>, %arg6: memref<128x128xf32, #tpu.memory_space<vmem>>, %arg7: memref<1x128xf32, #tpu.memory_space<vmem>>, %arg8: memref<512x128xf32, #tpu.memory_space<vmem>>, %arg9: memref<512x128xbf16, #tpu.memory_space<vmem>>, %arg10: memref<512x128xf32, #tpu.memory_space<vmem>>, %arg11: memref<512x128xf32, #tpu.memory_space<vmem>>) attributes {dimension_semantics = [#tpu.dimension_semantics<parallel>, #tpu.dimension_semantics<arbitrary>], iteration_bounds = array<i64: 1, 1>, scalar_prefetch = 0 : i64, scratch_operands = 1 : i64, tpu.core_type = #tpu.core_type<tc>, window_params = [{transform_indices = @transform_0, window_bounds = array<i64: 512, 512>}, {transform_indices = @transform_1, window_bounds = array<i64: 512, 128>}, {transform_indices = @transform_2, window_bounds = array<i64: 512, 128>}, {pipeline_mode = #tpu.pipeline_mode<synchronous>, transform_indices = @transform_3, window_bounds = array<i64: 128, 128>}, {pipeline_mode = #tpu.pipeline_mode<synchronous>, transform_indices = @transform_4, window_bounds = array<i64: 128, 128>}, {pipeline_mode = #tpu.pipeline_mode<synchronous>, transform_indices = @transform_5, window_bounds = array<i64: 1, 128>}, {transform_indices = @transform_6, window_bounds = array<i64: 512, 128>}, {transform_indices = @transform_7, window_bounds = array<i64: 512, 128>}, {transform_indices = @transform_8, window_bounds = array<i64: 512, 128>}]} {
    %c0_i32 = arith.constant 0 : i32
    %0 = arith.cmpi eq, %arg1, %c0_i32 : i32
    %1 = arith.extui %0 : i1 to i32
    %c0_i32_0 = arith.constant 0 : i32
    %2 = arith.cmpi ne, %1, %c0_i32_0 : i32
    scf.if %2 {
      %cst_10 = arith.constant 0.000000e+00 : f32
      %12 = vector.broadcast %cst_10 : f32 to vector<512x128xf32>
      %c0_11 = arith.constant 0 : index
      %c0_12 = arith.constant 0 : index
      %13 = vector.load %arg11[%c0_11, %c0_12] : memref<512x128xf32, #tpu.memory_space<vmem>>, vector<512x128xf32>
      tpu.vector_store %arg11[%c0_11, %c0_12], %12 {strides = array<i32>} : memref<512x128xf32, #tpu.memory_space<vmem>>, vector<512x128xf32>,
    } else {
    }
    %c0 = arith.constant 0 : index
    %c0_1 = arith.constant 0 : index
    %3 = vector.load %arg11[%c0, %c0_1] : memref<512x128xf32, #tpu.memory_space<vmem>>, vector<512x128xf32>
    %c0_2 = arith.constant 0 : index
    %c0_3 = arith.constant 0 : index
    %4 = vector.load %arg2[%c0_2, %c0_3] : memref<512x512xbf16, #tpu.memory_space<vmem>>, vector<512x512xbf16>
    %c0_4 = arith.constant 0 : index
    %c0_5 = arith.constant 0 : index
    %5 = vector.load %arg3[%c0_4, %c0_5] : memref<512x128xbf16, #tpu.memory_space<vmem>>, vector<512x128xbf16>
    %cst = arith.constant dense<0.000000e+00> : vector<512x128xf32>
    %6 = tpu.matmul %4, %5, %cst {dimension_numbers = #tpu.dot_dimension_numbers<[1], [0], [0], [1], [0, 0, 1, 1], [], []>} : vector<512x512xbf16>, vector<512x128xbf16>, vector<512x128xf32> -> vector<512x128xf32>
    %7 = arith.addf %3, %6 : vector<512x128xf32>
    %c0_6 = arith.constant 0 : index
    %c0_7 = arith.constant 0 : index
    %8 = vector.load %arg11[%c0_6, %c0_7] : memref<512x128xf32, #tpu.memory_space<vmem>>, vector<512x128xf32>
    tpu.vector_store %arg11[%c0_6, %c0_7], %7 {strides = array<i32>} : memref<512x128xf32, #tpu.memory_space<vmem>>, vector<512x128xf32>,
    %c0_i32_8 = arith.constant 0 : i32
    %9 = arith.cmpi eq, %arg1, %c0_i32_8 : i32
    %10 = arith.extui %9 : i1 to i32
    %c0_i32_9 = arith.constant 0 : i32
    %11 = arith.cmpi ne, %10, %c0_i32_9 : i32
    scf.if %11 {
      %c0_10 = arith.constant 0 : index
      %c0_11 = arith.constant 0 : index
      %12 = vector.load %arg11[%c0_10, %c0_11] : memref<512x128xf32, #tpu.memory_space<vmem>>, vector<512x128xf32>
      %c0_12 = arith.constant 0 : index
      %c0_13 = arith.constant 0 : index
      %13 = vector.load %arg4[%c0_12, %c0_13] : memref<512x128xf32, #tpu.memory_space<vmem>>, vector<512x128xf32>
      %c0_14 = arith.constant 0 : index
      %c0_15 = arith.constant 0 : index
      %14 = vector.load %arg5[%c0_14, %c0_15] : memref<128x128xf32, #tpu.memory_space<vmem>>, vector<128x128xf32>
      %cst_16 = arith.constant dense<0.000000e+00> : vector<512x128xf32>
      %15 = tpu.matmul %12, %14, %cst_16 {dimension_numbers = #tpu.dot_dimension_numbers<[1], [0], [0], [1], [0, 0, 1, 1], [], []>} : vector<512x128xf32>, vector<128x128xf32>, vector<512x128xf32> -> vector<512x128xf32>
      %16 = arith.mulf %13, %12 : vector<512x128xf32>
      %c0_17 = arith.constant 0 : index
      %c0_18 = arith.constant 0 : index
      %17 = vector.load %arg6[%c0_17, %c0_18] : memref<128x128xf32, #tpu.memory_space<vmem>>, vector<128x128xf32>
      %cst_19 = arith.constant dense<0.000000e+00> : vector<512x128xf32>
      %18 = tpu.matmul %16, %17, %cst_19 {dimension_numbers = #tpu.dot_dimension_numbers<[1], [0], [0], [1], [0, 0, 1, 1], [], []>} : vector<512x128xf32>, vector<128x128xf32>, vector<512x128xf32> -> vector<512x128xf32>
      %19 = arith.addf %15, %18 : vector<512x128xf32>
      %c0_20 = arith.constant 0 : index
      %c0_21 = arith.constant 0 : index
      %20 = vector.load %arg7[%c0_20, %c0_21] : memref<1x128xf32, #tpu.memory_space<vmem>>, vector<1x128xf32>
      %21 = vector.broadcast %20 : vector<1x128xf32> to vector<512x128xf32>
      %22 = arith.addf %19, %21 : vector<512x128xf32>
      %cst_22 = arith.constant 0.000000e+00 : f32
      %23 = vector.broadcast %cst_22 : f32 to vector<512x128xf32>
      %24 = arith.cmpf oge, %22, %23 : vector<512x128xf32>
      %cst_23 = arith.constant 2.000000e-01 : f32
      %25 = vector.broadcast %cst_23 : f32 to vector<512x128xf32>
      %26 = arith.mulf %25, %22 : vector<512x128xf32>
      %27 = arith.select %24, %22, %26 : vector<512x128xi1>, vector<512x128xf32>
      %28 = arith.mulf %27, %27 : vector<512x128xf32>
      %cst_24 = arith.constant dense<0.000000e+00> : vector<512xf32>
      %29 = vector.multi_reduction <add>, %28, %cst_24 [1] : vector<512x128xf32> to vector<512xf32>
      %30 = vector.shape_cast %29 : vector<512xf32> to vector<512x1xf32>
      %cst_25 = arith.constant 1.000000e-24 : f32
      %31 = vector.broadcast %cst_25 : f32 to vector<512x1xf32>
      %32 = arith.maximumf %30, %31 : vector<512x1xf32>
      %33 = math.rsqrt %32 : vector<512x1xf32>
      %c0_26 = arith.constant 0 : index
      %c0_27 = arith.constant 0 : index
      %34 = vector.load %arg8[%c0_26, %c0_27] : memref<512x128xf32, #tpu.memory_space<vmem>>, vector<512x128xf32>
      tpu.vector_store %arg8[%c0_26, %c0_27], %27 {strides = array<i32>} : memref<512x128xf32, #tpu.memory_space<vmem>>, vector<512x128xf32>,
      %35 = arith.truncf %27 : vector<512x128xf32> to vector<512x128xbf16>
      %c0_28 = arith.constant 0 : index
      %c0_29 = arith.constant 0 : index
      %36 = vector.load %arg9[%c0_28, %c0_29] : memref<512x128xbf16, #tpu.memory_space<vmem>>, vector<512x128xbf16>
      tpu.vector_store %arg9[%c0_28, %c0_29], %35 {strides = array<i32>} : memref<512x128xbf16, #tpu.memory_space<vmem>>, vector<512x128xbf16>,
      %37 = vector.broadcast %33 : vector<512x1xf32> to vector<512x128xf32>
      %38 = arith.mulf %27, %37 : vector<512x128xf32>
      %c0_30 = arith.constant 0 : index
      %c0_31 = arith.constant 0 : index
      %39 = vector.load %arg10[%c0_30, %c0_31] : memref<512x128xf32, #tpu.memory_space<vmem>>, vector<512x128xf32>
      tpu.vector_store %arg10[%c0_30, %c0_31], %38 {strides = array<i32>} : memref<512x128xf32, #tpu.memory_space<vmem>>, vector<512x128xf32>,
    } else {
    }
    return
  }
  func.func @transform_0(%arg0: i32, %arg1: i32) -> (i32, i32) {
    %c0_i32 = arith.constant 0 : i32
    return %arg0, %arg1 : i32, i32
  }
  func.func @transform_1(%arg0: i32, %arg1: i32) -> (i32, i32) {
    %c0_i32 = arith.constant 0 : i32
    %c0_i32_0 = arith.constant 0 : i32
    return %arg1, %c0_i32 : i32, i32
  }
  func.func @transform_2(%arg0: i32, %arg1: i32) -> (i32, i32) {
    %c0_i32 = arith.constant 0 : i32
    %c0_i32_0 = arith.constant 0 : i32
    return %arg0, %c0_i32 : i32, i32
  }
  func.func @transform_3(%arg0: i32, %arg1: i32) -> (i32, i32) {
    %c0_i32 = arith.constant 0 : i32
    %c0_i32_0 = arith.constant 0 : i32
    %c0_i32_1 = arith.constant 0 : i32
    return %c0_i32, %c0_i32_0 : i32, i32
  }
  func.func @transform_4(%arg0: i32, %arg1: i32) -> (i32, i32) {
    %c0_i32 = arith.constant 0 : i32
    %c0_i32_0 = arith.constant 0 : i32
    %c0_i32_1 = arith.constant 0 : i32
    return %c0_i32, %c0_i32_0 : i32, i32
  }
  func.func @transform_5(%arg0: i32, %arg1: i32) -> (i32, i32) {
    %c0_i32 = arith.constant 0 : i32
    %c0_i32_0 = arith.constant 0 : i32
    %c0_i32_1 = arith.constant 0 : i32
    return %c0_i32, %c0_i32_0 : i32, i32
  }
  func.func @transform_6(%arg0: i32, %arg1: i32) -> (i32, i32) {
    %c0_i32 = arith.constant 0 : i32
    %c0_i32_0 = arith.constant 0 : i32
    return %arg0, %c0_i32 : i32, i32
  }
  func.func @transform_7(%arg0: i32, %arg1: i32) -> (i32, i32) {
    %c0_i32 = arith.constant 0 : i32
    %c0_i32_0 = arith.constant 0 : i32
    return %arg0, %c0_i32 : i32, i32
  }
  func.func @transform_8(%arg0: i32, %arg1: i32) -> (i32, i32) {
    %c0_i32 = arith.constant 0 : i32
    %c0_i32_0 = arith.constant 0 : i32
    return %arg0, %c0_i32 : i32, i32
  }
}

</mosaic_0001>

<llo_original>
// kernel: ngcf_forward.2
$region0: #{ngcf_forward.2}
  #allocation0 [shape = 'u32[]', space=smem, size = 0x4, offset = 0x4, fixed_abs, tag = 'smem constant byte address 0x4 - core index']
  #allocation1 [shape = 'u32[144,128]{1,0:T(1,128)}', space=vmem, size = 0x12000, scoped, tag = 'internal scratch']
  #allocation2 [shape = 'f32[512,128]{1,0:T(8,128)}', space=vmem, size = 0x40000, scoped, tag = 'scratch operand']
  %s0 = inlined_call_operand.vmem [shape: bf16[512,512], index: 0, kind: input, shape index: {}]
  %s1 = inlined_call_operand.vmem [shape: bf16[512,128], index: 1, kind: input, shape index: {}]
  %s2 = inlined_call_operand.vmem [shape: f32[512,128], index: 2, kind: input, shape index: {}]
  %s3 = inlined_call_operand.vmem [shape: f32[128,128], index: 3, kind: input, shape index: {}]
  %s4 = inlined_call_operand.vmem [shape: f32[128,128], index: 4, kind: input, shape index: {}]
  %s5 = inlined_call_operand.vmem [shape: f32[1,128], index: 5, kind: input, shape index: {}]
  %s6 = inlined_call_operand.vmem [shape: f32[512,128], index: 6, kind: output, shape index: {0}]
  %s7 = inlined_call_operand.vmem [shape: bf16[512,128], index: 7, kind: output, shape index: {1}]
  %s8 = inlined_call_operand.vmem [shape: f32[512,128], index: 8, kind: output, shape index: {2}]
  %9 = xla_tuple %s6, %s7, %s8
  %s10 = sld [smem:[#allocation0]]
  $region58: #{ngcf_forward.2} parent=0
    _
  %s12 = ssub.s32 1, %s10
  %s13 = scalar_select 0, %s12, %s10
  // Predicated region
  $region2: #{ngcf_forward.2} parent=0 // pred_check
    _
  $region3: #{ngcf_forward.2} parent=0 // pred_check_branch
    %15 = sbr.rel (0) target = $region5
  $region4: #{ngcf_forward.2} parent=0 // pred_region
    _
  $region5: #{ngcf_forward.2} parent=0 // pred_fallthru
    _
  // Predicated region
  $region6: #{ngcf_forward.2} parent=0 // pred_check
    _
  $region7: #{ngcf_forward.2} parent=0 // pred_check_branch
    %17 = sbr.rel (0) target = $region9
  $region8: #{ngcf_forward.2} parent=0 // pred_region
    _
  $region9: #{ngcf_forward.2} parent=0 // pred_fallthru
    _
  // Predicated region
  $region10: #{ngcf_forward.2} parent=0 // pred_check
    _
  $region11: #{ngcf_forward.2} parent=0 // pred_check_branch
    %19 = sbr.rel (0) target = $region13
  $region12: #{ngcf_forward.2} parent=0 // pred_region
    _
  $region13: #{ngcf_forward.2} parent=0 // pred_fallthru
    _
  // Predicated region
  $region14: #{ngcf_forward.2} parent=0 // pred_check
    _
  $region15: #{ngcf_forward.2} parent=0 // pred_check_branch
    %21 = sbr.rel (0) target = $region17
  $region16: #{ngcf_forward.2} parent=0 // pred_region
    _
  $region17: #{ngcf_forward.2} parent=0 // pred_fallthru
    _
  // Predicated region
  $region18: #{ngcf_forward.2} parent=0 // pred_check
    _
  $region19: #{ngcf_forward.2} parent=0 // pred_check_branch
    %23 = sbr.rel (0) target = $region21
  $region20: #{ngcf_forward.2} parent=0 // pred_region
    _
  $region21: #{ngcf_forward.2} parent=0 // pred_fallthru
    _
  // Predicated region
  $region22: #{ngcf_forward.2} parent=0 // pred_check
    _
  $region23: #{ngcf_forward.2} parent=0 // pred_check_branch
    %25 = sbr.rel (0) target = $region25
  $region24: #{ngcf_forward.2} parent=0 // pred_region
    _
  $region25: #{ngcf_forward.2} parent=0 // pred_fallthru
    _
  %p27 = scmp.eq.s32.totalorder 0, 0
  // Predicated region
  $region26: #{ngcf_forward.2} parent=0 // pred_check
    %p28 = pneg %p27
  $region27: #{ngcf_forward.2} parent=0 // pred_check_branch
    %30 = sbr.rel (%p28) target = $region29
  $region28: #{ngcf_forward.2} parent=0 // pred_region
    %31 = vst [vmem:[#allocation2] sm:$0xff] 0.0
    %32 = vst [vmem:[#allocation2 + $0x8] sm:$0xff] 0.0
    %33 = vst [vmem:[#allocation2 + $0x10] sm:$0xff] 0.0
    %34 = vst [vmem:[#allocation2 + $0x18] sm:$0xff] 0.0
    %35 = vst [vmem:[#allocation2 + $0x20] sm:$0xff] 0.0
    %36 = vst [vmem:[#allocation2 + $0x28] sm:$0xff] 0.0
    %37 = vst [vmem:[#allocation2 + $0x30] sm:$0xff] 0.0
    %38 = vst [vmem:[#allocation2 + $0x38] sm:$0xff] 0.0
    %39 = vst [vmem:[#allocation2 + $0x40] sm:$0xff] 0.0
    %40 = vst [vmem:[#allocation2 + $0x48] sm:$0xff] 0.0
    %41 = vst [vmem:[#allocation2 + $0x50] sm:$0xff] 0.0
    %42 = vst [vmem:[#allocation2 + $0x58] sm:$0xff] 0.0
    %43 = vst [vmem:[#allocation2 + $0x60] sm:$0xff] 0.0
    %44 = vst [vmem:[#allocation2 + $0x68] sm:$0xff] 0.0
    %45 = vst [vmem:[#allocation2 + $0x70] sm:$0xff] 0.0
    %46 = vst [vmem:[#allocation2 + $0x78] sm:$0xff] 0.0
    %47 = vst [vmem:[#allocation2 + $0x80] sm:$0xff] 0.0
    %48 = vst [vmem:[#allocation2 + $0x88] sm:$0xff] 0.0
    %49 = vst [vmem:[#allocation2 + $0x90] sm:$0xff] 0.0
    %50 = vst [vmem:[#allocation2 + $0x98] sm:$0xff] 0.0
    %51 = vst [vmem:[#allocation2 + $0xa0] sm:$0xff] 0.0
    %52 = vst [vmem:[#allocation2 + $0xa8] sm:$0xff] 0.0
    %53 = vst [vmem:[#allocation2 + $0xb0] sm:$0xff] 0.0
    %54 = vst [vmem:[#allocation2 + $0xb8] sm:$0xff] 0.0
    %55 = vst [vmem:[#allocation2 + $0xc0] sm:$0xff] 0.0
    %56 = vst [vmem:[#allocation2 + $0xc8] sm:$0xff] 0.0
    %57 = vst [vmem:[#allocation2 + $0xd0] sm:$0xff] 0.0
    %58 = vst [vmem:[#allocation2 + $0xd8] sm:$0xff] 0.0
    %59 = vst [vmem:[#allocation2 + $0xe0] sm:$0xff] 0.0
    %60 = vst [vmem:[#allocation2 + $0xe8] sm:$0xff] 0.0
    %61 = vst [vmem:[#allocation2 + $0xf0] sm:$0xff] 0.0
    %62 = vst [vmem:[#allocation2 + $0xf8] sm:$0xff] 0.0
    %63 = vst [vmem:[#allocation2 + $0x100] sm:$0xff] 0.0
    %64 = vst [vmem:[#allocation2 + $0x108] sm:$0xff] 0.0
    %65 = vst [vmem:[#allocation2 + $0x110] sm:$0xff] 0.0
    %66 = vst [vmem:[#allocation2 + $0x118] sm:$0xff] 0.0
    %67 = vst [vmem:[#allocation2 + $0x120] sm:$0xff] 0.0
    %68 = vst [vmem:[#allocation2 + $0x128] sm:$0xff] 0.0
    %69 = vst [vmem:[#allocation2 + $0x130] sm:$0xff] 0.0
    %70 = vst [vmem:[#allocation2 + $0x138] sm:$0xff] 0.0
    %71 = vst [vmem:[#allocation2 + $0x140] sm:$0xff] 0.0
    %72 = vst [vmem:[#allocation2 + $0x148] sm:$0xff] 0.0
    %73 = vst [vmem:[#allocation2 + $0x150] sm:$0xff] 0.0
    %74 = vst [vmem:[#allocation2 + $0x158] sm:$0xff] 0.0
    %75 = vst [vmem:[#allocation2 + $0x160] sm:$0xff] 0.0
    %76 = vst [vmem:[#allocation2 + $0x168] sm:$0xff] 0.0
    %77 = vst [vmem:[#allocation2 + $0x170] sm:$0xff] 0.0
    %78 = vst [vmem:[#allocation2 + $0x178] sm:$0xff] 0.0
    %79 = vst [vmem:[#allocation2 + $0x180] sm:$0xff] 0.0
    %80 = vst [vmem:[#allocation2 + $0x188] sm:$0xff] 0.0
    %81 = vst [vmem:[#allocation2 + $0x190] sm:$0xff] 0.0
    %82 = vst [vmem:[#allocation2 + $0x198] sm:$0xff] 0.0
    %83 = vst [vmem:[#allocation2 + $0x1a0] sm:$0xff] 0.0
    %84 = vst [vmem:[#allocation2 + $0x1a8] sm:$0xff] 0.0
    %85 = vst [vmem:[#allocation2 + $0x1b0] sm:$0xff] 0.0
    %86 = vst [vmem:[#allocation2 + $0x1b8] sm:$0xff] 0.0
    %87 = vst [vmem:[#allocation2 + $0x1c0] sm:$0xff] 0.0
    %88 = vst [vmem:[#allocation2 + $0x1c8] sm:$0xff] 0.0
    %89 = vst [vmem:[#allocation2 + $0x1d0] sm:$0xff] 0.0
    %90 = vst [vmem:[#allocation2 + $0x1d8] sm:$0xff] 0.0
    %91 = vst [vmem:[#allocation2 + $0x1e0] sm:$0xff] 0.0
    %92 = vst [vmem:[#allocation2 + $0x1e8] sm:$0xff] 0.0
    %93 = vst [vmem:[#allocation2 + $0x1f0] sm:$0xff] 0.0
    %94 = vst [vmem:[#allocation2 + $0x1f8] sm:$0xff] 0.0
  $region29: #{ngcf_forward.2} parent=0 // pred_fallthru
    _
  %v95 = vld [vmem:[#allocation2] sm:$0xff]
  %v96 = vld [vmem:[#allocation2 + $0x8] sm:$0xff]
  %v97 = vld [vmem:[#allocation2 + $0x10] sm:$0xff]
  %v98 = vld [vmem:[#allocation2 + $0x18] sm:$0xff]
  %v99 = vld [vmem:[#allocation2 + $0x20] sm:$0xff]
  %v100 = vld [vmem:[#allocation2 + $0x28] sm:$0xff]
  %v101 = vld [vmem:[#allocation2 + $0x30] sm:$0xff]
  %v102 = vld [vmem:[#allocation2 + $0x38] sm:$0xff]
  %v103 = vld [vmem:[#allocation2 + $0x40] sm:$0xff]
  %v104 = vld [vmem:[#allocation2 + $0x48] sm:$0xff]
  %v105 = vld [vmem:[#allocation2 + $0x50] sm:$0xff]
  %v106 = vld [vmem:[#allocation2 + $0x58] sm:$0xff]
  %v107 = vld [vmem:[#allocation2 + $0x60] sm:$0xff]
  %v108 = vld [vmem:[#allocation2 + $0x68] sm:$0xff]
  %v109 = vld [vmem:[#allocation2 + $0x70] sm:$0xff]
  %v110 = vld [vmem:[#allocation2 + $0x78] sm:$0xff]
  %v111 = vld [vmem:[#allocation2 + $0x80] sm:$0xff]
  %v112 = vld [vmem:[#allocation2 + $0x88] sm:$0xff]
  %v113 = vld [vmem:[#allocation2 + $0x90] sm:$0xff]
  %v114 = vld [vmem:[#allocation2 + $0x98] sm:$0xff]
  %v115 = vld [vmem:[#allocation2 + $0xa0] sm:$0xff]
  %v116 = vld [vmem:[#allocation2 + $0xa8] sm:$0xff]
  %v117 = vld [vmem:[#allocation2 + $0xb0] sm:$0xff]
  %v118 = vld [vmem:[#allocation2 + $0xb8] sm:$0xff]
  %v119 = vld [vmem:[#allocation2 + $0xc0] sm:$0xff]
  %v120 = vld [vmem:[#allocation2 + $0xc8] sm:$0xff]
  %v121 = vld [vmem:[#allocation2 + $0xd0] sm:$0xff]
  %v122 = vld [vmem:[#allocation2 + $0xd8] sm:$0xff]
  %v123 = vld [vmem:[#allocation2 + $0xe0] sm:$0xff]
  %v124 = vld [vmem:[#allocation2 + $0xe8] sm:$0xff]
  %v125 = vld [vmem:[#allocation2 + $0xf0] sm:$0xff]
  %v126 = vld [vmem:[#allocation2 + $0xf8] sm:$0xff]
  %v127 = vld [vmem:[#allocation2 + $0x100] sm:$0xff]
  %v128 = vld [vmem:[#allocation2 + $0x108] sm:$0xff]
  %v129 = vld [vmem:[#allocation2 + $0x110] sm:$0xff]
  %v130 = vld [vmem:[#allocation2 + $0x118] sm:$0xff]
  %v131 = vld [vmem:[#allocation2 + $0x120] sm:$0xff]
  %v132 = vld [vmem:[#allocation2 + $0x128] sm:$0xff]
  %v133 = vld [vmem:[#allocation2 + $0x130] sm:$0xff]
  %v134 = vld [vmem:[#allocation2 + $0x138] sm:$0xff]
  %v135 = vld [vmem:[#allocation2 + $0x140] sm:$0xff]
  %v136 = vld [vmem:[#allocation2 + $0x148] sm:$0xff]
  %v137 = vld [vmem:[#allocation2 + $0x150] sm:$0xff]
  %v138 = vld [vmem:[#allocation2 + $0x158] sm:$0xff]
  %v139 = vld [vmem:[#allocation2 + $0x160] sm:$0xff]
  %v140 = vld [vmem:[#allocation2 + $0x168] sm:$0xff]
  %v141 = vld [vmem:[#allocation2 + $0x170] sm:$0xff]
  %v142 = vld [vmem:[#allocation2 + $0x178] sm:$0xff]
  %v143 = vld [vmem:[#allocation2 + $0x180] sm:$0xff]
  %v144 = vld [vmem:[#allocation2 + $0x188] sm:$0xff]
  %v145 = vld [vmem:[#allocation2 + $0x190] sm:$0xff]
  %v146 = vld [vmem:[#allocation2 + $0x198] sm:$0xff]
  %v147 = vld [vmem:[#allocation2 + $0x1a0] sm:$0xff]
  %v148 = vld [vmem:[#allocation2 + $0x1a8] sm:$0xff]
  %v149 = vld [vmem:[#allocation2 + $0x1b0] sm:$0xff]
  %v150 = vld [vmem:[#allocation2 + $0x1b8] sm:$0xff]
  %v151 = vld [vmem:[#allocation2 + $0x1c0] sm:$0xff]
  %v152 = vld [vmem:[#allocation2 + $0x1c8] sm:$0xff]
  %v153 = vld [vmem:[#allocation2 + $0x1d0] sm:$0xff]
  %v154 = vld [vmem:[#allocation2 + $0x1d8] sm:$0xff]
  %v155 = vld [vmem:[#allocation2 + $0x1e0] sm:$0xff]
  %v156 = vld [vmem:[#allocation2 + $0x1e8] sm:$0xff]
  %v157 = vld [vmem:[#allocation2 + $0x1f0] sm:$0xff]
  %v158 = vld [vmem:[#allocation2 + $0x1f8] sm:$0xff]
  %v159 = vld [vmem:[%s0] sm:$0xff]
  %v160 = vld [vmem:[%s0 + $0x8] sm:$0xff]
  %v161 = vld [vmem:[%s0 + $0x10] sm:$0xff]
  %v162 = vld [vmem:[%s0 + $0x18] sm:$0xff]
  %v163 = vld [vmem:[%s0 + $0x20] sm:$0xff]
  %v164 = vld [vmem:[%s0 + $0x28] sm:$0xff]
  %v165 = vld [vmem:[%s0 + $0x30] sm:$0xff]
  %v166 = vld [vmem:[%s0 + $0x38] sm:$0xff]
  %v167 = vld [vmem:[%s0 + $0x40] sm:$0xff]
  %v168 = vld [vmem:[%s0 + $0x48] sm:$0xff]
  %v169 = vld [vmem:[%s0 + $0x50] sm:$0xff]
  %v170 = vld [vmem:[%s0 + $0x58] sm:$0xff]
  %v171 = vld [vmem:[%s0 + $0x60] sm:$0xff]
  %v172 = vld [vmem:[%s0 + $0x68] sm:$0xff]
  %v173 = vld [vmem:[%s0 + $0x70] sm:$0xff]
  %v174 = vld [vmem:[%s0 + $0x78] sm:$0xff]
  %v175 = vld [vmem:[%s0 + $0x80] sm:$0xff]
  %v176 = vld [vmem:[%s0 + $0x88] sm:$0xff]
  %v177 = vld [vmem:[%s0 + $0x90] sm:$0xff]
  %v178 = vld [vmem:[%s0 + $0x98] sm:$0xff]
  %v179 = vld [vmem:[%s0 + $0xa0] sm:$0xff]
  %v180 = vld [vmem:[%s0 + $0xa8] sm:$0xff]
  %v181 = vld [vmem:[%s0 + $0xb0] sm:$0xff]
  %v182 = vld [vmem:[%s0 + $0xb8] sm:$0xff]
  %v183 = vld [vmem:[%s0 + $0xc0] sm:$0xff]
  %v184 = vld [vmem:[%s0 + $0xc8] sm:$0xff]
  %v185 = vld [vmem:[%s0 + $0xd0] sm:$0xff]
  %v186 = vld [vmem:[%s0 + $0xd8] sm:$0xff]
  %v187 = vld [vmem:[%s0 + $0xe0] sm:$0xff]
  %v188 = vld [vmem:[%s0 + $0xe8] sm:$0xff]
  %v189 = vld [vmem:[%s0 + $0xf0] sm:$0xff]
  %v190 = vld [vmem:[%s0 + $0xf8] sm:$0xff]
  %v191 = vld [vmem:[%s0 + $0x100] sm:$0xff]
  %v192 = vld [vmem:[%s0 + $0x108] sm:$0xff]
  %v193 = vld [vmem:[%s0 + $0x110] sm:$0xff]
  %v194 = vld [vmem:[%s0 + $0x118] sm:$0xff]
  %v195 = vld [vmem:[%s0 + $0x120] sm:$0xff]
  %v196 = vld [vmem:[%s0 + $0x128] sm:$0xff]
  %v197 = vld [vmem:[%s0 + $0x130] sm:$0xff]
  %v198 = vld [vmem:[%s0 + $0x138] sm:$0xff]
  %v199 = vld [vmem:[%s0 + $0x140] sm:$0xff]
  %v200 = vld [vmem:[%s0 + $0x148] sm:$0xff]
  %v201 = vld [vmem:[%s0 + $0x150] sm:$0xff]
  %v202 = vld [vmem:[%s0 + $0x158] sm:$0xff]
  %v203 = vld [vmem:[%s0 + $0x160] sm:$0xff]
  %v204 = vld [vmem:[%s0 + $0x168] sm:$0xff]
  %v205 = vld [vmem:[%s0 + $0x170] sm:$0xff]
  %v206 = vld [vmem:[%s0 + $0x178] sm:$0xff]
  %v207 = vld [vmem:[%s0 + $0x180] sm:$0xff]
  %v208 = vld [vmem:[%s0 + $0x188] sm:$0xff]
  %v209 = vld [vmem:[%s0 + $0x190] sm:$0xff]
  %v210 = vld [vmem:[%s0 + $0x198] sm:$0xff]
  %v211 = vld [vmem:[%s0 + $0x1a0] sm:$0xff]
  %v212 = vld [vmem:[%s0 + $0x1a8] sm:$0xff]
  %v213 = vld [vmem:[%s0 + $0x1b0] sm:$0xff]
  %v214 = vld [vmem:[%s0 + $0x1b8] sm:$0xff]
  %v215 = vld [vmem:[%s0 + $0x1c0] sm:$0xff]
  %v216 = vld [vmem:[%s0 + $0x1c8] sm:$0xff]
  %v217 = vld [vmem:[%s0 + $0x1d0] sm:$0xff]
  %v218 = vld [vmem:[%s0 + $0x1d8] sm:$0xff]
  %v219 = vld [vmem:[%s0 + $0x1e0] sm:$0xff]
  %v220 = vld [vmem:[%s0 + $0x1e8] sm:$0xff]
  %v221 = vld [vmem:[%s0 + $0x1f0] sm:$0xff]
  %v222 = vld [vmem:[%s0 + $0x1f8] sm:$0xff]
  %v223 = vld [vmem:[%s0 + $0x200] sm:$0xff]
  %v224 = vld [vmem:[%s0 + $0x208] sm:$0xff]
  %v225 = vld [vmem:[%s0 + $0x210] sm:$0xff]
  %v226 = vld [vmem:[%s0 + $0x218] sm:$0xff]
  %v227 = vld [vmem:[%s0 + $0x220] sm:$0xff]
  %v228 = vld [vmem:[%s0 + $0x228] sm:$0xff]
  %v229 = vld [vmem:[%s0 + $0x230] sm:$0xff]
  %v230 = vld [vmem:[%s0 + $0x238] sm:$0xff]
  %v231 = vld [vmem:[%s0 + $0x240] sm:$0xff]
  %v232 = vld [vmem:[%s0 + $0x248] sm:$0xff]
  %v233 = vld [vmem:[%s0 + $0x250] sm:$0xff]
  %v234 = vld [vmem:[%s0 + $0x258] sm:$0xff]
  %v235 = vld [vmem:[%s0 + $0x260] sm:$0xff]
  %v236 = vld [vmem:[%s0 + $0x268] sm:$0xff]
  %v237 = vld [vmem:[%s0 + $0x270] sm:$0xff]
  %v238 = vld [vmem:[%s0 + $0x278] sm:$0xff]
  %v239 = vld [vmem:[%s0 + $0x280] sm:$0xff]
  %v240 = vld [vmem:[%s0 + $0x288] sm:$0xff]
  %v241 = vld [vmem:[%s0 + $0x290] sm:$0xff]
  %v242 = vld [vmem:[%s0 + $0x298] sm:$0xff]
  %v243 = vld [vmem:[%s0 + $0x2a0] sm:$0xff]
  %v244 = vld [vmem:[%s0 + $0x2a8] sm:$0xff]
  %v245 = vld [vmem:[%s0 + $0x2b0] sm:$0xff]
  %v246 = vld [vmem:[%s0 + $0x2b8] sm:$0xff]
  %v247 = vld [vmem:[%s0 + $0x2c0] sm:$0xff]
  %v248 = vld [vmem:[%s0 + $0x2c8] sm:$0xff]
  %v249 = vld [vmem:[%s0 + $0x2d0] sm:$0xff]
  %v250 = vld [vmem:[%s0 + $0x2d8] sm:$0xff]
  %v251 = vld [vmem:[%s0 + $0x2e0] sm:$0xff]
  %v252 = vld [vmem:[%s0 + $0x2e8] sm:$0xff]
  %v253 = vld [vmem:[%s0 + $0x2f0] sm:$0xff]
  %v254 = vld [vmem:[%s0 + $0x2f8] sm:$0xff]
  %v255 = vld [vmem:[%s0 + $0x300] sm:$0xff]
  %v256 = vld [vmem:[%s0 + $0x308] sm:$0xff]
  %v257 = vld [vmem:[%s0 + $0x310] sm:$0xff]
  %v258 = vld [vmem:[%s0 + $0x318] sm:$0xff]
  %v259 = vld [vmem:[%s0 + $0x320] sm:$0xff]
  %v260 = vld [vmem:[%s0 + $0x328] sm:$0xff]
  %v261 = vld [vmem:[%s0 + $0x330] sm:$0xff]
  %v262 = vld [vmem:[%s0 + $0x338] sm:$0xff]
  %v263 = vld [vmem:[%s0 + $0x340] sm:$0xff]
  %v264 = vld [vmem:[%s0 + $0x348] sm:$0xff]
  %v265 = vld [vmem:[%s0 + $0x350] sm:$0xff]
  %v266 = vld [vmem:[%s0 + $0x358] sm:$0xff]
  %v267 = vld [vmem:[%s0 + $0x360] sm:$0xff]
  %v268 = vld [vmem:[%s0 + $0x368] sm:$0xff]
  %v269 = vld [vmem:[%s0 + $0x370] sm:$0xff]
  %v270 = vld [vmem:[%s0 + $0x378] sm:$0xff]
  %v271 = vld [vmem:[%s0 + $0x380] sm:$0xff]
  %v272 = vld [vmem:[%s0 + $0x388] sm:$0xff]
  %v273 = vld [vmem:[%s0 + $0x390] sm:$0xff]
  %v274 = vld [vmem:[%s0 + $0x398] sm:$0xff]
  %v275 = vld [vmem:[%s0 + $0x3a0] sm:$0xff]
  %v276 = vld [vmem:[%s0 + $0x3a8] sm:$0xff]
  %v277 = vld [vmem:[%s0 + $0x3b0] sm:$0xff]
  %v278 = vld [vmem:[%s0 + $0x3b8] sm:$0xff]
  %v279 = vld [vmem:[%s0 + $0x3c0] sm:$0xff]
  %v280 = vld [vmem:[%s0 + $0x3c8] sm:$0xff]
  %v281 = vld [vmem:[%s0 + $0x3d0] sm:$0xff]
  %v282 = vld [vmem:[%s0 + $0x3d8] sm:$0xff]
  %v283 = vld [vmem:[%s0 + $0x3e0] sm:$0xff]
  %v284 = vld [vmem:[%s0 + $0x3e8] sm:$0xff]
  %v285 = vld [vmem:[%s0 + $0x3f0] sm:$0xff]
  %v286 = vld [vmem:[%s0 + $0x3f8] sm:$0xff]
  %v287 = vld [vmem:[%s1] sm:$0xf]
  %v288 = vld [vmem:[%s1 + $0x4] sm:$0xf]
  %v289 = vld [vmem:[%s1 + $0x8] sm:$0xf]
  %v290 = vld [vmem:[%s1 + $0xc] sm:$0xf]
  %v291 = vld [vmem:[%s1 + $0x10] sm:$0xf]
  %v292 = vld [vmem:[%s1 + $0x14] sm:$0xf]
  %v293 = vld [vmem:[%s1 + $0x18] sm:$0xf]
  %v294 = vld [vmem:[%s1 + $0x1c] sm:$0xf]
  %v295 = vld [vmem:[%s1 + $0x20] sm:$0xf]
  %v296 = vld [vmem:[%s1 + $0x24] sm:$0xf]
  %v297 = vld [vmem:[%s1 + $0x28] sm:$0xf]
  %v298 = vld [vmem:[%s1 + $0x2c] sm:$0xf]
  %v299 = vld [vmem:[%s1 + $0x30] sm:$0xf]
  %v300 = vld [vmem:[%s1 + $0x34] sm:$0xf]
  %v301 = vld [vmem:[%s1 + $0x38] sm:$0xf]
  %v302 = vld [vmem:[%s1 + $0x3c] sm:$0xf]
  %v303 = vld [vmem:[%s1 + $0x40] sm:$0xf]
  %v304 = vld [vmem:[%s1 + $0x44] sm:$0xf]
  %v305 = vld [vmem:[%s1 + $0x48] sm:$0xf]
  %v306 = vld [vmem:[%s1 + $0x4c] sm:$0xf]
  %v307 = vld [vmem:[%s1 + $0x50] sm:$0xf]
  %v308 = vld [vmem:[%s1 + $0x54] sm:$0xf]
  %v309 = vld [vmem:[%s1 + $0x58] sm:$0xf]
  %v310 = vld [vmem:[%s1 + $0x5c] sm:$0xf]
  %v311 = vld [vmem:[%s1 + $0x60] sm:$0xf]
  %v312 = vld [vmem:[%s1 + $0x64] sm:$0xf]
  %v313 = vld [vmem:[%s1 + $0x68] sm:$0xf]
  %v314 = vld [vmem:[%s1 + $0x6c] sm:$0xf]
  %v315 = vld [vmem:[%s1 + $0x70] sm:$0xf]
  %v316 = vld [vmem:[%s1 + $0x74] sm:$0xf]
  %v317 = vld [vmem:[%s1 + $0x78] sm:$0xf]
  %v318 = vld [vmem:[%s1 + $0x7c] sm:$0xf]
  %v319 = vld [vmem:[%s1 + $0x80] sm:$0xf]
  %v320 = vld [vmem:[%s1 + $0x84] sm:$0xf]
  %v321 = vld [vmem:[%s1 + $0x88] sm:$0xf]
  %v322 = vld [vmem:[%s1 + $0x8c] sm:$0xf]
  %v323 = vld [vmem:[%s1 + $0x90] sm:$0xf]
  %v324 = vld [vmem:[%s1 + $0x94] sm:$0xf]
  %v325 = vld [vmem:[%s1 + $0x98] sm:$0xf]
  %v326 = vld [vmem:[%s1 + $0x9c] sm:$0xf]
  %v327 = vld [vmem:[%s1 + $0xa0] sm:$0xf]
  %v328 = vld [vmem:[%s1 + $0xa4] sm:$0xf]
  %v329 = vld [vmem:[%s1 + $0xa8] sm:$0xf]
  %v330 = vld [vmem:[%s1 + $0xac] sm:$0xf]
  %v331 = vld [vmem:[%s1 + $0xb0] sm:$0xf]
  %v332 = vld [vmem:[%s1 + $0xb4] sm:$0xf]
  %v333 = vld [vmem:[%s1 + $0xb8] sm:$0xf]
  %v334 = vld [vmem:[%s1 + $0xbc] sm:$0xf]
  %v335 = vld [vmem:[%s1 + $0xc0] sm:$0xf]
  %v336 = vld [vmem:[%s1 + $0xc4] sm:$0xf]
  %v337 = vld [vmem:[%s1 + $0xc8] sm:$0xf]
  %v338 = vld [vmem:[%s1 + $0xcc] sm:$0xf]
  %v339 = vld [vmem:[%s1 + $0xd0] sm:$0xf]
  %v340 = vld [vmem:[%s1 + $0xd4] sm:$0xf]
  %v341 = vld [vmem:[%s1 + $0xd8] sm:$0xf]
  %v342 = vld [vmem:[%s1 + $0xdc] sm:$0xf]
  %v343 = vld [vmem:[%s1 + $0xe0] sm:$0xf]
  %v344 = vld [vmem:[%s1 + $0xe4] sm:$0xf]
  %v345 = vld [vmem:[%s1 + $0xe8] sm:$0xf]
  %v346 = vld [vmem:[%s1 + $0xec] sm:$0xf]
  %v347 = vld [vmem:[%s1 + $0xf0] sm:$0xf]
  %v348 = vld [vmem:[%s1 + $0xf4] sm:$0xf]
  %v349 = vld [vmem:[%s1 + $0xf8] sm:$0xf]
  %v350 = vld [vmem:[%s1 + $0xfc] sm:$0xf]
  %v479 = vunpack.c.l.b16 %v159
  %v480 = vunpack.c.h.b16 %v159
  %v481 = vunpack.c.l.b16 %v160
  %v482 = vunpack.c.h.b16 %v160
  %v483 = vunpack.c.l.b16 %v161
  %v484 = vunpack.c.h.b16 %v161
  %v485 = vunpack.c.l.b16 %v162
  %v486 = vunpack.c.h.b16 %v162
  %v487 = vunpack.c.l.b16 %v163
  %v488 = vunpack.c.h.b16 %v163
  %v489 = vunpack.c.l.b16 %v164
  %v490 = vunpack.c.h.b16 %v164
  %v491 = vunpack.c.l.b16 %v165
  %v492 = vunpack.c.h.b16 %v165
  %v493 = vunpack.c.l.b16 %v166
  %v494 = vunpack.c.h.b16 %v166
  %v495 = vunpack.c.l.b16 %v167
  %v496 = vunpack.c.h.b16 %v167
  %v497 = vunpack.c.l.b16 %v168
  %v498 = vunpack.c.h.b16 %v168
  %v499 = vunpack.c.l.b16 %v169
  %v500 = vunpack.c.h.b16 %v169
  %v501 = vunpack.c.l.b16 %v170
  %v502 = vunpack.c.h.b16 %v170
  %v503 = vunpack.c.l.b16 %v171
  %v504 = vunpack.c.h.b16 %v171
  %v505 = vunpack.c.l.b16 %v172
  %v506 = vunpack.c.h.b16 %v172
  %v507 = vunpack.c.l.b16 %v173
  %v508 = vunpack.c.h.b16 %v173
  %v509 = vunpack.c.l.b16 %v174
  %v510 = vunpack.c.h.b16 %v174
  %v511 = vunpack.c.l.b16 %v175
  %v512 = vunpack.c.h.b16 %v175
  %v513 = vunpack.c.l.b16 %v176
  %v514 = vunpack.c.h.b16 %v176
  %v515 = vunpack.c.l.b16 %v177
  %v516 = vunpack.c.h.b16 %v177
  %v517 = vunpack.c.l.b16 %v178
  %v518 = vunpack.c.h.b16 %v178
  %v519 = vunpack.c.l.b16 %v179
  %v520 = vunpack.c.h.b16 %v179
  %v521 = vunpack.c.l.b16 %v180
  %v522 = vunpack.c.h.b16 %v180
  %v523 = vunpack.c.l.b16 %v181
  %v524 = vunpack.c.h.b16 %v181
  %v525 = vunpack.c.l.b16 %v182
  %v526 = vunpack.c.h.b16 %v182
  %v527 = vunpack.c.l.b16 %v183
  %v528 = vunpack.c.h.b16 %v183
  %v529 = vunpack.c.l.b16 %v184
  %v530 = vunpack.c.h.b16 %v184
  %v531 = vunpack.c.l.b16 %v185
  %v532 = vunpack.c.h.b16 %v185
  %v533 = vunpack.c.l.b16 %v186
  %v534 = vunpack.c.h.b16 %v186
  %v535 = vunpack.c.l.b16 %v187
  %v536 = vunpack.c.h.b16 %v187
  %v537 = vunpack.c.l.b16 %v188
  %v538 = vunpack.c.h.b16 %v188
  %v539 = vunpack.c.l.b16 %v189
  %v540 = vunpack.c.h.b16 %v189
  %v541 = vunpack.c.l.b16 %v190
  %v542 = vunpack.c.h.b16 %v190
  %v543 = vunpack.c.l.b16 %v191
  %v544 = vunpack.c.h.b16 %v191
  %v545 = vunpack.c.l.b16 %v192
  %v546 = vunpack.c.h.b16 %v192
  %v547 = vunpack.c.l.b16 %v193
  %v548 = vunpack.c.h.b16 %v193
  %v549 = vunpack.c.l.b16 %v194
  %v550 = vunpack.c.h.b16 %v194
  %v551 = vunpack.c.l.b16 %v195
  %v552 = vunpack.c.h.b16 %v195
  %v553 = vunpack.c.l.b16 %v196
  %v554 = vunpack.c.h.b16 %v196
  %v555 = vunpack.c.l.b16 %v197
  %v556 = vunpack.c.h.b16 %v197
  %v557 = vunpack.c.l.b16 %v198
  %v558 = vunpack.c.h.b16 %v198
  %v559 = vunpack.c.l.b16 %v199
  %v560 = vunpack.c.h.b16 %v199
  %v561 = vunpack.c.l.b16 %v200
  %v562 = vunpack.c.h.b16 %v200
  %v563 = vunpack.c.l.b16 %v201
  %v564 = vunpack.c.h.b16 %v201
  %v565 = vunpack.c.l.b16 %v202
  %v566 = vunpack.c.h.b16 %v202
  %v567 = vunpack.c.l.b16 %v203
  %v568 = vunpack.c.h.b16 %v203
  %v569 = vunpack.c.l.b16 %v204
  %v570 = vunpack.c.h.b16 %v204
  %v571 = vunpack.c.l.b16 %v205
  %v572 = vunpack.c.h.b16 %v205
  %v573 = vunpack.c.l.b16 %v206
  %v574 = vunpack.c.h.b16 %v206
  %v575 = vunpack.c.l.b16 %v207
  %v576 = vunpack.c.h.b16 %v207
  %v577 = vunpack.c.l.b16 %v208
  %v578 = vunpack.c.h.b16 %v208
  %v579 = vunpack.c.l.b16 %v209
  %v580 = vunpack.c.h.b16 %v209
  %v581 = vunpack.c.l.b16 %v210
  %v582 = vunpack.c.h.b16 %v210
  %v583 = vunpack.c.l.b16 %v211
  %v584 = vunpack.c.h.b16 %v211
  %v585 = vunpack.c.l.b16 %v212
  %v586 = vunpack.c.h.b16 %v212
  %v587 = vunpack.c.l.b16 %v213
  %v588 = vunpack.c.h.b16 %v213
  %v589 = vunpack.c.l.b16 %v214
  %v590 = vunpack.c.h.b16 %v214
  %v591 = vunpack.c.l.b16 %v215
  %v592 = vunpack.c.h.b16 %v215
  %v593 = vunpack.c.l.b16 %v216
  %v594 = vunpack.c.h.b16 %v216
  %v595 = vunpack.c.l.b16 %v217
  %v596 = vunpack.c.h.b16 %v217
  %v597 = vunpack.c.l.b16 %v218
  %v598 = vunpack.c.h.b16 %v218
  %v599 = vunpack.c.l.b16 %v219
  %v600 = vunpack.c.h.b16 %v219
  %v601 = vunpack.c.l.b16 %v220
  %v602 = vunpack.c.h.b16 %v220
  %v603 = vunpack.c.l.b16 %v221
  %v604 = vunpack.c.h.b16 %v221
  %v605 = vunpack.c.l.b16 %v222
  %v606 = vunpack.c.h.b16 %v222
  %v607 = vunpack.c.l.b16 %v223
  %v608 = vunpack.c.h.b16 %v223
  %v609 = vunpack.c.l.b16 %v224
  %v610 = vunpack.c.h.b16 %v224
  %v611 = vunpack.c.l.b16 %v225
  %v612 = vunpack.c.h.b16 %v225
  %v613 = vunpack.c.l.b16 %v226
  %v614 = vunpack.c.h.b16 %v226
  %v615 = vunpack.c.l.b16 %v227
  %v616 = vunpack.c.h.b16 %v227
  %v617 = vunpack.c.l.b16 %v228
  %v618 = vunpack.c.h.b16 %v228
  %v619 = vunpack.c.l.b16 %v229
  %v620 = vunpack.c.h.b16 %v229
  %v621 = vunpack.c.l.b16 %v230
  %v622 = vunpack.c.h.b16 %v230
  %v623 = vunpack.c.l.b16 %v231
  %v624 = vunpack.c.h.b16 %v231
  %v625 = vunpack.c.l.b16 %v232
  %v626 = vunpack.c.h.b16 %v232
  %v627 = vunpack.c.l.b16 %v233
  %v628 = vunpack.c.h.b16 %v233
  %v629 = vunpack.c.l.b16 %v234
  %v630 = vunpack.c.h.b16 %v234
  %v631 = vunpack.c.l.b16 %v235
  %v632 = vunpack.c.h.b16 %v235
  %v633 = vunpack.c.l.b16 %v236
  %v634 = vunpack.c.h.b16 %v236
  %v635 = vunpack.c.l.b16 %v237
  %v636 = vunpack.c.h.b16 %v237
  %v637 = vunpack.c.l.b16 %v238
  %v638 = vunpack.c.h.b16 %v238
  %v639 = vunpack.c.l.b16 %v239
  %v640 = vunpack.c.h.b16 %v239
  %v641 = vunpack.c.l.b16 %v240
  %v642 = vunpack.c.h.b16 %v240
  %v643 = vunpack.c.l.b16 %v241
  %v644 = vunpack.c.h.b16 %v241
  %v645 = vunpack.c.l.b16 %v242
  %v646 = vunpack.c.h.b16 %v242
  %v647 = vunpack.c.l.b16 %v243
  %v648 = vunpack.c.h.b16 %v243
  %v649 = vunpack.c.l.b16 %v244
  %v650 = vunpack.c.h.b16 %v244
  %v651 = vunpack.c.l.b16 %v245
  %v652 = vunpack.c.h.b16 %v245
  %v653 = vunpack.c.l.b16 %v246
  %v654 = vunpack.c.h.b16 %v246
  %v655 = vunpack.c.l.b16 %v247
  %v656 = vunpack.c.h.b16 %v247
  %v657 = vunpack.c.l.b16 %v248
  %v658 = vunpack.c.h.b16 %v248
  %v659 = vunpack.c.l.b16 %v249
  %v660 = vunpack.c.h.b16 %v249
  %v661 = vunpack.c.l.b16 %v250
  %v662 = vunpack.c.h.b16 %v250
  %v663 = vunpack.c.l.b16 %v251
  %v664 = vunpack.c.h.b16 %v251
  %v665 = vunpack.c.l.b16 %v252
  %v666 = vunpack.c.h.b16 %v252
  %v667 = vunpack.c.l.b16 %v253
  %v668 = vunpack.c.h.b16 %v253
  %v669 = vunpack.c.l.b16 %v254
  %v670 = vunpack.c.h.b16 %v254
  %v671 = vunpack.c.l.b16 %v255
  %v672 = vunpack.c.h.b16 %v255
  %v673 = vunpack.c.l.b16 %v256
  %v674 = vunpack.c.h.b16 %v256
  %v675 = vunpack.c.l.b16 %v257
  %v676 = vunpack.c.h.b16 %v257
  %v677 = vunpack.c.l.b16 %v258
  %v678 = vunpack.c.h.b16 %v258
  %v679 = vunpack.c.l.b16 %v259
  %v680 = vunpack.c.h.b16 %v259
  %v681 = vunpack.c.l.b16 %v260
  %v682 = vunpack.c.h.b16 %v260
  %v683 = vunpack.c.l.b16 %v261
  %v684 = vunpack.c.h.b16 %v261
  %v685 = vunpack.c.l.b16 %v262
  %v686 = vunpack.c.h.b16 %v262
  %v687 = vunpack.c.l.b16 %v263
  %v688 = vunpack.c.h.b16 %v263
  %v689 = vunpack.c.l.b16 %v264
  %v690 = vunpack.c.h.b16 %v264
  %v691 = vunpack.c.l.b16 %v265
  %v692 = vunpack.c.h.b16 %v265
  %v693 = vunpack.c.l.b16 %v266
  %v694 = vunpack.c.h.b16 %v266
  %v695 = vunpack.c.l.b16 %v267
  %v696 = vunpack.c.h.b16 %v267
  %v697 = vunpack.c.l.b16 %v268
  %v698 = vunpack.c.h.b16 %v268
  %v699 = vunpack.c.l.b16 %v269
  %v700 = vunpack.c.h.b16 %v269
  %v701 = vunpack.c.l.b16 %v270
  %v702 = vunpack.c.h.b16 %v270
  %v703 = vunpack.c.l.b16 %v271
  %v704 = vunpack.c.h.b16 %v271
  %v705 = vunpack.c.l.b16 %v272
  %v706 = vunpack.c.h.b16 %v272
  %v707 = vunpack.c.l.b16 %v273
  %v708 = vunpack.c.h.b16 %v273
  %v709 = vunpack.c.l.b16 %v274
  %v710 = vunpack.c.h.b16 %v274
  %v711 = vunpack.c.l.b16 %v275
  %v712 = vunpack.c.h.b16 %v275
  %v713 = vunpack.c.l.b16 %v276
  %v714 = vunpack.c.h.b16 %v276
  %v715 = vunpack.c.l.b16 %v277
  %v716 = vunpack.c.h.b16 %v277
  %v717 = vunpack.c.l.b16 %v278
  %v718 = vunpack.c.h.b16 %v278
  %v719 = vunpack.c.l.b16 %v279
  %v720 = vunpack.c.h.b16 %v279
  %v721 = vunpack.c.l.b16 %v280
  %v722 = vunpack.c.h.b16 %v280
  %v723 = vunpack.c.l.b16 %v281
  %v724 = vunpack.c.h.b16 %v281
  %v725 = vunpack.c.l.b16 %v282
  %v726 = vunpack.c.h.b16 %v282
  %v727 = vunpack.c.l.b16 %v283
  %v728 = vunpack.c.h.b16 %v283
  %v729 = vunpack.c.l.b16 %v284
  %v730 = vunpack.c.h.b16 %v284
  %v731 = vunpack.c.l.b16 %v285
  %v732 = vunpack.c.h.b16 %v285
  %v733 = vunpack.c.l.b16 %v286
  %v734 = vunpack.c.h.b16 %v286
  %v735 = vpack.c.b16 %v483, %v479
  %v736 = vpack.c.b16 %v484, %v480
  %v737 = vpack.c.b16 %v485, %v481
  %v738 = vpack.c.b16 %v486, %v482
  %v739 = vpack.c.b16 %v491, %v487
  %v740 = vpack.c.b16 %v492, %v488
  %v741 = vpack.c.b16 %v493, %v489
  %v742 = vpack.c.b16 %v494, %v490
  %v743 = vpack.c.b16 %v499, %v495
  %v744 = vpack.c.b16 %v500, %v496
  %v745 = vpack.c.b16 %v501, %v497
  %v746 = vpack.c.b16 %v502, %v498
  %v747 = vpack.c.b16 %v507, %v503
  %v748 = vpack.c.b16 %v508, %v504
  %v749 = vpack.c.b16 %v509, %v505
  %v750 = vpack.c.b16 %v510, %v506
  %v751 = vpack.c.b16 %v515, %v511
  %v752 = vpack.c.b16 %v516, %v512
  %v753 = vpack.c.b16 %v517, %v513
  %v754 = vpack.c.b16 %v518, %v514
  %v755 = vpack.c.b16 %v523, %v519
  %v756 = vpack.c.b16 %v524, %v520
  %v757 = vpack.c.b16 %v525, %v521
  %v758 = vpack.c.b16 %v526, %v522
  %v759 = vpack.c.b16 %v531, %v527
  %v760 = vpack.c.b16 %v532, %v528
  %v761 = vpack.c.b16 %v533, %v529
  %v762 = vpack.c.b16 %v534, %v530
  %v763 = vpack.c.b16 %v539, %v535
  %v764 = vpack.c.b16 %v540, %v536
  %v765 = vpack.c.b16 %v541, %v537
  %v766 = vpack.c.b16 %v542, %v538
  %v767 = vpack.c.b16 %v547, %v543
  %v768 = vpack.c.b16 %v548, %v544
  %v769 = vpack.c.b16 %v549, %v545
  %v770 = vpack.c.b16 %v550, %v546
  %v771 = vpack.c.b16 %v555, %v551
  %v772 = vpack.c.b16 %v556, %v552
  %v773 = vpack.c.b16 %v557, %v553
  %v774 = vpack.c.b16 %v558, %v554
  %v775 = vpack.c.b16 %v563, %v559
  %v776 = vpack.c.b16 %v564, %v560
  %v777 = vpack.c.b16 %v565, %v561
  %v778 = vpack.c.b16 %v566, %v562
  %v779 = vpack.c.b16 %v571, %v567
  %v780 = vpack.c.b16 %v572, %v568
  %v781 = vpack.c.b16 %v573, %v569
  %v782 = vpack.c.b16 %v574, %v570
  %v783 = vpack.c.b16 %v579, %v575
  %v784 = vpack.c.b16 %v580, %v576
  %v785 = vpack.c.b16 %v581, %v577
  %v786 = vpack.c.b16 %v582, %v578
  %v787 = vpack.c.b16 %v587, %v583
  %v788 = vpack.c.b16 %v588, %v584
  %v789 = vpack.c.b16 %v589, %v585
  %v790 = vpack.c.b16 %v590, %v586
  %v791 = vpack.c.b16 %v595, %v591
  %v792 = vpack.c.b16 %v596, %v592
  %v793 = vpack.c.b16 %v597, %v593
  %v794 = vpack.c.b16 %v598, %v594
  %v795 = vpack.c.b16 %v603, %v599
  %v796 = vpack.c.b16 %v604, %v600
  %v797 = vpack.c.b16 %v605, %v601
  %v798 = vpack.c.b16 %v606, %v602
  %v799 = vpack.c.b16 %v611, %v607
  %v800 = vpack.c.b16 %v612, %v608
  %v801 = vpack.c.b16 %v613, %v609
  %v802 = vpack.c.b16 %v614, %v610
  %v803 = vpack.c.b16 %v619, %v615
  %v804 = vpack.c.b16 %v620, %v616
  %v805 = vpack.c.b16 %v621, %v617
  %v806 = vpack.c.b16 %v622, %v618
  %v807 = vpack.c.b16 %v627, %v623
  %v808 = vpack.c.b16 %v628, %v624
  %v809 = vpack.c.b16 %v629, %v625
  %v810 = vpack.c.b16 %v630, %v626
  %v811 = vpack.c.b16 %v635, %v631
  %v812 = vpack.c.b16 %v636, %v632
  %v813 = vpack.c.b16 %v637, %v633
  %v814 = vpack.c.b16 %v638, %v634
  %v815 = vpack.c.b16 %v643, %v639
  %v816 = vpack.c.b16 %v644, %v640
  %v817 = vpack.c.b16 %v645, %v641
  %v818 = vpack.c.b16 %v646, %v642
  %v819 = vpack.c.b16 %v651, %v647
  %v820 = vpack.c.b16 %v652, %v648
  %v821 = vpack.c.b16 %v653, %v649
  %v822 = vpack.c.b16 %v654, %v650
  %v823 = vpack.c.b16 %v659, %v655
  %v824 = vpack.c.b16 %v660, %v656
  %v825 = vpack.c.b16 %v661, %v657
  %v826 = vpack.c.b16 %v662, %v658
  %v827 = vpack.c.b16 %v667, %v663
  %v828 = vpack.c.b16 %v668, %v664
  %v829 = vpack.c.b16 %v669, %v665
  %v830 = vpack.c.b16 %v670, %v666
  %v831 = vpack.c.b16 %v675, %v671
  %v832 = vpack.c.b16 %v676, %v672
  %v833 = vpack.c.b16 %v677, %v673
  %v834 = vpack.c.b16 %v678, %v674
  %v835 = vpack.c.b16 %v683, %v679
  %v836 = vpack.c.b16 %v684, %v680
  %v837 = vpack.c.b16 %v685, %v681
  %v838 = vpack.c.b16 %v686, %v682
  %v839 = vpack.c.b16 %v691, %v687
  %v840 = vpack.c.b16 %v692, %v688
  %v841 = vpack.c.b16 %v693, %v689
  %v842 = vpack.c.b16 %v694, %v690
  %v843 = vpack.c.b16 %v699, %v695
  %v844 = vpack.c.b16 %v700, %v696
  %v845 = vpack.c.b16 %v701, %v697
  %v846 = vpack.c.b16 %v702, %v698
  %v847 = vpack.c.b16 %v707, %v703
  %v848 = vpack.c.b16 %v708, %v704
  %v849 = vpack.c.b16 %v709, %v705
  %v850 = vpack.c.b16 %v710, %v706
  %v851 = vpack.c.b16 %v715, %v711
  %v852 = vpack.c.b16 %v716, %v712
  %v853 = vpack.c.b16 %v717, %v713
  %v854 = vpack.c.b16 %v718, %v714
  %v855 = vpack.c.b16 %v723, %v719
  %v856 = vpack.c.b16 %v724, %v720
  %v857 = vpack.c.b16 %v725, %v721
  %v858 = vpack.c.b16 %v726, %v722
  %v859 = vpack.c.b16 %v731, %v727
  %v860 = vpack.c.b16 %v732, %v728
  %v861 = vpack.c.b16 %v733, %v729
  %v862 = vpack.c.b16 %v734, %v730
  %v1055 = vunpack.c.l.b16 %v287
  %v1056 = vunpack.c.l.b16 %v288
  %v1057 = vunpack.c.l.b16 %v289
  %v1058 = vunpack.c.l.b16 %v290
  %v1059 = vunpack.c.l.b16 %v291
  %v1060 = vunpack.c.l.b16 %v292
  %v1061 = vunpack.c.l.b16 %v293
  %v1062 = vunpack.c.l.b16 %v294
  %v1063 = vunpack.c.l.b16 %v295
  %v1064 = vunpack.c.l.b16 %v296
  %v1065 = vunpack.c.l.b16 %v297
  %v1066 = vunpack.c.l.b16 %v298
  %v1067 = vunpack.c.l.b16 %v299
  %v1068 = vunpack.c.l.b16 %v300
  %v1069 = vunpack.c.l.b16 %v301
  %v1070 = vunpack.c.l.b16 %v302
  %v1071 = vunpack.c.l.b16 %v303
  %v1072 = vunpack.c.l.b16 %v304
  %v1073 = vunpack.c.l.b16 %v305
  %v1074 = vunpack.c.l.b16 %v306
  %v1075 = vunpack.c.l.b16 %v307
  %v1076 = vunpack.c.l.b16 %v308
  %v1077 = vunpack.c.l.b16 %v309
  %v1078 = vunpack.c.l.b16 %v310
  %v1079 = vunpack.c.l.b16 %v311
  %v1080 = vunpack.c.l.b16 %v312
  %v1081 = vunpack.c.l.b16 %v313
  %v1082 = vunpack.c.l.b16 %v314
  %v1083 = vunpack.c.l.b16 %v315
  %v1084 = vunpack.c.l.b16 %v316
  %v1085 = vunpack.c.l.b16 %v317
  %v1086 = vunpack.c.l.b16 %v318
  %v1087 = vunpack.c.l.b16 %v319
  %v1088 = vunpack.c.l.b16 %v320
  %v1089 = vunpack.c.l.b16 %v321
  %v1090 = vunpack.c.l.b16 %v322
  %v1091 = vunpack.c.l.b16 %v323
  %v1092 = vunpack.c.l.b16 %v324
  %v1093 = vunpack.c.l.b16 %v325
  %v1094 = vunpack.c.l.b16 %v326
  %v1095 = vunpack.c.l.b16 %v327
  %v1096 = vunpack.c.l.b16 %v328
  %v1097 = vunpack.c.l.b16 %v329
  %v1098 = vunpack.c.l.b16 %v330
  %v1099 = vunpack.c.l.b16 %v331
  %v1100 = vunpack.c.l.b16 %v332
  %v1101 = vunpack.c.l.b16 %v333
  %v1102 = vunpack.c.l.b16 %v334
  %v1103 = vunpack.c.l.b16 %v335
  %v1104 = vunpack.c.l.b16 %v336
  %v1105 = vunpack.c.l.b16 %v337
  %v1106 = vunpack.c.l.b16 %v338
  %v1107 = vunpack.c.l.b16 %v339
  %v1108 = vunpack.c.l.b16 %v340
  %v1109 = vunpack.c.l.b16 %v341
  %v1110 = vunpack.c.l.b16 %v342
  %v1111 = vunpack.c.l.b16 %v343
  %v1112 = vunpack.c.l.b16 %v344
  %v1113 = vunpack.c.l.b16 %v345
  %v1114 = vunpack.c.l.b16 %v346
  %v1115 = vunpack.c.l.b16 %v347
  %v1116 = vunpack.c.l.b16 %v348
  %v1117 = vunpack.c.l.b16 %v349
  %v1118 = vunpack.c.l.b16 %v350
  %v1119 = vpack.c.b16 %v1056, %v1055
  %v1120 = vpack.c.b16 %v1058, %v1057
  %v1121 = vpack.c.b16 %v1060, %v1059
  %v1122 = vpack.c.b16 %v1062, %v1061
  %v1123 = vpack.c.b16 %v1064, %v1063
  %v1124 = vpack.c.b16 %v1066, %v1065
  %v1125 = vpack.c.b16 %v1068, %v1067
  %v1126 = vpack.c.b16 %v1070, %v1069
  %v1127 = vpack.c.b16 %v1072, %v1071
  %v1128 = vpack.c.b16 %v1074, %v1073
  %v1129 = vpack.c.b16 %v1076, %v1075
  %v1130 = vpack.c.b16 %v1078, %v1077
  %v1131 = vpack.c.b16 %v1080, %v1079
  %v1132 = vpack.c.b16 %v1082, %v1081
  %v1133 = vpack.c.b16 %v1084, %v1083
  %v1134 = vpack.c.b16 %v1086, %v1085
  %v1135 = vpack.c.b16 %v1088, %v1087
  %v1136 = vpack.c.b16 %v1090, %v1089
  %v1137 = vpack.c.b16 %v1092, %v1091
  %v1138 = vpack.c.b16 %v1094, %v1093
  %v1139 = vpack.c.b16 %v1096, %v1095
  %v1140 = vpack.c.b16 %v1098, %v1097
  %v1141 = vpack.c.b16 %v1100, %v1099
  %v1142 = vpack.c.b16 %v1102, %v1101
  %v1143 = vpack.c.b16 %v1104, %v1103
  %v1144 = vpack.c.b16 %v1106, %v1105
  %v1145 = vpack.c.b16 %v1108, %v1107
  %v1146 = vpack.c.b16 %v1110, %v1109
  %v1147 = vpack.c.b16 %v1112, %v1111
  %v1148 = vpack.c.b16 %v1114, %v1113
  %v1149 = vpack.c.b16 %v1116, %v1115
  %v1150 = vpack.c.b16 %v1118, %v1117
  %1183 = vmatprep.subr.bf16.mxu0 0
  %1184 = vmatpush1.bf16.msra.mxu0 %v1119
  %1185 = vmatprep.subr.bf16.mxu0 0
  %1186 = vmatpush1.bf16.msra.mxu0 %v1120
  %1187 = vmatprep.subr.bf16.mxu0 0
  %1188 = vmatpush1.bf16.msra.mxu0 %v1121
  %1189 = vmatprep.subr.bf16.mxu0 0
  %1190 = vmatpush1.bf16.msra.mxu0 %v1122
  %1191 = vmatprep.subr.bf16.mxu0 0
  %1192 = vmatpush1.bf16.msra.mxu0 %v1123
  %1193 = vmatprep.subr.bf16.mxu0 0
  %1194 = vmatpush1.bf16.msra.mxu0 %v1124
  %1195 = vmatprep.subr.bf16.mxu0 0
  %1196 = vmatpush1.bf16.msra.mxu0 %v1125
  %1197 = vmatprep.subr.bf16.mxu0 0
  %1198 = vmatpush1.bf16.msra.mxu0 %v1126
  %1199 = vmatprep.subr.bf16.mxu0 0
  %1200 = vmatpush1.bf16.msra.mxu0 %v1127
  %1201 = vmatprep.subr.bf16.mxu0 0
  %1202 = vmatpush1.bf16.msra.mxu0 %v1128
  %1203 = vmatprep.subr.bf16.mxu0 0
  %1204 = vmatpush1.bf16.msra.mxu0 %v1129
  %1205 = vmatprep.subr.bf16.mxu0 0
  %1206 = vmatpush1.bf16.msra.mxu0 %v1130
  %1207 = vmatprep.subr.bf16.mxu0 0
  %1208 = vmatpush1.bf16.msra.mxu0 %v1131
  %1209 = vmatprep.subr.bf16.mxu0 0
  %1210 = vmatpush1.bf16.msra.mxu0 %v1132
  %1211 = vmatprep.subr.bf16.mxu0 0
  %1212 = vmatpush1.bf16.msra.mxu0 %v1133
  %1213 = vmatprep.subr.bf16.mxu0 0
  %1214 = vmatpush1.bf16.msra.mxu0 %v1134
  %1215 = vmatprep.mubr.bf16.mxu0 %v736
  %1216 = vmatmul.mubr.bf16.gmra.mrb[0].mxu0 %v735
  %v1217 = vpop.f32.mrb[0].mxu0
  %v1218 = vadd.f32 0.0, %v1217
  %v1219 = vpop.f32.mrb[0].mxu0
  %v1220 = vpop.f32.mrb[0].mxu0
  %v1221 = vadd.f32 0.0, %v1220
  %v1222 = vpop.f32.mrb[0].mxu0
  %1223 = vmatprep.mubr.bf16.mxu0 %v740
  %1224 = vmatmul.mubr.bf16.gmra.mrb[0].mxu0 %v739
  %v1225 = vpop.f32.mrb[0].mxu0
  %v1226 = vadd.f32 0.0, %v1225
  %v1227 = vpop.f32.mrb[0].mxu0
  %v1228 = vpop.f32.mrb[0].mxu0
  %v1229 = vadd.f32 0.0, %v1228
  %v1230 = vpop.f32.mrb[0].mxu0
  %1231 = vmatprep.mubr.bf16.mxu0 %v744
  %1232 = vmatmul.mubr.bf16.gmra.mrb[0].mxu0 %v743
  %v1233 = vpop.f32.mrb[0].mxu0
  %v1234 = vadd.f32 0.0, %v1233
  %v1235 = vpop.f32.mrb[0].mxu0
  %v1236 = vpop.f32.mrb[0].mxu0
  %v1237 = vadd.f32 0.0, %v1236
  %v1238 = vpop.f32.mrb[0].mxu0
  %1239 = vmatprep.mubr.bf16.mxu0 %v748
  %1240 = vmatmul.mubr.bf16.gmra.mrb[0].mxu0 %v747
  %v1241 = vpop.f32.mrb[0].mxu0
  %v1242 = vadd.f32 0.0, %v1241
  %v1243 = vpop.f32.mrb[0].mxu0
  %v1244 = vpop.f32.mrb[0].mxu0
  %v1245 = vadd.f32 0.0, %v1244
  %v1246 = vpop.f32.mrb[0].mxu0
  %1247 = vmatprep.mubr.bf16.mxu0 %v752
  %1248 = vmatmul.mubr.bf16.gmra.mrb[0].mxu0 %v751
  %v1249 = vpop.f32.mrb[0].mxu0
  %v1250 = vadd.f32 0.0, %v1249
  %v1251 = vpop.f32.mrb[0].mxu0
  %v1252 = vpop.f32.mrb[0].mxu0
  %v1253 = vadd.f32 0.0, %v1252
  %v1254 = vpop.f32.mrb[0].mxu0
  %1255 = vmatprep.mubr.bf16.mxu0 %v756
  %1256 = vmatmul.mubr.bf16.gmra.mrb[0].mxu0 %v755
  %v1257 = vpop.f32.mrb[0].mxu0
  %v1258 = vadd.f32 0.0, %v1257
  %v1259 = vpop.f32.mrb[0].mxu0
  %v1260 = vpop.f32.mrb[0].mxu0
  %v1261 = vadd.f32 0.0, %v1260
  %v1262 = vpop.f32.mrb[0].mxu0
  %1263 = vmatprep.mubr.bf16.mxu0 %v760
  %1264 = vmatmul.mubr.bf16.gmra.mrb[0].mxu0 %v759
  %v1265 = vpop.f32.mrb[0].mxu0
  %v1266 = vadd.f32 0.0, %v1265
  %v1267 = vpop.f32.mrb[0].mxu0
  %v1268 = vpop.f32.mrb[0].mxu0
  %v1269 = vadd.f32 0.0, %v1268
  %v1270 = vpop.f32.mrb[0].mxu0
  %1271 = vmatprep.mubr.bf16.mxu0 %v764
  %1272 = vmatmul.mubr.bf16.gmra.mrb[0].mxu0 %v763
  %v1273 = vpop.f32.mrb[0].mxu0
  %v1274 = vadd.f32 0.0, %v1273
  %v1275 = vpop.f32.mrb[0].mxu0
  %v1276 = vpop.f32.mrb[0].mxu0
  %v1277 = vadd.f32 0.0, %v1276
  %v1278 = vpop.f32.mrb[0].mxu0
  %1279 = vmatprep.mubr.bf16.mxu0 %v768
  %1280 = vmatmul.mubr.bf16.gmra.mrb[0].mxu0 %v767
  %v1281 = vpop.f32.mrb[0].mxu0
  %v1282 = vadd.f32 0.0, %v1281
  %v1283 = vpop.f32.mrb[0].mxu0
  %v1284 = vpop.f32.mrb[0].mxu0
  %v1285 = vadd.f32 0.0, %v1284
  %v1286 = vpop.f32.mrb[0].mxu0
  %1287 = vmatprep.mubr.bf16.mxu0 %v772
  %1288 = vmatmul.mubr.bf16.gmra.mrb[0].mxu0 %v771
  %v1289 = vpop.f32.mrb[0].mxu0
  %v1290 = vadd.f32 0.0, %v1289
  %v1291 = vpop.f32.mrb[0].mxu0
  %v1292 = vpop.f32.mrb[0].mxu0
  %v1293 = vadd.f32 0.0, %v1292
  %v1294 = vpop.f32.mrb[0].mxu0
  %1295 = vmatprep.mubr.bf16.mxu0 %v776
  %1296 = vmatmul.mubr.bf16.gmra.mrb[0].mxu0 %v775
  %v1297 = vpop.f32.mrb[0].mxu0
  %v1298 = vadd.f32 0.0, %v1297
  %v1299 = vpop.f32.mrb[0].mxu0
  %v1300 = vpop.f32.mrb[0].mxu0
  %v1301 = vadd.f32 0.0, %v1300
  %v1302 = vpop.f32.mrb[0].mxu0
  %1303 = vmatprep.mubr.bf16.mxu0 %v780
  %1304 = vmatmul.mubr.bf16.gmra.mrb[0].mxu0 %v779
  %v1305 = vpop.f32.mrb[0].mxu0
  %v1306 = vadd.f32 0.0, %v1305
  %v1307 = vpop.f32.mrb[0].mxu0
  %v1308 = vpop.f32.mrb[0].mxu0
  %v1309 = vadd.f32 0.0, %v1308
  %v1310 = vpop.f32.mrb[0].mxu0
  %1311 = vmatprep.mubr.bf16.mxu0 %v784
  %1312 = vmatmul.mubr.bf16.gmra.mrb[0].mxu0 %v783
  %v1313 = vpop.f32.mrb[0].mxu0
  %v1314 = vadd.f32 0.0, %v1313
  %v1315 = vpop.f32.mrb[0].mxu0
  %v1316 = vpop.f32.mrb[0].mxu0
  %v1317 = vadd.f32 0.0, %v1316
  %v1318 = vpop.f32.mrb[0].mxu0
  %1319 = vmatprep.mubr.bf16.mxu0 %v788
  %1320 = vmatmul.mubr.bf16.gmra.mrb[0].mxu0 %v787
  %v1321 = vpop.f32.mrb[0].mxu0
  %v1322 = vadd.f32 0.0, %v1321
  %v1323 = vpop.f32.mrb[0].mxu0
  %v1324 = vpop.f32.mrb[0].mxu0
  %v1325 = vadd.f32 0.0, %v1324
  %v1326 = vpop.f32.mrb[0].mxu0
  %1327 = vmatprep.mubr.bf16.mxu0 %v792
  %1328 = vmatmul.mubr.bf16.gmra.mrb[0].mxu0 %v791
  %v1329 = vpop.f32.mrb[0].mxu0
  %v1330 = vadd.f32 0.0, %v1329
  %v1331 = vpop.f32.mrb[0].mxu0
  %v1332 = vpop.f32.mrb[0].mxu0
  %v1333 = vadd.f32 0.0, %v1332
  %v1334 = vpop.f32.mrb[0].mxu0
  %1335 = vmatprep.mubr.bf16.mxu0 %v796
  %1336 = vmatmul.mubr.bf16.gmra.mrb[0].mxu0 %v795
  %v1337 = vpop.f32.mrb[0].mxu0
  %v1338 = vadd.f32 0.0, %v1337
  %v1339 = vpop.f32.mrb[0].mxu0
  %v1340 = vpop.f32.mrb[0].mxu0
  %v1341 = vadd.f32 0.0, %v1340
  %v1342 = vpop.f32.mrb[0].mxu0
  %1343 = vmatprep.mubr.bf16.mxu0 %v800
  %1344 = vmatmul.mubr.bf16.gmra.mrb[0].mxu0 %v799
  %v1345 = vpop.f32.mrb[0].mxu0
  %v1346 = vadd.f32 0.0, %v1345
  %v1347 = vpop.f32.mrb[0].mxu0
  %v1348 = vpop.f32.mrb[0].mxu0
  %v1349 = vadd.f32 0.0, %v1348
  %v1350 = vpop.f32.mrb[0].mxu0
  %1351 = vmatprep.mubr.bf16.mxu0 %v804
  %1352 = vmatmul.mubr.bf16.gmra.mrb[0].mxu0 %v803
  %v1353 = vpop.f32.mrb[0].mxu0
  %v1354 = vadd.f32 0.0, %v1353
  %v1355 = vpop.f32.mrb[0].mxu0
  %v1356 = vpop.f32.mrb[0].mxu0
  %v1357 = vadd.f32 0.0, %v1356
  %v1358 = vpop.f32.mrb[0].mxu0
  %1359 = vmatprep.mubr.bf16.mxu0 %v808
  %1360 = vmatmul.mubr.bf16.gmra.mrb[0].mxu0 %v807
  %v1361 = vpop.f32.mrb[0].mxu0
  %v1362 = vadd.f32 0.0, %v1361
  %v1363 = vpop.f32.mrb[0].mxu0
  %v1364 = vpop.f32.mrb[0].mxu0
  %v1365 = vadd.f32 0.0, %v1364
  %v1366 = vpop.f32.mrb[0].mxu0
  %1367 = vmatprep.mubr.bf16.mxu0 %v812
  %1368 = vmatmul.mubr.bf16.gmra.mrb[0].mxu0 %v811
  %v1369 = vpop.f32.mrb[0].mxu0
  %v1370 = vadd.f32 0.0, %v1369
  %v1371 = vpop.f32.mrb[0].mxu0
  %v1372 = vpop.f32.mrb[0].mxu0
  %v1373 = vadd.f32 0.0, %v1372
  %v1374 = vpop.f32.mrb[0].mxu0
  %1375 = vmatprep.mubr.bf16.mxu0 %v816
  %1376 = vmatmul.mubr.bf16.gmra.mrb[0].mxu0 %v815
  %v1377 = vpop.f32.mrb[0].mxu0
  %v1378 = vadd.f32 0.0, %v1377
  %v1379 = vpop.f32.mrb[0].mxu0
  %v1380 = vpop.f32.mrb[0].mxu0
  %v1381 = vadd.f32 0.0, %v1380
  %v1382 = vpop.f32.mrb[0].mxu0
  %1383 = vmatprep.mubr.bf16.mxu0 %v820
  %1384 = vmatmul.mubr.bf16.gmra.mrb[0].mxu0 %v819
  %v1385 = vpop.f32.mrb[0].mxu0
  %v1386 = vadd.f32 0.0, %v1385
  %v1387 = vpop.f32.mrb[0].mxu0
  %v1388 = vpop.f32.mrb[0].mxu0
  %v1389 = vadd.f32 0.0, %v1388
  %v1390 = vpop.f32.mrb[0].mxu0
  %1391 = vmatprep.mubr.bf16.mxu0 %v824
  %1392 = vmatmul.mubr.bf16.gmra.mrb[0].mxu0 %v823
  %v1393 = vpop.f32.mrb[0].mxu0
  %v1394 = vadd.f32 0.0, %v1393
  %v1395 = vpop.f32.mrb[0].mxu0
  %v1396 = vpop.f32.mrb[0].mxu0
  %v1397 = vadd.f32 0.0, %v1396
  %v1398 = vpop.f32.mrb[0].mxu0
  %1399 = vmatprep.mubr.bf16.mxu0 %v828
  %1400 = vmatmul.mubr.bf16.gmra.mrb[0].mxu0 %v827
  %v1401 = vpop.f32.mrb[0].mxu0
  %v1402 = vadd.f32 0.0, %v1401
  %v1403 = vpop.f32.mrb[0].mxu0
  %v1404 = vpop.f32.mrb[0].mxu0
  %v1405 = vadd.f32 0.0, %v1404
  %v1406 = vpop.f32.mrb[0].mxu0
  %1407 = vmatprep.mubr.bf16.mxu0 %v832
  %1408 = vmatmul.mubr.bf16.gmra.mrb[0].mxu0 %v831
  %v1409 = vpop.f32.mrb[0].mxu0
  %v1410 = vadd.f32 0.0, %v1409
  %v1411 = vpop.f32.mrb[0].mxu0
  %v1412 = vpop.f32.mrb[0].mxu0
  %v1413 = vadd.f32 0.0, %v1412
  %v1414 = vpop.f32.mrb[0].mxu0
  %1415 = vmatprep.mubr.bf16.mxu0 %v836
  %1416 = vmatmul.mubr.bf16.gmra.mrb[0].mxu0 %v835
  %v1417 = vpop.f32.mrb[0].mxu0
  %v1418 = vadd.f32 0.0, %v1417
  %v1419 = vpop.f32.mrb[0].mxu0
  %v1420 = vpop.f32.mrb[0].mxu0
  %v1421 = vadd.f32 0.0, %v1420
  %v1422 = vpop.f32.mrb[0].mxu0
  %1423 = vmatprep.mubr.bf16.mxu0 %v840
  %1424 = vmatmul.mubr.bf16.gmra.mrb[0].mxu0 %v839
  %v1425 = vpop.f32.mrb[0].mxu0
  %v1426 = vadd.f32 0.0, %v1425
  %v1427 = vpop.f32.mrb[0].mxu0
  %v1428 = vpop.f32.mrb[0].mxu0
  %v1429 = vadd.f32 0.0, %v1428
  %v1430 = vpop.f32.mrb[0].mxu0
  %1431 = vmatprep.mubr.bf16.mxu0 %v844
  %1432 = vmatmul.mubr.bf16.gmra.mrb[0].mxu0 %v843
  %v1433 = vpop.f32.mrb[0].mxu0
  %v1434 = vadd.f32 0.0, %v1433
  %v1435 = vpop.f32.mrb[0].mxu0
  %v1436 = vpop.f32.mrb[0].mxu0
  %v1437 = vadd.f32 0.0, %v1436
  %v1438 = vpop.f32.mrb[0].mxu0
  %1439 = vmatprep.mubr.bf16.mxu0 %v848
  %1440 = vmatmul.mubr.bf16.gmra.mrb[0].mxu0 %v847
  %v1441 = vpop.f32.mrb[0].mxu0
  %v1442 = vadd.f32 0.0, %v1441
  %v1443 = vpop.f32.mrb[0].mxu0
  %v1444 = vpop.f32.mrb[0].mxu0
  %v1445 = vadd.f32 0.0, %v1444
  %v1446 = vpop.f32.mrb[0].mxu0
  %1447 = vmatprep.mubr.bf16.mxu0 %v852
  %1448 = vmatmul.mubr.bf16.gmra.mrb[0].mxu0 %v851
  %v1449 = vpop.f32.mrb[0].mxu0
  %v1450 = vadd.f32 0.0, %v1449
  %v1451 = vpop.f32.mrb[0].mxu0
  %v1452 = vpop.f32.mrb[0].mxu0
  %v1453 = vadd.f32 0.0, %v1452
  %v1454 = vpop.f32.mrb[0].mxu0
  %1455 = vmatprep.mubr.bf16.mxu0 %v856
  %1456 = vmatmul.mubr.bf16.gmra.mrb[0].mxu0 %v855
  %v1457 = vpop.f32.mrb[0].mxu0
  %v1458 = vadd.f32 0.0, %v1457
  %v1459 = vpop.f32.mrb[0].mxu0
  %v1460 = vpop.f32.mrb[0].mxu0
  %v1461 = vadd.f32 0.0, %v1460
  %v1462 = vpop.f32.mrb[0].mxu0
  %1463 = vmatprep.mubr.bf16.mxu0 %v860
  %1464 = vmatmul.mubr.bf16.gmra.mrb[0].mxu0 %v859
  %v1465 = vpop.f32.mrb[0].mxu0
  %v1466 = vadd.f32 0.0, %v1465
  %v1467 = vpop.f32.mrb[0].mxu0
  %v1468 = vpop.f32.mrb[0].mxu0
  %v1469 = vadd.f32 0.0, %v1468
  %v1470 = vpop.f32.mrb[0].mxu0
  %1471 = vdwg.mxu0
  %1472 = vmatprep.subr.bf16.mxu0 0
  %1473 = vmatpush1.bf16.msra.mxu0 %v1135
  %1474 = vmatprep.subr.bf16.mxu0 0
  %1475 = vmatpush1.bf16.msra.mxu0 %v1136
  %1476 = vmatprep.subr.bf16.mxu0 0
  %1477 = vmatpush1.bf16.msra.mxu0 %v1137
  %1478 = vmatprep.subr.bf16.mxu0 0
  %1479 = vmatpush1.bf16.msra.mxu0 %v1138
  %1480 = vmatprep.subr.bf16.mxu0 0
  %1481 = vmatpush1.bf16.msra.mxu0 %v1139
  %1482 = vmatprep.subr.bf16.mxu0 0
  %1483 = vmatpush1.bf16.msra.mxu0 %v1140
  %1484 = vmatprep.subr.bf16.mxu0 0
  %1485 = vmatpush1.bf16.msra.mxu0 %v1141
  %1486 = vmatprep.subr.bf16.mxu0 0
  %1487 = vmatpush1.bf16.msra.mxu0 %v1142
  %1488 = vmatprep.subr.bf16.mxu0 0
  %1489 = vmatpush1.bf16.msra.mxu0 %v1143
  %1490 = vmatprep.subr.bf16.mxu0 0
  %1491 = vmatpush1.bf16.msra.mxu0 %v1144
  %1492 = vmatprep.subr.bf16.mxu0 0
  %1493 = vmatpush1.bf16.msra.mxu0 %v1145
  %1494 = vmatprep.subr.bf16.mxu0 0
  %1495 = vmatpush1.bf16.msra.mxu0 %v1146
  %1496 = vmatprep.subr.bf16.mxu0 0
  %1497 = vmatpush1.bf16.msra.mxu0 %v1147
  %1498 = vmatprep.subr.bf16.mxu0 0
  %1499 = vmatpush1.bf16.msra.mxu0 %v1148
  %1500 = vmatprep.subr.bf16.mxu0 0
  %1501 = vmatpush1.bf16.msra.mxu0 %v1149
  %1502 = vmatprep.subr.bf16.mxu0 0
  %1503 = vmatpush1.bf16.msra.mxu0 %v1150
  %1504 = vmatprep.mubr.bf16.mxu0 %v738
  %1505 = vmatmul.mubr.bf16.gmra.mrb[0].mxu0 %v737
  %v1506 = vpop.f32.mrb[0].mxu0
  %v1507 = vadd.f32 %v1218, %v1506
  %v1508 = vpop.f32.mrb[0].mxu0
  %v1509 = vpop.f32.mrb[0].mxu0
  %v1510 = vadd.f32 %v1221, %v1509
  %v1511 = vpop.f32.mrb[0].mxu0
  %1512 = vmatprep.mubr.bf16.mxu0 %v742
  %1513 = vmatmul.mubr.bf16.gmra.mrb[0].mxu0 %v741
  %v1514 = vpop.f32.mrb[0].mxu0
  %v1515 = vadd.f32 %v1226, %v1514
  %v1516 = vpop.f32.mrb[0].mxu0
  %v1517 = vpop.f32.mrb[0].mxu0
  %v1518 = vadd.f32 %v1229, %v1517
  %v1519 = vpop.f32.mrb[0].mxu0
  %1520 = vmatprep.mubr.bf16.mxu0 %v746
  %1521 = vmatmul.mubr.bf16.gmra.mrb[0].mxu0 %v745
  %v1522 = vpop.f32.mrb[0].mxu0
  %v1523 = vadd.f32 %v1234, %v1522
  %v1524 = vpop.f32.mrb[0].mxu0
  %v1525 = vpop.f32.mrb[0].mxu0
  %v1526 = vadd.f32 %v1237, %v1525
  %v1527 = vpop.f32.mrb[0].mxu0
  %1528 = vmatprep.mubr.bf16.mxu0 %v750
  %1529 = vmatmul.mubr.bf16.gmra.mrb[0].mxu0 %v749
  %v1530 = vpop.f32.mrb[0].mxu0
  %v1531 = vadd.f32 %v1242, %v1530
  %v1532 = vpop.f32.mrb[0].mxu0
  %v1533 = vpop.f32.mrb[0].mxu0
  %v1534 = vadd.f32 %v1245, %v1533
  %v1535 = vpop.f32.mrb[0].mxu0
  %1536 = vmatprep.mubr.bf16.mxu0 %v754
  %1537 = vmatmul.mubr.bf16.gmra.mrb[0].mxu0 %v753
  %v1538 = vpop.f32.mrb[0].mxu0
  %v1539 = vadd.f32 %v1250, %v1538
  %v1540 = vpop.f32.mrb[0].mxu0
  %v1541 = vpop.f32.mrb[0].mxu0
  %v1542 = vadd.f32 %v1253, %v1541
  %v1543 = vpop.f32.mrb[0].mxu0
  %1544 = vmatprep.mubr.bf16.mxu0 %v758
  %1545 = vmatmul.mubr.bf16.gmra.mrb[0].mxu0 %v757
  %v1546 = vpop.f32.mrb[0].mxu0
  %v1547 = vadd.f32 %v1258, %v1546
  %v1548 = vpop.f32.mrb[0].mxu0
  %v1549 = vpop.f32.mrb[0].mxu0
  %v1550 = vadd.f32 %v1261, %v1549
  %v1551 = vpop.f32.mrb[0].mxu0
  %1552 = vmatprep.mubr.bf16.mxu0 %v762
  %1553 = vmatmul.mubr.bf16.gmra.mrb[0].mxu0 %v761
  %v1554 = vpop.f32.mrb[0].mxu0
  %v1555 = vadd.f32 %v1266, %v1554
  %v1556 = vpop.f32.mrb[0].mxu0
  %v1557 = vpop.f32.mrb[0].mxu0
  %v1558 = vadd.f32 %v1269, %v1557
  %v1559 = vpop.f32.mrb[0].mxu0
  %1560 = vmatprep.mubr.bf16.mxu0 %v766
  %1561 = vmatmul.mubr.bf16.gmra.mrb[0].mxu0 %v765
  %v1562 = vpop.f32.mrb[0].mxu0
  %v1563 = vadd.f32 %v1274, %v1562
  %v1564 = vpop.f32.mrb[0].mxu0
  %v1565 = vpop.f32.mrb[0].mxu0
  %v1566 = vadd.f32 %v1277, %v1565
  %v1567 = vpop.f32.mrb[0].mxu0
  %1568 = vmatprep.mubr.bf16.mxu0 %v770
  %1569 = vmatmul.mubr.bf16.gmra.mrb[0].mxu0 %v769
  %v1570 = vpop.f32.mrb[0].mxu0
  %v1571 = vadd.f32 %v1282, %v1570
  %v1572 = vpop.f32.mrb[0].mxu0
  %v1573 = vpop.f32.mrb[0].mxu0
  %v1574 = vadd.f32 %v1285, %v1573
  %v1575 = vpop.f32.mrb[0].mxu0
  %1576 = vmatprep.mubr.bf16.mxu0 %v774
  %1577 = vmatmul.mubr.bf16.gmra.mrb[0].mxu0 %v773
  %v1578 = vpop.f32.mrb[0].mxu0
  %v1579 = vadd.f32 %v1290, %v1578
  %v1580 = vpop.f32.mrb[0].mxu0
  %v1581 = vpop.f32.mrb[0].mxu0
  %v1582 = vadd.f32 %v1293, %v1581
  %v1583 = vpop.f32.mrb[0].mxu0
  %1584 = vmatprep.mubr.bf16.mxu0 %v778
  %1585 = vmatmul.mubr.bf16.gmra.mrb[0].mxu0 %v777
  %v1586 = vpop.f32.mrb[0].mxu0
  %v1587 = vadd.f32 %v1298, %v1586
  %v1588 = vpop.f32.mrb[0].mxu0
  %v1589 = vpop.f32.mrb[0].mxu0
  %v1590 = vadd.f32 %v1301, %v1589
  %v1591 = vpop.f32.mrb[0].mxu0
  %1592 = vmatprep.mubr.bf16.mxu0 %v782
  %1593 = vmatmul.mubr.bf16.gmra.mrb[0].mxu0 %v781
  %v1594 = vpop.f32.mrb[0].mxu0
  %v1595 = vadd.f32 %v1306, %v1594
  %v1596 = vpop.f32.mrb[0].mxu0
  %v1597 = vpop.f32.mrb[0].mxu0
  %v1598 = vadd.f32 %v1309, %v1597
  %v1599 = vpop.f32.mrb[0].mxu0
  %1600 = vmatprep.mubr.bf16.mxu0 %v786
  %1601 = vmatmul.mubr.bf16.gmra.mrb[0].mxu0 %v785
  %v1602 = vpop.f32.mrb[0].mxu0
  %v1603 = vadd.f32 %v1314, %v1602
  %v1604 = vpop.f32.mrb[0].mxu0
  %v1605 = vpop.f32.mrb[0].mxu0
  %v1606 = vadd.f32 %v1317, %v1605
  %v1607 = vpop.f32.mrb[0].mxu0
  %1608 = vmatprep.mubr.bf16.mxu0 %v790
  %1609 = vmatmul.mubr.bf16.gmra.mrb[0].mxu0 %v789
  %v1610 = vpop.f32.mrb[0].mxu0
  %v1611 = vadd.f32 %v1322, %v1610
  %v1612 = vpop.f32.mrb[0].mxu0
  %v1613 = vpop.f32.mrb[0].mxu0
  %v1614 = vadd.f32 %v1325, %v1613
  %v1615 = vpop.f32.mrb[0].mxu0
  %1616 = vmatprep.mubr.bf16.mxu0 %v794
  %1617 = vmatmul.mubr.bf16.gmra.mrb[0].mxu0 %v793
  %v1618 = vpop.f32.mrb[0].mxu0
  %v1619 = vadd.f32 %v1330, %v1618
  %v1620 = vpop.f32.mrb[0].mxu0
  %v1621 = vpop.f32.mrb[0].mxu0
  %v1622 = vadd.f32 %v1333, %v1621
  %v1623 = vpop.f32.mrb[0].mxu0
  %1624 = vmatprep.mubr.bf16.mxu0 %v798
  %1625 = vmatmul.mubr.bf16.gmra.mrb[0].mxu0 %v797
  %v1626 = vpop.f32.mrb[0].mxu0
  %v1627 = vadd.f32 %v1338, %v1626
  %v1628 = vpop.f32.mrb[0].mxu0
  %v1629 = vpop.f32.mrb[0].mxu0
  %v1630 = vadd.f32 %v1341, %v1629
  %v1631 = vpop.f32.mrb[0].mxu0
  %1632 = vmatprep.mubr.bf16.mxu0 %v802
  %1633 = vmatmul.mubr.bf16.gmra.mrb[0].mxu0 %v801
  %v1634 = vpop.f32.mrb[0].mxu0
  %v1635 = vadd.f32 %v1346, %v1634
  %v1636 = vpop.f32.mrb[0].mxu0
  %v1637 = vpop.f32.mrb[0].mxu0
  %v1638 = vadd.f32 %v1349, %v1637
  %v1639 = vpop.f32.mrb[0].mxu0
  %1640 = vmatprep.mubr.bf16.mxu0 %v806
  %1641 = vmatmul.mubr.bf16.gmra.mrb[0].mxu0 %v805
  %v1642 = vpop.f32.mrb[0].mxu0
  %v1643 = vadd.f32 %v1354, %v1642
  %v1644 = vpop.f32.mrb[0].mxu0
  %v1645 = vpop.f32.mrb[0].mxu0
  %v1646 = vadd.f32 %v1357, %v1645
  %v1647 = vpop.f32.mrb[0].mxu0
  %1648 = vmatprep.mubr.bf16.mxu0 %v810
  %1649 = vmatmul.mubr.bf16.gmra.mrb[0].mxu0 %v809
  %v1650 = vpop.f32.mrb[0].mxu0
  %v1651 = vadd.f32 %v1362, %v1650
  %v1652 = vpop.f32.mrb[0].mxu0
  %v1653 = vpop.f32.mrb[0].mxu0
  %v1654 = vadd.f32 %v1365, %v1653
  %v1655 = vpop.f32.mrb[0].mxu0
  %1656 = vmatprep.mubr.bf16.mxu0 %v814
  %1657 = vmatmul.mubr.bf16.gmra.mrb[0].mxu0 %v813
  %v1658 = vpop.f32.mrb[0].mxu0
  %v1659 = vadd.f32 %v1370, %v1658
  %v1660 = vpop.f32.mrb[0].mxu0
  %v1661 = vpop.f32.mrb[0].mxu0
  %v1662 = vadd.f32 %v1373, %v1661
  %v1663 = vpop.f32.mrb[0].mxu0
  %1664 = vmatprep.mubr.bf16.mxu0 %v818
  %1665 = vmatmul.mubr.bf16.gmra.mrb[0].mxu0 %v817
  %v1666 = vpop.f32.mrb[0].mxu0
  %v1667 = vadd.f32 %v1378, %v1666
  %v1668 = vpop.f32.mrb[0].mxu0
  %v1669 = vpop.f32.mrb[0].mxu0
  %v1670 = vadd.f32 %v1381, %v1669
  %v1671 = vpop.f32.mrb[0].mxu0
  %1672 = vmatprep.mubr.bf16.mxu0 %v822
  %1673 = vmatmul.mubr.bf16.gmra.mrb[0].mxu0 %v821
  %v1674 = vpop.f32.mrb[0].mxu0
  %v1675 = vadd.f32 %v1386, %v1674
  %v1676 = vpop.f32.mrb[0].mxu0
  %v1677 = vpop.f32.mrb[0].mxu0
  %v1678 = vadd.f32 %v1389, %v1677
  %v1679 = vpop.f32.mrb[0].mxu0
  %1680 = vmatprep.mubr.bf16.mxu0 %v826
  %1681 = vmatmul.mubr.bf16.gmra.mrb[0].mxu0 %v825
  %v1682 = vpop.f32.mrb[0].mxu0
  %v1683 = vadd.f32 %v1394, %v1682
  %v1684 = vpop.f32.mrb[0].mxu0
  %v1685 = vpop.f32.mrb[0].mxu0
  %v1686 = vadd.f32 %v1397, %v1685
  %v1687 = vpop.f32.mrb[0].mxu0
  %1688 = vmatprep.mubr.bf16.mxu0 %v830
  %1689 = vmatmul.mubr.bf16.gmra.mrb[0].mxu0 %v829
  %v1690 = vpop.f32.mrb[0].mxu0
  %v1691 = vadd.f32 %v1402, %v1690
  %v1692 = vpop.f32.mrb[0].mxu0
  %v1693 = vpop.f32.mrb[0].mxu0
  %v1694 = vadd.f32 %v1405, %v1693
  %v1695 = vpop.f32.mrb[0].mxu0
  %1696 = vmatprep.mubr.bf16.mxu0 %v834
  %1697 = vmatmul.mubr.bf16.gmra.mrb[0].mxu0 %v833
  %v1698 = vpop.f32.mrb[0].mxu0
  %v1699 = vadd.f32 %v1410, %v1698
  %v1700 = vpop.f32.mrb[0].mxu0
  %v1701 = vpop.f32.mrb[0].mxu0
  %v1702 = vadd.f32 %v1413, %v1701
  %v1703 = vpop.f32.mrb[0].mxu0
  %1704 = vmatprep.mubr.bf16.mxu0 %v838
  %1705 = vmatmul.mubr.bf16.gmra.mrb[0].mxu0 %v837
  %v1706 = vpop.f32.mrb[0].mxu0
  %v1707 = vadd.f32 %v1418, %v1706
  %v1708 = vpop.f32.mrb[0].mxu0
  %v1709 = vpop.f32.mrb[0].mxu0
  %v1710 = vadd.f32 %v1421, %v1709
  %v1711 = vpop.f32.mrb[0].mxu0
  %1712 = vmatprep.mubr.bf16.mxu0 %v842
  %1713 = vmatmul.mubr.bf16.gmra.mrb[0].mxu0 %v841
  %v1714 = vpop.f32.mrb[0].mxu0
  %v1715 = vadd.f32 %v1426, %v1714
  %v1716 = vpop.f32.mrb[0].mxu0
  %v1717 = vpop.f32.mrb[0].mxu0
  %v1718 = vadd.f32 %v1429, %v1717
  %v1719 = vpop.f32.mrb[0].mxu0
  %1720 = vmatprep.mubr.bf16.mxu0 %v846
  %1721 = vmatmul.mubr.bf16.gmra.mrb[0].mxu0 %v845
  %v1722 = vpop.f32.mrb[0].mxu0
  %v1723 = vadd.f32 %v1434, %v1722
  %v1724 = vpop.f32.mrb[0].mxu0
  %v1725 = vpop.f32.mrb[0].mxu0
  %v1726 = vadd.f32 %v1437, %v1725
  %v1727 = vpop.f32.mrb[0].mxu0
  %1728 = vmatprep.mubr.bf16.mxu0 %v850
  %1729 = vmatmul.mubr.bf16.gmra.mrb[0].mxu0 %v849
  %v1730 = vpop.f32.mrb[0].mxu0
  %v1731 = vadd.f32 %v1442, %v1730
  %v1732 = vpop.f32.mrb[0].mxu0
  %v1733 = vpop.f32.mrb[0].mxu0
  %v1734 = vadd.f32 %v1445, %v1733
  %v1735 = vpop.f32.mrb[0].mxu0
  %1736 = vmatprep.mubr.bf16.mxu0 %v854
  %1737 = vmatmul.mubr.bf16.gmra.mrb[0].mxu0 %v853
  %v1738 = vpop.f32.mrb[0].mxu0
  %v1739 = vadd.f32 %v1450, %v1738
  %v1740 = vpop.f32.mrb[0].mxu0
  %v1741 = vpop.f32.mrb[0].mxu0
  %v1742 = vadd.f32 %v1453, %v1741
  %v1743 = vpop.f32.mrb[0].mxu0
  %1744 = vmatprep.mubr.bf16.mxu0 %v858
  %1745 = vmatmul.mubr.bf16.gmra.mrb[0].mxu0 %v857
  %v1746 = vpop.f32.mrb[0].mxu0
  %v1747 = vadd.f32 %v1458, %v1746
  %v1748 = vpop.f32.mrb[0].mxu0
  %v1749 = vpop.f32.mrb[0].mxu0
  %v1750 = vadd.f32 %v1461, %v1749
  %v1751 = vpop.f32.mrb[0].mxu0
  %1752 = vmatprep.mubr.bf16.mxu0 %v862
  %1753 = vmatmul.mubr.bf16.gmra.mrb[0].mxu0 %v861
  %v1754 = vpop.f32.mrb[0].mxu0
  %v1755 = vadd.f32 %v1466, %v1754
  %v1756 = vpop.f32.mrb[0].mxu0
  %v1757 = vpop.f32.mrb[0].mxu0
  %v1758 = vadd.f32 %v1469, %v1757
  %v1759 = vpop.f32.mrb[0].mxu0
  %1760 = vdwg.mxu0
  %v1761 = vadd.f32 %v95, %v1507
  %v1762 = vadd.f32 %v96, %v1510
  %v1763 = vadd.f32 %v97, %v1515
  %v1764 = vadd.f32 %v98, %v1518
  %v1765 = vadd.f32 %v99, %v1523
  %v1766 = vadd.f32 %v100, %v1526
  %v1767 = vadd.f32 %v101, %v1531
  %v1768 = vadd.f32 %v102, %v1534
  %v1769 = vadd.f32 %v103, %v1539
  %v1770 = vadd.f32 %v104, %v1542
  %v1771 = vadd.f32 %v105, %v1547
  %v1772 = vadd.f32 %v106, %v1550
  %v1773 = vadd.f32 %v107, %v1555
  %v1774 = vadd.f32 %v108, %v1558
  %v1775 = vadd.f32 %v109, %v1563
  %v1776 = vadd.f32 %v110, %v1566
  %v1777 = vadd.f32 %v111, %v1571
  %v1778 = vadd.f32 %v112, %v1574
  %v1779 = vadd.f32 %v113, %v1579
  %v1780 = vadd.f32 %v114, %v1582
  %v1781 = vadd.f32 %v115, %v1587
  %v1782 = vadd.f32 %v116, %v1590
  %v1783 = vadd.f32 %v117, %v1595
  %v1784 = vadd.f32 %v118, %v1598
  %v1785 = vadd.f32 %v119, %v1603
  %v1786 = vadd.f32 %v120, %v1606
  %v1787 = vadd.f32 %v121, %v1611
  %v1788 = vadd.f32 %v122, %v1614
  %v1789 = vadd.f32 %v123, %v1619
  %v1790 = vadd.f32 %v124, %v1622
  %v1791 = vadd.f32 %v125, %v1627
  %v1792 = vadd.f32 %v126, %v1630
  %v1793 = vadd.f32 %v127, %v1635
  %v1794 = vadd.f32 %v128, %v1638
  %v1795 = vadd.f32 %v129, %v1643
  %v1796 = vadd.f32 %v130, %v1646
  %v1797 = vadd.f32 %v131, %v1651
  %v1798 = vadd.f32 %v132, %v1654
  %v1799 = vadd.f32 %v133, %v1659
  %v1800 = vadd.f32 %v134, %v1662
  %v1801 = vadd.f32 %v135, %v1667
  %v1802 = vadd.f32 %v136, %v1670
  %v1803 = vadd.f32 %v137, %v1675
  %v1804 = vadd.f32 %v138, %v1678
  %v1805 = vadd.f32 %v139, %v1683
  %v1806 = vadd.f32 %v140, %v1686
  %v1807 = vadd.f32 %v141, %v1691
  %v1808 = vadd.f32 %v142, %v1694
  %v1809 = vadd.f32 %v143, %v1699
  %v1810 = vadd.f32 %v144, %v1702
  %v1811 = vadd.f32 %v145, %v1707
  %v1812 = vadd.f32 %v146, %v1710
  %v1813 = vadd.f32 %v147, %v1715
  %v1814 = vadd.f32 %v148, %v1718
  %v1815 = vadd.f32 %v149, %v1723
  %v1816 = vadd.f32 %v150, %v1726
  %v1817 = vadd.f32 %v151, %v1731
  %v1818 = vadd.f32 %v152, %v1734
  %v1819 = vadd.f32 %v153, %v1739
  %v1820 = vadd.f32 %v154, %v1742
  %v1821 = vadd.f32 %v155, %v1747
  %v1822 = vadd.f32 %v156, %v1750
  %v1823 = vadd.f32 %v157, %v1755
  %v1824 = vadd.f32 %v158, %v1758
  %1825 = vst [vmem:[#allocation2] sm:$0xff] %v1761
  %1826 = vst [vmem:[#allocation2 + $0x8] sm:$0xff] %v1762
  %1827 = vst [vmem:[#allocation2 + $0x10] sm:$0xff] %v1763
  %1828 = vst [vmem:[#allocation2 + $0x18] sm:$0xff] %v1764
  %1829 = vst [vmem:[#allocation2 + $0x20] sm:$0xff] %v1765
  %1830 = vst [vmem:[#allocation2 + $0x28] sm:$0xff] %v1766
  %1831 = vst [vmem:[#allocation2 + $0x30] sm:$0xff] %v1767
  %1832 = vst [vmem:[#allocation2 + $0x38] sm:$0xff] %v1768
  %1833 = vst [vmem:[#allocation2 + $0x40] sm:$0xff] %v1769
  %1834 = vst [vmem:[#allocation2 + $0x48] sm:$0xff] %v1770
  %1835 = vst [vmem:[#allocation2 + $0x50] sm:$0xff] %v1771
  %1836 = vst [vmem:[#allocation2 + $0x58] sm:$0xff] %v1772
  %1837 = vst [vmem:[#allocation2 + $0x60] sm:$0xff] %v1773
  %1838 = vst [vmem:[#allocation2 + $0x68] sm:$0xff] %v1774
  %1839 = vst [vmem:[#allocation2 + $0x70] sm:$0xff] %v1775
  %1840 = vst [vmem:[#allocation2 + $0x78] sm:$0xff] %v1776
  %1841 = vst [vmem:[#allocation2 + $0x80] sm:$0xff] %v1777
  %1842 = vst [vmem:[#allocation2 + $0x88] sm:$0xff] %v1778
  %1843 = vst [vmem:[#allocation2 + $0x90] sm:$0xff] %v1779
  %1844 = vst [vmem:[#allocation2 + $0x98] sm:$0xff] %v1780
  %1845 = vst [vmem:[#allocation2 + $0xa0] sm:$0xff] %v1781
  %1846 = vst [vmem:[#allocation2 + $0xa8] sm:$0xff] %v1782
  %1847 = vst [vmem:[#allocation2 + $0xb0] sm:$0xff] %v1783
  %1848 = vst [vmem:[#allocation2 + $0xb8] sm:$0xff] %v1784
  %1849 = vst [vmem:[#allocation2 + $0xc0] sm:$0xff] %v1785
  %1850 = vst [vmem:[#allocation2 + $0xc8] sm:$0xff] %v1786
  %1851 = vst [vmem:[#allocation2 + $0xd0] sm:$0xff] %v1787
  %1852 = vst [vmem:[#allocation2 + $0xd8] sm:$0xff] %v1788
  %1853 = vst [vmem:[#allocation2 + $0xe0] sm:$0xff] %v1789
  %1854 = vst [vmem:[#allocation2 + $0xe8] sm:$0xff] %v1790
  %1855 = vst [vmem:[#allocation2 + $0xf0] sm:$0xff] %v1791
  %1856 = vst [vmem:[#allocation2 + $0xf8] sm:$0xff] %v1792
  %1857 = vst [vmem:[#allocation2 + $0x100] sm:$0xff] %v1793
  %1858 = vst [vmem:[#allocation2 + $0x108] sm:$0xff] %v1794
  %1859 = vst [vmem:[#allocation2 + $0x110] sm:$0xff] %v1795
  %1860 = vst [vmem:[#allocation2 + $0x118] sm:$0xff] %v1796
  %1861 = vst [vmem:[#allocation2 + $0x120] sm:$0xff] %v1797
  %1862 = vst [vmem:[#allocation2 + $0x128] sm:$0xff] %v1798
  %1863 = vst [vmem:[#allocation2 + $0x130] sm:$0xff] %v1799
  %1864 = vst [vmem:[#allocation2 + $0x138] sm:$0xff] %v1800
  %1865 = vst [vmem:[#allocation2 + $0x140] sm:$0xff] %v1801
  %1866 = vst [vmem:[#allocation2 + $0x148] sm:$0xff] %v1802
  %1867 = vst [vmem:[#allocation2 + $0x150] sm:$0xff] %v1803
  %1868 = vst [vmem:[#allocation2 + $0x158] sm:$0xff] %v1804
  %1869 = vst [vmem:[#allocation2 + $0x160] sm:$0xff] %v1805
  %1870 = vst [vmem:[#allocation2 + $0x168] sm:$0xff] %v1806
  %1871 = vst [vmem:[#allocation2 + $0x170] sm:$0xff] %v1807
  %1872 = vst [vmem:[#allocation2 + $0x178] sm:$0xff] %v1808
  %1873 = vst [vmem:[#allocation2 + $0x180] sm:$0xff] %v1809
  %1874 = vst [vmem:[#allocation2 + $0x188] sm:$0xff] %v1810
  %1875 = vst [vmem:[#allocation2 + $0x190] sm:$0xff] %v1811
  %1876 = vst [vmem:[#allocation2 + $0x198] sm:$0xff] %v1812
  %1877 = vst [vmem:[#allocation2 + $0x1a0] sm:$0xff] %v1813
  %1878 = vst [vmem:[#allocation2 + $0x1a8] sm:$0xff] %v1814
  %1879 = vst [vmem:[#allocation2 + $0x1b0] sm:$0xff] %v1815
  %1880 = vst [vmem:[#allocation2 + $0x1b8] sm:$0xff] %v1816
  %1881 = vst [vmem:[#allocation2 + $0x1c0] sm:$0xff] %v1817
  %1882 = vst [vmem:[#allocation2 + $0x1c8] sm:$0xff] %v1818
  %1883 = vst [vmem:[#allocation2 + $0x1d0] sm:$0xff] %v1819
  %1884 = vst [vmem:[#allocation2 + $0x1d8] sm:$0xff] %v1820
  %1885 = vst [vmem:[#allocation2 + $0x1e0] sm:$0xff] %v1821
  %1886 = vst [vmem:[#allocation2 + $0x1e8] sm:$0xff] %v1822
  %1887 = vst [vmem:[#allocation2 + $0x1f0] sm:$0xff] %v1823
  %1888 = vst [vmem:[#allocation2 + $0x1f8] sm:$0xff] %v1824
  // Predicated region
  $region30: #{ngcf_forward.2} parent=0 // pred_check
    %p1889 = pneg %p27
  $region31: #{ngcf_forward.2} parent=0 // pred_check_branch
    %1891 = sbr.rel (%p1889) target = $region33
  $region32: #{ngcf_forward.2} parent=0 // pred_region
    %v1892 = vld [vmem:[#allocation2] sm:$0xff]
    %v1893 = vld [vmem:[#allocation2 + $0x8] sm:$0xff]
    %v1894 = vld [vmem:[#allocation2 + $0x10] sm:$0xff]
    %v1895 = vld [vmem:[#allocation2 + $0x18] sm:$0xff]
    %v1896 = vld [vmem:[#allocation2 + $0x20] sm:$0xff]
    %v1897 = vld [vmem:[#allocation2 + $0x28] sm:$0xff]
    %v1898 = vld [vmem:[#allocation2 + $0x30] sm:$0xff]
    %v1899 = vld [vmem:[#allocation2 + $0x38] sm:$0xff]
    %v1900 = vld [vmem:[#allocation2 + $0x40] sm:$0xff]
    %v1901 = vld [vmem:[#allocation2 + $0x48] sm:$0xff]
    %v1902 = vld [vmem:[#allocation2 + $0x50] sm:$0xff]
    %v1903 = vld [vmem:[#allocation2 + $0x58] sm:$0xff]
    %v1904 = vld [vmem:[#allocation2 + $0x60] sm:$0xff]
    %v1905 = vld [vmem:[#allocation2 + $0x68] sm:$0xff]
    %v1906 = vld [vmem:[#allocation2 + $0x70] sm:$0xff]
    %v1907 = vld [vmem:[#allocation2 + $0x78] sm:$0xff]
    %v1908 = vld [vmem:[#allocation2 + $0x80] sm:$0xff]
    %v1909 = vld [vmem:[#allocation2 + $0x88] sm:$0xff]
    %v1910 = vld [vmem:[#allocation2 + $0x90] sm:$0xff]
    %v1911 = vld [vmem:[#allocation2 + $0x98] sm:$0xff]
    %v1912 = vld [vmem:[#allocation2 + $0xa0] sm:$0xff]
    %v1913 = vld [vmem:[#allocation2 + $0xa8] sm:$0xff]
    %v1914 = vld [vmem:[#allocation2 + $0xb0] sm:$0xff]
    %v1915 = vld [vmem:[#allocation2 + $0xb8] sm:$0xff]
    %v1916 = vld [vmem:[#allocation2 + $0xc0] sm:$0xff]
    %v1917 = vld [vmem:[#allocation2 + $0xc8] sm:$0xff]
    %v1918 = vld [vmem:[#allocation2 + $0xd0] sm:$0xff]
    %v1919 = vld [vmem:[#allocation2 + $0xd8] sm:$0xff]
    %v1920 = vld [vmem:[#allocation2 + $0xe0] sm:$0xff]
    %v1921 = vld [vmem:[#allocation2 + $0xe8] sm:$0xff]
    %v1922 = vld [vmem:[#allocation2 + $0xf0] sm:$0xff]
    %v1923 = vld [vmem:[#allocation2 + $0xf8] sm:$0xff]
    %v1924 = vld [vmem:[#allocation2 + $0x100] sm:$0xff]
    %v1925 = vld [vmem:[#allocation2 + $0x108] sm:$0xff]
    %v1926 = vld [vmem:[#allocation2 + $0x110] sm:$0xff]
    %v1927 = vld [vmem:[#allocation2 + $0x118] sm:$0xff]
    %v1928 = vld [vmem:[#allocation2 + $0x120] sm:$0xff]
    %v1929 = vld [vmem:[#allocation2 + $0x128] sm:$0xff]
    %v1930 = vld [vmem:[#allocation2 + $0x130] sm:$0xff]
    %v1931 = vld [vmem:[#allocation2 + $0x138] sm:$0xff]
    %v1932 = vld [vmem:[#allocation2 + $0x140] sm:$0xff]
    %v1933 = vld [vmem:[#allocation2 + $0x148] sm:$0xff]
    %v1934 = vld [vmem:[#allocation2 + $0x150] sm:$0xff]
    %v1935 = vld [vmem:[#allocation2 + $0x158] sm:$0xff]
    %v1936 = vld [vmem:[#allocation2 + $0x160] sm:$0xff]
    %v1937 = vld [vmem:[#allocation2 + $0x168] sm:$0xff]
    %v1938 = vld [vmem:[#allocation2 + $0x170] sm:$0xff]
    %v1939 = vld [vmem:[#allocation2 + $0x178] sm:$0xff]
    %v1940 = vld [vmem:[#allocation2 + $0x180] sm:$0xff]
    %v1941 = vld [vmem:[#allocation2 + $0x188] sm:$0xff]
    %v1942 = vld [vmem:[#allocation2 + $0x190] sm:$0xff]
    %v1943 = vld [vmem:[#allocation2 + $0x198] sm:$0xff]
    %v1944 = vld [vmem:[#allocation2 + $0x1a0] sm:$0xff]
    %v1945 = vld [vmem:[#allocation2 + $0x1a8] sm:$0xff]
    %v1946 = vld [vmem:[#allocation2 + $0x1b0] sm:$0xff]
    %v1947 = vld [vmem:[#allocation2 + $0x1b8] sm:$0xff]
    %v1948 = vld [vmem:[#allocation2 + $0x1c0] sm:$0xff]
    %v1949 = vld [vmem:[#allocation2 + $0x1c8] sm:$0xff]
    %v1950 = vld [vmem:[#allocation2 + $0x1d0] sm:$0xff]
    %v1951 = vld [vmem:[#allocation2 + $0x1d8] sm:$0xff]
    %v1952 = vld [vmem:[#allocation2 + $0x1e0] sm:$0xff]
    %v1953 = vld [vmem:[#allocation2 + $0x1e8] sm:$0xff]
    %v1954 = vld [vmem:[#allocation2 + $0x1f0] sm:$0xff]
    %v1955 = vld [vmem:[#allocation2 + $0x1f8] sm:$0xff]
    %v1956 = vld [vmem:[%s2] sm:$0xff]
    %v1957 = vld [vmem:[%s2 + $0x8] sm:$0xff]
    %v1958 = vld [vmem:[%s2 + $0x10] sm:$0xff]
    %v1959 = vld [vmem:[%s2 + $0x18] sm:$0xff]
    %v1960 = vld [vmem:[%s2 + $0x20] sm:$0xff]
    %v1961 = vld [vmem:[%s2 + $0x28] sm:$0xff]
    %v1962 = vld [vmem:[%s2 + $0x30] sm:$0xff]
    %v1963 = vld [vmem:[%s2 + $0x38] sm:$0xff]
    %v1964 = vld [vmem:[%s2 + $0x40] sm:$0xff]
    %v1965 = vld [vmem:[%s2 + $0x48] sm:$0xff]
    %v1966 = vld [vmem:[%s2 + $0x50] sm:$0xff]
    %v1967 = vld [vmem:[%s2 + $0x58] sm:$0xff]
    %v1968 = vld [vmem:[%s2 + $0x60] sm:$0xff]
    %v1969 = vld [vmem:[%s2 + $0x68] sm:$0xff]
    %v1970 = vld [vmem:[%s2 + $0x70] sm:$0xff]
    %v1971 = vld [vmem:[%s2 + $0x78] sm:$0xff]
    %v1972 = vld [vmem:[%s2 + $0x80] sm:$0xff]
    %v1973 = vld [vmem:[%s2 + $0x88] sm:$0xff]
    %v1974 = vld [vmem:[%s2 + $0x90] sm:$0xff]
    %v1975 = vld [vmem:[%s2 + $0x98] sm:$0xff]
    %v1976 = vld [vmem:[%s2 + $0xa0] sm:$0xff]
    %v1977 = vld [vmem:[%s2 + $0xa8] sm:$0xff]
    %v1978 = vld [vmem:[%s2 + $0xb0] sm:$0xff]
    %v1979 = vld [vmem:[%s2 + $0xb8] sm:$0xff]
    %v1980 = vld [vmem:[%s2 + $0xc0] sm:$0xff]
    %v1981 = vld [vmem:[%s2 + $0xc8] sm:$0xff]
    %v1982 = vld [vmem:[%s2 + $0xd0] sm:$0xff]
    %v1983 = vld [vmem:[%s2 + $0xd8] sm:$0xff]
    %v1984 = vld [vmem:[%s2 + $0xe0] sm:$0xff]
    %v1985 = vld [vmem:[%s2 + $0xe8] sm:$0xff]
    %v1986 = vld [vmem:[%s2 + $0xf0] sm:$0xff]
    %v1987 = vld [vmem:[%s2 + $0xf8] sm:$0xff]
    %v1988 = vld [vmem:[%s2 + $0x100] sm:$0xff]
    %v1989 = vld [vmem:[%s2 + $0x108] sm:$0xff]
    %v1990 = vld [vmem:[%s2 + $0x110] sm:$0xff]
    %v1991 = vld [vmem:[%s2 + $0x118] sm:$0xff]
    %v1992 = vld [vmem:[%s2 + $0x120] sm:$0xff]
    %v1993 = vld [vmem:[%s2 + $0x128] sm:$0xff]
    %v1994 = vld [vmem:[%s2 + $0x130] sm:$0xff]
    %v1995 = vld [vmem:[%s2 + $0x138] sm:$0xff]
    %v1996 = vld [vmem:[%s2 + $0x140] sm:$0xff]
    %v1997 = vld [vmem:[%s2 + $0x148] sm:$0xff]
    %v1998 = vld [vmem:[%s2 + $0x150] sm:$0xff]
    %v1999 = vld [vmem:[%s2 + $0x158] sm:$0xff]
    %v2000 = vld [vmem:[%s2 + $0x160] sm:$0xff]
    %v2001 = vld [vmem:[%s2 + $0x168] sm:$0xff]
    %v2002 = vld [vmem:[%s2 + $0x170] sm:$0xff]
    %v2003 = vld [vmem:[%s2 + $0x178] sm:$0xff]
    %v2004 = vld [vmem:[%s2 + $0x180] sm:$0xff]
    %v2005 = vld [vmem:[%s2 + $0x188] sm:$0xff]
    %v2006 = vld [vmem:[%s2 + $0x190] sm:$0xff]
    %v2007 = vld [vmem:[%s2 + $0x198] sm:$0xff]
    %v2008 = vld [vmem:[%s2 + $0x1a0] sm:$0xff]
    %v2009 = vld [vmem:[%s2 + $0x1a8] sm:$0xff]
    %v2010 = vld [vmem:[%s2 + $0x1b0] sm:$0xff]
    %v2011 = vld [vmem:[%s2 + $0x1b8] sm:$0xff]
    %v2012 = vld [vmem:[%s2 + $0x1c0] sm:$0xff]
    %v2013 = vld [vmem:[%s2 + $0x1c8] sm:$0xff]
    %v2014 = vld [vmem:[%s2 + $0x1d0] sm:$0xff]
    %v2015 = vld [vmem:[%s2 + $0x1d8] sm:$0xff]
    %v2016 = vld [vmem:[%s2 + $0x1e0] sm:$0xff]
    %v2017 = vld [vmem:[%s2 + $0x1e8] sm:$0xff]
    %v2018 = vld [vmem:[%s2 + $0x1f0] sm:$0xff]
    %v2019 = vld [vmem:[%s2 + $0x1f8] sm:$0xff]
    %v2020 = vld [vmem:[%s3] sm:$0xff]
    %v2021 = vld [vmem:[%s3 + $0x8] sm:$0xff]
    %v2022 = vld [vmem:[%s3 + $0x10] sm:$0xff]
    %v2023 = vld [vmem:[%s3 + $0x18] sm:$0xff]
    %v2024 = vld [vmem:[%s3 + $0x20] sm:$0xff]
    %v2025 = vld [vmem:[%s3 + $0x28] sm:$0xff]
    %v2026 = vld [vmem:[%s3 + $0x30] sm:$0xff]
    %v2027 = vld [vmem:[%s3 + $0x38] sm:$0xff]
    %v2028 = vld [vmem:[%s3 + $0x40] sm:$0xff]
    %v2029 = vld [vmem:[%s3 + $0x48] sm:$0xff]
    %v2030 = vld [vmem:[%s3 + $0x50] sm:$0xff]
    %v2031 = vld [vmem:[%s3 + $0x58] sm:$0xff]
    %v2032 = vld [vmem:[%s3 + $0x60] sm:$0xff]
    %v2033 = vld [vmem:[%s3 + $0x68] sm:$0xff]
    %v2034 = vld [vmem:[%s3 + $0x70] sm:$0xff]
    %v2035 = vld [vmem:[%s3 + $0x78] sm:$0xff]
    %v2036 = vmul.f32 %v1956, %v1892
    %v2037 = vmul.f32 %v1957, %v1893
    %v2038 = vmul.f32 %v1958, %v1894
    %v2039 = vmul.f32 %v1959, %v1895
    %v2040 = vmul.f32 %v1960, %v1896
    %v2041 = vmul.f32 %v1961, %v1897
    %v2042 = vmul.f32 %v1962, %v1898
    %v2043 = vmul.f32 %v1963, %v1899
    %v2044 = vmul.f32 %v1964, %v1900
    %v2045 = vmul.f32 %v1965, %v1901
    %v2046 = vmul.f32 %v1966, %v1902
    %v2047 = vmul.f32 %v1967, %v1903
    %v2048 = vmul.f32 %v1968, %v1904
    %v2049 = vmul.f32 %v1969, %v1905
    %v2050 = vmul.f32 %v1970, %v1906
    %v2051 = vmul.f32 %v1971, %v1907
    %v2052 = vmul.f32 %v1972, %v1908
    %v2053 = vmul.f32 %v1973, %v1909
    %v2054 = vmul.f32 %v1974, %v1910
    %v2055 = vmul.f32 %v1975, %v1911
    %v2056 = vmul.f32 %v1976, %v1912
    %v2057 = vmul.f32 %v1977, %v1913
    %v2058 = vmul.f32 %v1978, %v1914
    %v2059 = vmul.f32 %v1979, %v1915
    %v2060 = vmul.f32 %v1980, %v1916
    %v2061 = vmul.f32 %v1981, %v1917
    %v2062 = vmul.f32 %v1982, %v1918
    %v2063 = vmul.f32 %v1983, %v1919
    %v2064 = vmul.f32 %v1984, %v1920
    %v2065 = vmul.f32 %v1985, %v1921
    %v2066 = vmul.f32 %v1986, %v1922
    %v2067 = vmul.f32 %v1987, %v1923
    %v2068 = vmul.f32 %v1988, %v1924
    %v2069 = vmul.f32 %v1989, %v1925
    %v2070 = vmul.f32 %v1990, %v1926
    %v2071 = vmul.f32 %v1991, %v1927
    %v2072 = vmul.f32 %v1992, %v1928
    %v2073 = vmul.f32 %v1993, %v1929
    %v2074 = vmul.f32 %v1994, %v1930
    %v2075 = vmul.f32 %v1995, %v1931
    %v2076 = vmul.f32 %v1996, %v1932
    %v2077 = vmul.f32 %v1997, %v1933
    %v2078 = vmul.f32 %v1998, %v1934
    %v2079 = vmul.f32 %v1999, %v1935
    %v2080 = vmul.f32 %v2000, %v1936
    %v2081 = vmul.f32 %v2001, %v1937
    %v2082 = vmul.f32 %v2002, %v1938
    %v2083 = vmul.f32 %v2003, %v1939
    %v2084 = vmul.f32 %v2004, %v1940
    %v2085 = vmul.f32 %v2005, %v1941
    %v2086 = vmul.f32 %v2006, %v1942
    %v2087 = vmul.f32 %v2007, %v1943
    %v2088 = vmul.f32 %v2008, %v1944
    %v2089 = vmul.f32 %v2009, %v1945
    %v2090 = vmul.f32 %v2010, %v1946
    %v2091 = vmul.f32 %v2011, %v1947
    %v2092 = vmul.f32 %v2012, %v1948
    %v2093 = vmul.f32 %v2013, %v1949
    %v2094 = vmul.f32 %v2014, %v1950
    %v2095 = vmul.f32 %v2015, %v1951
    %v2096 = vmul.f32 %v2016, %v1952
    %v2097 = vmul.f32 %v2017, %v1953
    %v2098 = vmul.f32 %v2018, %v1954
    %v2099 = vmul.f32 %v2019, %v1955
    %v2100 = vld [vmem:[%s4] sm:$0xff]
    %v2101 = vld [vmem:[%s4 + $0x8] sm:$0xff]
    %v2102 = vld [vmem:[%s4 + $0x10] sm:$0xff]
    %v2103 = vld [vmem:[%s4 + $0x18] sm:$0xff]
    %v2104 = vld [vmem:[%s4 + $0x20] sm:$0xff]
    %v2105 = vld [vmem:[%s4 + $0x28] sm:$0xff]
    %v2106 = vld [vmem:[%s4 + $0x30] sm:$0xff]
    %v2107 = vld [vmem:[%s4 + $0x38] sm:$0xff]
    %v2108 = vld [vmem:[%s4 + $0x40] sm:$0xff]
    %v2109 = vld [vmem:[%s4 + $0x48] sm:$0xff]
    %v2110 = vld [vmem:[%s4 + $0x50] sm:$0xff]
    %v2111 = vld [vmem:[%s4 + $0x58] sm:$0xff]
    %v2112 = vld [vmem:[%s4 + $0x60] sm:$0xff]
    %v2113 = vld [vmem:[%s4 + $0x68] sm:$0xff]
    %v2114 = vld [vmem:[%s4 + $0x70] sm:$0xff]
    %v2115 = vld [vmem:[%s4 + $0x78] sm:$0xff]
    %2116 = vmatprep.subr.mxu0 0.0
    %2117 = vmatpush1.msra.mxu0 %v2100
    %2118 = vmatprep.subr.mxu0 0.0
    %2119 = vmatpush1.msra.mxu0 %v2101
    %2120 = vmatprep.subr.mxu0 0.0
    %2121 = vmatpush1.msra.mxu0 %v2102
    %2122 = vmatprep.subr.mxu0 0.0
    %2123 = vmatpush1.msra.mxu0 %v2103
    %2124 = vmatprep.subr.mxu0 0.0
    %2125 = vmatpush1.msra.mxu0 %v2104
    %2126 = vmatprep.subr.mxu0 0.0
    %2127 = vmatpush1.msra.mxu0 %v2105
    %2128 = vmatprep.subr.mxu0 0.0
    %2129 = vmatpush1.msra.mxu0 %v2106
    %2130 = vmatprep.subr.mxu0 0.0
    %2131 = vmatpush1.msra.mxu0 %v2107
    %2132 = vmatprep.subr.mxu0 0.0
    %2133 = vmatpush1.msra.mxu0 %v2108
    %2134 = vmatprep.subr.mxu0 0.0
    %2135 = vmatpush1.msra.mxu0 %v2109
    %2136 = vmatprep.subr.mxu0 0.0
    %2137 = vmatpush1.msra.mxu0 %v2110
    %2138 = vmatprep.subr.mxu0 0.0
    %2139 = vmatpush1.msra.mxu0 %v2111
    %2140 = vmatprep.subr.mxu0 0.0
    %2141 = vmatpush1.msra.mxu0 %v2112
    %2142 = vmatprep.subr.mxu0 0.0
    %2143 = vmatpush1.msra.mxu0 %v2113
    %2144 = vmatprep.subr.mxu0 0.0
    %2145 = vmatpush1.msra.mxu0 %v2114
    %2146 = vmatprep.subr.mxu0 0.0
    %2147 = vmatpush1.msra.mxu0 %v2115
    %2148 = vmatprep.subr.mxu0 0.0
    %2149 = vmatpush1.msra.mxu0 0.0
    %2150 = vmatprep.subr.mxu0 0.0
    %2151 = vmatpush1.msra.mxu0 0.0
    %2152 = vmatprep.subr.mxu0 0.0
    %2153 = vmatpush1.msra.mxu0 0.0
    %2154 = vmatprep.subr.mxu0 0.0
    %2155 = vmatpush1.msra.mxu0 0.0
    %2156 = vmatprep.subr.mxu0 0.0
    %2157 = vmatpush1.msra.mxu0 0.0
    %2158 = vmatprep.subr.mxu0 0.0
    %2159 = vmatpush1.msra.mxu0 0.0
    %2160 = vmatprep.subr.mxu0 0.0
    %2161 = vmatpush1.msra.mxu0 0.0
    %2162 = vmatprep.subr.mxu0 0.0
    %2163 = vmatpush1.msra.mxu0 0.0
    %2164 = vmatprep.subr.mxu0 0.0
    %2165 = vmatpush1.msra.mxu0 0.0
    %2166 = vmatprep.subr.mxu0 0.0
    %2167 = vmatpush1.msra.mxu0 0.0
    %2168 = vmatprep.subr.mxu0 0.0
    %2169 = vmatpush1.msra.mxu0 0.0
    %2170 = vmatprep.subr.mxu0 0.0
    %2171 = vmatpush1.msra.mxu0 0.0
    %2172 = vmatprep.subr.mxu0 0.0
    %2173 = vmatpush1.msra.mxu0 0.0
    %2174 = vmatprep.subr.mxu0 0.0
    %2175 = vmatpush1.msra.mxu0 0.0
    %2176 = vmatprep.subr.mxu0 0.0
    %2177 = vmatpush1.msra.mxu0 0.0
    %2178 = vmatprep.subr.mxu0 0.0
    %2179 = vmatpush1.msra.mxu0 0.0
    %2180 = vmatprep.mubr.f32.mxu0 0.0
    %2181 = vmatmul.mubr.f32.gmra.mrb[0].mxu0 %v2036
    %v2182 = vpop.f32.mrb[0].mxu0
    %v2183 = vadd.f32 0.0, %v2182
    %v2184 = vpop.f32.mrb[0].mxu0
    %2185 = vmatprep.mubr.f32.mxu0 0.0
    %2186 = vmatmul.mubr.f32.gmra.mrb[0].mxu0 %v2037
    %v2187 = vpop.f32.mrb[0].mxu0
    %v2188 = vadd.f32 0.0, %v2187
    %v2189 = vpop.f32.mrb[0].mxu0
    %2190 = vmatprep.mubr.f32.mxu0 0.0
    %2191 = vmatmul.mubr.f32.gmra.mrb[0].mxu0 %v2038
    %v2192 = vpop.f32.mrb[0].mxu0
    %v2193 = vadd.f32 0.0, %v2192
    %v2194 = vpop.f32.mrb[0].mxu0
    %2195 = vmatprep.mubr.f32.mxu0 0.0
    %2196 = vmatmul.mubr.f32.gmra.mrb[0].mxu0 %v2039
    %v2197 = vpop.f32.mrb[0].mxu0
    %v2198 = vadd.f32 0.0, %v2197
    %v2199 = vpop.f32.mrb[0].mxu0
    %2200 = vmatprep.mubr.f32.mxu0 0.0
    %2201 = vmatmul.mubr.f32.gmra.mrb[0].mxu0 %v2040
    %v2202 = vpop.f32.mrb[0].mxu0
    %v2203 = vadd.f32 0.0, %v2202
    %v2204 = vpop.f32.mrb[0].mxu0
    %2205 = vmatprep.mubr.f32.mxu0 0.0
    %2206 = vmatmul.mubr.f32.gmra.mrb[0].mxu0 %v2041
    %v2207 = vpop.f32.mrb[0].mxu0
    %v2208 = vadd.f32 0.0, %v2207
    %v2209 = vpop.f32.mrb[0].mxu0
    %2210 = vmatprep.mubr.f32.mxu0 0.0
    %2211 = vmatmul.mubr.f32.gmra.mrb[0].mxu0 %v2042
    %v2212 = vpop.f32.mrb[0].mxu0
    %v2213 = vadd.f32 0.0, %v2212
    %v2214 = vpop.f32.mrb[0].mxu0
    %2215 = vmatprep.mubr.f32.mxu0 0.0
    %2216 = vmatmul.mubr.f32.gmra.mrb[0].mxu0 %v2043
    %v2217 = vpop.f32.mrb[0].mxu0
    %v2218 = vadd.f32 0.0, %v2217
    %v2219 = vpop.f32.mrb[0].mxu0
    %2220 = vmatprep.mubr.f32.mxu0 0.0
    %2221 = vmatmul.mubr.f32.gmra.mrb[0].mxu0 %v2044
    %v2222 = vpop.f32.mrb[0].mxu0
    %v2223 = vadd.f32 0.0, %v2222
    %v2224 = vpop.f32.mrb[0].mxu0
    %2225 = vmatprep.mubr.f32.mxu0 0.0
    %2226 = vmatmul.mubr.f32.gmra.mrb[0].mxu0 %v2045
    %v2227 = vpop.f32.mrb[0].mxu0
    %v2228 = vadd.f32 0.0, %v2227
    %v2229 = vpop.f32.mrb[0].mxu0
    %2230 = vmatprep.mubr.f32.mxu0 0.0
    %2231 = vmatmul.mubr.f32.gmra.mrb[0].mxu0 %v2046
    %v2232 = vpop.f32.mrb[0].mxu0
    %v2233 = vadd.f32 0.0, %v2232
    %v2234 = vpop.f32.mrb[0].mxu0
    %2235 = vmatprep.mubr.f32.mxu0 0.0
    %2236 = vmatmul.mubr.f32.gmra.mrb[0].mxu0 %v2047
    %v2237 = vpop.f32.mrb[0].mxu0
    %v2238 = vadd.f32 0.0, %v2237
    %v2239 = vpop.f32.mrb[0].mxu0
    %2240 = vmatprep.mubr.f32.mxu0 0.0
    %2241 = vmatmul.mubr.f32.gmra.mrb[0].mxu0 %v2048
    %v2242 = vpop.f32.mrb[0].mxu0
    %v2243 = vadd.f32 0.0, %v2242
    %v2244 = vpop.f32.mrb[0].mxu0
    %2245 = vmatprep.mubr.f32.mxu0 0.0
    %2246 = vmatmul.mubr.f32.gmra.mrb[0].mxu0 %v2049
    %v2247 = vpop.f32.mrb[0].mxu0
    %v2248 = vadd.f32 0.0, %v2247
    %v2249 = vpop.f32.mrb[0].mxu0
    %2250 = vmatprep.mubr.f32.mxu0 0.0
    %2251 = vmatmul.mubr.f32.gmra.mrb[0].mxu0 %v2050
    %v2252 = vpop.f32.mrb[0].mxu0
    %v2253 = vadd.f32 0.0, %v2252
    %v2254 = vpop.f32.mrb[0].mxu0
    %2255 = vmatprep.mubr.f32.mxu0 0.0
    %2256 = vmatmul.mubr.f32.gmra.mrb[0].mxu0 %v2051
    %v2257 = vpop.f32.mrb[0].mxu0
    %v2258 = vadd.f32 0.0, %v2257
    %v2259 = vpop.f32.mrb[0].mxu0
    %2260 = vmatprep.mubr.f32.mxu0 0.0
    %2261 = vmatmul.mubr.f32.gmra.mrb[0].mxu0 %v2052
    %v2262 = vpop.f32.mrb[0].mxu0
    %v2263 = vadd.f32 0.0, %v2262
    %v2264 = vpop.f32.mrb[0].mxu0
    %2265 = vmatprep.mubr.f32.mxu0 0.0
    %2266 = vmatmul.mubr.f32.gmra.mrb[0].mxu0 %v2053
    %v2267 = vpop.f32.mrb[0].mxu0
    %v2268 = vadd.f32 0.0, %v2267
    %v2269 = vpop.f32.mrb[0].mxu0
    %2270 = vmatprep.mubr.f32.mxu0 0.0
    %2271 = vmatmul.mubr.f32.gmra.mrb[0].mxu0 %v2054
    %v2272 = vpop.f32.mrb[0].mxu0
    %v2273 = vadd.f32 0.0, %v2272
    %v2274 = vpop.f32.mrb[0].mxu0
    %2275 = vmatprep.mubr.f32.mxu0 0.0
    %2276 = vmatmul.mubr.f32.gmra.mrb[0].mxu0 %v2055
    %v2277 = vpop.f32.mrb[0].mxu0
    %v2278 = vadd.f32 0.0, %v2277
    %v2279 = vpop.f32.mrb[0].mxu0
    %2280 = vmatprep.mubr.f32.mxu0 0.0
    %2281 = vmatmul.mubr.f32.gmra.mrb[0].mxu0 %v2056
    %v2282 = vpop.f32.mrb[0].mxu0
    %v2283 = vadd.f32 0.0, %v2282
    %v2284 = vpop.f32.mrb[0].mxu0
    %2285 = vmatprep.mubr.f32.mxu0 0.0
    %2286 = vmatmul.mubr.f32.gmra.mrb[0].mxu0 %v2057
    %v2287 = vpop.f32.mrb[0].mxu0
    %v2288 = vadd.f32 0.0, %v2287
    %v2289 = vpop.f32.mrb[0].mxu0
    %2290 = vmatprep.mubr.f32.mxu0 0.0
    %2291 = vmatmul.mubr.f32.gmra.mrb[0].mxu0 %v2058
    %v2292 = vpop.f32.mrb[0].mxu0
    %v2293 = vadd.f32 0.0, %v2292
    %v2294 = vpop.f32.mrb[0].mxu0
    %2295 = vmatprep.mubr.f32.mxu0 0.0
    %2296 = vmatmul.mubr.f32.gmra.mrb[0].mxu0 %v2059
    %v2297 = vpop.f32.mrb[0].mxu0
    %v2298 = vadd.f32 0.0, %v2297
    %v2299 = vpop.f32.mrb[0].mxu0
    %2300 = vmatprep.mubr.f32.mxu0 0.0
    %2301 = vmatmul.mubr.f32.gmra.mrb[0].mxu0 %v2060
    %v2302 = vpop.f32.mrb[0].mxu0
    %v2303 = vadd.f32 0.0, %v2302
    %v2304 = vpop.f32.mrb[0].mxu0
    %2305 = vmatprep.mubr.f32.mxu0 0.0
    %2306 = vmatmul.mubr.f32.gmra.mrb[0].mxu0 %v2061
    %v2307 = vpop.f32.mrb[0].mxu0
    %v2308 = vadd.f32 0.0, %v2307
    %v2309 = vpop.f32.mrb[0].mxu0
    %2310 = vmatprep.mubr.f32.mxu0 0.0
    %2311 = vmatmul.mubr.f32.gmra.mrb[0].mxu0 %v2062
    %v2312 = vpop.f32.mrb[0].mxu0
    %v2313 = vadd.f32 0.0, %v2312
    %v2314 = vpop.f32.mrb[0].mxu0
    %2315 = vmatprep.mubr.f32.mxu0 0.0
    %2316 = vmatmul.mubr.f32.gmra.mrb[0].mxu0 %v2063
    %v2317 = vpop.f32.mrb[0].mxu0
    %v2318 = vadd.f32 0.0, %v2317
    %v2319 = vpop.f32.mrb[0].mxu0
    %2320 = vmatprep.mubr.f32.mxu0 0.0
    %2321 = vmatmul.mubr.f32.gmra.mrb[0].mxu0 %v2064
    %v2322 = vpop.f32.mrb[0].mxu0
    %v2323 = vadd.f32 0.0, %v2322
    %v2324 = vpop.f32.mrb[0].mxu0
    %2325 = vmatprep.mubr.f32.mxu0 0.0
    %2326 = vmatmul.mubr.f32.gmra.mrb[0].mxu0 %v2065
    %v2327 = vpop.f32.mrb[0].mxu0
    %v2328 = vadd.f32 0.0, %v2327
    %v2329 = vpop.f32.mrb[0].mxu0
    %2330 = vmatprep.mubr.f32.mxu0 0.0
    %2331 = vmatmul.mubr.f32.gmra.mrb[0].mxu0 %v2066
    %v2332 = vpop.f32.mrb[0].mxu0
    %v2333 = vadd.f32 0.0, %v2332
    %v2334 = vpop.f32.mrb[0].mxu0
    %2335 = vmatprep.mubr.f32.mxu0 0.0
    %2336 = vmatmul.mubr.f32.gmra.mrb[0].mxu0 %v2067
    %v2337 = vpop.f32.mrb[0].mxu0
    %v2338 = vadd.f32 0.0, %v2337
    %v2339 = vpop.f32.mrb[0].mxu0
    %2340 = vmatprep.mubr.f32.mxu0 0.0
    %2341 = vmatmul.mubr.f32.gmra.mrb[0].mxu0 %v2068
    %v2342 = vpop.f32.mrb[0].mxu0
    %v2343 = vadd.f32 0.0, %v2342
    %v2344 = vpop.f32.mrb[0].mxu0
    %2345 = vmatprep.mubr.f32.mxu0 0.0
    %2346 = vmatmul.mubr.f32.gmra.mrb[0].mxu0 %v2069
    %v2347 = vpop.f32.mrb[0].mxu0
    %v2348 = vadd.f32 0.0, %v2347
    %v2349 = vpop.f32.mrb[0].mxu0
    %2350 = vmatprep.mubr.f32.mxu0 0.0
    %2351 = vmatmul.mubr.f32.gmra.mrb[0].mxu0 %v2070
    %v2352 = vpop.f32.mrb[0].mxu0
    %v2353 = vadd.f32 0.0, %v2352
    %v2354 = vpop.f32.mrb[0].mxu0
    %2355 = vmatprep.mubr.f32.mxu0 0.0
    %2356 = vmatmul.mubr.f32.gmra.mrb[0].mxu0 %v2071
    %v2357 = vpop.f32.mrb[0].mxu0
    %v2358 = vadd.f32 0.0, %v2357
    %v2359 = vpop.f32.mrb[0].mxu0
    %2360 = vmatprep.mubr.f32.mxu0 0.0
    %2361 = vmatmul.mubr.f32.gmra.mrb[0].mxu0 %v2072
    %v2362 = vpop.f32.mrb[0].mxu0
    %v2363 = vadd.f32 0.0, %v2362
    %v2364 = vpop.f32.mrb[0].mxu0
    %2365 = vmatprep.mubr.f32.mxu0 0.0
    %2366 = vmatmul.mubr.f32.gmra.mrb[0].mxu0 %v2073
    %v2367 = vpop.f32.mrb[0].mxu0
    %v2368 = vadd.f32 0.0, %v2367
    %v2369 = vpop.f32.mrb[0].mxu0
    %2370 = vmatprep.mubr.f32.mxu0 0.0
    %2371 = vmatmul.mubr.f32.gmra.mrb[0].mxu0 %v2074
    %v2372 = vpop.f32.mrb[0].mxu0
    %v2373 = vadd.f32 0.0, %v2372
    %v2374 = vpop.f32.mrb[0].mxu0
    %2375 = vmatprep.mubr.f32.mxu0 0.0
    %2376 = vmatmul.mubr.f32.gmra.mrb[0].mxu0 %v2075
    %v2377 = vpop.f32.mrb[0].mxu0
    %v2378 = vadd.f32 0.0, %v2377
    %v2379 = vpop.f32.mrb[0].mxu0
    %2380 = vmatprep.mubr.f32.mxu0 0.0
    %2381 = vmatmul.mubr.f32.gmra.mrb[0].mxu0 %v2076
    %v2382 = vpop.f32.mrb[0].mxu0
    %v2383 = vadd.f32 0.0, %v2382
    %v2384 = vpop.f32.mrb[0].mxu0
    %2385 = vmatprep.mubr.f32.mxu0 0.0
    %2386 = vmatmul.mubr.f32.gmra.mrb[0].mxu0 %v2077
    %v2387 = vpop.f32.mrb[0].mxu0
    %v2388 = vadd.f32 0.0, %v2387
    %v2389 = vpop.f32.mrb[0].mxu0
    %2390 = vmatprep.mubr.f32.mxu0 0.0
    %2391 = vmatmul.mubr.f32.gmra.mrb[0].mxu0 %v2078
    %v2392 = vpop.f32.mrb[0].mxu0
    %v2393 = vadd.f32 0.0, %v2392
    %v2394 = vpop.f32.mrb[0].mxu0
    %2395 = vmatprep.mubr.f32.mxu0 0.0
    %2396 = vmatmul.mubr.f32.gmra.mrb[0].mxu0 %v2079
    %v2397 = vpop.f32.mrb[0].mxu0
    %v2398 = vadd.f32 0.0, %v2397
    %v2399 = vpop.f32.mrb[0].mxu0
    %2400 = vmatprep.mubr.f32.mxu0 0.0
    %2401 = vmatmul.mubr.f32.gmra.mrb[0].mxu0 %v2080
    %v2402 = vpop.f32.mrb[0].mxu0
    %v2403 = vadd.f32 0.0, %v2402
    %v2404 = vpop.f32.mrb[0].mxu0
    %2405 = vmatprep.mubr.f32.mxu0 0.0
    %2406 = vmatmul.mubr.f32.gmra.mrb[0].mxu0 %v2081
    %v2407 = vpop.f32.mrb[0].mxu0
    %v2408 = vadd.f32 0.0, %v2407
    %v2409 = vpop.f32.mrb[0].mxu0
    %2410 = vmatprep.mubr.f32.mxu0 0.0
    %2411 = vmatmul.mubr.f32.gmra.mrb[0].mxu0 %v2082
    %v2412 = vpop.f32.mrb[0].mxu0
    %v2413 = vadd.f32 0.0, %v2412
    %v2414 = vpop.f32.mrb[0].mxu0
    %2415 = vmatprep.mubr.f32.mxu0 0.0
    %2416 = vmatmul.mubr.f32.gmra.mrb[0].mxu0 %v2083
    %v2417 = vpop.f32.mrb[0].mxu0
    %v2418 = vadd.f32 0.0, %v2417
    %v2419 = vpop.f32.mrb[0].mxu0
    %2420 = vmatprep.mubr.f32.mxu0 0.0
    %2421 = vmatmul.mubr.f32.gmra.mrb[0].mxu0 %v2084
    %v2422 = vpop.f32.mrb[0].mxu0
    %v2423 = vadd.f32 0.0, %v2422
    %v2424 = vpop.f32.mrb[0].mxu0
    %2425 = vmatprep.mubr.f32.mxu0 0.0
    %2426 = vmatmul.mubr.f32.gmra.mrb[0].mxu0 %v2085
    %v2427 = vpop.f32.mrb[0].mxu0
    %v2428 = vadd.f32 0.0, %v2427
    %v2429 = vpop.f32.mrb[0].mxu0
    %2430 = vmatprep.mubr.f32.mxu0 0.0
    %2431 = vmatmul.mubr.f32.gmra.mrb[0].mxu0 %v2086
    %v2432 = vpop.f32.mrb[0].mxu0
    %v2433 = vadd.f32 0.0, %v2432
    %v2434 = vpop.f32.mrb[0].mxu0
    %2435 = vmatprep.mubr.f32.mxu0 0.0
    %2436 = vmatmul.mubr.f32.gmra.mrb[0].mxu0 %v2087
    %v2437 = vpop.f32.mrb[0].mxu0
    %v2438 = vadd.f32 0.0, %v2437
    %v2439 = vpop.f32.mrb[0].mxu0
    %2440 = vmatprep.mubr.f32.mxu0 0.0
    %2441 = vmatmul.mubr.f32.gmra.mrb[0].mxu0 %v2088
    %v2442 = vpop.f32.mrb[0].mxu0
    %v2443 = vadd.f32 0.0, %v2442
    %v2444 = vpop.f32.mrb[0].mxu0
    %2445 = vmatprep.mubr.f32.mxu0 0.0
    %2446 = vmatmul.mubr.f32.gmra.mrb[0].mxu0 %v2089
    %v2447 = vpop.f32.mrb[0].mxu0
    %v2448 = vadd.f32 0.0, %v2447
    %v2449 = vpop.f32.mrb[0].mxu0
    %2450 = vmatprep.mubr.f32.mxu0 0.0
    %2451 = vmatmul.mubr.f32.gmra.mrb[0].mxu0 %v2090
    %v2452 = vpop.f32.mrb[0].mxu0
    %v2453 = vadd.f32 0.0, %v2452
    %v2454 = vpop.f32.mrb[0].mxu0
    %2455 = vmatprep.mubr.f32.mxu0 0.0
    %2456 = vmatmul.mubr.f32.gmra.mrb[0].mxu0 %v2091
    %v2457 = vpop.f32.mrb[0].mxu0
    %v2458 = vadd.f32 0.0, %v2457
    %v2459 = vpop.f32.mrb[0].mxu0
    %2460 = vmatprep.mubr.f32.mxu0 0.0
    %2461 = vmatmul.mubr.f32.gmra.mrb[0].mxu0 %v2092
    %v2462 = vpop.f32.mrb[0].mxu0
    %v2463 = vadd.f32 0.0, %v2462
    %v2464 = vpop.f32.mrb[0].mxu0
    %2465 = vmatprep.mubr.f32.mxu0 0.0
    %2466 = vmatmul.mubr.f32.gmra.mrb[0].mxu0 %v2093
    %v2467 = vpop.f32.mrb[0].mxu0
    %v2468 = vadd.f32 0.0, %v2467
    %v2469 = vpop.f32.mrb[0].mxu0
    %2470 = vmatprep.mubr.f32.mxu0 0.0
    %2471 = vmatmul.mubr.f32.gmra.mrb[0].mxu0 %v2094
    %v2472 = vpop.f32.mrb[0].mxu0
    %v2473 = vadd.f32 0.0, %v2472
    %v2474 = vpop.f32.mrb[0].mxu0
    %2475 = vmatprep.mubr.f32.mxu0 0.0
    %2476 = vmatmul.mubr.f32.gmra.mrb[0].mxu0 %v2095
    %v2477 = vpop.f32.mrb[0].mxu0
    %v2478 = vadd.f32 0.0, %v2477
    %v2479 = vpop.f32.mrb[0].mxu0
    %2480 = vmatprep.mubr.f32.mxu0 0.0
    %2481 = vmatmul.mubr.f32.gmra.mrb[0].mxu0 %v2096
    %v2482 = vpop.f32.mrb[0].mxu0
    %v2483 = vadd.f32 0.0, %v2482
    %v2484 = vpop.f32.mrb[0].mxu0
    %2485 = vmatprep.mubr.f32.mxu0 0.0
    %2486 = vmatmul.mubr.f32.gmra.mrb[0].mxu0 %v2097
    %v2487 = vpop.f32.mrb[0].mxu0
    %v2488 = vadd.f32 0.0, %v2487
    %v2489 = vpop.f32.mrb[0].mxu0
    %2490 = vmatprep.mubr.f32.mxu0 0.0
    %2491 = vmatmul.mubr.f32.gmra.mrb[0].mxu0 %v2098
    %v2492 = vpop.f32.mrb[0].mxu0
    %v2493 = vadd.f32 0.0, %v2492
    %v2494 = vpop.f32.mrb[0].mxu0
    %2495 = vmatprep.mubr.f32.mxu0 0.0
    %2496 = vmatmul.mubr.f32.gmra.mrb[0].mxu0 %v2099
    %v2497 = vpop.f32.mrb[0].mxu0
    %v2498 = vadd.f32 0.0, %v2497
    %v2499 = vpop.f32.mrb[0].mxu0
    %2500 = vdwg.mxu0
    %2501 = vmatprep.subr.mxu0 0.0
    %2502 = vmatpush1.msra.mxu0 %v2020
    %2503 = vmatprep.subr.mxu0 0.0
    %2504 = vmatpush1.msra.mxu0 %v2021
    %2505 = vmatprep.subr.mxu0 0.0
    %2506 = vmatpush1.msra.mxu0 %v2022
    %2507 = vmatprep.subr.mxu0 0.0
    %2508 = vmatpush1.msra.mxu0 %v2023
    %2509 = vmatprep.subr.mxu0 0.0
    %2510 = vmatpush1.msra.mxu0 %v2024
    %2511 = vmatprep.subr.mxu0 0.0
    %2512 = vmatpush1.msra.mxu0 %v2025
    %2513 = vmatprep.subr.mxu0 0.0
    %2514 = vmatpush1.msra.mxu0 %v2026
    %2515 = vmatprep.subr.mxu0 0.0
    %2516 = vmatpush1.msra.mxu0 %v2027
    %2517 = vmatprep.subr.mxu0 0.0
    %2518 = vmatpush1.msra.mxu0 %v2028
    %2519 = vmatprep.subr.mxu0 0.0
    %2520 = vmatpush1.msra.mxu0 %v2029
    %2521 = vmatprep.subr.mxu0 0.0
    %2522 = vmatpush1.msra.mxu0 %v2030
    %2523 = vmatprep.subr.mxu0 0.0
    %2524 = vmatpush1.msra.mxu0 %v2031
    %2525 = vmatprep.subr.mxu0 0.0
    %2526 = vmatpush1.msra.mxu0 %v2032
    %2527 = vmatprep.subr.mxu0 0.0
    %2528 = vmatpush1.msra.mxu0 %v2033
    %2529 = vmatprep.subr.mxu0 0.0
    %2530 = vmatpush1.msra.mxu0 %v2034
    %2531 = vmatprep.subr.mxu0 0.0
    %2532 = vmatpush1.msra.mxu0 %v2035
    %2533 = vmatprep.subr.mxu0 0.0
    %2534 = vmatpush1.msra.mxu0 0.0
    %2535 = vmatprep.subr.mxu0 0.0
    %2536 = vmatpush1.msra.mxu0 0.0
    %2537 = vmatprep.subr.mxu0 0.0
    %2538 = vmatpush1.msra.mxu0 0.0
    %2539 = vmatprep.subr.mxu0 0.0
    %2540 = vmatpush1.msra.mxu0 0.0
    %2541 = vmatprep.subr.mxu0 0.0
    %2542 = vmatpush1.msra.mxu0 0.0
    %2543 = vmatprep.subr.mxu0 0.0
    %2544 = vmatpush1.msra.mxu0 0.0
    %2545 = vmatprep.subr.mxu0 0.0
    %2546 = vmatpush1.msra.mxu0 0.0
    %2547 = vmatprep.subr.mxu0 0.0
    %2548 = vmatpush1.msra.mxu0 0.0
    %2549 = vmatprep.subr.mxu0 0.0
    %2550 = vmatpush1.msra.mxu0 0.0
    %2551 = vmatprep.subr.mxu0 0.0
    %2552 = vmatpush1.msra.mxu0 0.0
    %2553 = vmatprep.subr.mxu0 0.0
    %2554 = vmatpush1.msra.mxu0 0.0
    %2555 = vmatprep.subr.mxu0 0.0
    %2556 = vmatpush1.msra.mxu0 0.0
    %2557 = vmatprep.subr.mxu0 0.0
    %2558 = vmatpush1.msra.mxu0 0.0
    %2559 = vmatprep.subr.mxu0 0.0
    %2560 = vmatpush1.msra.mxu0 0.0
    %2561 = vmatprep.subr.mxu0 0.0
    %2562 = vmatpush1.msra.mxu0 0.0
    %2563 = vmatprep.subr.mxu0 0.0
    %2564 = vmatpush1.msra.mxu0 0.0
    %2565 = vmatprep.mubr.f32.mxu0 0.0
    %2566 = vmatmul.mubr.f32.gmra.mrb[0].mxu0 %v1892
    %v2567 = vpop.f32.mrb[0].mxu0
    %v2568 = vadd.f32 %v2183, %v2567
    %v2569 = vpop.f32.mrb[0].mxu0
    %2570 = vmatprep.mubr.f32.mxu0 0.0
    %2571 = vmatmul.mubr.f32.gmra.mrb[0].mxu0 %v1893
    %v2572 = vpop.f32.mrb[0].mxu0
    %v2573 = vadd.f32 %v2188, %v2572
    %v2574 = vpop.f32.mrb[0].mxu0
    %2575 = vmatprep.mubr.f32.mxu0 0.0
    %2576 = vmatmul.mubr.f32.gmra.mrb[0].mxu0 %v1894
    %v2577 = vpop.f32.mrb[0].mxu0
    %v2578 = vadd.f32 %v2193, %v2577
    %v2579 = vpop.f32.mrb[0].mxu0
    %2580 = vmatprep.mubr.f32.mxu0 0.0
    %2581 = vmatmul.mubr.f32.gmra.mrb[0].mxu0 %v1895
    %v2582 = vpop.f32.mrb[0].mxu0
    %v2583 = vadd.f32 %v2198, %v2582
    %v2584 = vpop.f32.mrb[0].mxu0
    %2585 = vmatprep.mubr.f32.mxu0 0.0
    %2586 = vmatmul.mubr.f32.gmra.mrb[0].mxu0 %v1896
    %v2587 = vpop.f32.mrb[0].mxu0
    %v2588 = vadd.f32 %v2203, %v2587
    %v2589 = vpop.f32.mrb[0].mxu0
    %2590 = vmatprep.mubr.f32.mxu0 0.0
    %2591 = vmatmul.mubr.f32.gmra.mrb[0].mxu0 %v1897
    %v2592 = vpop.f32.mrb[0].mxu0
    %v2593 = vadd.f32 %v2208, %v2592
    %v2594 = vpop.f32.mrb[0].mxu0
    %2595 = vmatprep.mubr.f32.mxu0 0.0
    %2596 = vmatmul.mubr.f32.gmra.mrb[0].mxu0 %v1898
    %v2597 = vpop.f32.mrb[0].mxu0
    %v2598 = vadd.f32 %v2213, %v2597
    %v2599 = vpop.f32.mrb[0].mxu0
    %2600 = vmatprep.mubr.f32.mxu0 0.0
    %2601 = vmatmul.mubr.f32.gmra.mrb[0].mxu0 %v1899
    %v2602 = vpop.f32.mrb[0].mxu0
    %v2603 = vadd.f32 %v2218, %v2602
    %v2604 = vpop.f32.mrb[0].mxu0
    %2605 = vmatprep.mubr.f32.mxu0 0.0
    %2606 = vmatmul.mubr.f32.gmra.mrb[0].mxu0 %v1900
    %v2607 = vpop.f32.mrb[0].mxu0
    %v2608 = vadd.f32 %v2223, %v2607
    %v2609 = vpop.f32.mrb[0].mxu0
    %2610 = vmatprep.mubr.f32.mxu0 0.0
    %2611 = vmatmul.mubr.f32.gmra.mrb[0].mxu0 %v1901
    %v2612 = vpop.f32.mrb[0].mxu0
    %v2613 = vadd.f32 %v2228, %v2612
    %v2614 = vpop.f32.mrb[0].mxu0
    %2615 = vmatprep.mubr.f32.mxu0 0.0
    %2616 = vmatmul.mubr.f32.gmra.mrb[0].mxu0 %v1902
    %v2617 = vpop.f32.mrb[0].mxu0
    %v2618 = vadd.f32 %v2233, %v2617
    %v2619 = vpop.f32.mrb[0].mxu0
    %2620 = vmatprep.mubr.f32.mxu0 0.0
    %2621 = vmatmul.mubr.f32.gmra.mrb[0].mxu0 %v1903
    %v2622 = vpop.f32.mrb[0].mxu0
    %v2623 = vadd.f32 %v2238, %v2622
    %v2624 = vpop.f32.mrb[0].mxu0
    %2625 = vmatprep.mubr.f32.mxu0 0.0
    %2626 = vmatmul.mubr.f32.gmra.mrb[0].mxu0 %v1904
    %v2627 = vpop.f32.mrb[0].mxu0
    %v2628 = vadd.f32 %v2243, %v2627
    %v2629 = vpop.f32.mrb[0].mxu0
    %2630 = vmatprep.mubr.f32.mxu0 0.0
    %2631 = vmatmul.mubr.f32.gmra.mrb[0].mxu0 %v1905
    %v2632 = vpop.f32.mrb[0].mxu0
    %v2633 = vadd.f32 %v2248, %v2632
    %v2634 = vpop.f32.mrb[0].mxu0
    %2635 = vmatprep.mubr.f32.mxu0 0.0
    %2636 = vmatmul.mubr.f32.gmra.mrb[0].mxu0 %v1906
    %v2637 = vpop.f32.mrb[0].mxu0
    %v2638 = vadd.f32 %v2253, %v2637
    %v2639 = vpop.f32.mrb[0].mxu0
    %2640 = vmatprep.mubr.f32.mxu0 0.0
    %2641 = vmatmul.mubr.f32.gmra.mrb[0].mxu0 %v1907
    %v2642 = vpop.f32.mrb[0].mxu0
    %v2643 = vadd.f32 %v2258, %v2642
    %v2644 = vpop.f32.mrb[0].mxu0
    %2645 = vmatprep.mubr.f32.mxu0 0.0
    %2646 = vmatmul.mubr.f32.gmra.mrb[0].mxu0 %v1908
    %v2647 = vpop.f32.mrb[0].mxu0
    %v2648 = vadd.f32 %v2263, %v2647
    %v2649 = vpop.f32.mrb[0].mxu0
    %2650 = vmatprep.mubr.f32.mxu0 0.0
    %2651 = vmatmul.mubr.f32.gmra.mrb[0].mxu0 %v1909
    %v2652 = vpop.f32.mrb[0].mxu0
    %v2653 = vadd.f32 %v2268, %v2652
    %v2654 = vpop.f32.mrb[0].mxu0
    %2655 = vmatprep.mubr.f32.mxu0 0.0
    %2656 = vmatmul.mubr.f32.gmra.mrb[0].mxu0 %v1910
    %v2657 = vpop.f32.mrb[0].mxu0
    %v2658 = vadd.f32 %v2273, %v2657
    %v2659 = vpop.f32.mrb[0].mxu0
    %2660 = vmatprep.mubr.f32.mxu0 0.0
    %2661 = vmatmul.mubr.f32.gmra.mrb[0].mxu0 %v1911
    %v2662 = vpop.f32.mrb[0].mxu0
    %v2663 = vadd.f32 %v2278, %v2662
    %v2664 = vpop.f32.mrb[0].mxu0
    %2665 = vmatprep.mubr.f32.mxu0 0.0
    %2666 = vmatmul.mubr.f32.gmra.mrb[0].mxu0 %v1912
    %v2667 = vpop.f32.mrb[0].mxu0
    %v2668 = vadd.f32 %v2283, %v2667
    %v2669 = vpop.f32.mrb[0].mxu0
    %2670 = vmatprep.mubr.f32.mxu0 0.0
    %2671 = vmatmul.mubr.f32.gmra.mrb[0].mxu0 %v1913
    %v2672 = vpop.f32.mrb[0].mxu0
    %v2673 = vadd.f32 %v2288, %v2672
    %v2674 = vpop.f32.mrb[0].mxu0
    %2675 = vmatprep.mubr.f32.mxu0 0.0
    %2676 = vmatmul.mubr.f32.gmra.mrb[0].mxu0 %v1914
    %v2677 = vpop.f32.mrb[0].mxu0
    %v2678 = vadd.f32 %v2293, %v2677
    %v2679 = vpop.f32.mrb[0].mxu0
    %2680 = vmatprep.mubr.f32.mxu0 0.0
    %2681 = vmatmul.mubr.f32.gmra.mrb[0].mxu0 %v1915
    %v2682 = vpop.f32.mrb[0].mxu0
    %v2683 = vadd.f32 %v2298, %v2682
    %v2684 = vpop.f32.mrb[0].mxu0
    %2685 = vmatprep.mubr.f32.mxu0 0.0
    %2686 = vmatmul.mubr.f32.gmra.mrb[0].mxu0 %v1916
    %v2687 = vpop.f32.mrb[0].mxu0
    %v2688 = vadd.f32 %v2303, %v2687
    %v2689 = vpop.f32.mrb[0].mxu0
    %2690 = vmatprep.mubr.f32.mxu0 0.0
    %2691 = vmatmul.mubr.f32.gmra.mrb[0].mxu0 %v1917
    %v2692 = vpop.f32.mrb[0].mxu0
    %v2693 = vadd.f32 %v2308, %v2692
    %v2694 = vpop.f32.mrb[0].mxu0
    %2695 = vmatprep.mubr.f32.mxu0 0.0
    %2696 = vmatmul.mubr.f32.gmra.mrb[0].mxu0 %v1918
    %v2697 = vpop.f32.mrb[0].mxu0
    %v2698 = vadd.f32 %v2313, %v2697
    %v2699 = vpop.f32.mrb[0].mxu0
    %2700 = vmatprep.mubr.f32.mxu0 0.0
    %2701 = vmatmul.mubr.f32.gmra.mrb[0].mxu0 %v1919
    %v2702 = vpop.f32.mrb[0].mxu0
    %v2703 = vadd.f32 %v2318, %v2702
    %v2704 = vpop.f32.mrb[0].mxu0
    %2705 = vmatprep.mubr.f32.mxu0 0.0
    %2706 = vmatmul.mubr.f32.gmra.mrb[0].mxu0 %v1920
    %v2707 = vpop.f32.mrb[0].mxu0
    %v2708 = vadd.f32 %v2323, %v2707
    %v2709 = vpop.f32.mrb[0].mxu0
    %2710 = vmatprep.mubr.f32.mxu0 0.0
    %2711 = vmatmul.mubr.f32.gmra.mrb[0].mxu0 %v1921
    %v2712 = vpop.f32.mrb[0].mxu0
    %v2713 = vadd.f32 %v2328, %v2712
    %v2714 = vpop.f32.mrb[0].mxu0
    %2715 = vmatprep.mubr.f32.mxu0 0.0
    %2716 = vmatmul.mubr.f32.gmra.mrb[0].mxu0 %v1922
    %v2717 = vpop.f32.mrb[0].mxu0
    %v2718 = vadd.f32 %v2333, %v2717
    %v2719 = vpop.f32.mrb[0].mxu0
    %2720 = vmatprep.mubr.f32.mxu0 0.0
    %2721 = vmatmul.mubr.f32.gmra.mrb[0].mxu0 %v1923
    %v2722 = vpop.f32.mrb[0].mxu0
    %v2723 = vadd.f32 %v2338, %v2722
    %v2724 = vpop.f32.mrb[0].mxu0
    %2725 = vmatprep.mubr.f32.mxu0 0.0
    %2726 = vmatmul.mubr.f32.gmra.mrb[0].mxu0 %v1924
    %v2727 = vpop.f32.mrb[0].mxu0
    %v2728 = vadd.f32 %v2343, %v2727
    %v2729 = vpop.f32.mrb[0].mxu0
    %2730 = vmatprep.mubr.f32.mxu0 0.0
    %2731 = vmatmul.mubr.f32.gmra.mrb[0].mxu0 %v1925
    %v2732 = vpop.f32.mrb[0].mxu0
    %v2733 = vadd.f32 %v2348, %v2732
    %v2734 = vpop.f32.mrb[0].mxu0
    %2735 = vmatprep.mubr.f32.mxu0 0.0
    %2736 = vmatmul.mubr.f32.gmra.mrb[0].mxu0 %v1926
    %v2737 = vpop.f32.mrb[0].mxu0
    %v2738 = vadd.f32 %v2353, %v2737
    %v2739 = vpop.f32.mrb[0].mxu0
    %2740 = vmatprep.mubr.f32.mxu0 0.0
    %2741 = vmatmul.mubr.f32.gmra.mrb[0].mxu0 %v1927
    %v2742 = vpop.f32.mrb[0].mxu0
    %v2743 = vadd.f32 %v2358, %v2742
    %v2744 = vpop.f32.mrb[0].mxu0
    %2745 = vmatprep.mubr.f32.mxu0 0.0
    %2746 = vmatmul.mubr.f32.gmra.mrb[0].mxu0 %v1928
    %v2747 = vpop.f32.mrb[0].mxu0
    %v2748 = vadd.f32 %v2363, %v2747
    %v2749 = vpop.f32.mrb[0].mxu0
    %2750 = vmatprep.mubr.f32.mxu0 0.0
    %2751 = vmatmul.mubr.f32.gmra.mrb[0].mxu0 %v1929
    %v2752 = vpop.f32.mrb[0].mxu0
    %v2753 = vadd.f32 %v2368, %v2752
    %v2754 = vpop.f32.mrb[0].mxu0
    %2755 = vmatprep.mubr.f32.mxu0 0.0
    %2756 = vmatmul.mubr.f32.gmra.mrb[0].mxu0 %v1930
    %v2757 = vpop.f32.mrb[0].mxu0
    %v2758 = vadd.f32 %v2373, %v2757
    %v2759 = vpop.f32.mrb[0].mxu0
    %2760 = vmatprep.mubr.f32.mxu0 0.0
    %2761 = vmatmul.mubr.f32.gmra.mrb[0].mxu0 %v1931
    %v2762 = vpop.f32.mrb[0].mxu0
    %v2763 = vadd.f32 %v2378, %v2762
    %v2764 = vpop.f32.mrb[0].mxu0
    %2765 = vmatprep.mubr.f32.mxu0 0.0
    %2766 = vmatmul.mubr.f32.gmra.mrb[0].mxu0 %v1932
    %v2767 = vpop.f32.mrb[0].mxu0
    %v2768 = vadd.f32 %v2383, %v2767
    %v2769 = vpop.f32.mrb[0].mxu0
    %2770 = vmatprep.mubr.f32.mxu0 0.0
    %2771 = vmatmul.mubr.f32.gmra.mrb[0].mxu0 %v1933
    %v2772 = vpop.f32.mrb[0].mxu0
    %v2773 = vadd.f32 %v2388, %v2772
    %v2774 = vpop.f32.mrb[0].mxu0
    %2775 = vmatprep.mubr.f32.mxu0 0.0
    %2776 = vmatmul.mubr.f32.gmra.mrb[0].mxu0 %v1934
    %v2777 = vpop.f32.mrb[0].mxu0
    %v2778 = vadd.f32 %v2393, %v2777
    %v2779 = vpop.f32.mrb[0].mxu0
    %2780 = vmatprep.mubr.f32.mxu0 0.0
    %2781 = vmatmul.mubr.f32.gmra.mrb[0].mxu0 %v1935
    %v2782 = vpop.f32.mrb[0].mxu0
    %v2783 = vadd.f32 %v2398, %v2782
    %v2784 = vpop.f32.mrb[0].mxu0
    %2785 = vmatprep.mubr.f32.mxu0 0.0
    %2786 = vmatmul.mubr.f32.gmra.mrb[0].mxu0 %v1936
    %v2787 = vpop.f32.mrb[0].mxu0
    %v2788 = vadd.f32 %v2403, %v2787
    %v2789 = vpop.f32.mrb[0].mxu0
    %2790 = vmatprep.mubr.f32.mxu0 0.0
    %2791 = vmatmul.mubr.f32.gmra.mrb[0].mxu0 %v1937
    %v2792 = vpop.f32.mrb[0].mxu0
    %v2793 = vadd.f32 %v2408, %v2792
    %v2794 = vpop.f32.mrb[0].mxu0
    %2795 = vmatprep.mubr.f32.mxu0 0.0
    %2796 = vmatmul.mubr.f32.gmra.mrb[0].mxu0 %v1938
    %v2797 = vpop.f32.mrb[0].mxu0
    %v2798 = vadd.f32 %v2413, %v2797
    %v2799 = vpop.f32.mrb[0].mxu0
    %2800 = vmatprep.mubr.f32.mxu0 0.0
    %2801 = vmatmul.mubr.f32.gmra.mrb[0].mxu0 %v1939
    %v2802 = vpop.f32.mrb[0].mxu0
    %v2803 = vadd.f32 %v2418, %v2802
    %v2804 = vpop.f32.mrb[0].mxu0
    %2805 = vmatprep.mubr.f32.mxu0 0.0
    %2806 = vmatmul.mubr.f32.gmra.mrb[0].mxu0 %v1940
    %v2807 = vpop.f32.mrb[0].mxu0
    %v2808 = vadd.f32 %v2423, %v2807
    %v2809 = vpop.f32.mrb[0].mxu0
    %2810 = vmatprep.mubr.f32.mxu0 0.0
    %2811 = vmatmul.mubr.f32.gmra.mrb[0].mxu0 %v1941
    %v2812 = vpop.f32.mrb[0].mxu0
    %v2813 = vadd.f32 %v2428, %v2812
    %v2814 = vpop.f32.mrb[0].mxu0
    %2815 = vmatprep.mubr.f32.mxu0 0.0
    %2816 = vmatmul.mubr.f32.gmra.mrb[0].mxu0 %v1942
    %v2817 = vpop.f32.mrb[0].mxu0
    %v2818 = vadd.f32 %v2433, %v2817
    %v2819 = vpop.f32.mrb[0].mxu0
    %2820 = vmatprep.mubr.f32.mxu0 0.0
    %2821 = vmatmul.mubr.f32.gmra.mrb[0].mxu0 %v1943
    %v2822 = vpop.f32.mrb[0].mxu0
    %v2823 = vadd.f32 %v2438, %v2822
    %v2824 = vpop.f32.mrb[0].mxu0
    %2825 = vmatprep.mubr.f32.mxu0 0.0
    %2826 = vmatmul.mubr.f32.gmra.mrb[0].mxu0 %v1944
    %v2827 = vpop.f32.mrb[0].mxu0
    %v2828 = vadd.f32 %v2443, %v2827
    %v2829 = vpop.f32.mrb[0].mxu0
    %2830 = vmatprep.mubr.f32.mxu0 0.0
    %2831 = vmatmul.mubr.f32.gmra.mrb[0].mxu0 %v1945
    %v2832 = vpop.f32.mrb[0].mxu0
    %v2833 = vadd.f32 %v2448, %v2832
    %v2834 = vpop.f32.mrb[0].mxu0
    %2835 = vmatprep.mubr.f32.mxu0 0.0
    %2836 = vmatmul.mubr.f32.gmra.mrb[0].mxu0 %v1946
    %v2837 = vpop.f32.mrb[0].mxu0
    %v2838 = vadd.f32 %v2453, %v2837
    %v2839 = vpop.f32.mrb[0].mxu0
    %2840 = vmatprep.mubr.f32.mxu0 0.0
    %2841 = vmatmul.mubr.f32.gmra.mrb[0].mxu0 %v1947
    %v2842 = vpop.f32.mrb[0].mxu0
    %v2843 = vadd.f32 %v2458, %v2842
    %v2844 = vpop.f32.mrb[0].mxu0
    %2845 = vmatprep.mubr.f32.mxu0 0.0
    %2846 = vmatmul.mubr.f32.gmra.mrb[0].mxu0 %v1948
    %v2847 = vpop.f32.mrb[0].mxu0
    %v2848 = vadd.f32 %v2463, %v2847
    %v2849 = vpop.f32.mrb[0].mxu0
    %2850 = vmatprep.mubr.f32.mxu0 0.0
    %2851 = vmatmul.mubr.f32.gmra.mrb[0].mxu0 %v1949
    %v2852 = vpop.f32.mrb[0].mxu0
    %v2853 = vadd.f32 %v2468, %v2852
    %v2854 = vpop.f32.mrb[0].mxu0
    %2855 = vmatprep.mubr.f32.mxu0 0.0
    %2856 = vmatmul.mubr.f32.gmra.mrb[0].mxu0 %v1950
    %v2857 = vpop.f32.mrb[0].mxu0
    %v2858 = vadd.f32 %v2473, %v2857
    %v2859 = vpop.f32.mrb[0].mxu0
    %2860 = vmatprep.mubr.f32.mxu0 0.0
    %2861 = vmatmul.mubr.f32.gmra.mrb[0].mxu0 %v1951
    %v2862 = vpop.f32.mrb[0].mxu0
    %v2863 = vadd.f32 %v2478, %v2862
    %v2864 = vpop.f32.mrb[0].mxu0
    %2865 = vmatprep.mubr.f32.mxu0 0.0
    %2866 = vmatmul.mubr.f32.gmra.mrb[0].mxu0 %v1952
    %v2867 = vpop.f32.mrb[0].mxu0
    %v2868 = vadd.f32 %v2483, %v2867
    %v2869 = vpop.f32.mrb[0].mxu0
    %2870 = vmatprep.mubr.f32.mxu0 0.0
    %2871 = vmatmul.mubr.f32.gmra.mrb[0].mxu0 %v1953
    %v2872 = vpop.f32.mrb[0].mxu0
    %v2873 = vadd.f32 %v2488, %v2872
    %v2874 = vpop.f32.mrb[0].mxu0
    %2875 = vmatprep.mubr.f32.mxu0 0.0
    %2876 = vmatmul.mubr.f32.gmra.mrb[0].mxu0 %v1954
    %v2877 = vpop.f32.mrb[0].mxu0
    %v2878 = vadd.f32 %v2493, %v2877
    %v2879 = vpop.f32.mrb[0].mxu0
    %2880 = vmatprep.mubr.f32.mxu0 0.0
    %2881 = vmatmul.mubr.f32.gmra.mrb[0].mxu0 %v1955
    %v2882 = vpop.f32.mrb[0].mxu0
    %v2883 = vadd.f32 %v2498, %v2882
    %v2884 = vpop.f32.mrb[0].mxu0
    %2885 = vdwg.mxu0
    %v2886 = vld [vmem:[%s5] sm:$0x1]
    %v2888 = vlaneseq
    %v2889 = vshrl.u32 %v2888, 7
    %v2890 = vsub.s32 0, %v2889
    %v2891 = vrot.slane %v2886, %v2890
    %v2893 = vadd.f32 %v2568, %v2891
    %v2894 = vadd.f32 %v2573, %v2891
    %v2895 = vadd.f32 %v2578, %v2891
    %v2896 = vadd.f32 %v2583, %v2891
    %v2897 = vadd.f32 %v2588, %v2891
    %v2898 = vadd.f32 %v2593, %v2891
    %v2899 = vadd.f32 %v2598, %v2891
    %v2900 = vadd.f32 %v2603, %v2891
    %v2901 = vadd.f32 %v2608, %v2891
    %v2902 = vadd.f32 %v2613, %v2891
    %v2903 = vadd.f32 %v2618, %v2891
    %v2904 = vadd.f32 %v2623, %v2891
    %v2905 = vadd.f32 %v2628, %v2891
    %v2906 = vadd.f32 %v2633, %v2891
    %v2907 = vadd.f32 %v2638, %v2891
    %v2908 = vadd.f32 %v2643, %v2891
    %v2909 = vadd.f32 %v2648, %v2891
    %v2910 = vadd.f32 %v2653, %v2891
    %v2911 = vadd.f32 %v2658, %v2891
    %v2912 = vadd.f32 %v2663, %v2891
    %v2913 = vadd.f32 %v2668, %v2891
    %v2914 = vadd.f32 %v2673, %v2891
    %v2915 = vadd.f32 %v2678, %v2891
    %v2916 = vadd.f32 %v2683, %v2891
    %v2917 = vadd.f32 %v2688, %v2891
    %v2918 = vadd.f32 %v2693, %v2891
    %v2919 = vadd.f32 %v2698, %v2891
    %v2920 = vadd.f32 %v2703, %v2891
    %v2921 = vadd.f32 %v2708, %v2891
    %v2922 = vadd.f32 %v2713, %v2891
    %v2923 = vadd.f32 %v2718, %v2891
    %v2924 = vadd.f32 %v2723, %v2891
    %v2925 = vadd.f32 %v2728, %v2891
    %v2926 = vadd.f32 %v2733, %v2891
    %v2927 = vadd.f32 %v2738, %v2891
    %v2928 = vadd.f32 %v2743, %v2891
    %v2929 = vadd.f32 %v2748, %v2891
    %v2930 = vadd.f32 %v2753, %v2891
    %v2931 = vadd.f32 %v2758, %v2891
    %v2932 = vadd.f32 %v2763, %v2891
    %v2933 = vadd.f32 %v2768, %v2891
    %v2934 = vadd.f32 %v2773, %v2891
    %v2935 = vadd.f32 %v2778, %v2891
    %v2936 = vadd.f32 %v2783, %v2891
    %v2937 = vadd.f32 %v2788, %v2891
    %v2938 = vadd.f32 %v2793, %v2891
    %v2939 = vadd.f32 %v2798, %v2891
    %v2940 = vadd.f32 %v2803, %v2891
    %v2941 = vadd.f32 %v2808, %v2891
    %v2942 = vadd.f32 %v2813, %v2891
    %v2943 = vadd.f32 %v2818, %v2891
    %v2944 = vadd.f32 %v2823, %v2891
    %v2945 = vadd.f32 %v2828, %v2891
    %v2946 = vadd.f32 %v2833, %v2891
    %v2947 = vadd.f32 %v2838, %v2891
    %v2948 = vadd.f32 %v2843, %v2891
    %v2949 = vadd.f32 %v2848, %v2891
    %v2950 = vadd.f32 %v2853, %v2891
    %v2951 = vadd.f32 %v2858, %v2891
    %v2952 = vadd.f32 %v2863, %v2891
    %v2953 = vadd.f32 %v2868, %v2891
    %v2954 = vadd.f32 %v2873, %v2891
    %v2955 = vadd.f32 %v2878, %v2891
    %v2956 = vadd.f32 %v2883, %v2891
    %vm2957 = vcmp.ge.f32.partialorder %v2893, 0.0
    %vm2958 = vcmp.ge.f32.partialorder %v2894, 0.0
    %vm2959 = vcmp.ge.f32.partialorder %v2895, 0.0
    %vm2960 = vcmp.ge.f32.partialorder %v2896, 0.0
    %vm2961 = vcmp.ge.f32.partialorder %v2897, 0.0
    %vm2962 = vcmp.ge.f32.partialorder %v2898, 0.0
    %vm2963 = vcmp.ge.f32.partialorder %v2899, 0.0
    %vm2964 = vcmp.ge.f32.partialorder %v2900, 0.0
    %vm2965 = vcmp.ge.f32.partialorder %v2901, 0.0
    %vm2966 = vcmp.ge.f32.partialorder %v2902, 0.0
    %vm2967 = vcmp.ge.f32.partialorder %v2903, 0.0
    %vm2968 = vcmp.ge.f32.partialorder %v2904, 0.0
    %vm2969 = vcmp.ge.f32.partialorder %v2905, 0.0
    %vm2970 = vcmp.ge.f32.partialorder %v2906, 0.0
    %vm2971 = vcmp.ge.f32.partialorder %v2907, 0.0
    %vm2972 = vcmp.ge.f32.partialorder %v2908, 0.0
    %vm2973 = vcmp.ge.f32.partialorder %v2909, 0.0
    %vm2974 = vcmp.ge.f32.partialorder %v2910, 0.0
    %vm2975 = vcmp.ge.f32.partialorder %v2911, 0.0
    %vm2976 = vcmp.ge.f32.partialorder %v2912, 0.0
    %vm2977 = vcmp.ge.f32.partialorder %v2913, 0.0
    %vm2978 = vcmp.ge.f32.partialorder %v2914, 0.0
    %vm2979 = vcmp.ge.f32.partialorder %v2915, 0.0
    %vm2980 = vcmp.ge.f32.partialorder %v2916, 0.0
    %vm2981 = vcmp.ge.f32.partialorder %v2917, 0.0
    %vm2982 = vcmp.ge.f32.partialorder %v2918, 0.0
    %vm2983 = vcmp.ge.f32.partialorder %v2919, 0.0
    %vm2984 = vcmp.ge.f32.partialorder %v2920, 0.0
    %vm2985 = vcmp.ge.f32.partialorder %v2921, 0.0
    %vm2986 = vcmp.ge.f32.partialorder %v2922, 0.0
    %vm2987 = vcmp.ge.f32.partialorder %v2923, 0.0
    %vm2988 = vcmp.ge.f32.partialorder %v2924, 0.0
    %vm2989 = vcmp.ge.f32.partialorder %v2925, 0.0
    %vm2990 = vcmp.ge.f32.partialorder %v2926, 0.0
    %vm2991 = vcmp.ge.f32.partialorder %v2927, 0.0
    %vm2992 = vcmp.ge.f32.partialorder %v2928, 0.0
    %vm2993 = vcmp.ge.f32.partialorder %v2929, 0.0
    %vm2994 = vcmp.ge.f32.partialorder %v2930, 0.0
    %vm2995 = vcmp.ge.f32.partialorder %v2931, 0.0
    %vm2996 = vcmp.ge.f32.partialorder %v2932, 0.0
    %vm2997 = vcmp.ge.f32.partialorder %v2933, 0.0
    %vm2998 = vcmp.ge.f32.partialorder %v2934, 0.0
    %vm2999 = vcmp.ge.f32.partialorder %v2935, 0.0
    %vm3000 = vcmp.ge.f32.partialorder %v2936, 0.0
    %vm3001 = vcmp.ge.f32.partialorder %v2937, 0.0
    %vm3002 = vcmp.ge.f32.partialorder %v2938, 0.0
    %vm3003 = vcmp.ge.f32.partialorder %v2939, 0.0
    %vm3004 = vcmp.ge.f32.partialorder %v2940, 0.0
    %vm3005 = vcmp.ge.f32.partialorder %v2941, 0.0
    %vm3006 = vcmp.ge.f32.partialorder %v2942, 0.0
    %vm3007 = vcmp.ge.f32.partialorder %v2943, 0.0
    %vm3008 = vcmp.ge.f32.partialorder %v2944, 0.0
    %vm3009 = vcmp.ge.f32.partialorder %v2945, 0.0
    %vm3010 = vcmp.ge.f32.partialorder %v2946, 0.0
    %vm3011 = vcmp.ge.f32.partialorder %v2947, 0.0
    %vm3012 = vcmp.ge.f32.partialorder %v2948, 0.0
    %vm3013 = vcmp.ge.f32.partialorder %v2949, 0.0
    %vm3014 = vcmp.ge.f32.partialorder %v2950, 0.0
    %vm3015 = vcmp.ge.f32.partialorder %v2951, 0.0
    %vm3016 = vcmp.ge.f32.partialorder %v2952, 0.0
    %vm3017 = vcmp.ge.f32.partialorder %v2953, 0.0
    %vm3018 = vcmp.ge.f32.partialorder %v2954, 0.0
    %vm3019 = vcmp.ge.f32.partialorder %v2955, 0.0
    %vm3020 = vcmp.ge.f32.partialorder %v2956, 0.0
    %v3021 = vmul.f32 %v2893, 0.2
    %v3022 = vmul.f32 %v2894, 0.2
    %v3023 = vmul.f32 %v2895, 0.2
    %v3024 = vmul.f32 %v2896, 0.2
    %v3025 = vmul.f32 %v2897, 0.2
    %v3026 = vmul.f32 %v2898, 0.2
    %v3027 = vmul.f32 %v2899, 0.2
    %v3028 = vmul.f32 %v2900, 0.2
    %v3029 = vmul.f32 %v2901, 0.2
    %v3030 = vmul.f32 %v2902, 0.2
    %v3031 = vmul.f32 %v2903, 0.2
    %v3032 = vmul.f32 %v2904, 0.2
    %v3033 = vmul.f32 %v2905, 0.2
    %v3034 = vmul.f32 %v2906, 0.2
    %v3035 = vmul.f32 %v2907, 0.2
    %v3036 = vmul.f32 %v2908, 0.2
    %v3037 = vmul.f32 %v2909, 0.2
    %v3038 = vmul.f32 %v2910, 0.2
    %v3039 = vmul.f32 %v2911, 0.2
    %v3040 = vmul.f32 %v2912, 0.2
    %v3041 = vmul.f32 %v2913, 0.2
    %v3042 = vmul.f32 %v2914, 0.2
    %v3043 = vmul.f32 %v2915, 0.2
    %v3044 = vmul.f32 %v2916, 0.2
    %v3045 = vmul.f32 %v2917, 0.2
    %v3046 = vmul.f32 %v2918, 0.2
    %v3047 = vmul.f32 %v2919, 0.2
    %v3048 = vmul.f32 %v2920, 0.2
    %v3049 = vmul.f32 %v2921, 0.2
    %v3050 = vmul.f32 %v2922, 0.2
    %v3051 = vmul.f32 %v2923, 0.2
    %v3052 = vmul.f32 %v2924, 0.2
    %v3053 = vmul.f32 %v2925, 0.2
    %v3054 = vmul.f32 %v2926, 0.2
    %v3055 = vmul.f32 %v2927, 0.2
    %v3056 = vmul.f32 %v2928, 0.2
    %v3057 = vmul.f32 %v2929, 0.2
    %v3058 = vmul.f32 %v2930, 0.2
    %v3059 = vmul.f32 %v2931, 0.2
    %v3060 = vmul.f32 %v2932, 0.2
    %v3061 = vmul.f32 %v2933, 0.2
    %v3062 = vmul.f32 %v2934, 0.2
    %v3063 = vmul.f32 %v2935, 0.2
    %v3064 = vmul.f32 %v2936, 0.2
    %v3065 = vmul.f32 %v2937, 0.2
    %v3066 = vmul.f32 %v2938, 0.2
    %v3067 = vmul.f32 %v2939, 0.2
    %v3068 = vmul.f32 %v2940, 0.2
    %v3069 = vmul.f32 %v2941, 0.2
    %v3070 = vmul.f32 %v2942, 0.2
    %v3071 = vmul.f32 %v2943, 0.2
    %v3072 = vmul.f32 %v2944, 0.2
    %v3073 = vmul.f32 %v2945, 0.2
    %v3074 = vmul.f32 %v2946, 0.2
    %v3075 = vmul.f32 %v2947, 0.2
    %v3076 = vmul.f32 %v2948, 0.2
    %v3077 = vmul.f32 %v2949, 0.2
    %v3078 = vmul.f32 %v2950, 0.2
    %v3079 = vmul.f32 %v2951, 0.2
    %v3080 = vmul.f32 %v2952, 0.2
    %v3081 = vmul.f32 %v2953, 0.2
    %v3082 = vmul.f32 %v2954, 0.2
    %v3083 = vmul.f32 %v2955, 0.2
    %v3084 = vmul.f32 %v2956, 0.2
    %v3085 = vsel %vm2957, %v2893, %v3021
    %v3086 = vsel %vm2958, %v2894, %v3022
    %v3087 = vsel %vm2959, %v2895, %v3023
    %v3088 = vsel %vm2960, %v2896, %v3024
    %v3089 = vsel %vm2961, %v2897, %v3025
    %v3090 = vsel %vm2962, %v2898, %v3026
    %v3091 = vsel %vm2963, %v2899, %v3027
    %v3092 = vsel %vm2964, %v2900, %v3028
    %v3093 = vsel %vm2965, %v2901, %v3029
    %v3094 = vsel %vm2966, %v2902, %v3030
    %v3095 = vsel %vm2967, %v2903, %v3031
    %v3096 = vsel %vm2968, %v2904, %v3032
    %v3097 = vsel %vm2969, %v2905, %v3033
    %v3098 = vsel %vm2970, %v2906, %v3034
    %v3099 = vsel %vm2971, %v2907, %v3035
    %v3100 = vsel %vm2972, %v2908, %v3036
    %v3101 = vsel %vm2973, %v2909, %v3037
    %v3102 = vsel %vm2974, %v2910, %v3038
    %v3103 = vsel %vm2975, %v2911, %v3039
    %v3104 = vsel %vm2976, %v2912, %v3040
    %v3105 = vsel %vm2977, %v2913, %v3041
    %v3106 = vsel %vm2978, %v2914, %v3042
    %v3107 = vsel %vm2979, %v2915, %v3043
    %v3108 = vsel %vm2980, %v2916, %v3044
    %v3109 = vsel %vm2981, %v2917, %v3045
    %v3110 = vsel %vm2982, %v2918, %v3046
    %v3111 = vsel %vm2983, %v2919, %v3047
    %v3112 = vsel %vm2984, %v2920, %v3048
    %v3113 = vsel %vm2985, %v2921, %v3049
    %v3114 = vsel %vm2986, %v2922, %v3050
    %v3115 = vsel %vm2987, %v2923, %v3051
    %v3116 = vsel %vm2988, %v2924, %v3052
    %v3117 = vsel %vm2989, %v2925, %v3053
    %v3118 = vsel %vm2990, %v2926, %v3054
    %v3119 = vsel %vm2991, %v2927, %v3055
    %v3120 = vsel %vm2992, %v2928, %v3056
    %v3121 = vsel %vm2993, %v2929, %v3057
    %v3122 = vsel %vm2994, %v2930, %v3058
    %v3123 = vsel %vm2995, %v2931, %v3059
    %v3124 = vsel %vm2996, %v2932, %v3060
    %v3125 = vsel %vm2997, %v2933, %v3061
    %v3126 = vsel %vm2998, %v2934, %v3062
    %v3127 = vsel %vm2999, %v2935, %v3063
    %v3128 = vsel %vm3000, %v2936, %v3064
    %v3129 = vsel %vm3001, %v2937, %v3065
    %v3130 = vsel %vm3002, %v2938, %v3066
    %v3131 = vsel %vm3003, %v2939, %v3067
    %v3132 = vsel %vm3004, %v2940, %v3068
    %v3133 = vsel %vm3005, %v2941, %v3069
    %v3134 = vsel %vm3006, %v2942, %v3070
    %v3135 = vsel %vm3007, %v2943, %v3071
    %v3136 = vsel %vm3008, %v2944, %v3072
    %v3137 = vsel %vm3009, %v2945, %v3073
    %v3138 = vsel %vm3010, %v2946, %v3074
    %v3139 = vsel %vm3011, %v2947, %v3075
    %v3140 = vsel %vm3012, %v2948, %v3076
    %v3141 = vsel %vm3013, %v2949, %v3077
    %v3142 = vsel %vm3014, %v2950, %v3078
    %v3143 = vsel %vm3015, %v2951, %v3079
    %v3144 = vsel %vm3016, %v2952, %v3080
    %v3145 = vsel %vm3017, %v2953, %v3081
    %v3146 = vsel %vm3018, %v2954, %v3082
    %v3147 = vsel %vm3019, %v2955, %v3083
    %v3148 = vsel %vm3020, %v2956, %v3084
    %v3149 = vmul.f32 %v3085, %v3085
    %v3150 = vmul.f32 %v3086, %v3086
    %v3151 = vmul.f32 %v3087, %v3087
    %v3152 = vmul.f32 %v3088, %v3088
    %v3153 = vmul.f32 %v3089, %v3089
    %v3154 = vmul.f32 %v3090, %v3090
    %v3155 = vmul.f32 %v3091, %v3091
    %v3156 = vmul.f32 %v3092, %v3092
    %v3157 = vmul.f32 %v3093, %v3093
    %v3158 = vmul.f32 %v3094, %v3094
    %v3159 = vmul.f32 %v3095, %v3095
    %v3160 = vmul.f32 %v3096, %v3096
    %v3161 = vmul.f32 %v3097, %v3097
    %v3162 = vmul.f32 %v3098, %v3098
    %v3163 = vmul.f32 %v3099, %v3099
    %v3164 = vmul.f32 %v3100, %v3100
    %v3165 = vmul.f32 %v3101, %v3101
    %v3166 = vmul.f32 %v3102, %v3102
    %v3167 = vmul.f32 %v3103, %v3103
    %v3168 = vmul.f32 %v3104, %v3104
    %v3169 = vmul.f32 %v3105, %v3105
    %v3170 = vmul.f32 %v3106, %v3106
    %v3171 = vmul.f32 %v3107, %v3107
    %v3172 = vmul.f32 %v3108, %v3108
    %v3173 = vmul.f32 %v3109, %v3109
    %v3174 = vmul.f32 %v3110, %v3110
    %v3175 = vmul.f32 %v3111, %v3111
    %v3176 = vmul.f32 %v3112, %v3112
    %v3177 = vmul.f32 %v3113, %v3113
    %v3178 = vmul.f32 %v3114, %v3114
    %v3179 = vmul.f32 %v3115, %v3115
    %v3180 = vmul.f32 %v3116, %v3116
    %v3181 = vmul.f32 %v3117, %v3117
    %v3182 = vmul.f32 %v3118, %v3118
    %v3183 = vmul.f32 %v3119, %v3119
    %v3184 = vmul.f32 %v3120, %v3120
    %v3185 = vmul.f32 %v3121, %v3121
    %v3186 = vmul.f32 %v3122, %v3122
    %v3187 = vmul.f32 %v3123, %v3123
    %v3188 = vmul.f32 %v3124, %v3124
    %v3189 = vmul.f32 %v3125, %v3125
    %v3190 = vmul.f32 %v3126, %v3126
    %v3191 = vmul.f32 %v3127, %v3127
    %v3192 = vmul.f32 %v3128, %v3128
    %v3193 = vmul.f32 %v3129, %v3129
    %v3194 = vmul.f32 %v3130, %v3130
    %v3195 = vmul.f32 %v3131, %v3131
    %v3196 = vmul.f32 %v3132, %v3132
    %v3197 = vmul.f32 %v3133, %v3133
    %v3198 = vmul.f32 %v3134, %v3134
    %v3199 = vmul.f32 %v3135, %v3135
    %v3200 = vmul.f32 %v3136, %v3136
    %v3201 = vmul.f32 %v3137, %v3137
    %v3202 = vmul.f32 %v3138, %v3138
    %v3203 = vmul.f32 %v3139, %v3139
    %v3204 = vmul.f32 %v3140, %v3140
    %v3205 = vmul.f32 %v3141, %v3141
    %v3206 = vmul.f32 %v3142, %v3142
    %v3207 = vmul.f32 %v3143, %v3143
    %v3208 = vmul.f32 %v3144, %v3144
    %v3209 = vmul.f32 %v3145, %v3145
    %v3210 = vmul.f32 %v3146, %v3146
    %v3211 = vmul.f32 %v3147, %v3147
    %v3212 = vmul.f32 %v3148, %v3148
    %3213 = vadd.xlane.f32.xlu0 %v3149
    %v3214 = vpop.xlane.xlu0 %3213
    %3215 = vadd.xlane.f32.xlu0 %v3150
    %v3216 = vpop.xlane.xlu0 %3215
    %3217 = vadd.xlane.f32.xlu0 %v3151
    %v3218 = vpop.xlane.xlu0 %3217
    %3219 = vadd.xlane.f32.xlu0 %v3152
    %v3220 = vpop.xlane.xlu0 %3219
    %3221 = vadd.xlane.f32.xlu0 %v3153
    %v3222 = vpop.xlane.xlu0 %3221
    %3223 = vadd.xlane.f32.xlu0 %v3154
    %v3224 = vpop.xlane.xlu0 %3223
    %3225 = vadd.xlane.f32.xlu0 %v3155
    %v3226 = vpop.xlane.xlu0 %3225
    %3227 = vadd.xlane.f32.xlu0 %v3156
    %v3228 = vpop.xlane.xlu0 %3227
    %3229 = vadd.xlane.f32.xlu0 %v3157
    %v3230 = vpop.xlane.xlu0 %3229
    %3231 = vadd.xlane.f32.xlu0 %v3158
    %v3232 = vpop.xlane.xlu0 %3231
    %3233 = vadd.xlane.f32.xlu0 %v3159
    %v3234 = vpop.xlane.xlu0 %3233
    %3235 = vadd.xlane.f32.xlu0 %v3160
    %v3236 = vpop.xlane.xlu0 %3235
    %3237 = vadd.xlane.f32.xlu0 %v3161
    %v3238 = vpop.xlane.xlu0 %3237
    %3239 = vadd.xlane.f32.xlu0 %v3162
    %v3240 = vpop.xlane.xlu0 %3239
    %3241 = vadd.xlane.f32.xlu0 %v3163
    %v3242 = vpop.xlane.xlu0 %3241
    %3243 = vadd.xlane.f32.xlu0 %v3164
    %v3244 = vpop.xlane.xlu0 %3243
    %3245 = vadd.xlane.f32.xlu0 %v3165
    %v3246 = vpop.xlane.xlu0 %3245
    %3247 = vadd.xlane.f32.xlu0 %v3166
    %v3248 = vpop.xlane.xlu0 %3247
    %3249 = vadd.xlane.f32.xlu0 %v3167
    %v3250 = vpop.xlane.xlu0 %3249
    %3251 = vadd.xlane.f32.xlu0 %v3168
    %v3252 = vpop.xlane.xlu0 %3251
    %3253 = vadd.xlane.f32.xlu0 %v3169
    %v3254 = vpop.xlane.xlu0 %3253
    %3255 = vadd.xlane.f32.xlu0 %v3170
    %v3256 = vpop.xlane.xlu0 %3255
    %3257 = vadd.xlane.f32.xlu0 %v3171
    %v3258 = vpop.xlane.xlu0 %3257
    %3259 = vadd.xlane.f32.xlu0 %v3172
    %v3260 = vpop.xlane.xlu0 %3259
    %3261 = vadd.xlane.f32.xlu0 %v3173
    %v3262 = vpop.xlane.xlu0 %3261
    %3263 = vadd.xlane.f32.xlu0 %v3174
    %v3264 = vpop.xlane.xlu0 %3263
    %3265 = vadd.xlane.f32.xlu0 %v3175
    %v3266 = vpop.xlane.xlu0 %3265
    %3267 = vadd.xlane.f32.xlu0 %v3176
    %v3268 = vpop.xlane.xlu0 %3267
    %3269 = vadd.xlane.f32.xlu0 %v3177
    %v3270 = vpop.xlane.xlu0 %3269
    %3271 = vadd.xlane.f32.xlu0 %v3178
    %v3272 = vpop.xlane.xlu0 %3271
    %3273 = vadd.xlane.f32.xlu0 %v3179
    %v3274 = vpop.xlane.xlu0 %3273
    %3275 = vadd.xlane.f32.xlu0 %v3180
    %v3276 = vpop.xlane.xlu0 %3275
    %3277 = vadd.xlane.f32.xlu0 %v3181
    %v3278 = vpop.xlane.xlu0 %3277
    %3279 = vadd.xlane.f32.xlu0 %v3182
    %v3280 = vpop.xlane.xlu0 %3279
    %3281 = vadd.xlane.f32.xlu0 %v3183
    %v3282 = vpop.xlane.xlu0 %3281
    %3283 = vadd.xlane.f32.xlu0 %v3184
    %v3284 = vpop.xlane.xlu0 %3283
    %3285 = vadd.xlane.f32.xlu0 %v3185
    %v3286 = vpop.xlane.xlu0 %3285
    %3287 = vadd.xlane.f32.xlu0 %v3186
    %v3288 = vpop.xlane.xlu0 %3287
    %3289 = vadd.xlane.f32.xlu0 %v3187
    %v3290 = vpop.xlane.xlu0 %3289
    %3291 = vadd.xlane.f32.xlu0 %v3188
    %v3292 = vpop.xlane.xlu0 %3291
    %3293 = vadd.xlane.f32.xlu0 %v3189
    %v3294 = vpop.xlane.xlu0 %3293
    %3295 = vadd.xlane.f32.xlu0 %v3190
    %v3296 = vpop.xlane.xlu0 %3295
    %3297 = vadd.xlane.f32.xlu0 %v3191
    %v3298 = vpop.xlane.xlu0 %3297
    %3299 = vadd.xlane.f32.xlu0 %v3192
    %v3300 = vpop.xlane.xlu0 %3299
    %3301 = vadd.xlane.f32.xlu0 %v3193
    %v3302 = vpop.xlane.xlu0 %3301
    %3303 = vadd.xlane.f32.xlu0 %v3194
    %v3304 = vpop.xlane.xlu0 %3303
    %3305 = vadd.xlane.f32.xlu0 %v3195
    %v3306 = vpop.xlane.xlu0 %3305
    %3307 = vadd.xlane.f32.xlu0 %v3196
    %v3308 = vpop.xlane.xlu0 %3307
    %3309 = vadd.xlane.f32.xlu0 %v3197
    %v3310 = vpop.xlane.xlu0 %3309
    %3311 = vadd.xlane.f32.xlu0 %v3198
    %v3312 = vpop.xlane.xlu0 %3311
    %3313 = vadd.xlane.f32.xlu0 %v3199
    %v3314 = vpop.xlane.xlu0 %3313
    %3315 = vadd.xlane.f32.xlu0 %v3200
    %v3316 = vpop.xlane.xlu0 %3315
    %3317 = vadd.xlane.f32.xlu0 %v3201
    %v3318 = vpop.xlane.xlu0 %3317
    %3319 = vadd.xlane.f32.xlu0 %v3202
    %v3320 = vpop.xlane.xlu0 %3319
    %3321 = vadd.xlane.f32.xlu0 %v3203
    %v3322 = vpop.xlane.xlu0 %3321
    %3323 = vadd.xlane.f32.xlu0 %v3204
    %v3324 = vpop.xlane.xlu0 %3323
    %3325 = vadd.xlane.f32.xlu0 %v3205
    %v3326 = vpop.xlane.xlu0 %3325
    %3327 = vadd.xlane.f32.xlu0 %v3206
    %v3328 = vpop.xlane.xlu0 %3327
    %3329 = vadd.xlane.f32.xlu0 %v3207
    %v3330 = vpop.xlane.xlu0 %3329
    %3331 = vadd.xlane.f32.xlu0 %v3208
    %v3332 = vpop.xlane.xlu0 %3331
    %3333 = vadd.xlane.f32.xlu0 %v3209
    %v3334 = vpop.xlane.xlu0 %3333
    %3335 = vadd.xlane.f32.xlu0 %v3210
    %v3336 = vpop.xlane.xlu0 %3335
    %3337 = vadd.xlane.f32.xlu0 %v3211
    %v3338 = vpop.xlane.xlu0 %3337
    %3339 = vadd.xlane.f32.xlu0 %v3212
    %v3340 = vpop.xlane.xlu0 %3339
    %v3341 = vmax.f32 %v3214, 1e-24
    %v3342 = vmax.f32 %v3216, 1e-24
    %v3343 = vmax.f32 %v3218, 1e-24
    %v3344 = vmax.f32 %v3220, 1e-24
    %v3345 = vmax.f32 %v3222, 1e-24
    %v3346 = vmax.f32 %v3224, 1e-24
    %v3347 = vmax.f32 %v3226, 1e-24
    %v3348 = vmax.f32 %v3228, 1e-24
    %v3349 = vmax.f32 %v3230, 1e-24
    %v3350 = vmax.f32 %v3232, 1e-24
    %v3351 = vmax.f32 %v3234, 1e-24
    %v3352 = vmax.f32 %v3236, 1e-24
    %v3353 = vmax.f32 %v3238, 1e-24
    %v3354 = vmax.f32 %v3240, 1e-24
    %v3355 = vmax.f32 %v3242, 1e-24
    %v3356 = vmax.f32 %v3244, 1e-24
    %v3357 = vmax.f32 %v3246, 1e-24
    %v3358 = vmax.f32 %v3248, 1e-24
    %v3359 = vmax.f32 %v3250, 1e-24
    %v3360 = vmax.f32 %v3252, 1e-24
    %v3361 = vmax.f32 %v3254, 1e-24
    %v3362 = vmax.f32 %v3256, 1e-24
    %v3363 = vmax.f32 %v3258, 1e-24
    %v3364 = vmax.f32 %v3260, 1e-24
    %v3365 = vmax.f32 %v3262, 1e-24
    %v3366 = vmax.f32 %v3264, 1e-24
    %v3367 = vmax.f32 %v3266, 1e-24
    %v3368 = vmax.f32 %v3268, 1e-24
    %v3369 = vmax.f32 %v3270, 1e-24
    %v3370 = vmax.f32 %v3272, 1e-24
    %v3371 = vmax.f32 %v3274, 1e-24
    %v3372 = vmax.f32 %v3276, 1e-24
    %v3373 = vmax.f32 %v3278, 1e-24
    %v3374 = vmax.f32 %v3280, 1e-24
    %v3375 = vmax.f32 %v3282, 1e-24
    %v3376 = vmax.f32 %v3284, 1e-24
    %v3377 = vmax.f32 %v3286, 1e-24
    %v3378 = vmax.f32 %v3288, 1e-24
    %v3379 = vmax.f32 %v3290, 1e-24
    %v3380 = vmax.f32 %v3292, 1e-24
    %v3381 = vmax.f32 %v3294, 1e-24
    %v3382 = vmax.f32 %v3296, 1e-24
    %v3383 = vmax.f32 %v3298, 1e-24
    %v3384 = vmax.f32 %v3300, 1e-24
    %v3385 = vmax.f32 %v3302, 1e-24
    %v3386 = vmax.f32 %v3304, 1e-24
    %v3387 = vmax.f32 %v3306, 1e-24
    %v3388 = vmax.f32 %v3308, 1e-24
    %v3389 = vmax.f32 %v3310, 1e-24
    %v3390 = vmax.f32 %v3312, 1e-24
    %v3391 = vmax.f32 %v3314, 1e-24
    %v3392 = vmax.f32 %v3316, 1e-24
    %v3393 = vmax.f32 %v3318, 1e-24
    %v3394 = vmax.f32 %v3320, 1e-24
    %v3395 = vmax.f32 %v3322, 1e-24
    %v3396 = vmax.f32 %v3324, 1e-24
    %v3397 = vmax.f32 %v3326, 1e-24
    %v3398 = vmax.f32 %v3328, 1e-24
    %v3399 = vmax.f32 %v3330, 1e-24
    %v3400 = vmax.f32 %v3332, 1e-24
    %v3401 = vmax.f32 %v3334, 1e-24
    %v3402 = vmax.f32 %v3336, 1e-24
    %v3403 = vmax.f32 %v3338, 1e-24
    %v3404 = vmax.f32 %v3340, 1e-24
    %v3405 = vrsqrt.pop %v3341
    %v3406 = vrsqrt.pop %v3342
    %v3407 = vrsqrt.pop %v3343
    %v3408 = vrsqrt.pop %v3344
    %v3409 = vrsqrt.pop %v3345
    %v3410 = vrsqrt.pop %v3346
    %v3411 = vrsqrt.pop %v3347
    %v3412 = vrsqrt.pop %v3348
    %v3413 = vrsqrt.pop %v3349
    %v3414 = vrsqrt.pop %v3350
    %v3415 = vrsqrt.pop %v3351
    %v3416 = vrsqrt.pop %v3352
    %v3417 = vrsqrt.pop %v3353
    %v3418 = vrsqrt.pop %v3354
    %v3419 = vrsqrt.pop %v3355
    %v3420 = vrsqrt.pop %v3356
    %v3421 = vrsqrt.pop %v3357
    %v3422 = vrsqrt.pop %v3358
    %v3423 = vrsqrt.pop %v3359
    %v3424 = vrsqrt.pop %v3360
    %v3425 = vrsqrt.pop %v3361
    %v3426 = vrsqrt.pop %v3362
    %v3427 = vrsqrt.pop %v3363
    %v3428 = vrsqrt.pop %v3364
    %v3429 = vrsqrt.pop %v3365
    %v3430 = vrsqrt.pop %v3366
    %v3431 = vrsqrt.pop %v3367
    %v3432 = vrsqrt.pop %v3368
    %v3433 = vrsqrt.pop %v3369
    %v3434 = vrsqrt.pop %v3370
    %v3435 = vrsqrt.pop %v3371
    %v3436 = vrsqrt.pop %v3372
    %v3437 = vrsqrt.pop %v3373
    %v3438 = vrsqrt.pop %v3374
    %v3439 = vrsqrt.pop %v3375
    %v3440 = vrsqrt.pop %v3376
    %v3441 = vrsqrt.pop %v3377
    %v3442 = vrsqrt.pop %v3378
    %v3443 = vrsqrt.pop %v3379
    %v3444 = vrsqrt.pop %v3380
    %v3445 = vrsqrt.pop %v3381
    %v3446 = vrsqrt.pop %v3382
    %v3447 = vrsqrt.pop %v3383
    %v3448 = vrsqrt.pop %v3384
    %v3449 = vrsqrt.pop %v3385
    %v3450 = vrsqrt.pop %v3386
    %v3451 = vrsqrt.pop %v3387
    %v3452 = vrsqrt.pop %v3388
    %v3453 = vrsqrt.pop %v3389
    %v3454 = vrsqrt.pop %v3390
    %v3455 = vrsqrt.pop %v3391
    %v3456 = vrsqrt.pop %v3392
    %v3457 = vrsqrt.pop %v3393
    %v3458 = vrsqrt.pop %v3394
    %v3459 = vrsqrt.pop %v3395
    %v3460 = vrsqrt.pop %v3396
    %v3461 = vrsqrt.pop %v3397
    %v3462 = vrsqrt.pop %v3398
    %v3463 = vrsqrt.pop %v3399
    %v3464 = vrsqrt.pop %v3400
    %v3465 = vrsqrt.pop %v3401
    %v3466 = vrsqrt.pop %v3402
    %v3467 = vrsqrt.pop %v3403
    %v3468 = vrsqrt.pop %v3404
    %3469 = vst [vmem:[%s6] sm:$0xff] %v3085
    %3470 = vst [vmem:[%s6 + $0x8] sm:$0xff] %v3086
    %3471 = vst [vmem:[%s6 + $0x10] sm:$0xff] %v3087
    %3472 = vst [vmem:[%s6 + $0x18] sm:$0xff] %v3088
    %3473 = vst [vmem:[%s6 + $0x20] sm:$0xff] %v3089
    %3474 = vst [vmem:[%s6 + $0x28] sm:$0xff] %v3090
    %3475 = vst [vmem:[%s6 + $0x30] sm:$0xff] %v3091
    %3476 = vst [vmem:[%s6 + $0x38] sm:$0xff] %v3092
    %3477 = vst [vmem:[%s6 + $0x40] sm:$0xff] %v3093
    %3478 = vst [vmem:[%s6 + $0x48] sm:$0xff] %v3094
    %3479 = vst [vmem:[%s6 + $0x50] sm:$0xff] %v3095
    %3480 = vst [vmem:[%s6 + $0x58] sm:$0xff] %v3096
    %3481 = vst [vmem:[%s6 + $0x60] sm:$0xff] %v3097
    %3482 = vst [vmem:[%s6 + $0x68] sm:$0xff] %v3098
    %3483 = vst [vmem:[%s6 + $0x70] sm:$0xff] %v3099
    %3484 = vst [vmem:[%s6 + $0x78] sm:$0xff] %v3100
    %3485 = vst [vmem:[%s6 + $0x80] sm:$0xff] %v3101
    %3486 = vst [vmem:[%s6 + $0x88] sm:$0xff] %v3102
    %3487 = vst [vmem:[%s6 + $0x90] sm:$0xff] %v3103
    %3488 = vst [vmem:[%s6 + $0x98] sm:$0xff] %v3104
    %3489 = vst [vmem:[%s6 + $0xa0] sm:$0xff] %v3105
    %3490 = vst [vmem:[%s6 + $0xa8] sm:$0xff] %v3106
    %3491 = vst [vmem:[%s6 + $0xb0] sm:$0xff] %v3107
    %3492 = vst [vmem:[%s6 + $0xb8] sm:$0xff] %v3108
    %3493 = vst [vmem:[%s6 + $0xc0] sm:$0xff] %v3109
    %3494 = vst [vmem:[%s6 + $0xc8] sm:$0xff] %v3110
    %3495 = vst [vmem:[%s6 + $0xd0] sm:$0xff] %v3111
    %3496 = vst [vmem:[%s6 + $0xd8] sm:$0xff] %v3112
    %3497 = vst [vmem:[%s6 + $0xe0] sm:$0xff] %v3113
    %3498 = vst [vmem:[%s6 + $0xe8] sm:$0xff] %v3114
    %3499 = vst [vmem:[%s6 + $0xf0] sm:$0xff] %v3115
    %3500 = vst [vmem:[%s6 + $0xf8] sm:$0xff] %v3116
    %3501 = vst [vmem:[%s6 + $0x100] sm:$0xff] %v3117
    %3502 = vst [vmem:[%s6 + $0x108] sm:$0xff] %v3118
    %3503 = vst [vmem:[%s6 + $0x110] sm:$0xff] %v3119
    %3504 = vst [vmem:[%s6 + $0x118] sm:$0xff] %v3120
    %3505 = vst [vmem:[%s6 + $0x120] sm:$0xff] %v3121
    %3506 = vst [vmem:[%s6 + $0x128] sm:$0xff] %v3122
    %3507 = vst [vmem:[%s6 + $0x130] sm:$0xff] %v3123
    %3508 = vst [vmem:[%s6 + $0x138] sm:$0xff] %v3124
    %3509 = vst [vmem:[%s6 + $0x140] sm:$0xff] %v3125
    %3510 = vst [vmem:[%s6 + $0x148] sm:$0xff] %v3126
    %3511 = vst [vmem:[%s6 + $0x150] sm:$0xff] %v3127
    %3512 = vst [vmem:[%s6 + $0x158] sm:$0xff] %v3128
    %3513 = vst [vmem:[%s6 + $0x160] sm:$0xff] %v3129
    %3514 = vst [vmem:[%s6 + $0x168] sm:$0xff] %v3130
    %3515 = vst [vmem:[%s6 + $0x170] sm:$0xff] %v3131
    %3516 = vst [vmem:[%s6 + $0x178] sm:$0xff] %v3132
    %3517 = vst [vmem:[%s6 + $0x180] sm:$0xff] %v3133
    %3518 = vst [vmem:[%s6 + $0x188] sm:$0xff] %v3134
    %3519 = vst [vmem:[%s6 + $0x190] sm:$0xff] %v3135
    %3520 = vst [vmem:[%s6 + $0x198] sm:$0xff] %v3136
    %3521 = vst [vmem:[%s6 + $0x1a0] sm:$0xff] %v3137
    %3522 = vst [vmem:[%s6 + $0x1a8] sm:$0xff] %v3138
    %3523 = vst [vmem:[%s6 + $0x1b0] sm:$0xff] %v3139
    %3524 = vst [vmem:[%s6 + $0x1b8] sm:$0xff] %v3140
    %3525 = vst [vmem:[%s6 + $0x1c0] sm:$0xff] %v3141
    %3526 = vst [vmem:[%s6 + $0x1c8] sm:$0xff] %v3142
    %3527 = vst [vmem:[%s6 + $0x1d0] sm:$0xff] %v3143
    %3528 = vst [vmem:[%s6 + $0x1d8] sm:$0xff] %v3144
    %3529 = vst [vmem:[%s6 + $0x1e0] sm:$0xff] %v3145
    %3530 = vst [vmem:[%s6 + $0x1e8] sm:$0xff] %v3146
    %3531 = vst [vmem:[%s6 + $0x1f0] sm:$0xff] %v3147
    %3532 = vst [vmem:[%s6 + $0x1f8] sm:$0xff] %v3148
    %v3533 = vpack.c.bf16 %v3086, %v3085
    %v3534 = vpack.c.bf16 %v3088, %v3087
    %v3535 = vpack.c.bf16 %v3090, %v3089
    %v3536 = vpack.c.bf16 %v3092, %v3091
    %v3537 = vpack.c.bf16 %v3094, %v3093
    %v3538 = vpack.c.bf16 %v3096, %v3095
    %v3539 = vpack.c.bf16 %v3098, %v3097
    %v3540 = vpack.c.bf16 %v3100, %v3099
    %v3541 = vpack.c.bf16 %v3102, %v3101
    %v3542 = vpack.c.bf16 %v3104, %v3103
    %v3543 = vpack.c.bf16 %v3106, %v3105
    %v3544 = vpack.c.bf16 %v3108, %v3107
    %v3545 = vpack.c.bf16 %v3110, %v3109
    %v3546 = vpack.c.bf16 %v3112, %v3111
    %v3547 = vpack.c.bf16 %v3114, %v3113
    %v3548 = vpack.c.bf16 %v3116, %v3115
    %v3549 = vpack.c.bf16 %v3118, %v3117
    %v3550 = vpack.c.bf16 %v3120, %v3119
    %v3551 = vpack.c.bf16 %v3122, %v3121
    %v3552 = vpack.c.bf16 %v3124, %v3123
    %v3553 = vpack.c.bf16 %v3126, %v3125
    %v3554 = vpack.c.bf16 %v3128, %v3127
    %v3555 = vpack.c.bf16 %v3130, %v3129
    %v3556 = vpack.c.bf16 %v3132, %v3131
    %v3557 = vpack.c.bf16 %v3134, %v3133
    %v3558 = vpack.c.bf16 %v3136, %v3135
    %v3559 = vpack.c.bf16 %v3138, %v3137
    %v3560 = vpack.c.bf16 %v3140, %v3139
    %v3561 = vpack.c.bf16 %v3142, %v3141
    %v3562 = vpack.c.bf16 %v3144, %v3143
    %v3563 = vpack.c.bf16 %v3146, %v3145
    %v3564 = vpack.c.bf16 %v3148, %v3147
    %v3597 = vunpack.c.l.b16 %v3533
    %v3598 = vunpack.c.h.b16 %v3533
    %v3599 = vunpack.c.l.b16 %v3534
    %v3600 = vunpack.c.h.b16 %v3534
    %v3601 = vunpack.c.l.b16 %v3535
    %v3602 = vunpack.c.h.b16 %v3535
    %v3603 = vunpack.c.l.b16 %v3536
    %v3604 = vunpack.c.h.b16 %v3536
    %v3605 = vunpack.c.l.b16 %v3537
    %v3606 = vunpack.c.h.b16 %v3537
    %v3607 = vunpack.c.l.b16 %v3538
    %v3608 = vunpack.c.h.b16 %v3538
    %v3609 = vunpack.c.l.b16 %v3539
    %v3610 = vunpack.c.h.b16 %v3539
    %v3611 = vunpack.c.l.b16 %v3540
    %v3612 = vunpack.c.h.b16 %v3540
    %v3613 = vunpack.c.l.b16 %v3541
    %v3614 = vunpack.c.h.b16 %v3541
    %v3615 = vunpack.c.l.b16 %v3542
    %v3616 = vunpack.c.h.b16 %v3542
    %v3617 = vunpack.c.l.b16 %v3543
    %v3618 = vunpack.c.h.b16 %v3543
    %v3619 = vunpack.c.l.b16 %v3544
    %v3620 = vunpack.c.h.b16 %v3544
    %v3621 = vunpack.c.l.b16 %v3545
    %v3622 = vunpack.c.h.b16 %v3545
    %v3623 = vunpack.c.l.b16 %v3546
    %v3624 = vunpack.c.h.b16 %v3546
    %v3625 = vunpack.c.l.b16 %v3547
    %v3626 = vunpack.c.h.b16 %v3547
    %v3627 = vunpack.c.l.b16 %v3548
    %v3628 = vunpack.c.h.b16 %v3548
    %v3629 = vunpack.c.l.b16 %v3549
    %v3630 = vunpack.c.h.b16 %v3549
    %v3631 = vunpack.c.l.b16 %v3550
    %v3632 = vunpack.c.h.b16 %v3550
    %v3633 = vunpack.c.l.b16 %v3551
    %v3634 = vunpack.c.h.b16 %v3551
    %v3635 = vunpack.c.l.b16 %v3552
    %v3636 = vunpack.c.h.b16 %v3552
    %v3637 = vunpack.c.l.b16 %v3553
    %v3638 = vunpack.c.h.b16 %v3553
    %v3639 = vunpack.c.l.b16 %v3554
    %v3640 = vunpack.c.h.b16 %v3554
    %v3641 = vunpack.c.l.b16 %v3555
    %v3642 = vunpack.c.h.b16 %v3555
    %v3643 = vunpack.c.l.b16 %v3556
    %v3644 = vunpack.c.h.b16 %v3556
    %v3645 = vunpack.c.l.b16 %v3557
    %v3646 = vunpack.c.h.b16 %v3557
    %v3647 = vunpack.c.l.b16 %v3558
    %v3648 = vunpack.c.h.b16 %v3558
    %v3649 = vunpack.c.l.b16 %v3559
    %v3650 = vunpack.c.h.b16 %v3559
    %v3651 = vunpack.c.l.b16 %v3560
    %v3652 = vunpack.c.h.b16 %v3560
    %v3653 = vunpack.c.l.b16 %v3561
    %v3654 = vunpack.c.h.b16 %v3561
    %v3655 = vunpack.c.l.b16 %v3562
    %v3656 = vunpack.c.h.b16 %v3562
    %v3657 = vunpack.c.l.b16 %v3563
    %v3658 = vunpack.c.h.b16 %v3563
    %v3659 = vunpack.c.l.b16 %v3564
    %v3660 = vunpack.c.h.b16 %v3564
    %v3661 = vpack.c.b16 %v3597, %v3597
    %v3662 = vpack.c.b16 %v3598, %v3598
    %v3663 = vpack.c.b16 %v3599, %v3599
    %v3664 = vpack.c.b16 %v3600, %v3600
    %v3665 = vpack.c.b16 %v3601, %v3601
    %v3666 = vpack.c.b16 %v3602, %v3602
    %v3667 = vpack.c.b16 %v3603, %v3603
    %v3668 = vpack.c.b16 %v3604, %v3604
    %v3669 = vpack.c.b16 %v3605, %v3605
    %v3670 = vpack.c.b16 %v3606, %v3606
    %v3671 = vpack.c.b16 %v3607, %v3607
    %v3672 = vpack.c.b16 %v3608, %v3608
    %v3673 = vpack.c.b16 %v3609, %v3609
    %v3674 = vpack.c.b16 %v3610, %v3610
    %v3675 = vpack.c.b16 %v3611, %v3611
    %v3676 = vpack.c.b16 %v3612, %v3612
    %v3677 = vpack.c.b16 %v3613, %v3613
    %v3678 = vpack.c.b16 %v3614, %v3614
    %v3679 = vpack.c.b16 %v3615, %v3615
    %v3680 = vpack.c.b16 %v3616, %v3616
    %v3681 = vpack.c.b16 %v3617, %v3617
    %v3682 = vpack.c.b16 %v3618, %v3618
    %v3683 = vpack.c.b16 %v3619, %v3619
    %v3684 = vpack.c.b16 %v3620, %v3620
    %v3685 = vpack.c.b16 %v3621, %v3621
    %v3686 = vpack.c.b16 %v3622, %v3622
    %v3687 = vpack.c.b16 %v3623, %v3623
    %v3688 = vpack.c.b16 %v3624, %v3624
    %v3689 = vpack.c.b16 %v3625, %v3625
    %v3690 = vpack.c.b16 %v3626, %v3626
    %v3691 = vpack.c.b16 %v3627, %v3627
    %v3692 = vpack.c.b16 %v3628, %v3628
    %v3693 = vpack.c.b16 %v3629, %v3629
    %v3694 = vpack.c.b16 %v3630, %v3630
    %v3695 = vpack.c.b16 %v3631, %v3631
    %v3696 = vpack.c.b16 %v3632, %v3632
    %v3697 = vpack.c.b16 %v3633, %v3633
    %v3698 = vpack.c.b16 %v3634, %v3634
    %v3699 = vpack.c.b16 %v3635, %v3635
    %v3700 = vpack.c.b16 %v3636, %v3636
    %v3701 = vpack.c.b16 %v3637, %v3637
    %v3702 = vpack.c.b16 %v3638, %v3638
    %v3703 = vpack.c.b16 %v3639, %v3639
    %v3704 = vpack.c.b16 %v3640, %v3640
    %v3705 = vpack.c.b16 %v3641, %v3641
    %v3706 = vpack.c.b16 %v3642, %v3642
    %v3707 = vpack.c.b16 %v3643, %v3643
    %v3708 = vpack.c.b16 %v3644, %v3644
    %v3709 = vpack.c.b16 %v3645, %v3645
    %v3710 = vpack.c.b16 %v3646, %v3646
    %v3711 = vpack.c.b16 %v3647, %v3647
    %v3712 = vpack.c.b16 %v3648, %v3648
    %v3713 = vpack.c.b16 %v3649, %v3649
    %v3714 = vpack.c.b16 %v3650, %v3650
    %v3715 = vpack.c.b16 %v3651, %v3651
    %v3716 = vpack.c.b16 %v3652, %v3652
    %v3717 = vpack.c.b16 %v3653, %v3653
    %v3718 = vpack.c.b16 %v3654, %v3654
    %v3719 = vpack.c.b16 %v3655, %v3655
    %v3720 = vpack.c.b16 %v3656, %v3656
    %v3721 = vpack.c.b16 %v3657, %v3657
    %v3722 = vpack.c.b16 %v3658, %v3658
    %v3723 = vpack.c.b16 %v3659, %v3659
    %v3724 = vpack.c.b16 %v3660, %v3660
    %3789 = vst [vmem:[%s7] sm:$0xf] %v3661
    %3790 = vst [vmem:[%s7 + $0x4] sm:$0xf] %v3662
    %3791 = vst [vmem:[%s7 + $0x8] sm:$0xf] %v3663
    %3792 = vst [vmem:[%s7 + $0xc] sm:$0xf] %v3664
    %3793 = vst [vmem:[%s7 + $0x10] sm:$0xf] %v3665
    %3794 = vst [vmem:[%s7 + $0x14] sm:$0xf] %v3666
    %3795 = vst [vmem:[%s7 + $0x18] sm:$0xf] %v3667
    %3796 = vst [vmem:[%s7 + $0x1c] sm:$0xf] %v3668
    %3797 = vst [vmem:[%s7 + $0x20] sm:$0xf] %v3669
    %3798 = vst [vmem:[%s7 + $0x24] sm:$0xf] %v3670
    %3799 = vst [vmem:[%s7 + $0x28] sm:$0xf] %v3671
    %3800 = vst [vmem:[%s7 + $0x2c] sm:$0xf] %v3672
    %3801 = vst [vmem:[%s7 + $0x30] sm:$0xf] %v3673
    %3802 = vst [vmem:[%s7 + $0x34] sm:$0xf] %v3674
    %3803 = vst [vmem:[%s7 + $0x38] sm:$0xf] %v3675
    %3804 = vst [vmem:[%s7 + $0x3c] sm:$0xf] %v3676
    %3805 = vst [vmem:[%s7 + $0x40] sm:$0xf] %v3677
    %3806 = vst [vmem:[%s7 + $0x44] sm:$0xf] %v3678
    %3807 = vst [vmem:[%s7 + $0x48] sm:$0xf] %v3679
    %3808 = vst [vmem:[%s7 + $0x4c] sm:$0xf] %v3680
    %3809 = vst [vmem:[%s7 + $0x50] sm:$0xf] %v3681
    %3810 = vst [vmem:[%s7 + $0x54] sm:$0xf] %v3682
    %3811 = vst [vmem:[%s7 + $0x58] sm:$0xf] %v3683
    %3812 = vst [vmem:[%s7 + $0x5c] sm:$0xf] %v3684
    %3813 = vst [vmem:[%s7 + $0x60] sm:$0xf] %v3685
    %3814 = vst [vmem:[%s7 + $0x64] sm:$0xf] %v3686
    %3815 = vst [vmem:[%s7 + $0x68] sm:$0xf] %v3687
    %3816 = vst [vmem:[%s7 + $0x6c] sm:$0xf] %v3688
    %3817 = vst [vmem:[%s7 + $0x70] sm:$0xf] %v3689
    %3818 = vst [vmem:[%s7 + $0x74] sm:$0xf] %v3690
    %3819 = vst [vmem:[%s7 + $0x78] sm:$0xf] %v3691
    %3820 = vst [vmem:[%s7 + $0x7c] sm:$0xf] %v3692
    %3821 = vst [vmem:[%s7 + $0x80] sm:$0xf] %v3693
    %3822 = vst [vmem:[%s7 + $0x84] sm:$0xf] %v3694
    %3823 = vst [vmem:[%s7 + $0x88] sm:$0xf] %v3695
    %3824 = vst [vmem:[%s7 + $0x8c] sm:$0xf] %v3696
    %3825 = vst [vmem:[%s7 + $0x90] sm:$0xf] %v3697
    %3826 = vst [vmem:[%s7 + $0x94] sm:$0xf] %v3698
    %3827 = vst [vmem:[%s7 + $0x98] sm:$0xf] %v3699
    %3828 = vst [vmem:[%s7 + $0x9c] sm:$0xf] %v3700
    %3829 = vst [vmem:[%s7 + $0xa0] sm:$0xf] %v3701
    %3830 = vst [vmem:[%s7 + $0xa4] sm:$0xf] %v3702
    %3831 = vst [vmem:[%s7 + $0xa8] sm:$0xf] %v3703
    %3832 = vst [vmem:[%s7 + $0xac] sm:$0xf] %v3704
    %3833 = vst [vmem:[%s7 + $0xb0] sm:$0xf] %v3705
    %3834 = vst [vmem:[%s7 + $0xb4] sm:$0xf] %v3706
    %3835 = vst [vmem:[%s7 + $0xb8] sm:$0xf] %v3707
    %3836 = vst [vmem:[%s7 + $0xbc] sm:$0xf] %v3708
    %3837 = vst [vmem:[%s7 + $0xc0] sm:$0xf] %v3709
    %3838 = vst [vmem:[%s7 + $0xc4] sm:$0xf] %v3710
    %3839 = vst [vmem:[%s7 + $0xc8] sm:$0xf] %v3711
    %3840 = vst [vmem:[%s7 + $0xcc] sm:$0xf] %v3712
    %3841 = vst [vmem:[%s7 + $0xd0] sm:$0xf] %v3713
    %3842 = vst [vmem:[%s7 + $0xd4] sm:$0xf] %v3714
    %3843 = vst [vmem:[%s7 + $0xd8] sm:$0xf] %v3715
    %3844 = vst [vmem:[%s7 + $0xdc] sm:$0xf] %v3716
    %3845 = vst [vmem:[%s7 + $0xe0] sm:$0xf] %v3717
    %3846 = vst [vmem:[%s7 + $0xe4] sm:$0xf] %v3718
    %3847 = vst [vmem:[%s7 + $0xe8] sm:$0xf] %v3719
    %3848 = vst [vmem:[%s7 + $0xec] sm:$0xf] %v3720
    %3849 = vst [vmem:[%s7 + $0xf0] sm:$0xf] %v3721
    %3850 = vst [vmem:[%s7 + $0xf4] sm:$0xf] %v3722
    %3851 = vst [vmem:[%s7 + $0xf8] sm:$0xf] %v3723
    %3852 = vst [vmem:[%s7 + $0xfc] sm:$0xf] %v3724
    %v3853 = vmul.f32 %v3085, %v3405
    %v3854 = vmul.f32 %v3086, %v3406
    %v3855 = vmul.f32 %v3087, %v3407
    %v3856 = vmul.f32 %v3088, %v3408
    %v3857 = vmul.f32 %v3089, %v3409
    %v3858 = vmul.f32 %v3090, %v3410
    %v3859 = vmul.f32 %v3091, %v3411
    %v3860 = vmul.f32 %v3092, %v3412
    %v3861 = vmul.f32 %v3093, %v3413
    %v3862 = vmul.f32 %v3094, %v3414
    %v3863 = vmul.f32 %v3095, %v3415
    %v3864 = vmul.f32 %v3096, %v3416
    %v3865 = vmul.f32 %v3097, %v3417
    %v3866 = vmul.f32 %v3098, %v3418
    %v3867 = vmul.f32 %v3099, %v3419
    %v3868 = vmul.f32 %v3100, %v3420
    %v3869 = vmul.f32 %v3101, %v3421
    %v3870 = vmul.f32 %v3102, %v3422
    %v3871 = vmul.f32 %v3103, %v3423
    %v3872 = vmul.f32 %v3104, %v3424
    %v3873 = vmul.f32 %v3105, %v3425
    %v3874 = vmul.f32 %v3106, %v3426
    %v3875 = vmul.f32 %v3107, %v3427
    %v3876 = vmul.f32 %v3108, %v3428
    %v3877 = vmul.f32 %v3109, %v3429
    %v3878 = vmul.f32 %v3110, %v3430
    %v3879 = vmul.f32 %v3111, %v3431
    %v3880 = vmul.f32 %v3112, %v3432
    %v3881 = vmul.f32 %v3113, %v3433
    %v3882 = vmul.f32 %v3114, %v3434
    %v3883 = vmul.f32 %v3115, %v3435
    %v3884 = vmul.f32 %v3116, %v3436
    %v3885 = vmul.f32 %v3117, %v3437
    %v3886 = vmul.f32 %v3118, %v3438
    %v3887 = vmul.f32 %v3119, %v3439
    %v3888 = vmul.f32 %v3120, %v3440
    %v3889 = vmul.f32 %v3121, %v3441
    %v3890 = vmul.f32 %v3122, %v3442
    %v3891 = vmul.f32 %v3123, %v3443
    %v3892 = vmul.f32 %v3124, %v3444
    %v3893 = vmul.f32 %v3125, %v3445
    %v3894 = vmul.f32 %v3126, %v3446
    %v3895 = vmul.f32 %v3127, %v3447
    %v3896 = vmul.f32 %v3128, %v3448
    %v3897 = vmul.f32 %v3129, %v3449
    %v3898 = vmul.f32 %v3130, %v3450
    %v3899 = vmul.f32 %v3131, %v3451
    %v3900 = vmul.f32 %v3132, %v3452
    %v3901 = vmul.f32 %v3133, %v3453
    %v3902 = vmul.f32 %v3134, %v3454
    %v3903 = vmul.f32 %v3135, %v3455
    %v3904 = vmul.f32 %v3136, %v3456
    %v3905 = vmul.f32 %v3137, %v3457
    %v3906 = vmul.f32 %v3138, %v3458
    %v3907 = vmul.f32 %v3139, %v3459
    %v3908 = vmul.f32 %v3140, %v3460
    %v3909 = vmul.f32 %v3141, %v3461
    %v3910 = vmul.f32 %v3142, %v3462
    %v3911 = vmul.f32 %v3143, %v3463
    %v3912 = vmul.f32 %v3144, %v3464
    %v3913 = vmul.f32 %v3145, %v3465
    %v3914 = vmul.f32 %v3146, %v3466
    %v3915 = vmul.f32 %v3147, %v3467
    %v3916 = vmul.f32 %v3148, %v3468
    %3917 = vst [vmem:[%s8] sm:$0xff] %v3853
    %3918 = vst [vmem:[%s8 + $0x8] sm:$0xff] %v3854
    %3919 = vst [vmem:[%s8 + $0x10] sm:$0xff] %v3855
    %3920 = vst [vmem:[%s8 + $0x18] sm:$0xff] %v3856
    %3921 = vst [vmem:[%s8 + $0x20] sm:$0xff] %v3857
    %3922 = vst [vmem:[%s8 + $0x28] sm:$0xff] %v3858
    %3923 = vst [vmem:[%s8 + $0x30] sm:$0xff] %v3859
    %3924 = vst [vmem:[%s8 + $0x38] sm:$0xff] %v3860
    %3925 = vst [vmem:[%s8 + $0x40] sm:$0xff] %v3861
    %3926 = vst [vmem:[%s8 + $0x48] sm:$0xff] %v3862
    %3927 = vst [vmem:[%s8 + $0x50] sm:$0xff] %v3863
    %3928 = vst [vmem:[%s8 + $0x58] sm:$0xff] %v3864
    %3929 = vst [vmem:[%s8 + $0x60] sm:$0xff] %v3865
    %3930 = vst [vmem:[%s8 + $0x68] sm:$0xff] %v3866
    %3931 = vst [vmem:[%s8 + $0x70] sm:$0xff] %v3867
    %3932 = vst [vmem:[%s8 + $0x78] sm:$0xff] %v3868
    %3933 = vst [vmem:[%s8 + $0x80] sm:$0xff] %v3869
    %3934 = vst [vmem:[%s8 + $0x88] sm:$0xff] %v3870
    %3935 = vst [vmem:[%s8 + $0x90] sm:$0xff] %v3871
    %3936 = vst [vmem:[%s8 + $0x98] sm:$0xff] %v3872
    %3937 = vst [vmem:[%s8 + $0xa0] sm:$0xff] %v3873
    %3938 = vst [vmem:[%s8 + $0xa8] sm:$0xff] %v3874
    %3939 = vst [vmem:[%s8 + $0xb0] sm:$0xff] %v3875
    %3940 = vst [vmem:[%s8 + $0xb8] sm:$0xff] %v3876
    %3941 = vst [vmem:[%s8 + $0xc0] sm:$0xff] %v3877
    %3942 = vst [vmem:[%s8 + $0xc8] sm:$0xff] %v3878
    %3943 = vst [vmem:[%s8 + $0xd0] sm:$0xff] %v3879
    %3944 = vst [vmem:[%s8 + $0xd8] sm:$0xff] %v3880
    %3945 = vst [vmem:[%s8 + $0xe0] sm:$0xff] %v3881
    %3946 = vst [vmem:[%s8 + $0xe8] sm:$0xff] %v3882
    %3947 = vst [vmem:[%s8 + $0xf0] sm:$0xff] %v3883
    %3948 = vst [vmem:[%s8 + $0xf8] sm:$0xff] %v3884
    %3949 = vst [vmem:[%s8 + $0x100] sm:$0xff] %v3885
    %3950 = vst [vmem:[%s8 + $0x108] sm:$0xff] %v3886
    %3951 = vst [vmem:[%s8 + $0x110] sm:$0xff] %v3887
    %3952 = vst [vmem:[%s8 + $0x118] sm:$0xff] %v3888
    %3953 = vst [vmem:[%s8 + $0x120] sm:$0xff] %v3889
    %3954 = vst [vmem:[%s8 + $0x128] sm:$0xff] %v3890
    %3955 = vst [vmem:[%s8 + $0x130] sm:$0xff] %v3891
    %3956 = vst [vmem:[%s8 + $0x138] sm:$0xff] %v3892
    %3957 = vst [vmem:[%s8 + $0x140] sm:$0xff] %v3893
    %3958 = vst [vmem:[%s8 + $0x148] sm:$0xff] %v3894
    %3959 = vst [vmem:[%s8 + $0x150] sm:$0xff] %v3895
    %3960 = vst [vmem:[%s8 + $0x158] sm:$0xff] %v3896
    %3961 = vst [vmem:[%s8 + $0x160] sm:$0xff] %v3897
    %3962 = vst [vmem:[%s8 + $0x168] sm:$0xff] %v3898
    %3963 = vst [vmem:[%s8 + $0x170] sm:$0xff] %v3899
    %3964 = vst [vmem:[%s8 + $0x178] sm:$0xff] %v3900
    %3965 = vst [vmem:[%s8 + $0x180] sm:$0xff] %v3901
    %3966 = vst [vmem:[%s8 + $0x188] sm:$0xff] %v3902
    %3967 = vst [vmem:[%s8 + $0x190] sm:$0xff] %v3903
    %3968 = vst [vmem:[%s8 + $0x198] sm:$0xff] %v3904
    %3969 = vst [vmem:[%s8 + $0x1a0] sm:$0xff] %v3905
    %3970 = vst [vmem:[%s8 + $0x1a8] sm:$0xff] %v3906
    %3971 = vst [vmem:[%s8 + $0x1b0] sm:$0xff] %v3907
    %3972 = vst [vmem:[%s8 + $0x1b8] sm:$0xff] %v3908
    %3973 = vst [vmem:[%s8 + $0x1c0] sm:$0xff] %v3909
    %3974 = vst [vmem:[%s8 + $0x1c8] sm:$0xff] %v3910
    %3975 = vst [vmem:[%s8 + $0x1d0] sm:$0xff] %v3911
    %3976 = vst [vmem:[%s8 + $0x1d8] sm:$0xff] %v3912
    %3977 = vst [vmem:[%s8 + $0x1e0] sm:$0xff] %v3913
    %3978 = vst [vmem:[%s8 + $0x1e8] sm:$0xff] %v3914
    %3979 = vst [vmem:[%s8 + $0x1f0] sm:$0xff] %v3915
    %3980 = vst [vmem:[%s8 + $0x1f8] sm:$0xff] %v3916
  $region33: #{ngcf_forward.2} parent=0 // pred_fallthru
    _
  // Predicated region
  $region34: #{ngcf_forward.2} parent=0 // pred_check
    _
  $region35: #{ngcf_forward.2} parent=0 // pred_check_branch
    %3982 = sbr.rel (0) target = $region37
  $region36: #{ngcf_forward.2} parent=0 // pred_region
    _
  $region37: #{ngcf_forward.2} parent=0 // pred_fallthru
    _
  // Predicated region
  $region38: #{ngcf_forward.2} parent=0 // pred_check
    _
  $region39: #{ngcf_forward.2} parent=0 // pred_check_branch
    %3984 = sbr.rel (0) target = $region41
  $region40: #{ngcf_forward.2} parent=0 // pred_region
    _
  $region41: #{ngcf_forward.2} parent=0 // pred_fallthru
    _
  // Predicated region
  $region42: #{ngcf_forward.2} parent=0 // pred_check
    _
  $region43: #{ngcf_forward.2} parent=0 // pred_check_branch
    %3986 = sbr.rel (0) target = $region45
  $region44: #{ngcf_forward.2} parent=0 // pred_region
    _
  $region45: #{ngcf_forward.2} parent=0 // pred_fallthru
    _
  // Predicated region
  $region46: #{ngcf_forward.2} parent=0 // pred_check
    _
  $region47: #{ngcf_forward.2} parent=0 // pred_check_branch
    %3988 = sbr.rel (0) target = $region49
  $region48: #{ngcf_forward.2} parent=0 // pred_region
    _
  $region49: #{ngcf_forward.2} parent=0 // pred_fallthru
    _
  // Predicated region
  $region50: #{ngcf_forward.2} parent=0 // pred_check
    _
  $region51: #{ngcf_forward.2} parent=0 // pred_check_branch
    %3990 = sbr.rel (0) target = $region53
  $region52: #{ngcf_forward.2} parent=0 // pred_region
    _
  $region53: #{ngcf_forward.2} parent=0 // pred_fallthru
    _
  // Predicated region
  $region54: #{ngcf_forward.2} parent=0 // pred_check
    _
  $region55: #{ngcf_forward.2} parent=0 // pred_check_branch
    %3992 = sbr.rel (0) target = $region57
  $region56: #{ngcf_forward.2} parent=0 // pred_region
    _
  $region57: #{ngcf_forward.2} parent=0 // pred_fallthru
    _

// kernel: ngcf_forward.3
$region0: #{ngcf_forward.3}
  #allocation0 [shape = 'u32[]', space=smem, size = 0x4, offset = 0x4, fixed_abs, tag = 'smem constant byte address 0x4 - core index']
  #allocation1 [shape = 'u32[144,128]{1,0:T(1,128)}', space=vmem, size = 0x12000, scoped, tag = 'internal scratch']
  #allocation2 [shape = 'f32[512,128]{1,0:T(8,128)}', space=vmem, size = 0x40000, scoped, tag = 'scratch operand']
  %s0 = inlined_call_operand.vmem [shape: bf16[512,512], index: 0, kind: input, shape index: {}]
  %s1 = inlined_call_operand.vmem [shape: bf16[512,128], index: 1, kind: input, shape index: {}]
  %s2 = inlined_call_operand.vmem [shape: f32[512,128], index: 2, kind: input, shape index: {}]
  %s3 = inlined_call_operand.vmem [shape: f32[128,128], index: 3, kind: input, shape index: {}]
  %s4 = inlined_call_operand.vmem [shape: f32[128,128], index: 4, kind: input, shape index: {}]
  %s5 = inlined_call_operand.vmem [shape: f32[1,128], index: 5, kind: input, shape index: {}]
  %s6 = inlined_call_operand.hbm [shape: f32[512,128], index: 6, kind: output, shape index: {0}]
  %s7 = inlined_call_operand.hbm [shape: bf16[512,128], index: 7, kind: output, shape index: {1}]
  %s8 = inlined_call_operand.vmem [shape: f32[512,128], index: 8, kind: output, shape index: {2}]
  %9 = xla_tuple %s6, %s7, %s8
  %s10 = sld [smem:[#allocation0]]
  $region58: #{ngcf_forward.3} parent=0
    _
  %s12 = ssub.s32 1, %s10
  %s13 = scalar_select 0, %s12, %s10
  $region1: #{ngcf_forward.3} parent=0
    #allocation3 [shape = 'u8[262144]{0}', space=vmem, size = 0x40000, scoped, tag = 'output window, operand 0, single buffered']
    #allocation4 [shape = 's32[1]{0}', space=sflag, size = 0x4, scoped, tag = 'scoped memory for ngcf_forward.3']
    #allocation5 [shape = 'u8[131072]{0}', space=vmem, size = 0x20000, scoped, tag = 'output window, operand 1, single buffered']
    #allocation6 [shape = 's32[1]{0}', space=sflag, size = 0x4, scoped, tag = 'scoped memory for ngcf_forward.3']
    %14 = vsyncpa [#allocation4], 0
    %15 = vsyncpa [#allocation6], 0
    // Predicated region
    $region2: #{ngcf_forward.3} parent=1 // pred_check
      _
    $region3: #{ngcf_forward.3} parent=1 // pred_check_branch
      %17 = sbr.rel (0) target = $region5
    $region4: #{ngcf_forward.3} parent=1 // pred_region
      _
    $region5: #{ngcf_forward.3} parent=1 // pred_fallthru
      _
    // Predicated region
    $region6: #{ngcf_forward.3} parent=1 // pred_check
      _
    $region7: #{ngcf_forward.3} parent=1 // pred_check_branch
      %19 = sbr.rel (0) target = $region9
    $region8: #{ngcf_forward.3} parent=1 // pred_region
      _
    $region9: #{ngcf_forward.3} parent=1 // pred_fallthru
      _
    // Predicated region
    $region10: #{ngcf_forward.3} parent=1 // pred_check
      _
    $region11: #{ngcf_forward.3} parent=1 // pred_check_branch
      %21 = sbr.rel (0) target = $region13
    $region12: #{ngcf_forward.3} parent=1 // pred_region
      _
    $region13: #{ngcf_forward.3} parent=1 // pred_fallthru
      _
    // Predicated region
    $region14: #{ngcf_forward.3} parent=1 // pred_check
      _
    $region15: #{ngcf_forward.3} parent=1 // pred_check_branch
      %23 = sbr.rel (0) target = $region17
    $region16: #{ngcf_forward.3} parent=1 // pred_region
      _
    $region17: #{ngcf_forward.3} parent=1 // pred_fallthru
      _
    // Predicated region
    $region18: #{ngcf_forward.3} parent=1 // pred_check
      _
    $region19: #{ngcf_forward.3} parent=1 // pred_check_branch
      %25 = sbr.rel (0) target = $region21
    $region20: #{ngcf_forward.3} parent=1 // pred_region
      _
    $region21: #{ngcf_forward.3} parent=1 // pred_fallthru
      _
    // Predicated region
    $region22: #{ngcf_forward.3} parent=1 // pred_check
      _
    $region23: #{ngcf_forward.3} parent=1 // pred_check_branch
      %27 = sbr.rel (0) target = $region25
    $region24: #{ngcf_forward.3} parent=1 // pred_region
      _
    $region25: #{ngcf_forward.3} parent=1 // pred_fallthru
      _
    %p29 = scmp.eq.s32.totalorder 0, 0
    // Predicated region
    $region26: #{ngcf_forward.3} parent=1 // pred_check
      %p30 = pneg %p29
    $region27: #{ngcf_forward.3} parent=1 // pred_check_branch
      %32 = sbr.rel (%p30) target = $region29
    $region28: #{ngcf_forward.3} parent=1 // pred_region
      %33 = vst [vmem:[#allocation2] sm:$0xff] 0.0
      %34 = vst [vmem:[#allocation2 + $0x8] sm:$0xff] 0.0
      %35 = vst [vmem:[#allocation2 + $0x10] sm:$0xff] 0.0
      %36 = vst [vmem:[#allocation2 + $0x18] sm:$0xff] 0.0
      %37 = vst [vmem:[#allocation2 + $0x20] sm:$0xff] 0.0
      %38 = vst [vmem:[#allocation2 + $0x28] sm:$0xff] 0.0
      %39 = vst [vmem:[#allocation2 + $0x30] sm:$0xff] 0.0
      %40 = vst [vmem:[#allocation2 + $0x38] sm:$0xff] 0.0
      %41 = vst [vmem:[#allocation2 + $0x40] sm:$0xff] 0.0
      %42 = vst [vmem:[#allocation2 + $0x48] sm:$0xff] 0.0
      %43 = vst [vmem:[#allocation2 + $0x50] sm:$0xff] 0.0
      %44 = vst [vmem:[#allocation2 + $0x58] sm:$0xff] 0.0
      %45 = vst [vmem:[#allocation2 + $0x60] sm:$0xff] 0.0
      %46 = vst [vmem:[#allocation2 + $0x68] sm:$0xff] 0.0
      %47 = vst [vmem:[#allocation2 + $0x70] sm:$0xff] 0.0
      %48 = vst [vmem:[#allocation2 + $0x78] sm:$0xff] 0.0
      %49 = vst [vmem:[#allocation2 + $0x80] sm:$0xff] 0.0
      %50 = vst [vmem:[#allocation2 + $0x88] sm:$0xff] 0.0
      %51 = vst [vmem:[#allocation2 + $0x90] sm:$0xff] 0.0
      %52 = vst [vmem:[#allocation2 + $0x98] sm:$0xff] 0.0
      %53 = vst [vmem:[#allocation2 + $0xa0] sm:$0xff] 0.0
      %54 = vst [vmem:[#allocation2 + $0xa8] sm:$0xff] 0.0
      %55 = vst [vmem:[#allocation2 + $0xb0] sm:$0xff] 0.0
      %56 = vst [vmem:[#allocation2 + $0xb8] sm:$0xff] 0.0
      %57 = vst [vmem:[#allocation2 + $0xc0] sm:$0xff] 0.0
      %58 = vst [vmem:[#allocation2 + $0xc8] sm:$0xff] 0.0
      %59 = vst [vmem:[#allocation2 + $0xd0] sm:$0xff] 0.0
      %60 = vst [vmem:[#allocation2 + $0xd8] sm:$0xff] 0.0
      %61 = vst [vmem:[#allocation2 + $0xe0] sm:$0xff] 0.0
      %62 = vst [vmem:[#allocation2 + $0xe8] sm:$0xff] 0.0
      %63 = vst [vmem:[#allocation2 + $0xf0] sm:$0xff] 0.0
      %64 = vst [vmem:[#allocation2 + $0xf8] sm:$0xff] 0.0
      %65 = vst [vmem:[#allocation2 + $0x100] sm:$0xff] 0.0
      %66 = vst [vmem:[#allocation2 + $0x108] sm:$0xff] 0.0
      %67 = vst [vmem:[#allocation2 + $0x110] sm:$0xff] 0.0
      %68 = vst [vmem:[#allocation2 + $0x118] sm:$0xff] 0.0
      %69 = vst [vmem:[#allocation2 + $0x120] sm:$0xff] 0.0
      %70 = vst [vmem:[#allocation2 + $0x128] sm:$0xff] 0.0
      %71 = vst [vmem:[#allocation2 + $0x130] sm:$0xff] 0.0
      %72 = vst [vmem:[#allocation2 + $0x138] sm:$0xff] 0.0
      %73 = vst [vmem:[#allocation2 + $0x140] sm:$0xff] 0.0
      %74 = vst [vmem:[#allocation2 + $0x148] sm:$0xff] 0.0
      %75 = vst [vmem:[#allocation2 + $0x150] sm:$0xff] 0.0
      %76 = vst [vmem:[#allocation2 + $0x158] sm:$0xff] 0.0
      %77 = vst [vmem:[#allocation2 + $0x160] sm:$0xff] 0.0
      %78 = vst [vmem:[#allocation2 + $0x168] sm:$0xff] 0.0
      %79 = vst [vmem:[#allocation2 + $0x170] sm:$0xff] 0.0
      %80 = vst [vmem:[#allocation2 + $0x178] sm:$0xff] 0.0
      %81 = vst [vmem:[#allocation2 + $0x180] sm:$0xff] 0.0
      %82 = vst [vmem:[#allocation2 + $0x188] sm:$0xff] 0.0
      %83 = vst [vmem:[#allocation2 + $0x190] sm:$0xff] 0.0
      %84 = vst [vmem:[#allocation2 + $0x198] sm:$0xff] 0.0
      %85 = vst [vmem:[#allocation2 + $0x1a0] sm:$0xff] 0.0
      %86 = vst [vmem:[#allocation2 + $0x1a8] sm:$0xff] 0.0
      %87 = vst [vmem:[#allocation2 + $0x1b0] sm:$0xff] 0.0
      %88 = vst [vmem:[#allocation2 + $0x1b8] sm:$0xff] 0.0
      %89 = vst [vmem:[#allocation2 + $0x1c0] sm:$0xff] 0.0
      %90 = vst [vmem:[#allocation2 + $0x1c8] sm:$0xff] 0.0
      %91 = vst [vmem:[#allocation2 + $0x1d0] sm:$0xff] 0.0
      %92 = vst [vmem:[#allocation2 + $0x1d8] sm:$0xff] 0.0
      %93 = vst [vmem:[#allocation2 + $0x1e0] sm:$0xff] 0.0
      %94 = vst [vmem:[#allocation2 + $0x1e8] sm:$0xff] 0.0
      %95 = vst [vmem:[#allocation2 + $0x1f0] sm:$0xff] 0.0
      %96 = vst [vmem:[#allocation2 + $0x1f8] sm:$0xff] 0.0
    $region29: #{ngcf_forward.3} parent=1 // pred_fallthru
      _
    %v97 = vld [vmem:[#allocation2] sm:$0xff]
    %v98 = vld [vmem:[#allocation2 + $0x8] sm:$0xff]
    %v99 = vld [vmem:[#allocation2 + $0x10] sm:$0xff]
    %v100 = vld [vmem:[#allocation2 + $0x18] sm:$0xff]
    %v101 = vld [vmem:[#allocation2 + $0x20] sm:$0xff]
    %v102 = vld [vmem:[#allocation2 + $0x28] sm:$0xff]
    %v103 = vld [vmem:[#allocation2 + $0x30] sm:$0xff]
    %v104 = vld [vmem:[#allocation2 + $0x38] sm:$0xff]
    %v105 = vld [vmem:[#allocation2 + $0x40] sm:$0xff]
    %v106 = vld [vmem:[#allocation2 + $0x48] sm:$0xff]
    %v107 = vld [vmem:[#allocation2 + $0x50] sm:$0xff]
    %v108 = vld [vmem:[#allocation2 + $0x58] sm:$0xff]
    %v109 = vld [vmem:[#allocation2 + $0x60] sm:$0xff]
    %v110 = vld [vmem:[#allocation2 + $0x68] sm:$0xff]
    %v111 = vld [vmem:[#allocation2 + $0x70] sm:$0xff]
    %v112 = vld [vmem:[#allocation2 + $0x78] sm:$0xff]
    %v113 = vld [vmem:[#allocation2 + $0x80] sm:$0xff]
    %v114 = vld [vmem:[#allocation2 + $0x88] sm:$0xff]
    %v115 = vld [vmem:[#allocation2 + $0x90] sm:$0xff]
    %v116 = vld [vmem:[#allocation2 + $0x98] sm:$0xff]
    %v117 = vld [vmem:[#allocation2 + $0xa0] sm:$0xff]
    %v118 = vld [vmem:[#allocation2 + $0xa8] sm:$0xff]
    %v119 = vld [vmem:[#allocation2 + $0xb0] sm:$0xff]
    %v120 = vld [vmem:[#allocation2 + $0xb8] sm:$0xff]
    %v121 = vld [vmem:[#allocation2 + $0xc0] sm:$0xff]
    %v122 = vld [vmem:[#allocation2 + $0xc8] sm:$0xff]
    %v123 = vld [vmem:[#allocation2 + $0xd0] sm:$0xff]
    %v124 = vld [vmem:[#allocation2 + $0xd8] sm:$0xff]
    %v125 = vld [vmem:[#allocation2 + $0xe0] sm:$0xff]
    %v126 = vld [vmem:[#allocation2 + $0xe8] sm:$0xff]
    %v127 = vld [vmem:[#allocation2 + $0xf0] sm:$0xff]
    %v128 = vld [vmem:[#allocation2 + $0xf8] sm:$0xff]
    %v129 = vld [vmem:[#allocation2 + $0x100] sm:$0xff]
    %v130 = vld [vmem:[#allocation2 + $0x108] sm:$0xff]
    %v131 = vld [vmem:[#allocation2 + $0x110] sm:$0xff]
    %v132 = vld [vmem:[#allocation2 + $0x118] sm:$0xff]
    %v133 = vld [vmem:[#allocation2 + $0x120] sm:$0xff]
    %v134 = vld [vmem:[#allocation2 + $0x128] sm:$0xff]
    %v135 = vld [vmem:[#allocation2 + $0x130] sm:$0xff]
    %v136 = vld [vmem:[#allocation2 + $0x138] sm:$0xff]
    %v137 = vld [vmem:[#allocation2 + $0x140] sm:$0xff]
    %v138 = vld [vmem:[#allocation2 + $0x148] sm:$0xff]
    %v139 = vld [vmem:[#allocation2 + $0x150] sm:$0xff]
    %v140 = vld [vmem:[#allocation2 + $0x158] sm:$0xff]
    %v141 = vld [vmem:[#allocation2 + $0x160] sm:$0xff]
    %v142 = vld [vmem:[#allocation2 + $0x168] sm:$0xff]
    %v143 = vld [vmem:[#allocation2 + $0x170] sm:$0xff]
    %v144 = vld [vmem:[#allocation2 + $0x178] sm:$0xff]
    %v145 = vld [vmem:[#allocation2 + $0x180] sm:$0xff]
    %v146 = vld [vmem:[#allocation2 + $0x188] sm:$0xff]
    %v147 = vld [vmem:[#allocation2 + $0x190] sm:$0xff]
    %v148 = vld [vmem:[#allocation2 + $0x198] sm:$0xff]
    %v149 = vld [vmem:[#allocation2 + $0x1a0] sm:$0xff]
    %v150 = vld [vmem:[#allocation2 + $0x1a8] sm:$0xff]
    %v151 = vld [vmem:[#allocation2 + $0x1b0] sm:$0xff]
    %v152 = vld [vmem:[#allocation2 + $0x1b8] sm:$0xff]
    %v153 = vld [vmem:[#allocation2 + $0x1c0] sm:$0xff]
    %v154 = vld [vmem:[#allocation2 + $0x1c8] sm:$0xff]
    %v155 = vld [vmem:[#allocation2 + $0x1d0] sm:$0xff]
    %v156 = vld [vmem:[#allocation2 + $0x1d8] sm:$0xff]
    %v157 = vld [vmem:[#allocation2 + $0x1e0] sm:$0xff]
    %v158 = vld [vmem:[#allocation2 + $0x1e8] sm:$0xff]
    %v159 = vld [vmem:[#allocation2 + $0x1f0] sm:$0xff]
    %v160 = vld [vmem:[#allocation2 + $0x1f8] sm:$0xff]
    %v161 = vld [vmem:[%s0] sm:$0xff]
    %v162 = vld [vmem:[%s0 + $0x8] sm:$0xff]
    %v163 = vld [vmem:[%s0 + $0x10] sm:$0xff]
    %v164 = vld [vmem:[%s0 + $0x18] sm:$0xff]
    %v165 = vld [vmem:[%s0 + $0x20] sm:$0xff]
    %v166 = vld [vmem:[%s0 + $0x28] sm:$0xff]
    %v167 = vld [vmem:[%s0 + $0x30] sm:$0xff]
    %v168 = vld [vmem:[%s0 + $0x38] sm:$0xff]
    %v169 = vld [vmem:[%s0 + $0x40] sm:$0xff]
    %v170 = vld [vmem:[%s0 + $0x48] sm:$0xff]
    %v171 = vld [vmem:[%s0 + $0x50] sm:$0xff]
    %v172 = vld [vmem:[%s0 + $0x58] sm:$0xff]
    %v173 = vld [vmem:[%s0 + $0x60] sm:$0xff]
    %v174 = vld [vmem:[%s0 + $0x68] sm:$0xff]
    %v175 = vld [vmem:[%s0 + $0x70] sm:$0xff]
    %v176 = vld [vmem:[%s0 + $0x78] sm:$0xff]
    %v177 = vld [vmem:[%s0 + $0x80] sm:$0xff]
    %v178 = vld [vmem:[%s0 + $0x88] sm:$0xff]
    %v179 = vld [vmem:[%s0 + $0x90] sm:$0xff]
    %v180 = vld [vmem:[%s0 + $0x98] sm:$0xff]
    %v181 = vld [vmem:[%s0 + $0xa0] sm:$0xff]
    %v182 = vld [vmem:[%s0 + $0xa8] sm:$0xff]
    %v183 = vld [vmem:[%s0 + $0xb0] sm:$0xff]
    %v184 = vld [vmem:[%s0 + $0xb8] sm:$0xff]
    %v185 = vld [vmem:[%s0 + $0xc0] sm:$0xff]
    %v186 = vld [vmem:[%s0 + $0xc8] sm:$0xff]
    %v187 = vld [vmem:[%s0 + $0xd0] sm:$0xff]
    %v188 = vld [vmem:[%s0 + $0xd8] sm:$0xff]
    %v189 = vld [vmem:[%s0 + $0xe0] sm:$0xff]
    %v190 = vld [vmem:[%s0 + $0xe8] sm:$0xff]
    %v191 = vld [vmem:[%s0 + $0xf0] sm:$0xff]
    %v192 = vld [vmem:[%s0 + $0xf8] sm:$0xff]
    %v193 = vld [vmem:[%s0 + $0x100] sm:$0xff]
    %v194 = vld [vmem:[%s0 + $0x108] sm:$0xff]
    %v195 = vld [vmem:[%s0 + $0x110] sm:$0xff]
    %v196 = vld [vmem:[%s0 + $0x118] sm:$0xff]
    %v197 = vld [vmem:[%s0 + $0x120] sm:$0xff]
    %v198 = vld [vmem:[%s0 + $0x128] sm:$0xff]
    %v199 = vld [vmem:[%s0 + $0x130] sm:$0xff]
    %v200 = vld [vmem:[%s0 + $0x138] sm:$0xff]
    %v201 = vld [vmem:[%s0 + $0x140] sm:$0xff]
    %v202 = vld [vmem:[%s0 + $0x148] sm:$0xff]
    %v203 = vld [vmem:[%s0 + $0x150] sm:$0xff]
    %v204 = vld [vmem:[%s0 + $0x158] sm:$0xff]
    %v205 = vld [vmem:[%s0 + $0x160] sm:$0xff]
    %v206 = vld [vmem:[%s0 + $0x168] sm:$0xff]
    %v207 = vld [vmem:[%s0 + $0x170] sm:$0xff]
    %v208 = vld [vmem:[%s0 + $0x178] sm:$0xff]
    %v209 = vld [vmem:[%s0 + $0x180] sm:$0xff]
    %v210 = vld [vmem:[%s0 + $0x188] sm:$0xff]
    %v211 = vld [vmem:[%s0 + $0x190] sm:$0xff]
    %v212 = vld [vmem:[%s0 + $0x198] sm:$0xff]
    %v213 = vld [vmem:[%s0 + $0x1a0] sm:$0xff]
    %v214 = vld [vmem:[%s0 + $0x1a8] sm:$0xff]
    %v215 = vld [vmem:[%s0 + $0x1b0] sm:$0xff]
    %v216 = vld [vmem:[%s0 + $0x1b8] sm:$0xff]
    %v217 = vld [vmem:[%s0 + $0x1c0] sm:$0xff]
    %v218 = vld [vmem:[%s0 + $0x1c8] sm:$0xff]
    %v219 = vld [vmem:[%s0 + $0x1d0] sm:$0xff]
    %v220 = vld [vmem:[%s0 + $0x1d8] sm:$0xff]
    %v221 = vld [vmem:[%s0 + $0x1e0] sm:$0xff]
    %v222 = vld [vmem:[%s0 + $0x1e8] sm:$0xff]
    %v223 = vld [vmem:[%s0 + $0x1f0] sm:$0xff]
    %v224 = vld [vmem:[%s0 + $0x1f8] sm:$0xff]
    %v225 = vld [vmem:[%s0 + $0x200] sm:$0xff]
    %v226 = vld [vmem:[%s0 + $0x208] sm:$0xff]
    %v227 = vld [vmem:[%s0 + $0x210] sm:$0xff]
    %v228 = vld [vmem:[%s0 + $0x218] sm:$0xff]
    %v229 = vld [vmem:[%s0 + $0x220] sm:$0xff]
    %v230 = vld [vmem:[%s0 + $0x228] sm:$0xff]
    %v231 = vld [vmem:[%s0 + $0x230] sm:$0xff]
    %v232 = vld [vmem:[%s0 + $0x238] sm:$0xff]
    %v233 = vld [vmem:[%s0 + $0x240] sm:$0xff]
    %v234 = vld [vmem:[%s0 + $0x248] sm:$0xff]
    %v235 = vld [vmem:[%s0 + $0x250] sm:$0xff]
    %v236 = vld [vmem:[%s0 + $0x258] sm:$0xff]
    %v237 = vld [vmem:[%s0 + $0x260] sm:$0xff]
    %v238 = vld [vmem:[%s0 + $0x268] sm:$0xff]
    %v239 = vld [vmem:[%s0 + $0x270] sm:$0xff]
    %v240 = vld [vmem:[%s0 + $0x278] sm:$0xff]
    %v241 = vld [vmem:[%s0 + $0x280] sm:$0xff]
    %v242 = vld [vmem:[%s0 + $0x288] sm:$0xff]
    %v243 = vld [vmem:[%s0 + $0x290] sm:$0xff]
    %v244 = vld [vmem:[%s0 + $0x298] sm:$0xff]
    %v245 = vld [vmem:[%s0 + $0x2a0] sm:$0xff]
    %v246 = vld [vmem:[%s0 + $0x2a8] sm:$0xff]
    %v247 = vld [vmem:[%s0 + $0x2b0] sm:$0xff]
    %v248 = vld [vmem:[%s0 + $0x2b8] sm:$0xff]
    %v249 = vld [vmem:[%s0 + $0x2c0] sm:$0xff]
    %v250 = vld [vmem:[%s0 + $0x2c8] sm:$0xff]
    %v251 = vld [vmem:[%s0 + $0x2d0] sm:$0xff]
    %v252 = vld [vmem:[%s0 + $0x2d8] sm:$0xff]
    %v253 = vld [vmem:[%s0 + $0x2e0] sm:$0xff]
    %v254 = vld [vmem:[%s0 + $0x2e8] sm:$0xff]
    %v255 = vld [vmem:[%s0 + $0x2f0] sm:$0xff]
    %v256 = vld [vmem:[%s0 + $0x2f8] sm:$0xff]
    %v257 = vld [vmem:[%s0 + $0x300] sm:$0xff]
    %v258 = vld [vmem:[%s0 + $0x308] sm:$0xff]
    %v259 = vld [vmem:[%s0 + $0x310] sm:$0xff]
    %v260 = vld [vmem:[%s0 + $0x318] sm:$0xff]
    %v261 = vld [vmem:[%s0 + $0x320] sm:$0xff]
    %v262 = vld [vmem:[%s0 + $0x328] sm:$0xff]
    %v263 = vld [vmem:[%s0 + $0x330] sm:$0xff]
    %v264 = vld [vmem:[%s0 + $0x338] sm:$0xff]
    %v265 = vld [vmem:[%s0 + $0x340] sm:$0xff]
    %v266 = vld [vmem:[%s0 + $0x348] sm:$0xff]
    %v267 = vld [vmem:[%s0 + $0x350] sm:$0xff]
    %v268 = vld [vmem:[%s0 + $0x358] sm:$0xff]
    %v269 = vld [vmem:[%s0 + $0x360] sm:$0xff]
    %v270 = vld [vmem:[%s0 + $0x368] sm:$0xff]
    %v271 = vld [vmem:[%s0 + $0x370] sm:$0xff]
    %v272 = vld [vmem:[%s0 + $0x378] sm:$0xff]
    %v273 = vld [vmem:[%s0 + $0x380] sm:$0xff]
    %v274 = vld [vmem:[%s0 + $0x388] sm:$0xff]
    %v275 = vld [vmem:[%s0 + $0x390] sm:$0xff]
    %v276 = vld [vmem:[%s0 + $0x398] sm:$0xff]
    %v277 = vld [vmem:[%s0 + $0x3a0] sm:$0xff]
    %v278 = vld [vmem:[%s0 + $0x3a8] sm:$0xff]
    %v279 = vld [vmem:[%s0 + $0x3b0] sm:$0xff]
    %v280 = vld [vmem:[%s0 + $0x3b8] sm:$0xff]
    %v281 = vld [vmem:[%s0 + $0x3c0] sm:$0xff]
    %v282 = vld [vmem:[%s0 + $0x3c8] sm:$0xff]
    %v283 = vld [vmem:[%s0 + $0x3d0] sm:$0xff]
    %v284 = vld [vmem:[%s0 + $0x3d8] sm:$0xff]
    %v285 = vld [vmem:[%s0 + $0x3e0] sm:$0xff]
    %v286 = vld [vmem:[%s0 + $0x3e8] sm:$0xff]
    %v287 = vld [vmem:[%s0 + $0x3f0] sm:$0xff]
    %v288 = vld [vmem:[%s0 + $0x3f8] sm:$0xff]
    %v289 = vld [vmem:[%s1] sm:$0xf]
    %v290 = vld [vmem:[%s1 + $0x4] sm:$0xf]
    %v291 = vld [vmem:[%s1 + $0x8] sm:$0xf]
    %v292 = vld [vmem:[%s1 + $0xc] sm:$0xf]
    %v293 = vld [vmem:[%s1 + $0x10] sm:$0xf]
    %v294 = vld [vmem:[%s1 + $0x14] sm:$0xf]
    %v295 = vld [vmem:[%s1 + $0x18] sm:$0xf]
    %v296 = vld [vmem:[%s1 + $0x1c] sm:$0xf]
    %v297 = vld [vmem:[%s1 + $0x20] sm:$0xf]
    %v298 = vld [vmem:[%s1 + $0x24] sm:$0xf]
    %v299 = vld [vmem:[%s1 + $0x28] sm:$0xf]
    %v300 = vld [vmem:[%s1 + $0x2c] sm:$0xf]
    %v301 = vld [vmem:[%s1 + $0x30] sm:$0xf]
    %v302 = vld [vmem:[%s1 + $0x34] sm:$0xf]
    %v303 = vld [vmem:[%s1 + $0x38] sm:$0xf]
    %v304 = vld [vmem:[%s1 + $0x3c] sm:$0xf]
    %v305 = vld [vmem:[%s1 + $0x40] sm:$0xf]
    %v306 = vld [vmem:[%s1 + $0x44] sm:$0xf]
    %v307 = vld [vmem:[%s1 + $0x48] sm:$0xf]
    %v308 = vld [vmem:[%s1 + $0x4c] sm:$0xf]
    %v309 = vld [vmem:[%s1 + $0x50] sm:$0xf]
    %v310 = vld [vmem:[%s1 + $0x54] sm:$0xf]
    %v311 = vld [vmem:[%s1 + $0x58] sm:$0xf]
    %v312 = vld [vmem:[%s1 + $0x5c] sm:$0xf]
    %v313 = vld [vmem:[%s1 + $0x60] sm:$0xf]
    %v314 = vld [vmem:[%s1 + $0x64] sm:$0xf]
    %v315 = vld [vmem:[%s1 + $0x68] sm:$0xf]
    %v316 = vld [vmem:[%s1 + $0x6c] sm:$0xf]
    %v317 = vld [vmem:[%s1 + $0x70] sm:$0xf]
    %v318 = vld [vmem:[%s1 + $0x74] sm:$0xf]
    %v319 = vld [vmem:[%s1 + $0x78] sm:$0xf]
    %v320 = vld [vmem:[%s1 + $0x7c] sm:$0xf]
    %v321 = vld [vmem:[%s1 + $0x80] sm:$0xf]
    %v322 = vld [vmem:[%s1 + $0x84] sm:$0xf]
    %v323 = vld [vmem:[%s1 + $0x88] sm:$0xf]
    %v324 = vld [vmem:[%s1 + $0x8c] sm:$0xf]
    %v325 = vld [vmem:[%s1 + $0x90] sm:$0xf]
    %v326 = vld [vmem:[%s1 + $0x94] sm:$0xf]
    %v327 = vld [vmem:[%s1 + $0x98] sm:$0xf]
    %v328 = vld [vmem:[%s1 + $0x9c] sm:$0xf]
    %v329 = vld [vmem:[%s1 + $0xa0] sm:$0xf]
    %v330 = vld [vmem:[%s1 + $0xa4] sm:$0xf]
    %v331 = vld [vmem:[%s1 + $0xa8] sm:$0xf]
    %v332 = vld [vmem:[%s1 + $0xac] sm:$0xf]
    %v333 = vld [vmem:[%s1 + $0xb0] sm:$0xf]
    %v334 = vld [vmem:[%s1 + $0xb4] sm:$0xf]
    %v335 = vld [vmem:[%s1 + $0xb8] sm:$0xf]
    %v336 = vld [vmem:[%s1 + $0xbc] sm:$0xf]
    %v337 = vld [vmem:[%s1 + $0xc0] sm:$0xf]
    %v338 = vld [vmem:[%s1 + $0xc4] sm:$0xf]
    %v339 = vld [vmem:[%s1 + $0xc8] sm:$0xf]
    %v340 = vld [vmem:[%s1 + $0xcc] sm:$0xf]
    %v341 = vld [vmem:[%s1 + $0xd0] sm:$0xf]
    %v342 = vld [vmem:[%s1 + $0xd4] sm:$0xf]
    %v343 = vld [vmem:[%s1 + $0xd8] sm:$0xf]
    %v344 = vld [vmem:[%s1 + $0xdc] sm:$0xf]
    %v345 = vld [vmem:[%s1 + $0xe0] sm:$0xf]
    %v346 = vld [vmem:[%s1 + $0xe4] sm:$0xf]
    %v347 = vld [vmem:[%s1 + $0xe8] sm:$0xf]
    %v348 = vld [vmem:[%s1 + $0xec] sm:$0xf]
    %v349 = vld [vmem:[%s1 + $0xf0] sm:$0xf]
    %v350 = vld [vmem:[%s1 + $0xf4] sm:$0xf]
    %v351 = vld [vmem:[%s1 + $0xf8] sm:$0xf]
    %v352 = vld [vmem:[%s1 + $0xfc] sm:$0xf]
    %v481 = vunpack.c.l.b16 %v161
    %v482 = vunpack.c.h.b16 %v161
    %v483 = vunpack.c.l.b16 %v162
    %v484 = vunpack.c.h.b16 %v162
    %v485 = vunpack.c.l.b16 %v163
    %v486 = vunpack.c.h.b16 %v163
    %v487 = vunpack.c.l.b16 %v164
    %v488 = vunpack.c.h.b16 %v164
    %v489 = vunpack.c.l.b16 %v165
    %v490 = vunpack.c.h.b16 %v165
    %v491 = vunpack.c.l.b16 %v166
    %v492 = vunpack.c.h.b16 %v166
    %v493 = vunpack.c.l.b16 %v167
    %v494 = vunpack.c.h.b16 %v167
    %v495 = vunpack.c.l.b16 %v168
    %v496 = vunpack.c.h.b16 %v168
    %v497 = vunpack.c.l.b16 %v169
    %v498 = vunpack.c.h.b16 %v169
    %v499 = vunpack.c.l.b16 %v170
    %v500 = vunpack.c.h.b16 %v170
    %v501 = vunpack.c.l.b16 %v171
    %v502 = vunpack.c.h.b16 %v171
    %v503 = vunpack.c.l.b16 %v172
    %v504 = vunpack.c.h.b16 %v172
    %v505 = vunpack.c.l.b16 %v173
    %v506 = vunpack.c.h.b16 %v173
    %v507 = vunpack.c.l.b16 %v174
    %v508 = vunpack.c.h.b16 %v174
    %v509 = vunpack.c.l.b16 %v175
    %v510 = vunpack.c.h.b16 %v175
    %v511 = vunpack.c.l.b16 %v176
    %v512 = vunpack.c.h.b16 %v176
    %v513 = vunpack.c.l.b16 %v177
    %v514 = vunpack.c.h.b16 %v177
    %v515 = vunpack.c.l.b16 %v178
    %v516 = vunpack.c.h.b16 %v178
    %v517 = vunpack.c.l.b16 %v179
    %v518 = vunpack.c.h.b16 %v179
    %v519 = vunpack.c.l.b16 %v180
    %v520 = vunpack.c.h.b16 %v180
    %v521 = vunpack.c.l.b16 %v181
    %v522 = vunpack.c.h.b16 %v181
    %v523 = vunpack.c.l.b16 %v182
    %v524 = vunpack.c.h.b16 %v182
    %v525 = vunpack.c.l.b16 %v183
    %v526 = vunpack.c.h.b16 %v183
    %v527 = vunpack.c.l.b16 %v184
    %v528 = vunpack.c.h.b16 %v184
    %v529 = vunpack.c.l.b16 %v185
    %v530 = vunpack.c.h.b16 %v185
    %v531 = vunpack.c.l.b16 %v186
    %v532 = vunpack.c.h.b16 %v186
    %v533 = vunpack.c.l.b16 %v187
    %v534 = vunpack.c.h.b16 %v187
    %v535 = vunpack.c.l.b16 %v188
    %v536 = vunpack.c.h.b16 %v188
    %v537 = vunpack.c.l.b16 %v189
    %v538 = vunpack.c.h.b16 %v189
    %v539 = vunpack.c.l.b16 %v190
    %v540 = vunpack.c.h.b16 %v190
    %v541 = vunpack.c.l.b16 %v191
    %v542 = vunpack.c.h.b16 %v191
    %v543 = vunpack.c.l.b16 %v192
    %v544 = vunpack.c.h.b16 %v192
    %v545 = vunpack.c.l.b16 %v193
    %v546 = vunpack.c.h.b16 %v193
    %v547 = vunpack.c.l.b16 %v194
    %v548 = vunpack.c.h.b16 %v194
    %v549 = vunpack.c.l.b16 %v195
    %v550 = vunpack.c.h.b16 %v195
    %v551 = vunpack.c.l.b16 %v196
    %v552 = vunpack.c.h.b16 %v196
    %v553 = vunpack.c.l.b16 %v197
    %v554 = vunpack.c.h.b16 %v197
    %v555 = vunpack.c.l.b16 %v198
    %v556 = vunpack.c.h.b16 %v198
    %v557 = vunpack.c.l.b16 %v199
    %v558 = vunpack.c.h.b16 %v199
    %v559 = vunpack.c.l.b16 %v200
    %v560 = vunpack.c.h.b16 %v200
    %v561 = vunpack.c.l.b16 %v201
    %v562 = vunpack.c.h.b16 %v201
    %v563 = vunpack.c.l.b16 %v202
    %v564 = vunpack.c.h.b16 %v202
    %v565 = vunpack.c.l.b16 %v203
    %v566 = vunpack.c.h.b16 %v203
    %v567 = vunpack.c.l.b16 %v204
    %v568 = vunpack.c.h.b16 %v204
    %v569 = vunpack.c.l.b16 %v205
    %v570 = vunpack.c.h.b16 %v205
    %v571 = vunpack.c.l.b16 %v206
    %v572 = vunpack.c.h.b16 %v206
    %v573 = vunpack.c.l.b16 %v207
    %v574 = vunpack.c.h.b16 %v207
    %v575 = vunpack.c.l.b16 %v208
    %v576 = vunpack.c.h.b16 %v208
    %v577 = vunpack.c.l.b16 %v209
    %v578 = vunpack.c.h.b16 %v209
    %v579 = vunpack.c.l.b16 %v210
    %v580 = vunpack.c.h.b16 %v210
    %v581 = vunpack.c.l.b16 %v211
    %v582 = vunpack.c.h.b16 %v211
    %v583 = vunpack.c.l.b16 %v212
    %v584 = vunpack.c.h.b16 %v212
    %v585 = vunpack.c.l.b16 %v213
    %v586 = vunpack.c.h.b16 %v213
    %v587 = vunpack.c.l.b16 %v214
    %v588 = vunpack.c.h.b16 %v214
    %v589 = vunpack.c.l.b16 %v215
    %v590 = vunpack.c.h.b16 %v215
    %v591 = vunpack.c.l.b16 %v216
    %v592 = vunpack.c.h.b16 %v216
    %v593 = vunpack.c.l.b16 %v217
    %v594 = vunpack.c.h.b16 %v217
    %v595 = vunpack.c.l.b16 %v218
    %v596 = vunpack.c.h.b16 %v218
    %v597 = vunpack.c.l.b16 %v219
    %v598 = vunpack.c.h.b16 %v219
    %v599 = vunpack.c.l.b16 %v220
    %v600 = vunpack.c.h.b16 %v220
    %v601 = vunpack.c.l.b16 %v221
    %v602 = vunpack.c.h.b16 %v221
    %v603 = vunpack.c.l.b16 %v222
    %v604 = vunpack.c.h.b16 %v222
    %v605 = vunpack.c.l.b16 %v223
    %v606 = vunpack.c.h.b16 %v223
    %v607 = vunpack.c.l.b16 %v224
    %v608 = vunpack.c.h.b16 %v224
    %v609 = vunpack.c.l.b16 %v225
    %v610 = vunpack.c.h.b16 %v225
    %v611 = vunpack.c.l.b16 %v226
    %v612 = vunpack.c.h.b16 %v226
    %v613 = vunpack.c.l.b16 %v227
    %v614 = vunpack.c.h.b16 %v227
    %v615 = vunpack.c.l.b16 %v228
    %v616 = vunpack.c.h.b16 %v228
    %v617 = vunpack.c.l.b16 %v229
    %v618 = vunpack.c.h.b16 %v229
    %v619 = vunpack.c.l.b16 %v230
    %v620 = vunpack.c.h.b16 %v230
    %v621 = vunpack.c.l.b16 %v231
    %v622 = vunpack.c.h.b16 %v231
    %v623 = vunpack.c.l.b16 %v232
    %v624 = vunpack.c.h.b16 %v232
    %v625 = vunpack.c.l.b16 %v233
    %v626 = vunpack.c.h.b16 %v233
    %v627 = vunpack.c.l.b16 %v234
    %v628 = vunpack.c.h.b16 %v234
    %v629 = vunpack.c.l.b16 %v235
    %v630 = vunpack.c.h.b16 %v235
    %v631 = vunpack.c.l.b16 %v236
    %v632 = vunpack.c.h.b16 %v236
    %v633 = vunpack.c.l.b16 %v237
    %v634 = vunpack.c.h.b16 %v237
    %v635 = vunpack.c.l.b16 %v238
    %v636 = vunpack.c.h.b16 %v238
    %v637 = vunpack.c.l.b16 %v239
    %v638 = vunpack.c.h.b16 %v239
    %v639 = vunpack.c.l.b16 %v240
    %v640 = vunpack.c.h.b16 %v240
    %v641 = vunpack.c.l.b16 %v241
    %v642 = vunpack.c.h.b16 %v241
    %v643 = vunpack.c.l.b16 %v242
    %v644 = vunpack.c.h.b16 %v242
    %v645 = vunpack.c.l.b16 %v243
    %v646 = vunpack.c.h.b16 %v243
    %v647 = vunpack.c.l.b16 %v244
    %v648 = vunpack.c.h.b16 %v244
    %v649 = vunpack.c.l.b16 %v245
    %v650 = vunpack.c.h.b16 %v245
    %v651 = vunpack.c.l.b16 %v246
    %v652 = vunpack.c.h.b16 %v246
    %v653 = vunpack.c.l.b16 %v247
    %v654 = vunpack.c.h.b16 %v247
    %v655 = vunpack.c.l.b16 %v248
    %v656 = vunpack.c.h.b16 %v248
    %v657 = vunpack.c.l.b16 %v249
    %v658 = vunpack.c.h.b16 %v249
    %v659 = vunpack.c.l.b16 %v250
    %v660 = vunpack.c.h.b16 %v250
    %v661 = vunpack.c.l.b16 %v251
    %v662 = vunpack.c.h.b16 %v251
    %v663 = vunpack.c.l.b16 %v252
    %v664 = vunpack.c.h.b16 %v252
    %v665 = vunpack.c.l.b16 %v253
    %v666 = vunpack.c.h.b16 %v253
    %v667 = vunpack.c.l.b16 %v254
    %v668 = vunpack.c.h.b16 %v254
    %v669 = vunpack.c.l.b16 %v255
    %v670 = vunpack.c.h.b16 %v255
    %v671 = vunpack.c.l.b16 %v256
    %v672 = vunpack.c.h.b16 %v256
    %v673 = vunpack.c.l.b16 %v257
    %v674 = vunpack.c.h.b16 %v257
    %v675 = vunpack.c.l.b16 %v258
    %v676 = vunpack.c.h.b16 %v258
    %v677 = vunpack.c.l.b16 %v259
    %v678 = vunpack.c.h.b16 %v259
    %v679 = vunpack.c.l.b16 %v260
    %v680 = vunpack.c.h.b16 %v260
    %v681 = vunpack.c.l.b16 %v261
    %v682 = vunpack.c.h.b16 %v261
    %v683 = vunpack.c.l.b16 %v262
    %v684 = vunpack.c.h.b16 %v262
    %v685 = vunpack.c.l.b16 %v263
    %v686 = vunpack.c.h.b16 %v263
    %v687 = vunpack.c.l.b16 %v264
    %v688 = vunpack.c.h.b16 %v264
    %v689 = vunpack.c.l.b16 %v265
    %v690 = vunpack.c.h.b16 %v265
    %v691 = vunpack.c.l.b16 %v266
    %v692 = vunpack.c.h.b16 %v266
    %v693 = vunpack.c.l.b16 %v267
    %v694 = vunpack.c.h.b16 %v267
    %v695 = vunpack.c.l.b16 %v268
    %v696 = vunpack.c.h.b16 %v268
    %v697 = vunpack.c.l.b16 %v269
    %v698 = vunpack.c.h.b16 %v269
    %v699 = vunpack.c.l.b16 %v270
    %v700 = vunpack.c.h.b16 %v270
    %v701 = vunpack.c.l.b16 %v271
    %v702 = vunpack.c.h.b16 %v271
    %v703 = vunpack.c.l.b16 %v272
    %v704 = vunpack.c.h.b16 %v272
    %v705 = vunpack.c.l.b16 %v273
    %v706 = vunpack.c.h.b16 %v273
    %v707 = vunpack.c.l.b16 %v274
    %v708 = vunpack.c.h.b16 %v274
    %v709 = vunpack.c.l.b16 %v275
    %v710 = vunpack.c.h.b16 %v275
    %v711 = vunpack.c.l.b16 %v276
    %v712 = vunpack.c.h.b16 %v276
    %v713 = vunpack.c.l.b16 %v277
    %v714 = vunpack.c.h.b16 %v277
    %v715 = vunpack.c.l.b16 %v278
    %v716 = vunpack.c.h.b16 %v278
    %v717 = vunpack.c.l.b16 %v279
    %v718 = vunpack.c.h.b16 %v279
    %v719 = vunpack.c.l.b16 %v280
    %v720 = vunpack.c.h.b16 %v280
    %v721 = vunpack.c.l.b16 %v281
    %v722 = vunpack.c.h.b16 %v281
    %v723 = vunpack.c.l.b16 %v282
    %v724 = vunpack.c.h.b16 %v282
    %v725 = vunpack.c.l.b16 %v283
    %v726 = vunpack.c.h.b16 %v283
    %v727 = vunpack.c.l.b16 %v284
    %v728 = vunpack.c.h.b16 %v284
    %v729 = vunpack.c.l.b16 %v285
    %v730 = vunpack.c.h.b16 %v285
    %v731 = vunpack.c.l.b16 %v286
    %v732 = vunpack.c.h.b16 %v286
    %v733 = vunpack.c.l.b16 %v287
    %v734 = vunpack.c.h.b16 %v287
    %v735 = vunpack.c.l.b16 %v288
    %v736 = vunpack.c.h.b16 %v288
    %v737 = vpack.c.b16 %v485, %v481
    %v738 = vpack.c.b16 %v486, %v482
    %v739 = vpack.c.b16 %v487, %v483
    %v740 = vpack.c.b16 %v488, %v484
    %v741 = vpack.c.b16 %v493, %v489
    %v742 = vpack.c.b16 %v494, %v490
    %v743 = vpack.c.b16 %v495, %v491
    %v744 = vpack.c.b16 %v496, %v492
    %v745 = vpack.c.b16 %v501, %v497
    %v746 = vpack.c.b16 %v502, %v498
    %v747 = vpack.c.b16 %v503, %v499
    %v748 = vpack.c.b16 %v504, %v500
    %v749 = vpack.c.b16 %v509, %v505
    %v750 = vpack.c.b16 %v510, %v506
    %v751 = vpack.c.b16 %v511, %v507
    %v752 = vpack.c.b16 %v512, %v508
    %v753 = vpack.c.b16 %v517, %v513
    %v754 = vpack.c.b16 %v518, %v514
    %v755 = vpack.c.b16 %v519, %v515
    %v756 = vpack.c.b16 %v520, %v516
    %v757 = vpack.c.b16 %v525, %v521
    %v758 = vpack.c.b16 %v526, %v522
    %v759 = vpack.c.b16 %v527, %v523
    %v760 = vpack.c.b16 %v528, %v524
    %v761 = vpack.c.b16 %v533, %v529
    %v762 = vpack.c.b16 %v534, %v530
    %v763 = vpack.c.b16 %v535, %v531
    %v764 = vpack.c.b16 %v536, %v532
    %v765 = vpack.c.b16 %v541, %v537
    %v766 = vpack.c.b16 %v542, %v538
    %v767 = vpack.c.b16 %v543, %v539
    %v768 = vpack.c.b16 %v544, %v540
    %v769 = vpack.c.b16 %v549, %v545
    %v770 = vpack.c.b16 %v550, %v546
    %v771 = vpack.c.b16 %v551, %v547
    %v772 = vpack.c.b16 %v552, %v548
    %v773 = vpack.c.b16 %v557, %v553
    %v774 = vpack.c.b16 %v558, %v554
    %v775 = vpack.c.b16 %v559, %v555
    %v776 = vpack.c.b16 %v560, %v556
    %v777 = vpack.c.b16 %v565, %v561
    %v778 = vpack.c.b16 %v566, %v562
    %v779 = vpack.c.b16 %v567, %v563
    %v780 = vpack.c.b16 %v568, %v564
    %v781 = vpack.c.b16 %v573, %v569
    %v782 = vpack.c.b16 %v574, %v570
    %v783 = vpack.c.b16 %v575, %v571
    %v784 = vpack.c.b16 %v576, %v572
    %v785 = vpack.c.b16 %v581, %v577
    %v786 = vpack.c.b16 %v582, %v578
    %v787 = vpack.c.b16 %v583, %v579
    %v788 = vpack.c.b16 %v584, %v580
    %v789 = vpack.c.b16 %v589, %v585
    %v790 = vpack.c.b16 %v590, %v586
    %v791 = vpack.c.b16 %v591, %v587
    %v792 = vpack.c.b16 %v592, %v588
    %v793 = vpack.c.b16 %v597, %v593
    %v794 = vpack.c.b16 %v598, %v594
    %v795 = vpack.c.b16 %v599, %v595
    %v796 = vpack.c.b16 %v600, %v596
    %v797 = vpack.c.b16 %v605, %v601
    %v798 = vpack.c.b16 %v606, %v602
    %v799 = vpack.c.b16 %v607, %v603
    %v800 = vpack.c.b16 %v608, %v604
    %v801 = vpack.c.b16 %v613, %v609
    %v802 = vpack.c.b16 %v614, %v610
    %v803 = vpack.c.b16 %v615, %v611
    %v804 = vpack.c.b16 %v616, %v612
    %v805 = vpack.c.b16 %v621, %v617
    %v806 = vpack.c.b16 %v622, %v618
    %v807 = vpack.c.b16 %v623, %v619
    %v808 = vpack.c.b16 %v624, %v620
    %v809 = vpack.c.b16 %v629, %v625
    %v810 = vpack.c.b16 %v630, %v626
    %v811 = vpack.c.b16 %v631, %v627
    %v812 = vpack.c.b16 %v632, %v628
    %v813 = vpack.c.b16 %v637, %v633
    %v814 = vpack.c.b16 %v638, %v634
    %v815 = vpack.c.b16 %v639, %v635
    %v816 = vpack.c.b16 %v640, %v636
    %v817 = vpack.c.b16 %v645, %v641
    %v818 = vpack.c.b16 %v646, %v642
    %v819 = vpack.c.b16 %v647, %v643
    %v820 = vpack.c.b16 %v648, %v644
    %v821 = vpack.c.b16 %v653, %v649
    %v822 = vpack.c.b16 %v654, %v650
    %v823 = vpack.c.b16 %v655, %v651
    %v824 = vpack.c.b16 %v656, %v652
    %v825 = vpack.c.b16 %v661, %v657
    %v826 = vpack.c.b16 %v662, %v658
    %v827 = vpack.c.b16 %v663, %v659
    %v828 = vpack.c.b16 %v664, %v660
    %v829 = vpack.c.b16 %v669, %v665
    %v830 = vpack.c.b16 %v670, %v666
    %v831 = vpack.c.b16 %v671, %v667
    %v832 = vpack.c.b16 %v672, %v668
    %v833 = vpack.c.b16 %v677, %v673
    %v834 = vpack.c.b16 %v678, %v674
    %v835 = vpack.c.b16 %v679, %v675
    %v836 = vpack.c.b16 %v680, %v676
    %v837 = vpack.c.b16 %v685, %v681
    %v838 = vpack.c.b16 %v686, %v682
    %v839 = vpack.c.b16 %v687, %v683
    %v840 = vpack.c.b16 %v688, %v684
    %v841 = vpack.c.b16 %v693, %v689
    %v842 = vpack.c.b16 %v694, %v690
    %v843 = vpack.c.b16 %v695, %v691
    %v844 = vpack.c.b16 %v696, %v692
    %v845 = vpack.c.b16 %v701, %v697
    %v846 = vpack.c.b16 %v702, %v698
    %v847 = vpack.c.b16 %v703, %v699
    %v848 = vpack.c.b16 %v704, %v700
    %v849 = vpack.c.b16 %v709, %v705
    %v850 = vpack.c.b16 %v710, %v706
    %v851 = vpack.c.b16 %v711, %v707
    %v852 = vpack.c.b16 %v712, %v708
    %v853 = vpack.c.b16 %v717, %v713
    %v854 = vpack.c.b16 %v718, %v714
    %v855 = vpack.c.b16 %v719, %v715
    %v856 = vpack.c.b16 %v720, %v716
    %v857 = vpack.c.b16 %v725, %v721
    %v858 = vpack.c.b16 %v726, %v722
    %v859 = vpack.c.b16 %v727, %v723
    %v860 = vpack.c.b16 %v728, %v724
    %v861 = vpack.c.b16 %v733, %v729
    %v862 = vpack.c.b16 %v734, %v730
    %v863 = vpack.c.b16 %v735, %v731
    %v864 = vpack.c.b16 %v736, %v732
    %v1057 = vunpack.c.l.b16 %v289
    %v1058 = vunpack.c.l.b16 %v290
    %v1059 = vunpack.c.l.b16 %v291
    %v1060 = vunpack.c.l.b16 %v292
    %v1061 = vunpack.c.l.b16 %v293
    %v1062 = vunpack.c.l.b16 %v294
    %v1063 = vunpack.c.l.b16 %v295
    %v1064 = vunpack.c.l.b16 %v296
    %v1065 = vunpack.c.l.b16 %v297
    %v1066 = vunpack.c.l.b16 %v298
    %v1067 = vunpack.c.l.b16 %v299
    %v1068 = vunpack.c.l.b16 %v300
    %v1069 = vunpack.c.l.b16 %v301
    %v1070 = vunpack.c.l.b16 %v302
    %v1071 = vunpack.c.l.b16 %v303
    %v1072 = vunpack.c.l.b16 %v304
    %v1073 = vunpack.c.l.b16 %v305
    %v1074 = vunpack.c.l.b16 %v306
    %v1075 = vunpack.c.l.b16 %v307
    %v1076 = vunpack.c.l.b16 %v308
    %v1077 = vunpack.c.l.b16 %v309
    %v1078 = vunpack.c.l.b16 %v310
    %v1079 = vunpack.c.l.b16 %v311
    %v1080 = vunpack.c.l.b16 %v312
    %v1081 = vunpack.c.l.b16 %v313
    %v1082 = vunpack.c.l.b16 %v314
    %v1083 = vunpack.c.l.b16 %v315
    %v1084 = vunpack.c.l.b16 %v316
    %v1085 = vunpack.c.l.b16 %v317
    %v1086 = vunpack.c.l.b16 %v318
    %v1087 = vunpack.c.l.b16 %v319
    %v1088 = vunpack.c.l.b16 %v320
    %v1089 = vunpack.c.l.b16 %v321
    %v1090 = vunpack.c.l.b16 %v322
    %v1091 = vunpack.c.l.b16 %v323
    %v1092 = vunpack.c.l.b16 %v324
    %v1093 = vunpack.c.l.b16 %v325
    %v1094 = vunpack.c.l.b16 %v326
    %v1095 = vunpack.c.l.b16 %v327
    %v1096 = vunpack.c.l.b16 %v328
    %v1097 = vunpack.c.l.b16 %v329
    %v1098 = vunpack.c.l.b16 %v330
    %v1099 = vunpack.c.l.b16 %v331
    %v1100 = vunpack.c.l.b16 %v332
    %v1101 = vunpack.c.l.b16 %v333
    %v1102 = vunpack.c.l.b16 %v334
    %v1103 = vunpack.c.l.b16 %v335
    %v1104 = vunpack.c.l.b16 %v336
    %v1105 = vunpack.c.l.b16 %v337
    %v1106 = vunpack.c.l.b16 %v338
    %v1107 = vunpack.c.l.b16 %v339
    %v1108 = vunpack.c.l.b16 %v340
    %v1109 = vunpack.c.l.b16 %v341
    %v1110 = vunpack.c.l.b16 %v342
    %v1111 = vunpack.c.l.b16 %v343
    %v1112 = vunpack.c.l.b16 %v344
    %v1113 = vunpack.c.l.b16 %v345
    %v1114 = vunpack.c.l.b16 %v346
    %v1115 = vunpack.c.l.b16 %v347
    %v1116 = vunpack.c.l.b16 %v348
    %v1117 = vunpack.c.l.b16 %v349
    %v1118 = vunpack.c.l.b16 %v350
    %v1119 = vunpack.c.l.b16 %v351
    %v1120 = vunpack.c.l.b16 %v352
    %v1121 = vpack.c.b16 %v1058, %v1057
    %v1122 = vpack.c.b16 %v1060, %v1059
    %v1123 = vpack.c.b16 %v1062, %v1061
    %v1124 = vpack.c.b16 %v1064, %v1063
    %v1125 = vpack.c.b16 %v1066, %v1065
    %v1126 = vpack.c.b16 %v1068, %v1067
    %v1127 = vpack.c.b16 %v1070, %v1069
    %v1128 = vpack.c.b16 %v1072, %v1071
    %v1129 = vpack.c.b16 %v1074, %v1073
    %v1130 = vpack.c.b16 %v1076, %v1075
    %v1131 = vpack.c.b16 %v1078, %v1077
    %v1132 = vpack.c.b16 %v1080, %v1079
    %v1133 = vpack.c.b16 %v1082, %v1081
    %v1134 = vpack.c.b16 %v1084, %v1083
    %v1135 = vpack.c.b16 %v1086, %v1085
    %v1136 = vpack.c.b16 %v1088, %v1087
    %v1137 = vpack.c.b16 %v1090, %v1089
    %v1138 = vpack.c.b16 %v1092, %v1091
    %v1139 = vpack.c.b16 %v1094, %v1093
    %v1140 = vpack.c.b16 %v1096, %v1095
    %v1141 = vpack.c.b16 %v1098, %v1097
    %v1142 = vpack.c.b16 %v1100, %v1099
    %v1143 = vpack.c.b16 %v1102, %v1101
    %v1144 = vpack.c.b16 %v1104, %v1103
    %v1145 = vpack.c.b16 %v1106, %v1105
    %v1146 = vpack.c.b16 %v1108, %v1107
    %v1147 = vpack.c.b16 %v1110, %v1109
    %v1148 = vpack.c.b16 %v1112, %v1111
    %v1149 = vpack.c.b16 %v1114, %v1113
    %v1150 = vpack.c.b16 %v1116, %v1115
    %v1151 = vpack.c.b16 %v1118, %v1117
    %v1152 = vpack.c.b16 %v1120, %v1119
    %1185 = vmatprep.subr.bf16.mxu0 0
    %1186 = vmatpush1.bf16.msra.mxu0 %v1121
    %1187 = vmatprep.subr.bf16.mxu0 0
    %1188 = vmatpush1.bf16.msra.mxu0 %v1122
    %1189 = vmatprep.subr.bf16.mxu0 0
    %1190 = vmatpush1.bf16.msra.mxu0 %v1123
    %1191 = vmatprep.subr.bf16.mxu0 0
    %1192 = vmatpush1.bf16.msra.mxu0 %v1124
    %1193 = vmatprep.subr.bf16.mxu0 0
    %1194 = vmatpush1.bf16.msra.mxu0 %v1125
    %1195 = vmatprep.subr.bf16.mxu0 0
    %1196 = vmatpush1.bf16.msra.mxu0 %v1126
    %1197 = vmatprep.subr.bf16.mxu0 0
    %1198 = vmatpush1.bf16.msra.mxu0 %v1127
    %1199 = vmatprep.subr.bf16.mxu0 0
    %1200 = vmatpush1.bf16.msra.mxu0 %v1128
    %1201 = vmatprep.subr.bf16.mxu0 0
    %1202 = vmatpush1.bf16.msra.mxu0 %v1129
    %1203 = vmatprep.subr.bf16.mxu0 0
    %1204 = vmatpush1.bf16.msra.mxu0 %v1130
    %1205 = vmatprep.subr.bf16.mxu0 0
    %1206 = vmatpush1.bf16.msra.mxu0 %v1131
    %1207 = vmatprep.subr.bf16.mxu0 0
    %1208 = vmatpush1.bf16.msra.mxu0 %v1132
    %1209 = vmatprep.subr.bf16.mxu0 0
    %1210 = vmatpush1.bf16.msra.mxu0 %v1133
    %1211 = vmatprep.subr.bf16.mxu0 0
    %1212 = vmatpush1.bf16.msra.mxu0 %v1134
    %1213 = vmatprep.subr.bf16.mxu0 0
    %1214 = vmatpush1.bf16.msra.mxu0 %v1135
    %1215 = vmatprep.subr.bf16.mxu0 0
    %1216 = vmatpush1.bf16.msra.mxu0 %v1136
    %1217 = vmatprep.mubr.bf16.mxu0 %v738
    %1218 = vmatmul.mubr.bf16.gmra.mrb[0].mxu0 %v737
    %v1219 = vpop.f32.mrb[0].mxu0
    %v1220 = vadd.f32 0.0, %v1219
    %v1221 = vpop.f32.mrb[0].mxu0
    %v1222 = vpop.f32.mrb[0].mxu0
    %v1223 = vadd.f32 0.0, %v1222
    %v1224 = vpop.f32.mrb[0].mxu0
    %1225 = vmatprep.mubr.bf16.mxu0 %v742
    %1226 = vmatmul.mubr.bf16.gmra.mrb[0].mxu0 %v741
    %v1227 = vpop.f32.mrb[0].mxu0
    %v1228 = vadd.f32 0.0, %v1227
    %v1229 = vpop.f32.mrb[0].mxu0
    %v1230 = vpop.f32.mrb[0].mxu0
    %v1231 = vadd.f32 0.0, %v1230
    %v1232 = vpop.f32.mrb[0].mxu0
    %1233 = vmatprep.mubr.bf16.mxu0 %v746
    %1234 = vmatmul.mubr.bf16.gmra.mrb[0].mxu0 %v745
    %v1235 = vpop.f32.mrb[0].mxu0
    %v1236 = vadd.f32 0.0, %v1235
    %v1237 = vpop.f32.mrb[0].mxu0
    %v1238 = vpop.f32.mrb[0].mxu0
    %v1239 = vadd.f32 0.0, %v1238
    %v1240 = vpop.f32.mrb[0].mxu0
    %1241 = vmatprep.mubr.bf16.mxu0 %v750
    %1242 = vmatmul.mubr.bf16.gmra.mrb[0].mxu0 %v749
    %v1243 = vpop.f32.mrb[0].mxu0
    %v1244 = vadd.f32 0.0, %v1243
    %v1245 = vpop.f32.mrb[0].mxu0
    %v1246 = vpop.f32.mrb[0].mxu0
    %v1247 = vadd.f32 0.0, %v1246
    %v1248 = vpop.f32.mrb[0].mxu0
    %1249 = vmatprep.mubr.bf16.mxu0 %v754
    %1250 = vmatmul.mubr.bf16.gmra.mrb[0].mxu0 %v753
    %v1251 = vpop.f32.mrb[0].mxu0
    %v1252 = vadd.f32 0.0, %v1251
    %v1253 = vpop.f32.mrb[0].mxu0
    %v1254 = vpop.f32.mrb[0].mxu0
    %v1255 = vadd.f32 0.0, %v1254
    %v1256 = vpop.f32.mrb[0].mxu0
    %1257 = vmatprep.mubr.bf16.mxu0 %v758
    %1258 = vmatmul.mubr.bf16.gmra.mrb[0].mxu0 %v757
    %v1259 = vpop.f32.mrb[0].mxu0
    %v1260 = vadd.f32 0.0, %v1259
    %v1261 = vpop.f32.mrb[0].mxu0
    %v1262 = vpop.f32.mrb[0].mxu0
    %v1263 = vadd.f32 0.0, %v1262
    %v1264 = vpop.f32.mrb[0].mxu0
    %1265 = vmatprep.mubr.bf16.mxu0 %v762
    %1266 = vmatmul.mubr.bf16.gmra.mrb[0].mxu0 %v761
    %v1267 = vpop.f32.mrb[0].mxu0
    %v1268 = vadd.f32 0.0, %v1267
    %v1269 = vpop.f32.mrb[0].mxu0
    %v1270 = vpop.f32.mrb[0].mxu0
    %v1271 = vadd.f32 0.0, %v1270
    %v1272 = vpop.f32.mrb[0].mxu0
    %1273 = vmatprep.mubr.bf16.mxu0 %v766
    %1274 = vmatmul.mubr.bf16.gmra.mrb[0].mxu0 %v765
    %v1275 = vpop.f32.mrb[0].mxu0
    %v1276 = vadd.f32 0.0, %v1275
    %v1277 = vpop.f32.mrb[0].mxu0
    %v1278 = vpop.f32.mrb[0].mxu0
    %v1279 = vadd.f32 0.0, %v1278
    %v1280 = vpop.f32.mrb[0].mxu0
    %1281 = vmatprep.mubr.bf16.mxu0 %v770
    %1282 = vmatmul.mubr.bf16.gmra.mrb[0].mxu0 %v769
    %v1283 = vpop.f32.mrb[0].mxu0
    %v1284 = vadd.f32 0.0, %v1283
    %v1285 = vpop.f32.mrb[0].mxu0
    %v1286 = vpop.f32.mrb[0].mxu0
    %v1287 = vadd.f32 0.0, %v1286
    %v1288 = vpop.f32.mrb[0].mxu0
    %1289 = vmatprep.mubr.bf16.mxu0 %v774
    %1290 = vmatmul.mubr.bf16.gmra.mrb[0].mxu0 %v773
    %v1291 = vpop.f32.mrb[0].mxu0
    %v1292 = vadd.f32 0.0, %v1291
    %v1293 = vpop.f32.mrb[0].mxu0
    %v1294 = vpop.f32.mrb[0].mxu0
    %v1295 = vadd.f32 0.0, %v1294
    %v1296 = vpop.f32.mrb[0].mxu0
    %1297 = vmatprep.mubr.bf16.mxu0 %v778
    %1298 = vmatmul.mubr.bf16.gmra.mrb[0].mxu0 %v777
    %v1299 = vpop.f32.mrb[0].mxu0
    %v1300 = vadd.f32 0.0, %v1299
    %v1301 = vpop.f32.mrb[0].mxu0
    %v1302 = vpop.f32.mrb[0].mxu0
    %v1303 = vadd.f32 0.0, %v1302
    %v1304 = vpop.f32.mrb[0].mxu0
    %1305 = vmatprep.mubr.bf16.mxu0 %v782
    %1306 = vmatmul.mubr.bf16.gmra.mrb[0].mxu0 %v781
    %v1307 = vpop.f32.mrb[0].mxu0
    %v1308 = vadd.f32 0.0, %v1307
    %v1309 = vpop.f32.mrb[0].mxu0
    %v1310 = vpop.f32.mrb[0].mxu0
    %v1311 = vadd.f32 0.0, %v1310
    %v1312 = vpop.f32.mrb[0].mxu0
    %1313 = vmatprep.mubr.bf16.mxu0 %v786
    %1314 = vmatmul.mubr.bf16.gmra.mrb[0].mxu0 %v785
    %v1315 = vpop.f32.mrb[0].mxu0
    %v1316 = vadd.f32 0.0, %v1315
    %v1317 = vpop.f32.mrb[0].mxu0
    %v1318 = vpop.f32.mrb[0].mxu0
    %v1319 = vadd.f32 0.0, %v1318
    %v1320 = vpop.f32.mrb[0].mxu0
    %1321 = vmatprep.mubr.bf16.mxu0 %v790
    %1322 = vmatmul.mubr.bf16.gmra.mrb[0].mxu0 %v789
    %v1323 = vpop.f32.mrb[0].mxu0
    %v1324 = vadd.f32 0.0, %v1323
    %v1325 = vpop.f32.mrb[0].mxu0
    %v1326 = vpop.f32.mrb[0].mxu0
    %v1327 = vadd.f32 0.0, %v1326
    %v1328 = vpop.f32.mrb[0].mxu0
    %1329 = vmatprep.mubr.bf16.mxu0 %v794
    %1330 = vmatmul.mubr.bf16.gmra.mrb[0].mxu0 %v793
    %v1331 = vpop.f32.mrb[0].mxu0
    %v1332 = vadd.f32 0.0, %v1331
    %v1333 = vpop.f32.mrb[0].mxu0
    %v1334 = vpop.f32.mrb[0].mxu0
    %v1335 = vadd.f32 0.0, %v1334
    %v1336 = vpop.f32.mrb[0].mxu0
    %1337 = vmatprep.mubr.bf16.mxu0 %v798
    %1338 = vmatmul.mubr.bf16.gmra.mrb[0].mxu0 %v797
    %v1339 = vpop.f32.mrb[0].mxu0
    %v1340 = vadd.f32 0.0, %v1339
    %v1341 = vpop.f32.mrb[0].mxu0
    %v1342 = vpop.f32.mrb[0].mxu0
    %v1343 = vadd.f32 0.0, %v1342
    %v1344 = vpop.f32.mrb[0].mxu0
    %1345 = vmatprep.mubr.bf16.mxu0 %v802
    %1346 = vmatmul.mubr.bf16.gmra.mrb[0].mxu0 %v801
    %v1347 = vpop.f32.mrb[0].mxu0
    %v1348 = vadd.f32 0.0, %v1347
    %v1349 = vpop.f32.mrb[0].mxu0
    %v1350 = vpop.f32.mrb[0].mxu0
    %v1351 = vadd.f32 0.0, %v1350
    %v1352 = vpop.f32.mrb[0].mxu0
    %1353 = vmatprep.mubr.bf16.mxu0 %v806
    %1354 = vmatmul.mubr.bf16.gmra.mrb[0].mxu0 %v805
    %v1355 = vpop.f32.mrb[0].mxu0
    %v1356 = vadd.f32 0.0, %v1355
    %v1357 = vpop.f32.mrb[0].mxu0
    %v1358 = vpop.f32.mrb[0].mxu0
    %v1359 = vadd.f32 0.0, %v1358
    %v1360 = vpop.f32.mrb[0].mxu0
    %1361 = vmatprep.mubr.bf16.mxu0 %v810
    %1362 = vmatmul.mubr.bf16.gmra.mrb[0].mxu0 %v809
    %v1363 = vpop.f32.mrb[0].mxu0
    %v1364 = vadd.f32 0.0, %v1363
    %v1365 = vpop.f32.mrb[0].mxu0
    %v1366 = vpop.f32.mrb[0].mxu0
    %v1367 = vadd.f32 0.0, %v1366
    %v1368 = vpop.f32.mrb[0].mxu0
    %1369 = vmatprep.mubr.bf16.mxu0 %v814
    %1370 = vmatmul.mubr.bf16.gmra.mrb[0].mxu0 %v813
    %v1371 = vpop.f32.mrb[0].mxu0
    %v1372 = vadd.f32 0.0, %v1371
    %v1373 = vpop.f32.mrb[0].mxu0
    %v1374 = vpop.f32.mrb[0].mxu0
    %v1375 = vadd.f32 0.0, %v1374
    %v1376 = vpop.f32.mrb[0].mxu0
    %1377 = vmatprep.mubr.bf16.mxu0 %v818
    %1378 = vmatmul.mubr.bf16.gmra.mrb[0].mxu0 %v817
    %v1379 = vpop.f32.mrb[0].mxu0
    %v1380 = vadd.f32 0.0, %v1379
    %v1381 = vpop.f32.mrb[0].mxu0
    %v1382 = vpop.f32.mrb[0].mxu0
    %v1383 = vadd.f32 0.0, %v1382
    %v1384 = vpop.f32.mrb[0].mxu0
    %1385 = vmatprep.mubr.bf16.mxu0 %v822
    %1386 = vmatmul.mubr.bf16.gmra.mrb[0].mxu0 %v821
    %v1387 = vpop.f32.mrb[0].mxu0
    %v1388 = vadd.f32 0.0, %v1387
    %v1389 = vpop.f32.mrb[0].mxu0
    %v1390 = vpop.f32.mrb[0].mxu0
    %v1391 = vadd.f32 0.0, %v1390
    %v1392 = vpop.f32.mrb[0].mxu0
    %1393 = vmatprep.mubr.bf16.mxu0 %v826
    %1394 = vmatmul.mubr.bf16.gmra.mrb[0].mxu0 %v825
    %v1395 = vpop.f32.mrb[0].mxu0
    %v1396 = vadd.f32 0.0, %v1395
    %v1397 = vpop.f32.mrb[0].mxu0
    %v1398 = vpop.f32.mrb[0].mxu0
    %v1399 = vadd.f32 0.0, %v1398
    %v1400 = vpop.f32.mrb[0].mxu0
    %1401 = vmatprep.mubr.bf16.mxu0 %v830
    %1402 = vmatmul.mubr.bf16.gmra.mrb[0].mxu0 %v829
    %v1403 = vpop.f32.mrb[0].mxu0
    %v1404 = vadd.f32 0.0, %v1403
    %v1405 = vpop.f32.mrb[0].mxu0
    %v1406 = vpop.f32.mrb[0].mxu0
    %v1407 = vadd.f32 0.0, %v1406
    %v1408 = vpop.f32.mrb[0].mxu0
    %1409 = vmatprep.mubr.bf16.mxu0 %v834
    %1410 = vmatmul.mubr.bf16.gmra.mrb[0].mxu0 %v833
    %v1411 = vpop.f32.mrb[0].mxu0
    %v1412 = vadd.f32 0.0, %v1411
    %v1413 = vpop.f32.mrb[0].mxu0
    %v1414 = vpop.f32.mrb[0].mxu0
    %v1415 = vadd.f32 0.0, %v1414
    %v1416 = vpop.f32.mrb[0].mxu0
    %1417 = vmatprep.mubr.bf16.mxu0 %v838
    %1418 = vmatmul.mubr.bf16.gmra.mrb[0].mxu0 %v837
    %v1419 = vpop.f32.mrb[0].mxu0
    %v1420 = vadd.f32 0.0, %v1419
    %v1421 = vpop.f32.mrb[0].mxu0
    %v1422 = vpop.f32.mrb[0].mxu0
    %v1423 = vadd.f32 0.0, %v1422
    %v1424 = vpop.f32.mrb[0].mxu0
    %1425 = vmatprep.mubr.bf16.mxu0 %v842
    %1426 = vmatmul.mubr.bf16.gmra.mrb[0].mxu0 %v841
    %v1427 = vpop.f32.mrb[0].mxu0
    %v1428 = vadd.f32 0.0, %v1427
    %v1429 = vpop.f32.mrb[0].mxu0
    %v1430 = vpop.f32.mrb[0].mxu0
    %v1431 = vadd.f32 0.0, %v1430
    %v1432 = vpop.f32.mrb[0].mxu0
    %1433 = vmatprep.mubr.bf16.mxu0 %v846
    %1434 = vmatmul.mubr.bf16.gmra.mrb[0].mxu0 %v845
    %v1435 = vpop.f32.mrb[0].mxu0
    %v1436 = vadd.f32 0.0, %v1435
    %v1437 = vpop.f32.mrb[0].mxu0
    %v1438 = vpop.f32.mrb[0].mxu0
    %v1439 = vadd.f32 0.0, %v1438
    %v1440 = vpop.f32.mrb[0].mxu0
    %1441 = vmatprep.mubr.bf16.mxu0 %v850
    %1442 = vmatmul.mubr.bf16.gmra.mrb[0].mxu0 %v849
    %v1443 = vpop.f32.mrb[0].mxu0
    %v1444 = vadd.f32 0.0, %v1443
    %v1445 = vpop.f32.mrb[0].mxu0
    %v1446 = vpop.f32.mrb[0].mxu0
    %v1447 = vadd.f32 0.0, %v1446
    %v1448 = vpop.f32.mrb[0].mxu0
    %1449 = vmatprep.mubr.bf16.mxu0 %v854
    %1450 = vmatmul.mubr.bf16.gmra.mrb[0].mxu0 %v853
    %v1451 = vpop.f32.mrb[0].mxu0
    %v1452 = vadd.f32 0.0, %v1451
    %v1453 = vpop.f32.mrb[0].mxu0
    %v1454 = vpop.f32.mrb[0].mxu0
    %v1455 = vadd.f32 0.0, %v1454
    %v1456 = vpop.f32.mrb[0].mxu0
    %1457 = vmatprep.mubr.bf16.mxu0 %v858
    %1458 = vmatmul.mubr.bf16.gmra.mrb[0].mxu0 %v857
    %v1459 = vpop.f32.mrb[0].mxu0
    %v1460 = vadd.f32 0.0, %v1459
    %v1461 = vpop.f32.mrb[0].mxu0
    %v1462 = vpop.f32.mrb[0].mxu0
    %v1463 = vadd.f32 0.0, %v1462
    %v1464 = vpop.f32.mrb[0].mxu0
    %1465 = vmatprep.mubr.bf16.mxu0 %v862
    %1466 = vmatmul.mubr.bf16.gmra.mrb[0].mxu0 %v861
    %v1467 = vpop.f32.mrb[0].mxu0
    %v1468 = vadd.f32 0.0, %v1467
    %v1469 = vpop.f32.mrb[0].mxu0
    %v1470 = vpop.f32.mrb[0].mxu0
    %v1471 = vadd.f32 0.0, %v1470
    %v1472 = vpop.f32.mrb[0].mxu0
    %1473 = vdwg.mxu0
    %1474 = vmatprep.subr.bf16.mxu0 0
    %1475 = vmatpush1.bf16.msra.mxu0 %v1137
    %1476 = vmatprep.subr.bf16.mxu0 0
    %1477 = vmatpush1.bf16.msra.mxu0 %v1138
    %1478 = vmatprep.subr.bf16.mxu0 0
    %1479 = vmatpush1.bf16.msra.mxu0 %v1139
    %1480 = vmatprep.subr.bf16.mxu0 0
    %1481 = vmatpush1.bf16.msra.mxu0 %v1140
    %1482 = vmatprep.subr.bf16.mxu0 0
    %1483 = vmatpush1.bf16.msra.mxu0 %v1141
    %1484 = vmatprep.subr.bf16.mxu0 0
    %1485 = vmatpush1.bf16.msra.mxu0 %v1142
    %1486 = vmatprep.subr.bf16.mxu0 0
    %1487 = vmatpush1.bf16.msra.mxu0 %v1143
    %1488 = vmatprep.subr.bf16.mxu0 0
    %1489 = vmatpush1.bf16.msra.mxu0 %v1144
    %1490 = vmatprep.subr.bf16.mxu0 0
    %1491 = vmatpush1.bf16.msra.mxu0 %v1145
    %1492 = vmatprep.subr.bf16.mxu0 0
    %1493 = vmatpush1.bf16.msra.mxu0 %v1146
    %1494 = vmatprep.subr.bf16.mxu0 0
    %1495 = vmatpush1.bf16.msra.mxu0 %v1147
    %1496 = vmatprep.subr.bf16.mxu0 0
    %1497 = vmatpush1.bf16.msra.mxu0 %v1148
    %1498 = vmatprep.subr.bf16.mxu0 0
    %1499 = vmatpush1.bf16.msra.mxu0 %v1149
    %1500 = vmatprep.subr.bf16.mxu0 0
    %1501 = vmatpush1.bf16.msra.mxu0 %v1150
    %1502 = vmatprep.subr.bf16.mxu0 0
    %1503 = vmatpush1.bf16.msra.mxu0 %v1151
    %1504 = vmatprep.subr.bf16.mxu0 0
    %1505 = vmatpush1.bf16.msra.mxu0 %v1152
    %1506 = vmatprep.mubr.bf16.mxu0 %v740
    %1507 = vmatmul.mubr.bf16.gmra.mrb[0].mxu0 %v739
    %v1508 = vpop.f32.mrb[0].mxu0
    %v1509 = vadd.f32 %v1220, %v1508
    %v1510 = vpop.f32.mrb[0].mxu0
    %v1511 = vpop.f32.mrb[0].mxu0
    %v1512 = vadd.f32 %v1223, %v1511
    %v1513 = vpop.f32.mrb[0].mxu0
    %1514 = vmatprep.mubr.bf16.mxu0 %v744
    %1515 = vmatmul.mubr.bf16.gmra.mrb[0].mxu0 %v743
    %v1516 = vpop.f32.mrb[0].mxu0
    %v1517 = vadd.f32 %v1228, %v1516
    %v1518 = vpop.f32.mrb[0].mxu0
    %v1519 = vpop.f32.mrb[0].mxu0
    %v1520 = vadd.f32 %v1231, %v1519
    %v1521 = vpop.f32.mrb[0].mxu0
    %1522 = vmatprep.mubr.bf16.mxu0 %v748
    %1523 = vmatmul.mubr.bf16.gmra.mrb[0].mxu0 %v747
    %v1524 = vpop.f32.mrb[0].mxu0
    %v1525 = vadd.f32 %v1236, %v1524
    %v1526 = vpop.f32.mrb[0].mxu0
    %v1527 = vpop.f32.mrb[0].mxu0
    %v1528 = vadd.f32 %v1239, %v1527
    %v1529 = vpop.f32.mrb[0].mxu0
    %1530 = vmatprep.mubr.bf16.mxu0 %v752
    %1531 = vmatmul.mubr.bf16.gmra.mrb[0].mxu0 %v751
    %v1532 = vpop.f32.mrb[0].mxu0
    %v1533 = vadd.f32 %v1244, %v1532
    %v1534 = vpop.f32.mrb[0].mxu0
    %v1535 = vpop.f32.mrb[0].mxu0
    %v1536 = vadd.f32 %v1247, %v1535
    %v1537 = vpop.f32.mrb[0].mxu0
    %1538 = vmatprep.mubr.bf16.mxu0 %v756
    %1539 = vmatmul.mubr.bf16.gmra.mrb[0].mxu0 %v755
    %v1540 = vpop.f32.mrb[0].mxu0
    %v1541 = vadd.f32 %v1252, %v1540
    %v1542 = vpop.f32.mrb[0].mxu0
    %v1543 = vpop.f32.mrb[0].mxu0
    %v1544 = vadd.f32 %v1255, %v1543
    %v1545 = vpop.f32.mrb[0].mxu0
    %1546 = vmatprep.mubr.bf16.mxu0 %v760
    %1547 = vmatmul.mubr.bf16.gmra.mrb[0].mxu0 %v759
    %v1548 = vpop.f32.mrb[0].mxu0
    %v1549 = vadd.f32 %v1260, %v1548
    %v1550 = vpop.f32.mrb[0].mxu0
    %v1551 = vpop.f32.mrb[0].mxu0
    %v1552 = vadd.f32 %v1263, %v1551
    %v1553 = vpop.f32.mrb[0].mxu0
    %1554 = vmatprep.mubr.bf16.mxu0 %v764
    %1555 = vmatmul.mubr.bf16.gmra.mrb[0].mxu0 %v763
    %v1556 = vpop.f32.mrb[0].mxu0
    %v1557 = vadd.f32 %v1268, %v1556
    %v1558 = vpop.f32.mrb[0].mxu0
    %v1559 = vpop.f32.mrb[0].mxu0
    %v1560 = vadd.f32 %v1271, %v1559
    %v1561 = vpop.f32.mrb[0].mxu0
    %1562 = vmatprep.mubr.bf16.mxu0 %v768
    %1563 = vmatmul.mubr.bf16.gmra.mrb[0].mxu0 %v767
    %v1564 = vpop.f32.mrb[0].mxu0
    %v1565 = vadd.f32 %v1276, %v1564
    %v1566 = vpop.f32.mrb[0].mxu0
    %v1567 = vpop.f32.mrb[0].mxu0
    %v1568 = vadd.f32 %v1279, %v1567
    %v1569 = vpop.f32.mrb[0].mxu0
    %1570 = vmatprep.mubr.bf16.mxu0 %v772
    %1571 = vmatmul.mubr.bf16.gmra.mrb[0].mxu0 %v771
    %v1572 = vpop.f32.mrb[0].mxu0
    %v1573 = vadd.f32 %v1284, %v1572
    %v1574 = vpop.f32.mrb[0].mxu0
    %v1575 = vpop.f32.mrb[0].mxu0
    %v1576 = vadd.f32 %v1287, %v1575
    %v1577 = vpop.f32.mrb[0].mxu0
    %1578 = vmatprep.mubr.bf16.mxu0 %v776
    %1579 = vmatmul.mubr.bf16.gmra.mrb[0].mxu0 %v775
    %v1580 = vpop.f32.mrb[0].mxu0
    %v1581 = vadd.f32 %v1292, %v1580
    %v1582 = vpop.f32.mrb[0].mxu0
    %v1583 = vpop.f32.mrb[0].mxu0
    %v1584 = vadd.f32 %v1295, %v1583
    %v1585 = vpop.f32.mrb[0].mxu0
    %1586 = vmatprep.mubr.bf16.mxu0 %v780
    %1587 = vmatmul.mubr.bf16.gmra.mrb[0].mxu0 %v779
    %v1588 = vpop.f32.mrb[0].mxu0
    %v1589 = vadd.f32 %v1300, %v1588
    %v1590 = vpop.f32.mrb[0].mxu0
    %v1591 = vpop.f32.mrb[0].mxu0
    %v1592 = vadd.f32 %v1303, %v1591
    %v1593 = vpop.f32.mrb[0].mxu0
    %1594 = vmatprep.mubr.bf16.mxu0 %v784
    %1595 = vmatmul.mubr.bf16.gmra.mrb[0].mxu0 %v783
    %v1596 = vpop.f32.mrb[0].mxu0
    %v1597 = vadd.f32 %v1308, %v1596
    %v1598 = vpop.f32.mrb[0].mxu0
    %v1599 = vpop.f32.mrb[0].mxu0
    %v1600 = vadd.f32 %v1311, %v1599
    %v1601 = vpop.f32.mrb[0].mxu0
    %1602 = vmatprep.mubr.bf16.mxu0 %v788
    %1603 = vmatmul.mubr.bf16.gmra.mrb[0].mxu0 %v787
    %v1604 = vpop.f32.mrb[0].mxu0
    %v1605 = vadd.f32 %v1316, %v1604
    %v1606 = vpop.f32.mrb[0].mxu0
    %v1607 = vpop.f32.mrb[0].mxu0
    %v1608 = vadd.f32 %v1319, %v1607
    %v1609 = vpop.f32.mrb[0].mxu0
    %1610 = vmatprep.mubr.bf16.mxu0 %v792
    %1611 = vmatmul.mubr.bf16.gmra.mrb[0].mxu0 %v791
    %v1612 = vpop.f32.mrb[0].mxu0
    %v1613 = vadd.f32 %v1324, %v1612
    %v1614 = vpop.f32.mrb[0].mxu0
    %v1615 = vpop.f32.mrb[0].mxu0
    %v1616 = vadd.f32 %v1327, %v1615
    %v1617 = vpop.f32.mrb[0].mxu0
    %1618 = vmatprep.mubr.bf16.mxu0 %v796
    %1619 = vmatmul.mubr.bf16.gmra.mrb[0].mxu0 %v795
    %v1620 = vpop.f32.mrb[0].mxu0
    %v1621 = vadd.f32 %v1332, %v1620
    %v1622 = vpop.f32.mrb[0].mxu0
    %v1623 = vpop.f32.mrb[0].mxu0
    %v1624 = vadd.f32 %v1335, %v1623
    %v1625 = vpop.f32.mrb[0].mxu0
    %1626 = vmatprep.mubr.bf16.mxu0 %v800
    %1627 = vmatmul.mubr.bf16.gmra.mrb[0].mxu0 %v799
    %v1628 = vpop.f32.mrb[0].mxu0
    %v1629 = vadd.f32 %v1340, %v1628
    %v1630 = vpop.f32.mrb[0].mxu0
    %v1631 = vpop.f32.mrb[0].mxu0
    %v1632 = vadd.f32 %v1343, %v1631
    %v1633 = vpop.f32.mrb[0].mxu0
    %1634 = vmatprep.mubr.bf16.mxu0 %v804
    %1635 = vmatmul.mubr.bf16.gmra.mrb[0].mxu0 %v803
    %v1636 = vpop.f32.mrb[0].mxu0
    %v1637 = vadd.f32 %v1348, %v1636
    %v1638 = vpop.f32.mrb[0].mxu0
    %v1639 = vpop.f32.mrb[0].mxu0
    %v1640 = vadd.f32 %v1351, %v1639
    %v1641 = vpop.f32.mrb[0].mxu0
    %1642 = vmatprep.mubr.bf16.mxu0 %v808
    %1643 = vmatmul.mubr.bf16.gmra.mrb[0].mxu0 %v807
    %v1644 = vpop.f32.mrb[0].mxu0
    %v1645 = vadd.f32 %v1356, %v1644
    %v1646 = vpop.f32.mrb[0].mxu0
    %v1647 = vpop.f32.mrb[0].mxu0
    %v1648 = vadd.f32 %v1359, %v1647
    %v1649 = vpop.f32.mrb[0].mxu0
    %1650 = vmatprep.mubr.bf16.mxu0 %v812
    %1651 = vmatmul.mubr.bf16.gmra.mrb[0].mxu0 %v811
    %v1652 = vpop.f32.mrb[0].mxu0
    %v1653 = vadd.f32 %v1364, %v1652
    %v1654 = vpop.f32.mrb[0].mxu0
    %v1655 = vpop.f32.mrb[0].mxu0
    %v1656 = vadd.f32 %v1367, %v1655
    %v1657 = vpop.f32.mrb[0].mxu0
    %1658 = vmatprep.mubr.bf16.mxu0 %v816
    %1659 = vmatmul.mubr.bf16.gmra.mrb[0].mxu0 %v815
    %v1660 = vpop.f32.mrb[0].mxu0
    %v1661 = vadd.f32 %v1372, %v1660
    %v1662 = vpop.f32.mrb[0].mxu0
    %v1663 = vpop.f32.mrb[0].mxu0
    %v1664 = vadd.f32 %v1375, %v1663
    %v1665 = vpop.f32.mrb[0].mxu0
    %1666 = vmatprep.mubr.bf16.mxu0 %v820
    %1667 = vmatmul.mubr.bf16.gmra.mrb[0].mxu0 %v819
    %v1668 = vpop.f32.mrb[0].mxu0
    %v1669 = vadd.f32 %v1380, %v1668
    %v1670 = vpop.f32.mrb[0].mxu0
    %v1671 = vpop.f32.mrb[0].mxu0
    %v1672 = vadd.f32 %v1383, %v1671
    %v1673 = vpop.f32.mrb[0].mxu0
    %1674 = vmatprep.mubr.bf16.mxu0 %v824
    %1675 = vmatmul.mubr.bf16.gmra.mrb[0].mxu0 %v823
    %v1676 = vpop.f32.mrb[0].mxu0
    %v1677 = vadd.f32 %v1388, %v1676
    %v1678 = vpop.f32.mrb[0].mxu0
    %v1679 = vpop.f32.mrb[0].mxu0
    %v1680 = vadd.f32 %v1391, %v1679
    %v1681 = vpop.f32.mrb[0].mxu0
    %1682 = vmatprep.mubr.bf16.mxu0 %v828
    %1683 = vmatmul.mubr.bf16.gmra.mrb[0].mxu0 %v827
    %v1684 = vpop.f32.mrb[0].mxu0
    %v1685 = vadd.f32 %v1396, %v1684
    %v1686 = vpop.f32.mrb[0].mxu0
    %v1687 = vpop.f32.mrb[0].mxu0
    %v1688 = vadd.f32 %v1399, %v1687
    %v1689 = vpop.f32.mrb[0].mxu0
    %1690 = vmatprep.mubr.bf16.mxu0 %v832
    %1691 = vmatmul.mubr.bf16.gmra.mrb[0].mxu0 %v831
    %v1692 = vpop.f32.mrb[0].mxu0
    %v1693 = vadd.f32 %v1404, %v1692
    %v1694 = vpop.f32.mrb[0].mxu0
    %v1695 = vpop.f32.mrb[0].mxu0
    %v1696 = vadd.f32 %v1407, %v1695
    %v1697 = vpop.f32.mrb[0].mxu0
    %1698 = vmatprep.mubr.bf16.mxu0 %v836
    %1699 = vmatmul.mubr.bf16.gmra.mrb[0].mxu0 %v835
    %v1700 = vpop.f32.mrb[0].mxu0
    %v1701 = vadd.f32 %v1412, %v1700
    %v1702 = vpop.f32.mrb[0].mxu0
    %v1703 = vpop.f32.mrb[0].mxu0
    %v1704 = vadd.f32 %v1415, %v1703
    %v1705 = vpop.f32.mrb[0].mxu0
    %1706 = vmatprep.mubr.bf16.mxu0 %v840
    %1707 = vmatmul.mubr.bf16.gmra.mrb[0].mxu0 %v839
    %v1708 = vpop.f32.mrb[0].mxu0
    %v1709 = vadd.f32 %v1420, %v1708
    %v1710 = vpop.f32.mrb[0].mxu0
    %v1711 = vpop.f32.mrb[0].mxu0
    %v1712 = vadd.f32 %v1423, %v1711
    %v1713 = vpop.f32.mrb[0].mxu0
    %1714 = vmatprep.mubr.bf16.mxu0 %v844
    %1715 = vmatmul.mubr.bf16.gmra.mrb[0].mxu0 %v843
    %v1716 = vpop.f32.mrb[0].mxu0
    %v1717 = vadd.f32 %v1428, %v1716
    %v1718 = vpop.f32.mrb[0].mxu0
    %v1719 = vpop.f32.mrb[0].mxu0
    %v1720 = vadd.f32 %v1431, %v1719
    %v1721 = vpop.f32.mrb[0].mxu0
    %1722 = vmatprep.mubr.bf16.mxu0 %v848
    %1723 = vmatmul.mubr.bf16.gmra.mrb[0].mxu0 %v847
    %v1724 = vpop.f32.mrb[0].mxu0
    %v1725 = vadd.f32 %v1436, %v1724
    %v1726 = vpop.f32.mrb[0].mxu0
    %v1727 = vpop.f32.mrb[0].mxu0
    %v1728 = vadd.f32 %v1439, %v1727
    %v1729 = vpop.f32.mrb[0].mxu0
    %1730 = vmatprep.mubr.bf16.mxu0 %v852
    %1731 = vmatmul.mubr.bf16.gmra.mrb[0].mxu0 %v851
    %v1732 = vpop.f32.mrb[0].mxu0
    %v1733 = vadd.f32 %v1444, %v1732
    %v1734 = vpop.f32.mrb[0].mxu0
    %v1735 = vpop.f32.mrb[0].mxu0
    %v1736 = vadd.f32 %v1447, %v1735
    %v1737 = vpop.f32.mrb[0].mxu0
    %1738 = vmatprep.mubr.bf16.mxu0 %v856
    %1739 = vmatmul.mubr.bf16.gmra.mrb[0].mxu0 %v855
    %v1740 = vpop.f32.mrb[0].mxu0
    %v1741 = vadd.f32 %v1452, %v1740
    %v1742 = vpop.f32.mrb[0].mxu0
    %v1743 = vpop.f32.mrb[0].mxu0
    %v1744 = vadd.f32 %v1455, %v1743
    %v1745 = vpop.f32.mrb[0].mxu0
    %1746 = vmatprep.mubr.bf16.mxu0 %v860
    %1747 = vmatmul.mubr.bf16.gmra.mrb[0].mxu0 %v859
    %v1748 = vpop.f32.mrb[0].mxu0
    %v1749 = vadd.f32 %v1460, %v1748
    %v1750 = vpop.f32.mrb[0].mxu0
    %v1751 = vpop.f32.mrb[0].mxu0
    %v1752 = vadd.f32 %v1463, %v1751
    %v1753 = vpop.f32.mrb[0].mxu0
    %1754 = vmatprep.mubr.bf16.mxu0 %v864
    %1755 = vmatmul.mubr.bf16.gmra.mrb[0].mxu0 %v863
    %v1756 = vpop.f32.mrb[0].mxu0
    %v1757 = vadd.f32 %v1468, %v1756
    %v1758 = vpop.f32.mrb[0].mxu0
    %v1759 = vpop.f32.mrb[0].mxu0
    %v1760 = vadd.f32 %v1471, %v1759
    %v1761 = vpop.f32.mrb[0].mxu0
    %1762 = vdwg.mxu0
    %v1763 = vadd.f32 %v97, %v1509
    %v1764 = vadd.f32 %v98, %v1512
    %v1765 = vadd.f32 %v99, %v1517
    %v1766 = vadd.f32 %v100, %v1520
    %v1767 = vadd.f32 %v101, %v1525
    %v1768 = vadd.f32 %v102, %v1528
    %v1769 = vadd.f32 %v103, %v1533
    %v1770 = vadd.f32 %v104, %v1536
    %v1771 = vadd.f32 %v105, %v1541
    %v1772 = vadd.f32 %v106, %v1544
    %v1773 = vadd.f32 %v107, %v1549
    %v1774 = vadd.f32 %v108, %v1552
    %v1775 = vadd.f32 %v109, %v1557
    %v1776 = vadd.f32 %v110, %v1560
    %v1777 = vadd.f32 %v111, %v1565
    %v1778 = vadd.f32 %v112, %v1568
    %v1779 = vadd.f32 %v113, %v1573
    %v1780 = vadd.f32 %v114, %v1576
    %v1781 = vadd.f32 %v115, %v1581
    %v1782 = vadd.f32 %v116, %v1584
    %v1783 = vadd.f32 %v117, %v1589
    %v1784 = vadd.f32 %v118, %v1592
    %v1785 = vadd.f32 %v119, %v1597
    %v1786 = vadd.f32 %v120, %v1600
    %v1787 = vadd.f32 %v121, %v1605
    %v1788 = vadd.f32 %v122, %v1608
    %v1789 = vadd.f32 %v123, %v1613
    %v1790 = vadd.f32 %v124, %v1616
    %v1791 = vadd.f32 %v125, %v1621
    %v1792 = vadd.f32 %v126, %v1624
    %v1793 = vadd.f32 %v127, %v1629
    %v1794 = vadd.f32 %v128, %v1632
    %v1795 = vadd.f32 %v129, %v1637
    %v1796 = vadd.f32 %v130, %v1640
    %v1797 = vadd.f32 %v131, %v1645
    %v1798 = vadd.f32 %v132, %v1648
    %v1799 = vadd.f32 %v133, %v1653
    %v1800 = vadd.f32 %v134, %v1656
    %v1801 = vadd.f32 %v135, %v1661
    %v1802 = vadd.f32 %v136, %v1664
    %v1803 = vadd.f32 %v137, %v1669
    %v1804 = vadd.f32 %v138, %v1672
    %v1805 = vadd.f32 %v139, %v1677
    %v1806 = vadd.f32 %v140, %v1680
    %v1807 = vadd.f32 %v141, %v1685
    %v1808 = vadd.f32 %v142, %v1688
    %v1809 = vadd.f32 %v143, %v1693
    %v1810 = vadd.f32 %v144, %v1696
    %v1811 = vadd.f32 %v145, %v1701
    %v1812 = vadd.f32 %v146, %v1704
    %v1813 = vadd.f32 %v147, %v1709
    %v1814 = vadd.f32 %v148, %v1712
    %v1815 = vadd.f32 %v149, %v1717
    %v1816 = vadd.f32 %v150, %v1720
    %v1817 = vadd.f32 %v151, %v1725
    %v1818 = vadd.f32 %v152, %v1728
    %v1819 = vadd.f32 %v153, %v1733
    %v1820 = vadd.f32 %v154, %v1736
    %v1821 = vadd.f32 %v155, %v1741
    %v1822 = vadd.f32 %v156, %v1744
    %v1823 = vadd.f32 %v157, %v1749
    %v1824 = vadd.f32 %v158, %v1752
    %v1825 = vadd.f32 %v159, %v1757
    %v1826 = vadd.f32 %v160, %v1760
    %1827 = vst [vmem:[#allocation2] sm:$0xff] %v1763
    %1828 = vst [vmem:[#allocation2 + $0x8] sm:$0xff] %v1764
    %1829 = vst [vmem:[#allocation2 + $0x10] sm:$0xff] %v1765
    %1830 = vst [vmem:[#allocation2 + $0x18] sm:$0xff] %v1766
    %1831 = vst [vmem:[#allocation2 + $0x20] sm:$0xff] %v1767
    %1832 = vst [vmem:[#allocation2 + $0x28] sm:$0xff] %v1768
    %1833 = vst [vmem:[#allocation2 + $0x30] sm:$0xff] %v1769
    %1834 = vst [vmem:[#allocation2 + $0x38] sm:$0xff] %v1770
    %1835 = vst [vmem:[#allocation2 + $0x40] sm:$0xff] %v1771
    %1836 = vst [vmem:[#allocation2 + $0x48] sm:$0xff] %v1772
    %1837 = vst [vmem:[#allocation2 + $0x50] sm:$0xff] %v1773
    %1838 = vst [vmem:[#allocation2 + $0x58] sm:$0xff] %v1774
    %1839 = vst [vmem:[#allocation2 + $0x60] sm:$0xff] %v1775
    %1840 = vst [vmem:[#allocation2 + $0x68] sm:$0xff] %v1776
    %1841 = vst [vmem:[#allocation2 + $0x70] sm:$0xff] %v1777
    %1842 = vst [vmem:[#allocation2 + $0x78] sm:$0xff] %v1778
    %1843 = vst [vmem:[#allocation2 + $0x80] sm:$0xff] %v1779
    %1844 = vst [vmem:[#allocation2 + $0x88] sm:$0xff] %v1780
    %1845 = vst [vmem:[#allocation2 + $0x90] sm:$0xff] %v1781
    %1846 = vst [vmem:[#allocation2 + $0x98] sm:$0xff] %v1782
    %1847 = vst [vmem:[#allocation2 + $0xa0] sm:$0xff] %v1783
    %1848 = vst [vmem:[#allocation2 + $0xa8] sm:$0xff] %v1784
    %1849 = vst [vmem:[#allocation2 + $0xb0] sm:$0xff] %v1785
    %1850 = vst [vmem:[#allocation2 + $0xb8] sm:$0xff] %v1786
    %1851 = vst [vmem:[#allocation2 + $0xc0] sm:$0xff] %v1787
    %1852 = vst [vmem:[#allocation2 + $0xc8] sm:$0xff] %v1788
    %1853 = vst [vmem:[#allocation2 + $0xd0] sm:$0xff] %v1789
    %1854 = vst [vmem:[#allocation2 + $0xd8] sm:$0xff] %v1790
    %1855 = vst [vmem:[#allocation2 + $0xe0] sm:$0xff] %v1791
    %1856 = vst [vmem:[#allocation2 + $0xe8] sm:$0xff] %v1792
    %1857 = vst [vmem:[#allocation2 + $0xf0] sm:$0xff] %v1793
    %1858 = vst [vmem:[#allocation2 + $0xf8] sm:$0xff] %v1794
    %1859 = vst [vmem:[#allocation2 + $0x100] sm:$0xff] %v1795
    %1860 = vst [vmem:[#allocation2 + $0x108] sm:$0xff] %v1796
    %1861 = vst [vmem:[#allocation2 + $0x110] sm:$0xff] %v1797
    %1862 = vst [vmem:[#allocation2 + $0x118] sm:$0xff] %v1798
    %1863 = vst [vmem:[#allocation2 + $0x120] sm:$0xff] %v1799
    %1864 = vst [vmem:[#allocation2 + $0x128] sm:$0xff] %v1800
    %1865 = vst [vmem:[#allocation2 + $0x130] sm:$0xff] %v1801
    %1866 = vst [vmem:[#allocation2 + $0x138] sm:$0xff] %v1802
    %1867 = vst [vmem:[#allocation2 + $0x140] sm:$0xff] %v1803
    %1868 = vst [vmem:[#allocation2 + $0x148] sm:$0xff] %v1804
    %1869 = vst [vmem:[#allocation2 + $0x150] sm:$0xff] %v1805
    %1870 = vst [vmem:[#allocation2 + $0x158] sm:$0xff] %v1806
    %1871 = vst [vmem:[#allocation2 + $0x160] sm:$0xff] %v1807
    %1872 = vst [vmem:[#allocation2 + $0x168] sm:$0xff] %v1808
    %1873 = vst [vmem:[#allocation2 + $0x170] sm:$0xff] %v1809
    %1874 = vst [vmem:[#allocation2 + $0x178] sm:$0xff] %v1810
    %1875 = vst [vmem:[#allocation2 + $0x180] sm:$0xff] %v1811
    %1876 = vst [vmem:[#allocation2 + $0x188] sm:$0xff] %v1812
    %1877 = vst [vmem:[#allocation2 + $0x190] sm:$0xff] %v1813
    %1878 = vst [vmem:[#allocation2 + $0x198] sm:$0xff] %v1814
    %1879 = vst [vmem:[#allocation2 + $0x1a0] sm:$0xff] %v1815
    %1880 = vst [vmem:[#allocation2 + $0x1a8] sm:$0xff] %v1816
    %1881 = vst [vmem:[#allocation2 + $0x1b0] sm:$0xff] %v1817
    %1882 = vst [vmem:[#allocation2 + $0x1b8] sm:$0xff] %v1818
    %1883 = vst [vmem:[#allocation2 + $0x1c0] sm:$0xff] %v1819
    %1884 = vst [vmem:[#allocation2 + $0x1c8] sm:$0xff] %v1820
    %1885 = vst [vmem:[#allocation2 + $0x1d0] sm:$0xff] %v1821
    %1886 = vst [vmem:[#allocation2 + $0x1d8] sm:$0xff] %v1822
    %1887 = vst [vmem:[#allocation2 + $0x1e0] sm:$0xff] %v1823
    %1888 = vst [vmem:[#allocation2 + $0x1e8] sm:$0xff] %v1824
    %1889 = vst [vmem:[#allocation2 + $0x1f0] sm:$0xff] %v1825
    %1890 = vst [vmem:[#allocation2 + $0x1f8] sm:$0xff] %v1826
    // Predicated region
    $region30: #{ngcf_forward.3} parent=1 // pred_check
      %p1891 = pneg %p29
    $region31: #{ngcf_forward.3} parent=1 // pred_check_branch
      %1893 = sbr.rel (%p1891) target = $region33
    $region32: #{ngcf_forward.3} parent=1 // pred_region
      %v1894 = vld [vmem:[#allocation2] sm:$0xff]
      %v1895 = vld [vmem:[#allocation2 + $0x8] sm:$0xff]
      %v1896 = vld [vmem:[#allocation2 + $0x10] sm:$0xff]
      %v1897 = vld [vmem:[#allocation2 + $0x18] sm:$0xff]
      %v1898 = vld [vmem:[#allocation2 + $0x20] sm:$0xff]
      %v1899 = vld [vmem:[#allocation2 + $0x28] sm:$0xff]
      %v1900 = vld [vmem:[#allocation2 + $0x30] sm:$0xff]
      %v1901 = vld [vmem:[#allocation2 + $0x38] sm:$0xff]
      %v1902 = vld [vmem:[#allocation2 + $0x40] sm:$0xff]
      %v1903 = vld [vmem:[#allocation2 + $0x48] sm:$0xff]
      %v1904 = vld [vmem:[#allocation2 + $0x50] sm:$0xff]
      %v1905 = vld [vmem:[#allocation2 + $0x58] sm:$0xff]
      %v1906 = vld [vmem:[#allocation2 + $0x60] sm:$0xff]
      %v1907 = vld [vmem:[#allocation2 + $0x68] sm:$0xff]
      %v1908 = vld [vmem:[#allocation2 + $0x70] sm:$0xff]
      %v1909 = vld [vmem:[#allocation2 + $0x78] sm:$0xff]
      %v1910 = vld [vmem:[#allocation2 + $0x80] sm:$0xff]
      %v1911 = vld [vmem:[#allocation2 + $0x88] sm:$0xff]
      %v1912 = vld [vmem:[#allocation2 + $0x90] sm:$0xff]
      %v1913 = vld [vmem:[#allocation2 + $0x98] sm:$0xff]
      %v1914 = vld [vmem:[#allocation2 + $0xa0] sm:$0xff]
      %v1915 = vld [vmem:[#allocation2 + $0xa8] sm:$0xff]
      %v1916 = vld [vmem:[#allocation2 + $0xb0] sm:$0xff]
      %v1917 = vld [vmem:[#allocation2 + $0xb8] sm:$0xff]
      %v1918 = vld [vmem:[#allocation2 + $0xc0] sm:$0xff]
      %v1919 = vld [vmem:[#allocation2 + $0xc8] sm:$0xff]
      %v1920 = vld [vmem:[#allocation2 + $0xd0] sm:$0xff]
      %v1921 = vld [vmem:[#allocation2 + $0xd8] sm:$0xff]
      %v1922 = vld [vmem:[#allocation2 + $0xe0] sm:$0xff]
      %v1923 = vld [vmem:[#allocation2 + $0xe8] sm:$0xff]
      %v1924 = vld [vmem:[#allocation2 + $0xf0] sm:$0xff]
      %v1925 = vld [vmem:[#allocation2 + $0xf8] sm:$0xff]
      %v1926 = vld [vmem:[#allocation2 + $0x100] sm:$0xff]
      %v1927 = vld [vmem:[#allocation2 + $0x108] sm:$0xff]
      %v1928 = vld [vmem:[#allocation2 + $0x110] sm:$0xff]
      %v1929 = vld [vmem:[#allocation2 + $0x118] sm:$0xff]
      %v1930 = vld [vmem:[#allocation2 + $0x120] sm:$0xff]
      %v1931 = vld [vmem:[#allocation2 + $0x128] sm:$0xff]
      %v1932 = vld [vmem:[#allocation2 + $0x130] sm:$0xff]
      %v1933 = vld [vmem:[#allocation2 + $0x138] sm:$0xff]
      %v1934 = vld [vmem:[#allocation2 + $0x140] sm:$0xff]
      %v1935 = vld [vmem:[#allocation2 + $0x148] sm:$0xff]
      %v1936 = vld [vmem:[#allocation2 + $0x150] sm:$0xff]
      %v1937 = vld [vmem:[#allocation2 + $0x158] sm:$0xff]
      %v1938 = vld [vmem:[#allocation2 + $0x160] sm:$0xff]
      %v1939 = vld [vmem:[#allocation2 + $0x168] sm:$0xff]
      %v1940 = vld [vmem:[#allocation2 + $0x170] sm:$0xff]
      %v1941 = vld [vmem:[#allocation2 + $0x178] sm:$0xff]
      %v1942 = vld [vmem:[#allocation2 + $0x180] sm:$0xff]
      %v1943 = vld [vmem:[#allocation2 + $0x188] sm:$0xff]
      %v1944 = vld [vmem:[#allocation2 + $0x190] sm:$0xff]
      %v1945 = vld [vmem:[#allocation2 + $0x198] sm:$0xff]
      %v1946 = vld [vmem:[#allocation2 + $0x1a0] sm:$0xff]
      %v1947 = vld [vmem:[#allocation2 + $0x1a8] sm:$0xff]
      %v1948 = vld [vmem:[#allocation2 + $0x1b0] sm:$0xff]
      %v1949 = vld [vmem:[#allocation2 + $0x1b8] sm:$0xff]
      %v1950 = vld [vmem:[#allocation2 + $0x1c0] sm:$0xff]
      %v1951 = vld [vmem:[#allocation2 + $0x1c8] sm:$0xff]
      %v1952 = vld [vmem:[#allocation2 + $0x1d0] sm:$0xff]
      %v1953 = vld [vmem:[#allocation2 + $0x1d8] sm:$0xff]
      %v1954 = vld [vmem:[#allocation2 + $0x1e0] sm:$0xff]
      %v1955 = vld [vmem:[#allocation2 + $0x1e8] sm:$0xff]
      %v1956 = vld [vmem:[#allocation2 + $0x1f0] sm:$0xff]
      %v1957 = vld [vmem:[#allocation2 + $0x1f8] sm:$0xff]
      %v1958 = vld [vmem:[%s2] sm:$0xff]
      %v1959 = vld [vmem:[%s2 + $0x8] sm:$0xff]
      %v1960 = vld [vmem:[%s2 + $0x10] sm:$0xff]
      %v1961 = vld [vmem:[%s2 + $0x18] sm:$0xff]
      %v1962 = vld [vmem:[%s2 + $0x20] sm:$0xff]
      %v1963 = vld [vmem:[%s2 + $0x28] sm:$0xff]
      %v1964 = vld [vmem:[%s2 + $0x30] sm:$0xff]
      %v1965 = vld [vmem:[%s2 + $0x38] sm:$0xff]
      %v1966 = vld [vmem:[%s2 + $0x40] sm:$0xff]
      %v1967 = vld [vmem:[%s2 + $0x48] sm:$0xff]
      %v1968 = vld [vmem:[%s2 + $0x50] sm:$0xff]
      %v1969 = vld [vmem:[%s2 + $0x58] sm:$0xff]
      %v1970 = vld [vmem:[%s2 + $0x60] sm:$0xff]
      %v1971 = vld [vmem:[%s2 + $0x68] sm:$0xff]
      %v1972 = vld [vmem:[%s2 + $0x70] sm:$0xff]
      %v1973 = vld [vmem:[%s2 + $0x78] sm:$0xff]
      %v1974 = vld [vmem:[%s2 + $0x80] sm:$0xff]
      %v1975 = vld [vmem:[%s2 + $0x88] sm:$0xff]
      %v1976 = vld [vmem:[%s2 + $0x90] sm:$0xff]
      %v1977 = vld [vmem:[%s2 + $0x98] sm:$0xff]
      %v1978 = vld [vmem:[%s2 + $0xa0] sm:$0xff]
      %v1979 = vld [vmem:[%s2 + $0xa8] sm:$0xff]
      %v1980 = vld [vmem:[%s2 + $0xb0] sm:$0xff]
      %v1981 = vld [vmem:[%s2 + $0xb8] sm:$0xff]
      %v1982 = vld [vmem:[%s2 + $0xc0] sm:$0xff]
      %v1983 = vld [vmem:[%s2 + $0xc8] sm:$0xff]
      %v1984 = vld [vmem:[%s2 + $0xd0] sm:$0xff]
      %v1985 = vld [vmem:[%s2 + $0xd8] sm:$0xff]
      %v1986 = vld [vmem:[%s2 + $0xe0] sm:$0xff]
      %v1987 = vld [vmem:[%s2 + $0xe8] sm:$0xff]
      %v1988 = vld [vmem:[%s2 + $0xf0] sm:$0xff]
      %v1989 = vld [vmem:[%s2 + $0xf8] sm:$0xff]
      %v1990 = vld [vmem:[%s2 + $0x100] sm:$0xff]
      %v1991 = vld [vmem:[%s2 + $0x108] sm:$0xff]
      %v1992 = vld [vmem:[%s2 + $0x110] sm:$0xff]
      %v1993 = vld [vmem:[%s2 + $0x118] sm:$0xff]
      %v1994 = vld [vmem:[%s2 + $0x120] sm:$0xff]
      %v1995 = vld [vmem:[%s2 + $0x128] sm:$0xff]
      %v1996 = vld [vmem:[%s2 + $0x130] sm:$0xff]
      %v1997 = vld [vmem:[%s2 + $0x138] sm:$0xff]
      %v1998 = vld [vmem:[%s2 + $0x140] sm:$0xff]
      %v1999 = vld [vmem:[%s2 + $0x148] sm:$0xff]
      %v2000 = vld [vmem:[%s2 + $0x150] sm:$0xff]
      %v2001 = vld [vmem:[%s2 + $0x158] sm:$0xff]
      %v2002 = vld [vmem:[%s2 + $0x160] sm:$0xff]
      %v2003 = vld [vmem:[%s2 + $0x168] sm:$0xff]
      %v2004 = vld [vmem:[%s2 + $0x170] sm:$0xff]
      %v2005 = vld [vmem:[%s2 + $0x178] sm:$0xff]
      %v2006 = vld [vmem:[%s2 + $0x180] sm:$0xff]
      %v2007 = vld [vmem:[%s2 + $0x188] sm:$0xff]
      %v2008 = vld [vmem:[%s2 + $0x190] sm:$0xff]
      %v2009 = vld [vmem:[%s2 + $0x198] sm:$0xff]
      %v2010 = vld [vmem:[%s2 + $0x1a0] sm:$0xff]
      %v2011 = vld [vmem:[%s2 + $0x1a8] sm:$0xff]
      %v2012 = vld [vmem:[%s2 + $0x1b0] sm:$0xff]
      %v2013 = vld [vmem:[%s2 + $0x1b8] sm:$0xff]
      %v2014 = vld [vmem:[%s2 + $0x1c0] sm:$0xff]
      %v2015 = vld [vmem:[%s2 + $0x1c8] sm:$0xff]
      %v2016 = vld [vmem:[%s2 + $0x1d0] sm:$0xff]
      %v2017 = vld [vmem:[%s2 + $0x1d8] sm:$0xff]
      %v2018 = vld [vmem:[%s2 + $0x1e0] sm:$0xff]
      %v2019 = vld [vmem:[%s2 + $0x1e8] sm:$0xff]
      %v2020 = vld [vmem:[%s2 + $0x1f0] sm:$0xff]
      %v2021 = vld [vmem:[%s2 + $0x1f8] sm:$0xff]
      %v2022 = vld [vmem:[%s3] sm:$0xff]
      %v2023 = vld [vmem:[%s3 + $0x8] sm:$0xff]
      %v2024 = vld [vmem:[%s3 + $0x10] sm:$0xff]
      %v2025 = vld [vmem:[%s3 + $0x18] sm:$0xff]
      %v2026 = vld [vmem:[%s3 + $0x20] sm:$0xff]
      %v2027 = vld [vmem:[%s3 + $0x28] sm:$0xff]
      %v2028 = vld [vmem:[%s3 + $0x30] sm:$0xff]
      %v2029 = vld [vmem:[%s3 + $0x38] sm:$0xff]
      %v2030 = vld [vmem:[%s3 + $0x40] sm:$0xff]
      %v2031 = vld [vmem:[%s3 + $0x48] sm:$0xff]
      %v2032 = vld [vmem:[%s3 + $0x50] sm:$0xff]
      %v2033 = vld [vmem:[%s3 + $0x58] sm:$0xff]
      %v2034 = vld [vmem:[%s3 + $0x60] sm:$0xff]
      %v2035 = vld [vmem:[%s3 + $0x68] sm:$0xff]
      %v2036 = vld [vmem:[%s3 + $0x70] sm:$0xff]
      %v2037 = vld [vmem:[%s3 + $0x78] sm:$0xff]
      %v2038 = vmul.f32 %v1958, %v1894
      %v2039 = vmul.f32 %v1959, %v1895
      %v2040 = vmul.f32 %v1960, %v1896
      %v2041 = vmul.f32 %v1961, %v1897
      %v2042 = vmul.f32 %v1962, %v1898
      %v2043 = vmul.f32 %v1963, %v1899
      %v2044 = vmul.f32 %v1964, %v1900
      %v2045 = vmul.f32 %v1965, %v1901
      %v2046 = vmul.f32 %v1966, %v1902
      %v2047 = vmul.f32 %v1967, %v1903
      %v2048 = vmul.f32 %v1968, %v1904
      %v2049 = vmul.f32 %v1969, %v1905
      %v2050 = vmul.f32 %v1970, %v1906
      %v2051 = vmul.f32 %v1971, %v1907
      %v2052 = vmul.f32 %v1972, %v1908
      %v2053 = vmul.f32 %v1973, %v1909
      %v2054 = vmul.f32 %v1974, %v1910
      %v2055 = vmul.f32 %v1975, %v1911
      %v2056 = vmul.f32 %v1976, %v1912
      %v2057 = vmul.f32 %v1977, %v1913
      %v2058 = vmul.f32 %v1978, %v1914
      %v2059 = vmul.f32 %v1979, %v1915
      %v2060 = vmul.f32 %v1980, %v1916
      %v2061 = vmul.f32 %v1981, %v1917
      %v2062 = vmul.f32 %v1982, %v1918
      %v2063 = vmul.f32 %v1983, %v1919
      %v2064 = vmul.f32 %v1984, %v1920
      %v2065 = vmul.f32 %v1985, %v1921
      %v2066 = vmul.f32 %v1986, %v1922
      %v2067 = vmul.f32 %v1987, %v1923
      %v2068 = vmul.f32 %v1988, %v1924
      %v2069 = vmul.f32 %v1989, %v1925
      %v2070 = vmul.f32 %v1990, %v1926
      %v2071 = vmul.f32 %v1991, %v1927
      %v2072 = vmul.f32 %v1992, %v1928
      %v2073 = vmul.f32 %v1993, %v1929
      %v2074 = vmul.f32 %v1994, %v1930
      %v2075 = vmul.f32 %v1995, %v1931
      %v2076 = vmul.f32 %v1996, %v1932
      %v2077 = vmul.f32 %v1997, %v1933
      %v2078 = vmul.f32 %v1998, %v1934
      %v2079 = vmul.f32 %v1999, %v1935
      %v2080 = vmul.f32 %v2000, %v1936
      %v2081 = vmul.f32 %v2001, %v1937
      %v2082 = vmul.f32 %v2002, %v1938
      %v2083 = vmul.f32 %v2003, %v1939
      %v2084 = vmul.f32 %v2004, %v1940
      %v2085 = vmul.f32 %v2005, %v1941
      %v2086 = vmul.f32 %v2006, %v1942
      %v2087 = vmul.f32 %v2007, %v1943
      %v2088 = vmul.f32 %v2008, %v1944
      %v2089 = vmul.f32 %v2009, %v1945
      %v2090 = vmul.f32 %v2010, %v1946
      %v2091 = vmul.f32 %v2011, %v1947
      %v2092 = vmul.f32 %v2012, %v1948
      %v2093 = vmul.f32 %v2013, %v1949
      %v2094 = vmul.f32 %v2014, %v1950
      %v2095 = vmul.f32 %v2015, %v1951
      %v2096 = vmul.f32 %v2016, %v1952
      %v2097 = vmul.f32 %v2017, %v1953
      %v2098 = vmul.f32 %v2018, %v1954
      %v2099 = vmul.f32 %v2019, %v1955
      %v2100 = vmul.f32 %v2020, %v1956
      %v2101 = vmul.f32 %v2021, %v1957
      %v2102 = vld [vmem:[%s4] sm:$0xff]
      %v2103 = vld [vmem:[%s4 + $0x8] sm:$0xff]
      %v2104 = vld [vmem:[%s4 + $0x10] sm:$0xff]
      %v2105 = vld [vmem:[%s4 + $0x18] sm:$0xff]
      %v2106 = vld [vmem:[%s4 + $0x20] sm:$0xff]
      %v2107 = vld [vmem:[%s4 + $0x28] sm:$0xff]
      %v2108 = vld [vmem:[%s4 + $0x30] sm:$0xff]
      %v2109 = vld [vmem:[%s4 + $0x38] sm:$0xff]
      %v2110 = vld [vmem:[%s4 + $0x40] sm:$0xff]
      %v2111 = vld [vmem:[%s4 + $0x48] sm:$0xff]
      %v2112 = vld [vmem:[%s4 + $0x50] sm:$0xff]
      %v2113 = vld [vmem:[%s4 + $0x58] sm:$0xff]
      %v2114 = vld [vmem:[%s4 + $0x60] sm:$0xff]
      %v2115 = vld [vmem:[%s4 + $0x68] sm:$0xff]
      %v2116 = vld [vmem:[%s4 + $0x70] sm:$0xff]
      %v2117 = vld [vmem:[%s4 + $0x78] sm:$0xff]
      %2118 = vmatprep.subr.mxu0 0.0
      %2119 = vmatpush1.msra.mxu0 %v2102
      %2120 = vmatprep.subr.mxu0 0.0
      %2121 = vmatpush1.msra.mxu0 %v2103
      %2122 = vmatprep.subr.mxu0 0.0
      %2123 = vmatpush1.msra.mxu0 %v2104
      %2124 = vmatprep.subr.mxu0 0.0
      %2125 = vmatpush1.msra.mxu0 %v2105
      %2126 = vmatprep.subr.mxu0 0.0
      %2127 = vmatpush1.msra.mxu0 %v2106
      %2128 = vmatprep.subr.mxu0 0.0
      %2129 = vmatpush1.msra.mxu0 %v2107
      %2130 = vmatprep.subr.mxu0 0.0
      %2131 = vmatpush1.msra.mxu0 %v2108
      %2132 = vmatprep.subr.mxu0 0.0
      %2133 = vmatpush1.msra.mxu0 %v2109
      %2134 = vmatprep.subr.mxu0 0.0
      %2135 = vmatpush1.msra.mxu0 %v2110
      %2136 = vmatprep.subr.mxu0 0.0
      %2137 = vmatpush1.msra.mxu0 %v2111
      %2138 = vmatprep.subr.mxu0 0.0
      %2139 = vmatpush1.msra.mxu0 %v2112
      %2140 = vmatprep.subr.mxu0 0.0
      %2141 = vmatpush1.msra.mxu0 %v2113
      %2142 = vmatprep.subr.mxu0 0.0
      %2143 = vmatpush1.msra.mxu0 %v2114
      %2144 = vmatprep.subr.mxu0 0.0
      %2145 = vmatpush1.msra.mxu0 %v2115
      %2146 = vmatprep.subr.mxu0 0.0
      %2147 = vmatpush1.msra.mxu0 %v2116
      %2148 = vmatprep.subr.mxu0 0.0
      %2149 = vmatpush1.msra.mxu0 %v2117
      %2150 = vmatprep.subr.mxu0 0.0
      %2151 = vmatpush1.msra.mxu0 0.0
      %2152 = vmatprep.subr.mxu0 0.0
      %2153 = vmatpush1.msra.mxu0 0.0
      %2154 = vmatprep.subr.mxu0 0.0
      %2155 = vmatpush1.msra.mxu0 0.0
      %2156 = vmatprep.subr.mxu0 0.0
      %2157 = vmatpush1.msra.mxu0 0.0
      %2158 = vmatprep.subr.mxu0 0.0
      %2159 = vmatpush1.msra.mxu0 0.0
      %2160 = vmatprep.subr.mxu0 0.0
      %2161 = vmatpush1.msra.mxu0 0.0
      %2162 = vmatprep.subr.mxu0 0.0
      %2163 = vmatpush1.msra.mxu0 0.0
      %2164 = vmatprep.subr.mxu0 0.0
      %2165 = vmatpush1.msra.mxu0 0.0
      %2166 = vmatprep.subr.mxu0 0.0
      %2167 = vmatpush1.msra.mxu0 0.0
      %2168 = vmatprep.subr.mxu0 0.0
      %2169 = vmatpush1.msra.mxu0 0.0
      %2170 = vmatprep.subr.mxu0 0.0
      %2171 = vmatpush1.msra.mxu0 0.0
      %2172 = vmatprep.subr.mxu0 0.0
      %2173 = vmatpush1.msra.mxu0 0.0
      %2174 = vmatprep.subr.mxu0 0.0
      %2175 = vmatpush1.msra.mxu0 0.0
      %2176 = vmatprep.subr.mxu0 0.0
      %2177 = vmatpush1.msra.mxu0 0.0
      %2178 = vmatprep.subr.mxu0 0.0
      %2179 = vmatpush1.msra.mxu0 0.0
      %2180 = vmatprep.subr.mxu0 0.0
      %2181 = vmatpush1.msra.mxu0 0.0
      %2182 = vmatprep.mubr.f32.mxu0 0.0
      %2183 = vmatmul.mubr.f32.gmra.mrb[0].mxu0 %v2038
      %v2184 = vpop.f32.mrb[0].mxu0
      %v2185 = vadd.f32 0.0, %v2184
      %v2186 = vpop.f32.mrb[0].mxu0
      %2187 = vmatprep.mubr.f32.mxu0 0.0
      %2188 = vmatmul.mubr.f32.gmra.mrb[0].mxu0 %v2039
      %v2189 = vpop.f32.mrb[0].mxu0
      %v2190 = vadd.f32 0.0, %v2189
      %v2191 = vpop.f32.mrb[0].mxu0
      %2192 = vmatprep.mubr.f32.mxu0 0.0
      %2193 = vmatmul.mubr.f32.gmra.mrb[0].mxu0 %v2040
      %v2194 = vpop.f32.mrb[0].mxu0
      %v2195 = vadd.f32 0.0, %v2194
      %v2196 = vpop.f32.mrb[0].mxu0
      %2197 = vmatprep.mubr.f32.mxu0 0.0
      %2198 = vmatmul.mubr.f32.gmra.mrb[0].mxu0 %v2041
      %v2199 = vpop.f32.mrb[0].mxu0
      %v2200 = vadd.f32 0.0, %v2199
      %v2201 = vpop.f32.mrb[0].mxu0
      %2202 = vmatprep.mubr.f32.mxu0 0.0
      %2203 = vmatmul.mubr.f32.gmra.mrb[0].mxu0 %v2042
      %v2204 = vpop.f32.mrb[0].mxu0
      %v2205 = vadd.f32 0.0, %v2204
      %v2206 = vpop.f32.mrb[0].mxu0
      %2207 = vmatprep.mubr.f32.mxu0 0.0
      %2208 = vmatmul.mubr.f32.gmra.mrb[0].mxu0 %v2043
      %v2209 = vpop.f32.mrb[0].mxu0
      %v2210 = vadd.f32 0.0, %v2209
      %v2211 = vpop.f32.mrb[0].mxu0
      %2212 = vmatprep.mubr.f32.mxu0 0.0
      %2213 = vmatmul.mubr.f32.gmra.mrb[0].mxu0 %v2044
      %v2214 = vpop.f32.mrb[0].mxu0
      %v2215 = vadd.f32 0.0, %v2214
      %v2216 = vpop.f32.mrb[0].mxu0
      %2217 = vmatprep.mubr.f32.mxu0 0.0
      %2218 = vmatmul.mubr.f32.gmra.mrb[0].mxu0 %v2045
      %v2219 = vpop.f32.mrb[0].mxu0
      %v2220 = vadd.f32 0.0, %v2219
      %v2221 = vpop.f32.mrb[0].mxu0
      %2222 = vmatprep.mubr.f32.mxu0 0.0
      %2223 = vmatmul.mubr.f32.gmra.mrb[0].mxu0 %v2046
      %v2224 = vpop.f32.mrb[0].mxu0
      %v2225 = vadd.f32 0.0, %v2224
      %v2226 = vpop.f32.mrb[0].mxu0
      %2227 = vmatprep.mubr.f32.mxu0 0.0
      %2228 = vmatmul.mubr.f32.gmra.mrb[0].mxu0 %v2047
      %v2229 = vpop.f32.mrb[0].mxu0
      %v2230 = vadd.f32 0.0, %v2229
      %v2231 = vpop.f32.mrb[0].mxu0
      %2232 = vmatprep.mubr.f32.mxu0 0.0
      %2233 = vmatmul.mubr.f32.gmra.mrb[0].mxu0 %v2048
      %v2234 = vpop.f32.mrb[0].mxu0
      %v2235 = vadd.f32 0.0, %v2234
      %v2236 = vpop.f32.mrb[0].mxu0
      %2237 = vmatprep.mubr.f32.mxu0 0.0
      %2238 = vmatmul.mubr.f32.gmra.mrb[0].mxu0 %v2049
      %v2239 = vpop.f32.mrb[0].mxu0
      %v2240 = vadd.f32 0.0, %v2239
      %v2241 = vpop.f32.mrb[0].mxu0
      %2242 = vmatprep.mubr.f32.mxu0 0.0
      %2243 = vmatmul.mubr.f32.gmra.mrb[0].mxu0 %v2050
      %v2244 = vpop.f32.mrb[0].mxu0
      %v2245 = vadd.f32 0.0, %v2244
      %v2246 = vpop.f32.mrb[0].mxu0
      %2247 = vmatprep.mubr.f32.mxu0 0.0
      %2248 = vmatmul.mubr.f32.gmra.mrb[0].mxu0 %v2051
      %v2249 = vpop.f32.mrb[0].mxu0
      %v2250 = vadd.f32 0.0, %v2249
      %v2251 = vpop.f32.mrb[0].mxu0
      %2252 = vmatprep.mubr.f32.mxu0 0.0
      %2253 = vmatmul.mubr.f32.gmra.mrb[0].mxu0 %v2052
      %v2254 = vpop.f32.mrb[0].mxu0
      %v2255 = vadd.f32 0.0, %v2254
      %v2256 = vpop.f32.mrb[0].mxu0
      %2257 = vmatprep.mubr.f32.mxu0 0.0
      %2258 = vmatmul.mubr.f32.gmra.mrb[0].mxu0 %v2053
      %v2259 = vpop.f32.mrb[0].mxu0
      %v2260 = vadd.f32 0.0, %v2259
      %v2261 = vpop.f32.mrb[0].mxu0
      %2262 = vmatprep.mubr.f32.mxu0 0.0
      %2263 = vmatmul.mubr.f32.gmra.mrb[0].mxu0 %v2054
      %v2264 = vpop.f32.mrb[0].mxu0
      %v2265 = vadd.f32 0.0, %v2264
      %v2266 = vpop.f32.mrb[0].mxu0
      %2267 = vmatprep.mubr.f32.mxu0 0.0
      %2268 = vmatmul.mubr.f32.gmra.mrb[0].mxu0 %v2055
      %v2269 = vpop.f32.mrb[0].mxu0
      %v2270 = vadd.f32 0.0, %v2269
      %v2271 = vpop.f32.mrb[0].mxu0
      %2272 = vmatprep.mubr.f32.mxu0 0.0
      %2273 = vmatmul.mubr.f32.gmra.mrb[0].mxu0 %v2056
      %v2274 = vpop.f32.mrb[0].mxu0
      %v2275 = vadd.f32 0.0, %v2274
      %v2276 = vpop.f32.mrb[0].mxu0
      %2277 = vmatprep.mubr.f32.mxu0 0.0
      %2278 = vmatmul.mubr.f32.gmra.mrb[0].mxu0 %v2057
      %v2279 = vpop.f32.mrb[0].mxu0
      %v2280 = vadd.f32 0.0, %v2279
      %v2281 = vpop.f32.mrb[0].mxu0
      %2282 = vmatprep.mubr.f32.mxu0 0.0
      %2283 = vmatmul.mubr.f32.gmra.mrb[0].mxu0 %v2058
      %v2284 = vpop.f32.mrb[0].mxu0
      %v2285 = vadd.f32 0.0, %v2284
      %v2286 = vpop.f32.mrb[0].mxu0
      %2287 = vmatprep.mubr.f32.mxu0 0.0
      %2288 = vmatmul.mubr.f32.gmra.mrb[0].mxu0 %v2059
      %v2289 = vpop.f32.mrb[0].mxu0
      %v2290 = vadd.f32 0.0, %v2289
      %v2291 = vpop.f32.mrb[0].mxu0
      %2292 = vmatprep.mubr.f32.mxu0 0.0
      %2293 = vmatmul.mubr.f32.gmra.mrb[0].mxu0 %v2060
      %v2294 = vpop.f32.mrb[0].mxu0
      %v2295 = vadd.f32 0.0, %v2294
      %v2296 = vpop.f32.mrb[0].mxu0
      %2297 = vmatprep.mubr.f32.mxu0 0.0
      %2298 = vmatmul.mubr.f32.gmra.mrb[0].mxu0 %v2061
      %v2299 = vpop.f32.mrb[0].mxu0
      %v2300 = vadd.f32 0.0, %v2299
      %v2301 = vpop.f32.mrb[0].mxu0
      %2302 = vmatprep.mubr.f32.mxu0 0.0
      %2303 = vmatmul.mubr.f32.gmra.mrb[0].mxu0 %v2062
      %v2304 = vpop.f32.mrb[0].mxu0
      %v2305 = vadd.f32 0.0, %v2304
      %v2306 = vpop.f32.mrb[0].mxu0
      %2307 = vmatprep.mubr.f32.mxu0 0.0
      %2308 = vmatmul.mubr.f32.gmra.mrb[0].mxu0 %v2063
      %v2309 = vpop.f32.mrb[0].mxu0
      %v2310 = vadd.f32 0.0, %v2309
      %v2311 = vpop.f32.mrb[0].mxu0
      %2312 = vmatprep.mubr.f32.mxu0 0.0
      %2313 = vmatmul.mubr.f32.gmra.mrb[0].mxu0 %v2064
      %v2314 = vpop.f32.mrb[0].mxu0
      %v2315 = vadd.f32 0.0, %v2314
      %v2316 = vpop.f32.mrb[0].mxu0
      %2317 = vmatprep.mubr.f32.mxu0 0.0
      %2318 = vmatmul.mubr.f32.gmra.mrb[0].mxu0 %v2065
      %v2319 = vpop.f32.mrb[0].mxu0
      %v2320 = vadd.f32 0.0, %v2319
      %v2321 = vpop.f32.mrb[0].mxu0
      %2322 = vmatprep.mubr.f32.mxu0 0.0
      %2323 = vmatmul.mubr.f32.gmra.mrb[0].mxu0 %v2066
      %v2324 = vpop.f32.mrb[0].mxu0
      %v2325 = vadd.f32 0.0, %v2324
      %v2326 = vpop.f32.mrb[0].mxu0
      %2327 = vmatprep.mubr.f32.mxu0 0.0
      %2328 = vmatmul.mubr.f32.gmra.mrb[0].mxu0 %v2067
      %v2329 = vpop.f32.mrb[0].mxu0
      %v2330 = vadd.f32 0.0, %v2329
      %v2331 = vpop.f32.mrb[0].mxu0
      %2332 = vmatprep.mubr.f32.mxu0 0.0
      %2333 = vmatmul.mubr.f32.gmra.mrb[0].mxu0 %v2068
      %v2334 = vpop.f32.mrb[0].mxu0
      %v2335 = vadd.f32 0.0, %v2334
      %v2336 = vpop.f32.mrb[0].mxu0
      %2337 = vmatprep.mubr.f32.mxu0 0.0
      %2338 = vmatmul.mubr.f32.gmra.mrb[0].mxu0 %v2069
      %v2339 = vpop.f32.mrb[0].mxu0
      %v2340 = vadd.f32 0.0, %v2339
      %v2341 = vpop.f32.mrb[0].mxu0
      %2342 = vmatprep.mubr.f32.mxu0 0.0
      %2343 = vmatmul.mubr.f32.gmra.mrb[0].mxu0 %v2070
      %v2344 = vpop.f32.mrb[0].mxu0
      %v2345 = vadd.f32 0.0, %v2344
      %v2346 = vpop.f32.mrb[0].mxu0
      %2347 = vmatprep.mubr.f32.mxu0 0.0
      %2348 = vmatmul.mubr.f32.gmra.mrb[0].mxu0 %v2071
      %v2349 = vpop.f32.mrb[0].mxu0
      %v2350 = vadd.f32 0.0, %v2349
      %v2351 = vpop.f32.mrb[0].mxu0
      %2352 = vmatprep.mubr.f32.mxu0 0.0
      %2353 = vmatmul.mubr.f32.gmra.mrb[0].mxu0 %v2072
      %v2354 = vpop.f32.mrb[0].mxu0
      %v2355 = vadd.f32 0.0, %v2354
      %v2356 = vpop.f32.mrb[0].mxu0
      %2357 = vmatprep.mubr.f32.mxu0 0.0
      %2358 = vmatmul.mubr.f32.gmra.mrb[0].mxu0 %v2073
      %v2359 = vpop.f32.mrb[0].mxu0
      %v2360 = vadd.f32 0.0, %v2359
      %v2361 = vpop.f32.mrb[0].mxu0
      %2362 = vmatprep.mubr.f32.mxu0 0.0
      %2363 = vmatmul.mubr.f32.gmra.mrb[0].mxu0 %v2074
      %v2364 = vpop.f32.mrb[0].mxu0
      %v2365 = vadd.f32 0.0, %v2364
      %v2366 = vpop.f32.mrb[0].mxu0
      %2367 = vmatprep.mubr.f32.mxu0 0.0
      %2368 = vmatmul.mubr.f32.gmra.mrb[0].mxu0 %v2075
      %v2369 = vpop.f32.mrb[0].mxu0
      %v2370 = vadd.f32 0.0, %v2369
      %v2371 = vpop.f32.mrb[0].mxu0
      %2372 = vmatprep.mubr.f32.mxu0 0.0
      %2373 = vmatmul.mubr.f32.gmra.mrb[0].mxu0 %v2076
      %v2374 = vpop.f32.mrb[0].mxu0
      %v2375 = vadd.f32 0.0, %v2374
      %v2376 = vpop.f32.mrb[0].mxu0
      %2377 = vmatprep.mubr.f32.mxu0 0.0
      %2378 = vmatmul.mubr.f32.gmra.mrb[0].mxu0 %v2077
      %v2379 = vpop.f32.mrb[0].mxu0
      %v2380 = vadd.f32 0.0, %v2379
      %v2381 = vpop.f32.mrb[0].mxu0
      %2382 = vmatprep.mubr.f32.mxu0 0.0
      %2383 = vmatmul.mubr.f32.gmra.mrb[0].mxu0 %v2078
      %v2384 = vpop.f32.mrb[0].mxu0
      %v2385 = vadd.f32 0.0, %v2384
      %v2386 = vpop.f32.mrb[0].mxu0
      %2387 = vmatprep.mubr.f32.mxu0 0.0
      %2388 = vmatmul.mubr.f32.gmra.mrb[0].mxu0 %v2079
      %v2389 = vpop.f32.mrb[0].mxu0
      %v2390 = vadd.f32 0.0, %v2389
      %v2391 = vpop.f32.mrb[0].mxu0
      %2392 = vmatprep.mubr.f32.mxu0 0.0
      %2393 = vmatmul.mubr.f32.gmra.mrb[0].mxu0 %v2080
      %v2394 = vpop.f32.mrb[0].mxu0
      %v2395 = vadd.f32 0.0, %v2394
      %v2396 = vpop.f32.mrb[0].mxu0
      %2397 = vmatprep.mubr.f32.mxu0 0.0
      %2398 = vmatmul.mubr.f32.gmra.mrb[0].mxu0 %v2081
      %v2399 = vpop.f32.mrb[0].mxu0
      %v2400 = vadd.f32 0.0, %v2399
      %v2401 = vpop.f32.mrb[0].mxu0
      %2402 = vmatprep.mubr.f32.mxu0 0.0
      %2403 = vmatmul.mubr.f32.gmra.mrb[0].mxu0 %v2082
      %v2404 = vpop.f32.mrb[0].mxu0
      %v2405 = vadd.f32 0.0, %v2404
      %v2406 = vpop.f32.mrb[0].mxu0
      %2407 = vmatprep.mubr.f32.mxu0 0.0
      %2408 = vmatmul.mubr.f32.gmra.mrb[0].mxu0 %v2083
      %v2409 = vpop.f32.mrb[0].mxu0
      %v2410 = vadd.f32 0.0, %v2409
      %v2411 = vpop.f32.mrb[0].mxu0
      %2412 = vmatprep.mubr.f32.mxu0 0.0
      %2413 = vmatmul.mubr.f32.gmra.mrb[0].mxu0 %v2084
      %v2414 = vpop.f32.mrb[0].mxu0
      %v2415 = vadd.f32 0.0, %v2414
      %v2416 = vpop.f32.mrb[0].mxu0
      %2417 = vmatprep.mubr.f32.mxu0 0.0
      %2418 = vmatmul.mubr.f32.gmra.mrb[0].mxu0 %v2085
      %v2419 = vpop.f32.mrb[0].mxu0
      %v2420 = vadd.f32 0.0, %v2419
      %v2421 = vpop.f32.mrb[0].mxu0
      %2422 = vmatprep.mubr.f32.mxu0 0.0
      %2423 = vmatmul.mubr.f32.gmra.mrb[0].mxu0 %v2086
      %v2424 = vpop.f32.mrb[0].mxu0
      %v2425 = vadd.f32 0.0, %v2424
      %v2426 = vpop.f32.mrb[0].mxu0
      %2427 = vmatprep.mubr.f32.mxu0 0.0
      %2428 = vmatmul.mubr.f32.gmra.mrb[0].mxu0 %v2087
      %v2429 = vpop.f32.mrb[0].mxu0
      %v2430 = vadd.f32 0.0, %v2429
      %v2431 = vpop.f32.mrb[0].mxu0
      %2432 = vmatprep.mubr.f32.mxu0 0.0
      %2433 = vmatmul.mubr.f32.gmra.mrb[0].mxu0 %v2088
      %v2434 = vpop.f32.mrb[0].mxu0
      %v2435 = vadd.f32 0.0, %v2434
      %v2436 = vpop.f32.mrb[0].mxu0
      %2437 = vmatprep.mubr.f32.mxu0 0.0
      %2438 = vmatmul.mubr.f32.gmra.mrb[0].mxu0 %v2089
      %v2439 = vpop.f32.mrb[0].mxu0
      %v2440 = vadd.f32 0.0, %v2439
      %v2441 = vpop.f32.mrb[0].mxu0
      %2442 = vmatprep.mubr.f32.mxu0 0.0
      %2443 = vmatmul.mubr.f32.gmra.mrb[0].mxu0 %v2090
      %v2444 = vpop.f32.mrb[0].mxu0
      %v2445 = vadd.f32 0.0, %v2444
      %v2446 = vpop.f32.mrb[0].mxu0
      %2447 = vmatprep.mubr.f32.mxu0 0.0
      %2448 = vmatmul.mubr.f32.gmra.mrb[0].mxu0 %v2091
      %v2449 = vpop.f32.mrb[0].mxu0
      %v2450 = vadd.f32 0.0, %v2449
      %v2451 = vpop.f32.mrb[0].mxu0
      %2452 = vmatprep.mubr.f32.mxu0 0.0
      %2453 = vmatmul.mubr.f32.gmra.mrb[0].mxu0 %v2092
      %v2454 = vpop.f32.mrb[0].mxu0
      %v2455 = vadd.f32 0.0, %v2454
      %v2456 = vpop.f32.mrb[0].mxu0
      %2457 = vmatprep.mubr.f32.mxu0 0.0
      %2458 = vmatmul.mubr.f32.gmra.mrb[0].mxu0 %v2093
      %v2459 = vpop.f32.mrb[0].mxu0
      %v2460 = vadd.f32 0.0, %v2459
      %v2461 = vpop.f32.mrb[0].mxu0
      %2462 = vmatprep.mubr.f32.mxu0 0.0
      %2463 = vmatmul.mubr.f32.gmra.mrb[0].mxu0 %v2094
      %v2464 = vpop.f32.mrb[0].mxu0
      %v2465 = vadd.f32 0.0, %v2464
      %v2466 = vpop.f32.mrb[0].mxu0
      %2467 = vmatprep.mubr.f32.mxu0 0.0
      %2468 = vmatmul.mubr.f32.gmra.mrb[0].mxu0 %v2095
      %v2469 = vpop.f32.mrb[0].mxu0
      %v2470 = vadd.f32 0.0, %v2469
      %v2471 = vpop.f32.mrb[0].mxu0
      %2472 = vmatprep.mubr.f32.mxu0 0.0
      %2473 = vmatmul.mubr.f32.gmra.mrb[0].mxu0 %v2096
      %v2474 = vpop.f32.mrb[0].mxu0
      %v2475 = vadd.f32 0.0, %v2474
      %v2476 = vpop.f32.mrb[0].mxu0
      %2477 = vmatprep.mubr.f32.mxu0 0.0
      %2478 = vmatmul.mubr.f32.gmra.mrb[0].mxu0 %v2097
      %v2479 = vpop.f32.mrb[0].mxu0
      %v2480 = vadd.f32 0.0, %v2479
      %v2481 = vpop.f32.mrb[0].mxu0
      %2482 = vmatprep.mubr.f32.mxu0 0.0
      %2483 = vmatmul.mubr.f32.gmra.mrb[0].mxu0 %v2098
      %v2484 = vpop.f32.mrb[0].mxu0
      %v2485 = vadd.f32 0.0, %v2484
      %v2486 = vpop.f32.mrb[0].mxu0
      %2487 = vmatprep.mubr.f32.mxu0 0.0
      %2488 = vmatmul.mubr.f32.gmra.mrb[0].mxu0 %v2099
      %v2489 = vpop.f32.mrb[0].mxu0
      %v2490 = vadd.f32 0.0, %v2489
      %v2491 = vpop.f32.mrb[0].mxu0
      %2492 = vmatprep.mubr.f32.mxu0 0.0
      %2493 = vmatmul.mubr.f32.gmra.mrb[0].mxu0 %v2100
      %v2494 = vpop.f32.mrb[0].mxu0
      %v2495 = vadd.f32 0.0, %v2494
      %v2496 = vpop.f32.mrb[0].mxu0
      %2497 = vmatprep.mubr.f32.mxu0 0.0
      %2498 = vmatmul.mubr.f32.gmra.mrb[0].mxu0 %v2101
      %v2499 = vpop.f32.mrb[0].mxu0
      %v2500 = vadd.f32 0.0, %v2499
      %v2501 = vpop.f32.mrb[0].mxu0
      %2502 = vdwg.mxu0
      %2503 = vmatprep.subr.mxu0 0.0
      %2504 = vmatpush1.msra.mxu0 %v2022
      %2505 = vmatprep.subr.mxu0 0.0
      %2506 = vmatpush1.msra.mxu0 %v2023
      %2507 = vmatprep.subr.mxu0 0.0
      %2508 = vmatpush1.msra.mxu0 %v2024
      %2509 = vmatprep.subr.mxu0 0.0
      %2510 = vmatpush1.msra.mxu0 %v2025
      %2511 = vmatprep.subr.mxu0 0.0
      %2512 = vmatpush1.msra.mxu0 %v2026
      %2513 = vmatprep.subr.mxu0 0.0
      %2514 = vmatpush1.msra.mxu0 %v2027
      %2515 = vmatprep.subr.mxu0 0.0
      %2516 = vmatpush1.msra.mxu0 %v2028
      %2517 = vmatprep.subr.mxu0 0.0
      %2518 = vmatpush1.msra.mxu0 %v2029
      %2519 = vmatprep.subr.mxu0 0.0
      %2520 = vmatpush1.msra.mxu0 %v2030
      %2521 = vmatprep.subr.mxu0 0.0
      %2522 = vmatpush1.msra.mxu0 %v2031
      %2523 = vmatprep.subr.mxu0 0.0
      %2524 = vmatpush1.msra.mxu0 %v2032
      %2525 = vmatprep.subr.mxu0 0.0
      %2526 = vmatpush1.msra.mxu0 %v2033
      %2527 = vmatprep.subr.mxu0 0.0
      %2528 = vmatpush1.msra.mxu0 %v2034
      %2529 = vmatprep.subr.mxu0 0.0
      %2530 = vmatpush1.msra.mxu0 %v2035
      %2531 = vmatprep.subr.mxu0 0.0
      %2532 = vmatpush1.msra.mxu0 %v2036
      %2533 = vmatprep.subr.mxu0 0.0
      %2534 = vmatpush1.msra.mxu0 %v2037
      %2535 = vmatprep.subr.mxu0 0.0
      %2536 = vmatpush1.msra.mxu0 0.0
      %2537 = vmatprep.subr.mxu0 0.0
      %2538 = vmatpush1.msra.mxu0 0.0
      %2539 = vmatprep.subr.mxu0 0.0
      %2540 = vmatpush1.msra.mxu0 0.0
      %2541 = vmatprep.subr.mxu0 0.0
      %2542 = vmatpush1.msra.mxu0 0.0
      %2543 = vmatprep.subr.mxu0 0.0
      %2544 = vmatpush1.msra.mxu0 0.0
      %2545 = vmatprep.subr.mxu0 0.0
      %2546 = vmatpush1.msra.mxu0 0.0
      %2547 = vmatprep.subr.mxu0 0.0
      %2548 = vmatpush1.msra.mxu0 0.0
      %2549 = vmatprep.subr.mxu0 0.0
      %2550 = vmatpush1.msra.mxu0 0.0
      %2551 = vmatprep.subr.mxu0 0.0
      %2552 = vmatpush1.msra.mxu0 0.0
      %2553 = vmatprep.subr.mxu0 0.0
      %2554 = vmatpush1.msra.mxu0 0.0
      %2555 = vmatprep.subr.mxu0 0.0
      %2556 = vmatpush1.msra.mxu0 0.0
      %2557 = vmatprep.subr.mxu0 0.0
      %2558 = vmatpush1.msra.mxu0 0.0
      %2559 = vmatprep.subr.mxu0 0.0
      %2560 = vmatpush1.msra.mxu0 0.0
      %2561 = vmatprep.subr.mxu0 0.0
      %2562 = vmatpush1.msra.mxu0 0.0
      %2563 = vmatprep.subr.mxu0 0.0
      %2564 = vmatpush1.msra.mxu0 0.0
      %2565 = vmatprep.subr.mxu0 0.0
      %2566 = vmatpush1.msra.mxu0 0.0
      %2567 = vmatprep.mubr.f32.mxu0 0.0
      %2568 = vmatmul.mubr.f32.gmra.mrb[0].mxu0 %v1894
      %v2569 = vpop.f32.mrb[0].mxu0
      %v2570 = vadd.f32 %v2185, %v2569
      %v2571 = vpop.f32.mrb[0].mxu0
      %2572 = vmatprep.mubr.f32.mxu0 0.0
      %2573 = vmatmul.mubr.f32.gmra.mrb[0].mxu0 %v1895
      %v2574 = vpop.f32.mrb[0].mxu0
      %v2575 = vadd.f32 %v2190, %v2574
      %v2576 = vpop.f32.mrb[0].mxu0
      %2577 = vmatprep.mubr.f32.mxu0 0.0
      %2578 = vmatmul.mubr.f32.gmra.mrb[0].mxu0 %v1896
      %v2579 = vpop.f32.mrb[0].mxu0
      %v2580 = vadd.f32 %v2195, %v2579
      %v2581 = vpop.f32.mrb[0].mxu0
      %2582 = vmatprep.mubr.f32.mxu0 0.0
      %2583 = vmatmul.mubr.f32.gmra.mrb[0].mxu0 %v1897
      %v2584 = vpop.f32.mrb[0].mxu0
      %v2585 = vadd.f32 %v2200, %v2584
      %v2586 = vpop.f32.mrb[0].mxu0
      %2587 = vmatprep.mubr.f32.mxu0 0.0
      %2588 = vmatmul.mubr.f32.gmra.mrb[0].mxu0 %v1898
      %v2589 = vpop.f32.mrb[0].mxu0
      %v2590 = vadd.f32 %v2205, %v2589
      %v2591 = vpop.f32.mrb[0].mxu0
      %2592 = vmatprep.mubr.f32.mxu0 0.0
      %2593 = vmatmul.mubr.f32.gmra.mrb[0].mxu0 %v1899
      %v2594 = vpop.f32.mrb[0].mxu0
      %v2595 = vadd.f32 %v2210, %v2594
      %v2596 = vpop.f32.mrb[0].mxu0
      %2597 = vmatprep.mubr.f32.mxu0 0.0
      %2598 = vmatmul.mubr.f32.gmra.mrb[0].mxu0 %v1900
      %v2599 = vpop.f32.mrb[0].mxu0
      %v2600 = vadd.f32 %v2215, %v2599
      %v2601 = vpop.f32.mrb[0].mxu0
      %2602 = vmatprep.mubr.f32.mxu0 0.0
      %2603 = vmatmul.mubr.f32.gmra.mrb[0].mxu0 %v1901
      %v2604 = vpop.f32.mrb[0].mxu0
      %v2605 = vadd.f32 %v2220, %v2604
      %v2606 = vpop.f32.mrb[0].mxu0
      %2607 = vmatprep.mubr.f32.mxu0 0.0
      %2608 = vmatmul.mubr.f32.gmra.mrb[0].mxu0 %v1902
      %v2609 = vpop.f32.mrb[0].mxu0
      %v2610 = vadd.f32 %v2225, %v2609
      %v2611 = vpop.f32.mrb[0].mxu0
      %2612 = vmatprep.mubr.f32.mxu0 0.0
      %2613 = vmatmul.mubr.f32.gmra.mrb[0].mxu0 %v1903
      %v2614 = vpop.f32.mrb[0].mxu0
      %v2615 = vadd.f32 %v2230, %v2614
      %v2616 = vpop.f32.mrb[0].mxu0
      %2617 = vmatprep.mubr.f32.mxu0 0.0
      %2618 = vmatmul.mubr.f32.gmra.mrb[0].mxu0 %v1904
      %v2619 = vpop.f32.mrb[0].mxu0
      %v2620 = vadd.f32 %v2235, %v2619
      %v2621 = vpop.f32.mrb[0].mxu0
      %2622 = vmatprep.mubr.f32.mxu0 0.0
      %2623 = vmatmul.mubr.f32.gmra.mrb[0].mxu0 %v1905
      %v2624 = vpop.f32.mrb[0].mxu0
      %v2625 = vadd.f32 %v2240, %v2624
      %v2626 = vpop.f32.mrb[0].mxu0
      %2627 = vmatprep.mubr.f32.mxu0 0.0
      %2628 = vmatmul.mubr.f32.gmra.mrb[0].mxu0 %v1906
      %v2629 = vpop.f32.mrb[0].mxu0
      %v2630 = vadd.f32 %v2245, %v2629
      %v2631 = vpop.f32.mrb[0].mxu0
      %2632 = vmatprep.mubr.f32.mxu0 0.0
      %2633 = vmatmul.mubr.f32.gmra.mrb[0].mxu0 %v1907
      %v2634 = vpop.f32.mrb[0].mxu0
      %v2635 = vadd.f32 %v2250, %v2634
      %v2636 = vpop.f32.mrb[0].mxu0
      %2637 = vmatprep.mubr.f32.mxu0 0.0
      %2638 = vmatmul.mubr.f32.gmra.mrb[0].mxu0 %v1908
      %v2639 = vpop.f32.mrb[0].mxu0
      %v2640 = vadd.f32 %v2255, %v2639
      %v2641 = vpop.f32.mrb[0].mxu0
      %2642 = vmatprep.mubr.f32.mxu0 0.0
      %2643 = vmatmul.mubr.f32.gmra.mrb[0].mxu0 %v1909
      %v2644 = vpop.f32.mrb[0].mxu0
      %v2645 = vadd.f32 %v2260, %v2644
      %v2646 = vpop.f32.mrb[0].mxu0
      %2647 = vmatprep.mubr.f32.mxu0 0.0
      %2648 = vmatmul.mubr.f32.gmra.mrb[0].mxu0 %v1910
      %v2649 = vpop.f32.mrb[0].mxu0
      %v2650 = vadd.f32 %v2265, %v2649
      %v2651 = vpop.f32.mrb[0].mxu0
      %2652 = vmatprep.mubr.f32.mxu0 0.0
      %2653 = vmatmul.mubr.f32.gmra.mrb[0].mxu0 %v1911
      %v2654 = vpop.f32.mrb[0].mxu0
      %v2655 = vadd.f32 %v2270, %v2654
      %v2656 = vpop.f32.mrb[0].mxu0
      %2657 = vmatprep.mubr.f32.mxu0 0.0
      %2658 = vmatmul.mubr.f32.gmra.mrb[0].mxu0 %v1912
      %v2659 = vpop.f32.mrb[0].mxu0
      %v2660 = vadd.f32 %v2275, %v2659
      %v2661 = vpop.f32.mrb[0].mxu0
      %2662 = vmatprep.mubr.f32.mxu0 0.0
      %2663 = vmatmul.mubr.f32.gmra.mrb[0].mxu0 %v1913
      %v2664 = vpop.f32.mrb[0].mxu0
      %v2665 = vadd.f32 %v2280, %v2664
      %v2666 = vpop.f32.mrb[0].mxu0
      %2667 = vmatprep.mubr.f32.mxu0 0.0
      %2668 = vmatmul.mubr.f32.gmra.mrb[0].mxu0 %v1914
      %v2669 = vpop.f32.mrb[0].mxu0
      %v2670 = vadd.f32 %v2285, %v2669
      %v2671 = vpop.f32.mrb[0].mxu0
      %2672 = vmatprep.mubr.f32.mxu0 0.0
      %2673 = vmatmul.mubr.f32.gmra.mrb[0].mxu0 %v1915
      %v2674 = vpop.f32.mrb[0].mxu0
      %v2675 = vadd.f32 %v2290, %v2674
      %v2676 = vpop.f32.mrb[0].mxu0
      %2677 = vmatprep.mubr.f32.mxu0 0.0
      %2678 = vmatmul.mubr.f32.gmra.mrb[0].mxu0 %v1916
      %v2679 = vpop.f32.mrb[0].mxu0
      %v2680 = vadd.f32 %v2295, %v2679
      %v2681 = vpop.f32.mrb[0].mxu0
      %2682 = vmatprep.mubr.f32.mxu0 0.0
      %2683 = vmatmul.mubr.f32.gmra.mrb[0].mxu0 %v1917
      %v2684 = vpop.f32.mrb[0].mxu0
      %v2685 = vadd.f32 %v2300, %v2684
      %v2686 = vpop.f32.mrb[0].mxu0
      %2687 = vmatprep.mubr.f32.mxu0 0.0
      %2688 = vmatmul.mubr.f32.gmra.mrb[0].mxu0 %v1918
      %v2689 = vpop.f32.mrb[0].mxu0
      %v2690 = vadd.f32 %v2305, %v2689
      %v2691 = vpop.f32.mrb[0].mxu0
      %2692 = vmatprep.mubr.f32.mxu0 0.0
      %2693 = vmatmul.mubr.f32.gmra.mrb[0].mxu0 %v1919
      %v2694 = vpop.f32.mrb[0].mxu0
      %v2695 = vadd.f32 %v2310, %v2694
      %v2696 = vpop.f32.mrb[0].mxu0
      %2697 = vmatprep.mubr.f32.mxu0 0.0
      %2698 = vmatmul.mubr.f32.gmra.mrb[0].mxu0 %v1920
      %v2699 = vpop.f32.mrb[0].mxu0
      %v2700 = vadd.f32 %v2315, %v2699
      %v2701 = vpop.f32.mrb[0].mxu0
      %2702 = vmatprep.mubr.f32.mxu0 0.0
      %2703 = vmatmul.mubr.f32.gmra.mrb[0].mxu0 %v1921
      %v2704 = vpop.f32.mrb[0].mxu0
      %v2705 = vadd.f32 %v2320, %v2704
      %v2706 = vpop.f32.mrb[0].mxu0
      %2707 = vmatprep.mubr.f32.mxu0 0.0
      %2708 = vmatmul.mubr.f32.gmra.mrb[0].mxu0 %v1922
      %v2709 = vpop.f32.mrb[0].mxu0
      %v2710 = vadd.f32 %v2325, %v2709
      %v2711 = vpop.f32.mrb[0].mxu0
      %2712 = vmatprep.mubr.f32.mxu0 0.0
      %2713 = vmatmul.mubr.f32.gmra.mrb[0].mxu0 %v1923
      %v2714 = vpop.f32.mrb[0].mxu0
      %v2715 = vadd.f32 %v2330, %v2714
      %v2716 = vpop.f32.mrb[0].mxu0
      %2717 = vmatprep.mubr.f32.mxu0 0.0
      %2718 = vmatmul.mubr.f32.gmra.mrb[0].mxu0 %v1924
      %v2719 = vpop.f32.mrb[0].mxu0
      %v2720 = vadd.f32 %v2335, %v2719
      %v2721 = vpop.f32.mrb[0].mxu0
      %2722 = vmatprep.mubr.f32.mxu0 0.0
      %2723 = vmatmul.mubr.f32.gmra.mrb[0].mxu0 %v1925
      %v2724 = vpop.f32.mrb[0].mxu0
      %v2725 = vadd.f32 %v2340, %v2724
      %v2726 = vpop.f32.mrb[0].mxu0
      %2727 = vmatprep.mubr.f32.mxu0 0.0
      %2728 = vmatmul.mubr.f32.gmra.mrb[0].mxu0 %v1926
      %v2729 = vpop.f32.mrb[0].mxu0
      %v2730 = vadd.f32 %v2345, %v2729
      %v2731 = vpop.f32.mrb[0].mxu0
      %2732 = vmatprep.mubr.f32.mxu0 0.0
      %2733 = vmatmul.mubr.f32.gmra.mrb[0].mxu0 %v1927
      %v2734 = vpop.f32.mrb[0].mxu0
      %v2735 = vadd.f32 %v2350, %v2734
      %v2736 = vpop.f32.mrb[0].mxu0
      %2737 = vmatprep.mubr.f32.mxu0 0.0
      %2738 = vmatmul.mubr.f32.gmra.mrb[0].mxu0 %v1928
      %v2739 = vpop.f32.mrb[0].mxu0
      %v2740 = vadd.f32 %v2355, %v2739
      %v2741 = vpop.f32.mrb[0].mxu0
      %2742 = vmatprep.mubr.f32.mxu0 0.0
      %2743 = vmatmul.mubr.f32.gmra.mrb[0].mxu0 %v1929
      %v2744 = vpop.f32.mrb[0].mxu0
      %v2745 = vadd.f32 %v2360, %v2744
      %v2746 = vpop.f32.mrb[0].mxu0
      %2747 = vmatprep.mubr.f32.mxu0 0.0
      %2748 = vmatmul.mubr.f32.gmra.mrb[0].mxu0 %v1930
      %v2749 = vpop.f32.mrb[0].mxu0
      %v2750 = vadd.f32 %v2365, %v2749
      %v2751 = vpop.f32.mrb[0].mxu0
      %2752 = vmatprep.mubr.f32.mxu0 0.0
      %2753 = vmatmul.mubr.f32.gmra.mrb[0].mxu0 %v1931
      %v2754 = vpop.f32.mrb[0].mxu0
      %v2755 = vadd.f32 %v2370, %v2754
      %v2756 = vpop.f32.mrb[0].mxu0
      %2757 = vmatprep.mubr.f32.mxu0 0.0
      %2758 = vmatmul.mubr.f32.gmra.mrb[0].mxu0 %v1932
      %v2759 = vpop.f32.mrb[0].mxu0
      %v2760 = vadd.f32 %v2375, %v2759
      %v2761 = vpop.f32.mrb[0].mxu0
      %2762 = vmatprep.mubr.f32.mxu0 0.0
      %2763 = vmatmul.mubr.f32.gmra.mrb[0].mxu0 %v1933
      %v2764 = vpop.f32.mrb[0].mxu0
      %v2765 = vadd.f32 %v2380, %v2764
      %v2766 = vpop.f32.mrb[0].mxu0
      %2767 = vmatprep.mubr.f32.mxu0 0.0
      %2768 = vmatmul.mubr.f32.gmra.mrb[0].mxu0 %v1934
      %v2769 = vpop.f32.mrb[0].mxu0
      %v2770 = vadd.f32 %v2385, %v2769
      %v2771 = vpop.f32.mrb[0].mxu0
      %2772 = vmatprep.mubr.f32.mxu0 0.0
      %2773 = vmatmul.mubr.f32.gmra.mrb[0].mxu0 %v1935
      %v2774 = vpop.f32.mrb[0].mxu0
      %v2775 = vadd.f32 %v2390, %v2774
      %v2776 = vpop.f32.mrb[0].mxu0
      %2777 = vmatprep.mubr.f32.mxu0 0.0
      %2778 = vmatmul.mubr.f32.gmra.mrb[0].mxu0 %v1936
      %v2779 = vpop.f32.mrb[0].mxu0
      %v2780 = vadd.f32 %v2395, %v2779
      %v2781 = vpop.f32.mrb[0].mxu0
      %2782 = vmatprep.mubr.f32.mxu0 0.0
      %2783 = vmatmul.mubr.f32.gmra.mrb[0].mxu0 %v1937
      %v2784 = vpop.f32.mrb[0].mxu0
      %v2785 = vadd.f32 %v2400, %v2784
      %v2786 = vpop.f32.mrb[0].mxu0
      %2787 = vmatprep.mubr.f32.mxu0 0.0
      %2788 = vmatmul.mubr.f32.gmra.mrb[0].mxu0 %v1938
      %v2789 = vpop.f32.mrb[0].mxu0
      %v2790 = vadd.f32 %v2405, %v2789
      %v2791 = vpop.f32.mrb[0].mxu0
      %2792 = vmatprep.mubr.f32.mxu0 0.0
      %2793 = vmatmul.mubr.f32.gmra.mrb[0].mxu0 %v1939
      %v2794 = vpop.f32.mrb[0].mxu0
      %v2795 = vadd.f32 %v2410, %v2794
      %v2796 = vpop.f32.mrb[0].mxu0
      %2797 = vmatprep.mubr.f32.mxu0 0.0
      %2798 = vmatmul.mubr.f32.gmra.mrb[0].mxu0 %v1940
      %v2799 = vpop.f32.mrb[0].mxu0
      %v2800 = vadd.f32 %v2415, %v2799
      %v2801 = vpop.f32.mrb[0].mxu0
      %2802 = vmatprep.mubr.f32.mxu0 0.0
      %2803 = vmatmul.mubr.f32.gmra.mrb[0].mxu0 %v1941
      %v2804 = vpop.f32.mrb[0].mxu0
      %v2805 = vadd.f32 %v2420, %v2804
      %v2806 = vpop.f32.mrb[0].mxu0
      %2807 = vmatprep.mubr.f32.mxu0 0.0
      %2808 = vmatmul.mubr.f32.gmra.mrb[0].mxu0 %v1942
      %v2809 = vpop.f32.mrb[0].mxu0
      %v2810 = vadd.f32 %v2425, %v2809
      %v2811 = vpop.f32.mrb[0].mxu0
      %2812 = vmatprep.mubr.f32.mxu0 0.0
      %2813 = vmatmul.mubr.f32.gmra.mrb[0].mxu0 %v1943
      %v2814 = vpop.f32.mrb[0].mxu0
      %v2815 = vadd.f32 %v2430, %v2814
      %v2816 = vpop.f32.mrb[0].mxu0
      %2817 = vmatprep.mubr.f32.mxu0 0.0
      %2818 = vmatmul.mubr.f32.gmra.mrb[0].mxu0 %v1944
      %v2819 = vpop.f32.mrb[0].mxu0
      %v2820 = vadd.f32 %v2435, %v2819
      %v2821 = vpop.f32.mrb[0].mxu0
      %2822 = vmatprep.mubr.f32.mxu0 0.0
      %2823 = vmatmul.mubr.f32.gmra.mrb[0].mxu0 %v1945
      %v2824 = vpop.f32.mrb[0].mxu0
      %v2825 = vadd.f32 %v2440, %v2824
      %v2826 = vpop.f32.mrb[0].mxu0
      %2827 = vmatprep.mubr.f32.mxu0 0.0
      %2828 = vmatmul.mubr.f32.gmra.mrb[0].mxu0 %v1946
      %v2829 = vpop.f32.mrb[0].mxu0
      %v2830 = vadd.f32 %v2445, %v2829
      %v2831 = vpop.f32.mrb[0].mxu0
      %2832 = vmatprep.mubr.f32.mxu0 0.0
      %2833 = vmatmul.mubr.f32.gmra.mrb[0].mxu0 %v1947
      %v2834 = vpop.f32.mrb[0].mxu0
      %v2835 = vadd.f32 %v2450, %v2834
      %v2836 = vpop.f32.mrb[0].mxu0
      %2837 = vmatprep.mubr.f32.mxu0 0.0
      %2838 = vmatmul.mubr.f32.gmra.mrb[0].mxu0 %v1948
      %v2839 = vpop.f32.mrb[0].mxu0
      %v2840 = vadd.f32 %v2455, %v2839
      %v2841 = vpop.f32.mrb[0].mxu0
      %2842 = vmatprep.mubr.f32.mxu0 0.0
      %2843 = vmatmul.mubr.f32.gmra.mrb[0].mxu0 %v1949
      %v2844 = vpop.f32.mrb[0].mxu0
      %v2845 = vadd.f32 %v2460, %v2844
      %v2846 = vpop.f32.mrb[0].mxu0
      %2847 = vmatprep.mubr.f32.mxu0 0.0
      %2848 = vmatmul.mubr.f32.gmra.mrb[0].mxu0 %v1950
      %v2849 = vpop.f32.mrb[0].mxu0
      %v2850 = vadd.f32 %v2465, %v2849
      %v2851 = vpop.f32.mrb[0].mxu0
      %2852 = vmatprep.mubr.f32.mxu0 0.0
      %2853 = vmatmul.mubr.f32.gmra.mrb[0].mxu0 %v1951
      %v2854 = vpop.f32.mrb[0].mxu0
      %v2855 = vadd.f32 %v2470, %v2854
      %v2856 = vpop.f32.mrb[0].mxu0
      %2857 = vmatprep.mubr.f32.mxu0 0.0
      %2858 = vmatmul.mubr.f32.gmra.mrb[0].mxu0 %v1952
      %v2859 = vpop.f32.mrb[0].mxu0
      %v2860 = vadd.f32 %v2475, %v2859
      %v2861 = vpop.f32.mrb[0].mxu0
      %2862 = vmatprep.mubr.f32.mxu0 0.0
      %2863 = vmatmul.mubr.f32.gmra.mrb[0].mxu0 %v1953
      %v2864 = vpop.f32.mrb[0].mxu0
      %v2865 = vadd.f32 %v2480, %v2864
      %v2866 = vpop.f32.mrb[0].mxu0
      %2867 = vmatprep.mubr.f32.mxu0 0.0
      %2868 = vmatmul.mubr.f32.gmra.mrb[0].mxu0 %v1954
      %v2869 = vpop.f32.mrb[0].mxu0
      %v2870 = vadd.f32 %v2485, %v2869
      %v2871 = vpop.f32.mrb[0].mxu0
      %2872 = vmatprep.mubr.f32.mxu0 0.0
      %2873 = vmatmul.mubr.f32.gmra.mrb[0].mxu0 %v1955
      %v2874 = vpop.f32.mrb[0].mxu0
      %v2875 = vadd.f32 %v2490, %v2874
      %v2876 = vpop.f32.mrb[0].mxu0
      %2877 = vmatprep.mubr.f32.mxu0 0.0
      %2878 = vmatmul.mubr.f32.gmra.mrb[0].mxu0 %v1956
      %v2879 = vpop.f32.mrb[0].mxu0
      %v2880 = vadd.f32 %v2495, %v2879
      %v2881 = vpop.f32.mrb[0].mxu0
      %2882 = vmatprep.mubr.f32.mxu0 0.0
      %2883 = vmatmul.mubr.f32.gmra.mrb[0].mxu0 %v1957
      %v2884 = vpop.f32.mrb[0].mxu0
      %v2885 = vadd.f32 %v2500, %v2884
      %v2886 = vpop.f32.mrb[0].mxu0
      %2887 = vdwg.mxu0
      %v2888 = vld [vmem:[%s5] sm:$0x1]
      %v2890 = vlaneseq
      %v2891 = vshrl.u32 %v2890, 7
      %v2892 = vsub.s32 0, %v2891
      %v2893 = vrot.slane %v2888, %v2892
      %v2895 = vadd.f32 %v2570, %v2893
      %v2896 = vadd.f32 %v2575, %v2893
      %v2897 = vadd.f32 %v2580, %v2893
      %v2898 = vadd.f32 %v2585, %v2893
      %v2899 = vadd.f32 %v2590, %v2893
      %v2900 = vadd.f32 %v2595, %v2893
      %v2901 = vadd.f32 %v2600, %v2893
      %v2902 = vadd.f32 %v2605, %v2893
      %v2903 = vadd.f32 %v2610, %v2893
      %v2904 = vadd.f32 %v2615, %v2893
      %v2905 = vadd.f32 %v2620, %v2893
      %v2906 = vadd.f32 %v2625, %v2893
      %v2907 = vadd.f32 %v2630, %v2893
      %v2908 = vadd.f32 %v2635, %v2893
      %v2909 = vadd.f32 %v2640, %v2893
      %v2910 = vadd.f32 %v2645, %v2893
      %v2911 = vadd.f32 %v2650, %v2893
      %v2912 = vadd.f32 %v2655, %v2893
      %v2913 = vadd.f32 %v2660, %v2893
      %v2914 = vadd.f32 %v2665, %v2893
      %v2915 = vadd.f32 %v2670, %v2893
      %v2916 = vadd.f32 %v2675, %v2893
      %v2917 = vadd.f32 %v2680, %v2893
      %v2918 = vadd.f32 %v2685, %v2893
      %v2919 = vadd.f32 %v2690, %v2893
      %v2920 = vadd.f32 %v2695, %v2893
      %v2921 = vadd.f32 %v2700, %v2893
      %v2922 = vadd.f32 %v2705, %v2893
      %v2923 = vadd.f32 %v2710, %v2893
      %v2924 = vadd.f32 %v2715, %v2893
      %v2925 = vadd.f32 %v2720, %v2893
      %v2926 = vadd.f32 %v2725, %v2893
      %v2927 = vadd.f32 %v2730, %v2893
      %v2928 = vadd.f32 %v2735, %v2893
      %v2929 = vadd.f32 %v2740, %v2893
      %v2930 = vadd.f32 %v2745, %v2893
      %v2931 = vadd.f32 %v2750, %v2893
      %v2932 = vadd.f32 %v2755, %v2893
      %v2933 = vadd.f32 %v2760, %v2893
      %v2934 = vadd.f32 %v2765, %v2893
      %v2935 = vadd.f32 %v2770, %v2893
      %v2936 = vadd.f32 %v2775, %v2893
      %v2937 = vadd.f32 %v2780, %v2893
      %v2938 = vadd.f32 %v2785, %v2893
      %v2939 = vadd.f32 %v2790, %v2893
      %v2940 = vadd.f32 %v2795, %v2893
      %v2941 = vadd.f32 %v2800, %v2893
      %v2942 = vadd.f32 %v2805, %v2893
      %v2943 = vadd.f32 %v2810, %v2893
      %v2944 = vadd.f32 %v2815, %v2893
      %v2945 = vadd.f32 %v2820, %v2893
      %v2946 = vadd.f32 %v2825, %v2893
      %v2947 = vadd.f32 %v2830, %v2893
      %v2948 = vadd.f32 %v2835, %v2893
      %v2949 = vadd.f32 %v2840, %v2893
      %v2950 = vadd.f32 %v2845, %v2893
      %v2951 = vadd.f32 %v2850, %v2893
      %v2952 = vadd.f32 %v2855, %v2893
      %v2953 = vadd.f32 %v2860, %v2893
      %v2954 = vadd.f32 %v2865, %v2893
      %v2955 = vadd.f32 %v2870, %v2893
      %v2956 = vadd.f32 %v2875, %v2893
      %v2957 = vadd.f32 %v2880, %v2893
      %v2958 = vadd.f32 %v2885, %v2893
      %vm2959 = vcmp.ge.f32.partialorder %v2895, 0.0
      %vm2960 = vcmp.ge.f32.partialorder %v2896, 0.0
      %vm2961 = vcmp.ge.f32.partialorder %v2897, 0.0
      %vm2962 = vcmp.ge.f32.partialorder %v2898, 0.0
      %vm2963 = vcmp.ge.f32.partialorder %v2899, 0.0
      %vm2964 = vcmp.ge.f32.partialorder %v2900, 0.0
      %vm2965 = vcmp.ge.f32.partialorder %v2901, 0.0
      %vm2966 = vcmp.ge.f32.partialorder %v2902, 0.0
      %vm2967 = vcmp.ge.f32.partialorder %v2903, 0.0
      %vm2968 = vcmp.ge.f32.partialorder %v2904, 0.0
      %vm2969 = vcmp.ge.f32.partialorder %v2905, 0.0
      %vm2970 = vcmp.ge.f32.partialorder %v2906, 0.0
      %vm2971 = vcmp.ge.f32.partialorder %v2907, 0.0
      %vm2972 = vcmp.ge.f32.partialorder %v2908, 0.0
      %vm2973 = vcmp.ge.f32.partialorder %v2909, 0.0
      %vm2974 = vcmp.ge.f32.partialorder %v2910, 0.0
      %vm2975 = vcmp.ge.f32.partialorder %v2911, 0.0
      %vm2976 = vcmp.ge.f32.partialorder %v2912, 0.0
      %vm2977 = vcmp.ge.f32.partialorder %v2913, 0.0
      %vm2978 = vcmp.ge.f32.partialorder %v2914, 0.0
      %vm2979 = vcmp.ge.f32.partialorder %v2915, 0.0
      %vm2980 = vcmp.ge.f32.partialorder %v2916, 0.0
      %vm2981 = vcmp.ge.f32.partialorder %v2917, 0.0
      %vm2982 = vcmp.ge.f32.partialorder %v2918, 0.0
      %vm2983 = vcmp.ge.f32.partialorder %v2919, 0.0
      %vm2984 = vcmp.ge.f32.partialorder %v2920, 0.0
      %vm2985 = vcmp.ge.f32.partialorder %v2921, 0.0
      %vm2986 = vcmp.ge.f32.partialorder %v2922, 0.0
      %vm2987 = vcmp.ge.f32.partialorder %v2923, 0.0
      %vm2988 = vcmp.ge.f32.partialorder %v2924, 0.0
      %vm2989 = vcmp.ge.f32.partialorder %v2925, 0.0
      %vm2990 = vcmp.ge.f32.partialorder %v2926, 0.0
      %vm2991 = vcmp.ge.f32.partialorder %v2927, 0.0
      %vm2992 = vcmp.ge.f32.partialorder %v2928, 0.0
      %vm2993 = vcmp.ge.f32.partialorder %v2929, 0.0
      %vm2994 = vcmp.ge.f32.partialorder %v2930, 0.0
      %vm2995 = vcmp.ge.f32.partialorder %v2931, 0.0
      %vm2996 = vcmp.ge.f32.partialorder %v2932, 0.0
      %vm2997 = vcmp.ge.f32.partialorder %v2933, 0.0
      %vm2998 = vcmp.ge.f32.partialorder %v2934, 0.0
      %vm2999 = vcmp.ge.f32.partialorder %v2935, 0.0
      %vm3000 = vcmp.ge.f32.partialorder %v2936, 0.0
      %vm3001 = vcmp.ge.f32.partialorder %v2937, 0.0
      %vm3002 = vcmp.ge.f32.partialorder %v2938, 0.0
      %vm3003 = vcmp.ge.f32.partialorder %v2939, 0.0
      %vm3004 = vcmp.ge.f32.partialorder %v2940, 0.0
      %vm3005 = vcmp.ge.f32.partialorder %v2941, 0.0
      %vm3006 = vcmp.ge.f32.partialorder %v2942, 0.0
      %vm3007 = vcmp.ge.f32.partialorder %v2943, 0.0
      %vm3008 = vcmp.ge.f32.partialorder %v2944, 0.0
      %vm3009 = vcmp.ge.f32.partialorder %v2945, 0.0
      %vm3010 = vcmp.ge.f32.partialorder %v2946, 0.0
      %vm3011 = vcmp.ge.f32.partialorder %v2947, 0.0
      %vm3012 = vcmp.ge.f32.partialorder %v2948, 0.0
      %vm3013 = vcmp.ge.f32.partialorder %v2949, 0.0
      %vm3014 = vcmp.ge.f32.partialorder %v2950, 0.0
      %vm3015 = vcmp.ge.f32.partialorder %v2951, 0.0
      %vm3016 = vcmp.ge.f32.partialorder %v2952, 0.0
      %vm3017 = vcmp.ge.f32.partialorder %v2953, 0.0
      %vm3018 = vcmp.ge.f32.partialorder %v2954, 0.0
      %vm3019 = vcmp.ge.f32.partialorder %v2955, 0.0
      %vm3020 = vcmp.ge.f32.partialorder %v2956, 0.0
      %vm3021 = vcmp.ge.f32.partialorder %v2957, 0.0
      %vm3022 = vcmp.ge.f32.partialorder %v2958, 0.0
      %v3023 = vmul.f32 %v2895, 0.2
      %v3024 = vmul.f32 %v2896, 0.2
      %v3025 = vmul.f32 %v2897, 0.2
      %v3026 = vmul.f32 %v2898, 0.2
      %v3027 = vmul.f32 %v2899, 0.2
      %v3028 = vmul.f32 %v2900, 0.2
      %v3029 = vmul.f32 %v2901, 0.2
      %v3030 = vmul.f32 %v2902, 0.2
      %v3031 = vmul.f32 %v2903, 0.2
      %v3032 = vmul.f32 %v2904, 0.2
      %v3033 = vmul.f32 %v2905, 0.2
      %v3034 = vmul.f32 %v2906, 0.2
      %v3035 = vmul.f32 %v2907, 0.2
      %v3036 = vmul.f32 %v2908, 0.2
      %v3037 = vmul.f32 %v2909, 0.2
      %v3038 = vmul.f32 %v2910, 0.2
      %v3039 = vmul.f32 %v2911, 0.2
      %v3040 = vmul.f32 %v2912, 0.2
      %v3041 = vmul.f32 %v2913, 0.2
      %v3042 = vmul.f32 %v2914, 0.2
      %v3043 = vmul.f32 %v2915, 0.2
      %v3044 = vmul.f32 %v2916, 0.2
      %v3045 = vmul.f32 %v2917, 0.2
      %v3046 = vmul.f32 %v2918, 0.2
      %v3047 = vmul.f32 %v2919, 0.2
      %v3048 = vmul.f32 %v2920, 0.2
      %v3049 = vmul.f32 %v2921, 0.2
      %v3050 = vmul.f32 %v2922, 0.2
      %v3051 = vmul.f32 %v2923, 0.2
      %v3052 = vmul.f32 %v2924, 0.2
      %v3053 = vmul.f32 %v2925, 0.2
      %v3054 = vmul.f32 %v2926, 0.2
      %v3055 = vmul.f32 %v2927, 0.2
      %v3056 = vmul.f32 %v2928, 0.2
      %v3057 = vmul.f32 %v2929, 0.2
      %v3058 = vmul.f32 %v2930, 0.2
      %v3059 = vmul.f32 %v2931, 0.2
      %v3060 = vmul.f32 %v2932, 0.2
      %v3061 = vmul.f32 %v2933, 0.2
      %v3062 = vmul.f32 %v2934, 0.2
      %v3063 = vmul.f32 %v2935, 0.2
      %v3064 = vmul.f32 %v2936, 0.2
      %v3065 = vmul.f32 %v2937, 0.2
      %v3066 = vmul.f32 %v2938, 0.2
      %v3067 = vmul.f32 %v2939, 0.2
      %v3068 = vmul.f32 %v2940, 0.2
      %v3069 = vmul.f32 %v2941, 0.2
      %v3070 = vmul.f32 %v2942, 0.2
      %v3071 = vmul.f32 %v2943, 0.2
      %v3072 = vmul.f32 %v2944, 0.2
      %v3073 = vmul.f32 %v2945, 0.2
      %v3074 = vmul.f32 %v2946, 0.2
      %v3075 = vmul.f32 %v2947, 0.2
      %v3076 = vmul.f32 %v2948, 0.2
      %v3077 = vmul.f32 %v2949, 0.2
      %v3078 = vmul.f32 %v2950, 0.2
      %v3079 = vmul.f32 %v2951, 0.2
      %v3080 = vmul.f32 %v2952, 0.2
      %v3081 = vmul.f32 %v2953, 0.2
      %v3082 = vmul.f32 %v2954, 0.2
      %v3083 = vmul.f32 %v2955, 0.2
      %v3084 = vmul.f32 %v2956, 0.2
      %v3085 = vmul.f32 %v2957, 0.2
      %v3086 = vmul.f32 %v2958, 0.2
      %v3087 = vsel %vm2959, %v2895, %v3023
      %v3088 = vsel %vm2960, %v2896, %v3024
      %v3089 = vsel %vm2961, %v2897, %v3025
      %v3090 = vsel %vm2962, %v2898, %v3026
      %v3091 = vsel %vm2963, %v2899, %v3027
      %v3092 = vsel %vm2964, %v2900, %v3028
      %v3093 = vsel %vm2965, %v2901, %v3029
      %v3094 = vsel %vm2966, %v2902, %v3030
      %v3095 = vsel %vm2967, %v2903, %v3031
      %v3096 = vsel %vm2968, %v2904, %v3032
      %v3097 = vsel %vm2969, %v2905, %v3033
      %v3098 = vsel %vm2970, %v2906, %v3034
      %v3099 = vsel %vm2971, %v2907, %v3035
      %v3100 = vsel %vm2972, %v2908, %v3036
      %v3101 = vsel %vm2973, %v2909, %v3037
      %v3102 = vsel %vm2974, %v2910, %v3038
      %v3103 = vsel %vm2975, %v2911, %v3039
      %v3104 = vsel %vm2976, %v2912, %v3040
      %v3105 = vsel %vm2977, %v2913, %v3041
      %v3106 = vsel %vm2978, %v2914, %v3042
      %v3107 = vsel %vm2979, %v2915, %v3043
      %v3108 = vsel %vm2980, %v2916, %v3044
      %v3109 = vsel %vm2981, %v2917, %v3045
      %v3110 = vsel %vm2982, %v2918, %v3046
      %v3111 = vsel %vm2983, %v2919, %v3047
      %v3112 = vsel %vm2984, %v2920, %v3048
      %v3113 = vsel %vm2985, %v2921, %v3049
      %v3114 = vsel %vm2986, %v2922, %v3050
      %v3115 = vsel %vm2987, %v2923, %v3051
      %v3116 = vsel %vm2988, %v2924, %v3052
      %v3117 = vsel %vm2989, %v2925, %v3053
      %v3118 = vsel %vm2990, %v2926, %v3054
      %v3119 = vsel %vm2991, %v2927, %v3055
      %v3120 = vsel %vm2992, %v2928, %v3056
      %v3121 = vsel %vm2993, %v2929, %v3057
      %v3122 = vsel %vm2994, %v2930, %v3058
      %v3123 = vsel %vm2995, %v2931, %v3059
      %v3124 = vsel %vm2996, %v2932, %v3060
      %v3125 = vsel %vm2997, %v2933, %v3061
      %v3126 = vsel %vm2998, %v2934, %v3062
      %v3127 = vsel %vm2999, %v2935, %v3063
      %v3128 = vsel %vm3000, %v2936, %v3064
      %v3129 = vsel %vm3001, %v2937, %v3065
      %v3130 = vsel %vm3002, %v2938, %v3066
      %v3131 = vsel %vm3003, %v2939, %v3067
      %v3132 = vsel %vm3004, %v2940, %v3068
      %v3133 = vsel %vm3005, %v2941, %v3069
      %v3134 = vsel %vm3006, %v2942, %v3070
      %v3135 = vsel %vm3007, %v2943, %v3071
      %v3136 = vsel %vm3008, %v2944, %v3072
      %v3137 = vsel %vm3009, %v2945, %v3073
      %v3138 = vsel %vm3010, %v2946, %v3074
      %v3139 = vsel %vm3011, %v2947, %v3075
      %v3140 = vsel %vm3012, %v2948, %v3076
      %v3141 = vsel %vm3013, %v2949, %v3077
      %v3142 = vsel %vm3014, %v2950, %v3078
      %v3143 = vsel %vm3015, %v2951, %v3079
      %v3144 = vsel %vm3016, %v2952, %v3080
      %v3145 = vsel %vm3017, %v2953, %v3081
      %v3146 = vsel %vm3018, %v2954, %v3082
      %v3147 = vsel %vm3019, %v2955, %v3083
      %v3148 = vsel %vm3020, %v2956, %v3084
      %v3149 = vsel %vm3021, %v2957, %v3085
      %v3150 = vsel %vm3022, %v2958, %v3086
      %v3151 = vmul.f32 %v3087, %v3087
      %v3152 = vmul.f32 %v3088, %v3088
      %v3153 = vmul.f32 %v3089, %v3089
      %v3154 = vmul.f32 %v3090, %v3090
      %v3155 = vmul.f32 %v3091, %v3091
      %v3156 = vmul.f32 %v3092, %v3092
      %v3157 = vmul.f32 %v3093, %v3093
      %v3158 = vmul.f32 %v3094, %v3094
      %v3159 = vmul.f32 %v3095, %v3095
      %v3160 = vmul.f32 %v3096, %v3096
      %v3161 = vmul.f32 %v3097, %v3097
      %v3162 = vmul.f32 %v3098, %v3098
      %v3163 = vmul.f32 %v3099, %v3099
      %v3164 = vmul.f32 %v3100, %v3100
      %v3165 = vmul.f32 %v3101, %v3101
      %v3166 = vmul.f32 %v3102, %v3102
      %v3167 = vmul.f32 %v3103, %v3103
      %v3168 = vmul.f32 %v3104, %v3104
      %v3169 = vmul.f32 %v3105, %v3105
      %v3170 = vmul.f32 %v3106, %v3106
      %v3171 = vmul.f32 %v3107, %v3107
      %v3172 = vmul.f32 %v3108, %v3108
      %v3173 = vmul.f32 %v3109, %v3109
      %v3174 = vmul.f32 %v3110, %v3110
      %v3175 = vmul.f32 %v3111, %v3111
      %v3176 = vmul.f32 %v3112, %v3112
      %v3177 = vmul.f32 %v3113, %v3113
      %v3178 = vmul.f32 %v3114, %v3114
      %v3179 = vmul.f32 %v3115, %v3115
      %v3180 = vmul.f32 %v3116, %v3116
      %v3181 = vmul.f32 %v3117, %v3117
      %v3182 = vmul.f32 %v3118, %v3118
      %v3183 = vmul.f32 %v3119, %v3119
      %v3184 = vmul.f32 %v3120, %v3120
      %v3185 = vmul.f32 %v3121, %v3121
      %v3186 = vmul.f32 %v3122, %v3122
      %v3187 = vmul.f32 %v3123, %v3123
      %v3188 = vmul.f32 %v3124, %v3124
      %v3189 = vmul.f32 %v3125, %v3125
      %v3190 = vmul.f32 %v3126, %v3126
      %v3191 = vmul.f32 %v3127, %v3127
      %v3192 = vmul.f32 %v3128, %v3128
      %v3193 = vmul.f32 %v3129, %v3129
      %v3194 = vmul.f32 %v3130, %v3130
      %v3195 = vmul.f32 %v3131, %v3131
      %v3196 = vmul.f32 %v3132, %v3132
      %v3197 = vmul.f32 %v3133, %v3133
      %v3198 = vmul.f32 %v3134, %v3134
      %v3199 = vmul.f32 %v3135, %v3135
      %v3200 = vmul.f32 %v3136, %v3136
      %v3201 = vmul.f32 %v3137, %v3137
      %v3202 = vmul.f32 %v3138, %v3138
      %v3203 = vmul.f32 %v3139, %v3139
      %v3204 = vmul.f32 %v3140, %v3140
      %v3205 = vmul.f32 %v3141, %v3141
      %v3206 = vmul.f32 %v3142, %v3142
      %v3207 = vmul.f32 %v3143, %v3143
      %v3208 = vmul.f32 %v3144, %v3144
      %v3209 = vmul.f32 %v3145, %v3145
      %v3210 = vmul.f32 %v3146, %v3146
      %v3211 = vmul.f32 %v3147, %v3147
      %v3212 = vmul.f32 %v3148, %v3148
      %v3213 = vmul.f32 %v3149, %v3149
      %v3214 = vmul.f32 %v3150, %v3150
      %3215 = vadd.xlane.f32.xlu0 %v3151
      %v3216 = vpop.xlane.xlu0 %3215
      %3217 = vadd.xlane.f32.xlu0 %v3152
      %v3218 = vpop.xlane.xlu0 %3217
      %3219 = vadd.xlane.f32.xlu0 %v3153
      %v3220 = vpop.xlane.xlu0 %3219
      %3221 = vadd.xlane.f32.xlu0 %v3154
      %v3222 = vpop.xlane.xlu0 %3221
      %3223 = vadd.xlane.f32.xlu0 %v3155
      %v3224 = vpop.xlane.xlu0 %3223
      %3225 = vadd.xlane.f32.xlu0 %v3156
      %v3226 = vpop.xlane.xlu0 %3225
      %3227 = vadd.xlane.f32.xlu0 %v3157
      %v3228 = vpop.xlane.xlu0 %3227
      %3229 = vadd.xlane.f32.xlu0 %v3158
      %v3230 = vpop.xlane.xlu0 %3229
      %3231 = vadd.xlane.f32.xlu0 %v3159
      %v3232 = vpop.xlane.xlu0 %3231
      %3233 = vadd.xlane.f32.xlu0 %v3160
      %v3234 = vpop.xlane.xlu0 %3233
      %3235 = vadd.xlane.f32.xlu0 %v3161
      %v3236 = vpop.xlane.xlu0 %3235
      %3237 = vadd.xlane.f32.xlu0 %v3162
      %v3238 = vpop.xlane.xlu0 %3237
      %3239 = vadd.xlane.f32.xlu0 %v3163
      %v3240 = vpop.xlane.xlu0 %3239
      %3241 = vadd.xlane.f32.xlu0 %v3164
      %v3242 = vpop.xlane.xlu0 %3241
      %3243 = vadd.xlane.f32.xlu0 %v3165
      %v3244 = vpop.xlane.xlu0 %3243
      %3245 = vadd.xlane.f32.xlu0 %v3166
      %v3246 = vpop.xlane.xlu0 %3245
      %3247 = vadd.xlane.f32.xlu0 %v3167
      %v3248 = vpop.xlane.xlu0 %3247
      %3249 = vadd.xlane.f32.xlu0 %v3168
      %v3250 = vpop.xlane.xlu0 %3249
      %3251 = vadd.xlane.f32.xlu0 %v3169
      %v3252 = vpop.xlane.xlu0 %3251
      %3253 = vadd.xlane.f32.xlu0 %v3170
      %v3254 = vpop.xlane.xlu0 %3253
      %3255 = vadd.xlane.f32.xlu0 %v3171
      %v3256 = vpop.xlane.xlu0 %3255
      %3257 = vadd.xlane.f32.xlu0 %v3172
      %v3258 = vpop.xlane.xlu0 %3257
      %3259 = vadd.xlane.f32.xlu0 %v3173
      %v3260 = vpop.xlane.xlu0 %3259
      %3261 = vadd.xlane.f32.xlu0 %v3174
      %v3262 = vpop.xlane.xlu0 %3261
      %3263 = vadd.xlane.f32.xlu0 %v3175
      %v3264 = vpop.xlane.xlu0 %3263
      %3265 = vadd.xlane.f32.xlu0 %v3176
      %v3266 = vpop.xlane.xlu0 %3265
      %3267 = vadd.xlane.f32.xlu0 %v3177
      %v3268 = vpop.xlane.xlu0 %3267
      %3269 = vadd.xlane.f32.xlu0 %v3178
      %v3270 = vpop.xlane.xlu0 %3269
      %3271 = vadd.xlane.f32.xlu0 %v3179
      %v3272 = vpop.xlane.xlu0 %3271
      %3273 = vadd.xlane.f32.xlu0 %v3180
      %v3274 = vpop.xlane.xlu0 %3273
      %3275 = vadd.xlane.f32.xlu0 %v3181
      %v3276 = vpop.xlane.xlu0 %3275
      %3277 = vadd.xlane.f32.xlu0 %v3182
      %v3278 = vpop.xlane.xlu0 %3277
      %3279 = vadd.xlane.f32.xlu0 %v3183
      %v3280 = vpop.xlane.xlu0 %3279
      %3281 = vadd.xlane.f32.xlu0 %v3184
      %v3282 = vpop.xlane.xlu0 %3281
      %3283 = vadd.xlane.f32.xlu0 %v3185
      %v3284 = vpop.xlane.xlu0 %3283
      %3285 = vadd.xlane.f32.xlu0 %v3186
      %v3286 = vpop.xlane.xlu0 %3285
      %3287 = vadd.xlane.f32.xlu0 %v3187
      %v3288 = vpop.xlane.xlu0 %3287
      %3289 = vadd.xlane.f32.xlu0 %v3188
      %v3290 = vpop.xlane.xlu0 %3289
      %3291 = vadd.xlane.f32.xlu0 %v3189
      %v3292 = vpop.xlane.xlu0 %3291
      %3293 = vadd.xlane.f32.xlu0 %v3190
      %v3294 = vpop.xlane.xlu0 %3293
      %3295 = vadd.xlane.f32.xlu0 %v3191
      %v3296 = vpop.xlane.xlu0 %3295
      %3297 = vadd.xlane.f32.xlu0 %v3192
      %v3298 = vpop.xlane.xlu0 %3297
      %3299 = vadd.xlane.f32.xlu0 %v3193
      %v3300 = vpop.xlane.xlu0 %3299
      %3301 = vadd.xlane.f32.xlu0 %v3194
      %v3302 = vpop.xlane.xlu0 %3301
      %3303 = vadd.xlane.f32.xlu0 %v3195
      %v3304 = vpop.xlane.xlu0 %3303
      %3305 = vadd.xlane.f32.xlu0 %v3196
      %v3306 = vpop.xlane.xlu0 %3305
      %3307 = vadd.xlane.f32.xlu0 %v3197
      %v3308 = vpop.xlane.xlu0 %3307
      %3309 = vadd.xlane.f32.xlu0 %v3198
      %v3310 = vpop.xlane.xlu0 %3309
      %3311 = vadd.xlane.f32.xlu0 %v3199
      %v3312 = vpop.xlane.xlu0 %3311
      %3313 = vadd.xlane.f32.xlu0 %v3200
      %v3314 = vpop.xlane.xlu0 %3313
      %3315 = vadd.xlane.f32.xlu0 %v3201
      %v3316 = vpop.xlane.xlu0 %3315
      %3317 = vadd.xlane.f32.xlu0 %v3202
      %v3318 = vpop.xlane.xlu0 %3317
      %3319 = vadd.xlane.f32.xlu0 %v3203
      %v3320 = vpop.xlane.xlu0 %3319
      %3321 = vadd.xlane.f32.xlu0 %v3204
      %v3322 = vpop.xlane.xlu0 %3321
      %3323 = vadd.xlane.f32.xlu0 %v3205
      %v3324 = vpop.xlane.xlu0 %3323
      %3325 = vadd.xlane.f32.xlu0 %v3206
      %v3326 = vpop.xlane.xlu0 %3325
      %3327 = vadd.xlane.f32.xlu0 %v3207
      %v3328 = vpop.xlane.xlu0 %3327
      %3329 = vadd.xlane.f32.xlu0 %v3208
      %v3330 = vpop.xlane.xlu0 %3329
      %3331 = vadd.xlane.f32.xlu0 %v3209
      %v3332 = vpop.xlane.xlu0 %3331
      %3333 = vadd.xlane.f32.xlu0 %v3210
      %v3334 = vpop.xlane.xlu0 %3333
      %3335 = vadd.xlane.f32.xlu0 %v3211
      %v3336 = vpop.xlane.xlu0 %3335
      %3337 = vadd.xlane.f32.xlu0 %v3212
      %v3338 = vpop.xlane.xlu0 %3337
      %3339 = vadd.xlane.f32.xlu0 %v3213
      %v3340 = vpop.xlane.xlu0 %3339
      %3341 = vadd.xlane.f32.xlu0 %v3214
      %v3342 = vpop.xlane.xlu0 %3341
      %v3343 = vmax.f32 %v3216, 1e-24
      %v3344 = vmax.f32 %v3218, 1e-24
      %v3345 = vmax.f32 %v3220, 1e-24
      %v3346 = vmax.f32 %v3222, 1e-24
      %v3347 = vmax.f32 %v3224, 1e-24
      %v3348 = vmax.f32 %v3226, 1e-24
      %v3349 = vmax.f32 %v3228, 1e-24
      %v3350 = vmax.f32 %v3230, 1e-24
      %v3351 = vmax.f32 %v3232, 1e-24
      %v3352 = vmax.f32 %v3234, 1e-24
      %v3353 = vmax.f32 %v3236, 1e-24
      %v3354 = vmax.f32 %v3238, 1e-24
      %v3355 = vmax.f32 %v3240, 1e-24
      %v3356 = vmax.f32 %v3242, 1e-24
      %v3357 = vmax.f32 %v3244, 1e-24
      %v3358 = vmax.f32 %v3246, 1e-24
      %v3359 = vmax.f32 %v3248, 1e-24
      %v3360 = vmax.f32 %v3250, 1e-24
      %v3361 = vmax.f32 %v3252, 1e-24
      %v3362 = vmax.f32 %v3254, 1e-24
      %v3363 = vmax.f32 %v3256, 1e-24
      %v3364 = vmax.f32 %v3258, 1e-24
      %v3365 = vmax.f32 %v3260, 1e-24
      %v3366 = vmax.f32 %v3262, 1e-24
      %v3367 = vmax.f32 %v3264, 1e-24
      %v3368 = vmax.f32 %v3266, 1e-24
      %v3369 = vmax.f32 %v3268, 1e-24
      %v3370 = vmax.f32 %v3270, 1e-24
      %v3371 = vmax.f32 %v3272, 1e-24
      %v3372 = vmax.f32 %v3274, 1e-24
      %v3373 = vmax.f32 %v3276, 1e-24
      %v3374 = vmax.f32 %v3278, 1e-24
      %v3375 = vmax.f32 %v3280, 1e-24
      %v3376 = vmax.f32 %v3282, 1e-24
      %v3377 = vmax.f32 %v3284, 1e-24
      %v3378 = vmax.f32 %v3286, 1e-24
      %v3379 = vmax.f32 %v3288, 1e-24
      %v3380 = vmax.f32 %v3290, 1e-24
      %v3381 = vmax.f32 %v3292, 1e-24
      %v3382 = vmax.f32 %v3294, 1e-24
      %v3383 = vmax.f32 %v3296, 1e-24
      %v3384 = vmax.f32 %v3298, 1e-24
      %v3385 = vmax.f32 %v3300, 1e-24
      %v3386 = vmax.f32 %v3302, 1e-24
      %v3387 = vmax.f32 %v3304, 1e-24
      %v3388 = vmax.f32 %v3306, 1e-24
      %v3389 = vmax.f32 %v3308, 1e-24
      %v3390 = vmax.f32 %v3310, 1e-24
      %v3391 = vmax.f32 %v3312, 1e-24
      %v3392 = vmax.f32 %v3314, 1e-24
      %v3393 = vmax.f32 %v3316, 1e-24
      %v3394 = vmax.f32 %v3318, 1e-24
      %v3395 = vmax.f32 %v3320, 1e-24
      %v3396 = vmax.f32 %v3322, 1e-24
      %v3397 = vmax.f32 %v3324, 1e-24
      %v3398 = vmax.f32 %v3326, 1e-24
      %v3399 = vmax.f32 %v3328, 1e-24
      %v3400 = vmax.f32 %v3330, 1e-24
      %v3401 = vmax.f32 %v3332, 1e-24
      %v3402 = vmax.f32 %v3334, 1e-24
      %v3403 = vmax.f32 %v3336, 1e-24
      %v3404 = vmax.f32 %v3338, 1e-24
      %v3405 = vmax.f32 %v3340, 1e-24
      %v3406 = vmax.f32 %v3342, 1e-24
      %v3407 = vrsqrt.pop %v3343
      %v3408 = vrsqrt.pop %v3344
      %v3409 = vrsqrt.pop %v3345
      %v3410 = vrsqrt.pop %v3346
      %v3411 = vrsqrt.pop %v3347
      %v3412 = vrsqrt.pop %v3348
      %v3413 = vrsqrt.pop %v3349
      %v3414 = vrsqrt.pop %v3350
      %v3415 = vrsqrt.pop %v3351
      %v3416 = vrsqrt.pop %v3352
      %v3417 = vrsqrt.pop %v3353
      %v3418 = vrsqrt.pop %v3354
      %v3419 = vrsqrt.pop %v3355
      %v3420 = vrsqrt.pop %v3356
      %v3421 = vrsqrt.pop %v3357
      %v3422 = vrsqrt.pop %v3358
      %v3423 = vrsqrt.pop %v3359
      %v3424 = vrsqrt.pop %v3360
      %v3425 = vrsqrt.pop %v3361
      %v3426 = vrsqrt.pop %v3362
      %v3427 = vrsqrt.pop %v3363
      %v3428 = vrsqrt.pop %v3364
      %v3429 = vrsqrt.pop %v3365
      %v3430 = vrsqrt.pop %v3366
      %v3431 = vrsqrt.pop %v3367
      %v3432 = vrsqrt.pop %v3368
      %v3433 = vrsqrt.pop %v3369
      %v3434 = vrsqrt.pop %v3370
      %v3435 = vrsqrt.pop %v3371
      %v3436 = vrsqrt.pop %v3372
      %v3437 = vrsqrt.pop %v3373
      %v3438 = vrsqrt.pop %v3374
      %v3439 = vrsqrt.pop %v3375
      %v3440 = vrsqrt.pop %v3376
      %v3441 = vrsqrt.pop %v3377
      %v3442 = vrsqrt.pop %v3378
      %v3443 = vrsqrt.pop %v3379
      %v3444 = vrsqrt.pop %v3380
      %v3445 = vrsqrt.pop %v3381
      %v3446 = vrsqrt.pop %v3382
      %v3447 = vrsqrt.pop %v3383
      %v3448 = vrsqrt.pop %v3384
      %v3449 = vrsqrt.pop %v3385
      %v3450 = vrsqrt.pop %v3386
      %v3451 = vrsqrt.pop %v3387
      %v3452 = vrsqrt.pop %v3388
      %v3453 = vrsqrt.pop %v3389
      %v3454 = vrsqrt.pop %v3390
      %v3455 = vrsqrt.pop %v3391
      %v3456 = vrsqrt.pop %v3392
      %v3457 = vrsqrt.pop %v3393
      %v3458 = vrsqrt.pop %v3394
      %v3459 = vrsqrt.pop %v3395
      %v3460 = vrsqrt.pop %v3396
      %v3461 = vrsqrt.pop %v3397
      %v3462 = vrsqrt.pop %v3398
      %v3463 = vrsqrt.pop %v3399
      %v3464 = vrsqrt.pop %v3400
      %v3465 = vrsqrt.pop %v3401
      %v3466 = vrsqrt.pop %v3402
      %v3467 = vrsqrt.pop %v3403
      %v3468 = vrsqrt.pop %v3404
      %v3469 = vrsqrt.pop %v3405
      %v3470 = vrsqrt.pop %v3406
      %3471 = vst [vmem:[#allocation3] sm:$0xff] %v3087
      %3472 = vst [vmem:[#allocation3 + $0x8] sm:$0xff] %v3088
      %3473 = vst [vmem:[#allocation3 + $0x10] sm:$0xff] %v3089
      %3474 = vst [vmem:[#allocation3 + $0x18] sm:$0xff] %v3090
      %3475 = vst [vmem:[#allocation3 + $0x20] sm:$0xff] %v3091
      %3476 = vst [vmem:[#allocation3 + $0x28] sm:$0xff] %v3092
      %3477 = vst [vmem:[#allocation3 + $0x30] sm:$0xff] %v3093
      %3478 = vst [vmem:[#allocation3 + $0x38] sm:$0xff] %v3094
      %3479 = vst [vmem:[#allocation3 + $0x40] sm:$0xff] %v3095
      %3480 = vst [vmem:[#allocation3 + $0x48] sm:$0xff] %v3096
      %3481 = vst [vmem:[#allocation3 + $0x50] sm:$0xff] %v3097
      %3482 = vst [vmem:[#allocation3 + $0x58] sm:$0xff] %v3098
      %3483 = vst [vmem:[#allocation3 + $0x60] sm:$0xff] %v3099
      %3484 = vst [vmem:[#allocation3 + $0x68] sm:$0xff] %v3100
      %3485 = vst [vmem:[#allocation3 + $0x70] sm:$0xff] %v3101
      %3486 = vst [vmem:[#allocation3 + $0x78] sm:$0xff] %v3102
      %3487 = vst [vmem:[#allocation3 + $0x80] sm:$0xff] %v3103
      %3488 = vst [vmem:[#allocation3 + $0x88] sm:$0xff] %v3104
      %3489 = vst [vmem:[#allocation3 + $0x90] sm:$0xff] %v3105
      %3490 = vst [vmem:[#allocation3 + $0x98] sm:$0xff] %v3106
      %3491 = vst [vmem:[#allocation3 + $0xa0] sm:$0xff] %v3107
      %3492 = vst [vmem:[#allocation3 + $0xa8] sm:$0xff] %v3108
      %3493 = vst [vmem:[#allocation3 + $0xb0] sm:$0xff] %v3109
      %3494 = vst [vmem:[#allocation3 + $0xb8] sm:$0xff] %v3110
      %3495 = vst [vmem:[#allocation3 + $0xc0] sm:$0xff] %v3111
      %3496 = vst [vmem:[#allocation3 + $0xc8] sm:$0xff] %v3112
      %3497 = vst [vmem:[#allocation3 + $0xd0] sm:$0xff] %v3113
      %3498 = vst [vmem:[#allocation3 + $0xd8] sm:$0xff] %v3114
      %3499 = vst [vmem:[#allocation3 + $0xe0] sm:$0xff] %v3115
      %3500 = vst [vmem:[#allocation3 + $0xe8] sm:$0xff] %v3116
      %3501 = vst [vmem:[#allocation3 + $0xf0] sm:$0xff] %v3117
      %3502 = vst [vmem:[#allocation3 + $0xf8] sm:$0xff] %v3118
      %3503 = vst [vmem:[#allocation3 + $0x100] sm:$0xff] %v3119
      %3504 = vst [vmem:[#allocation3 + $0x108] sm:$0xff] %v3120
      %3505 = vst [vmem:[#allocation3 + $0x110] sm:$0xff] %v3121
      %3506 = vst [vmem:[#allocation3 + $0x118] sm:$0xff] %v3122
      %3507 = vst [vmem:[#allocation3 + $0x120] sm:$0xff] %v3123
      %3508 = vst [vmem:[#allocation3 + $0x128] sm:$0xff] %v3124
      %3509 = vst [vmem:[#allocation3 + $0x130] sm:$0xff] %v3125
      %3510 = vst [vmem:[#allocation3 + $0x138] sm:$0xff] %v3126
      %3511 = vst [vmem:[#allocation3 + $0x140] sm:$0xff] %v3127
      %3512 = vst [vmem:[#allocation3 + $0x148] sm:$0xff] %v3128
      %3513 = vst [vmem:[#allocation3 + $0x150] sm:$0xff] %v3129
      %3514 = vst [vmem:[#allocation3 + $0x158] sm:$0xff] %v3130
      %3515 = vst [vmem:[#allocation3 + $0x160] sm:$0xff] %v3131
      %3516 = vst [vmem:[#allocation3 + $0x168] sm:$0xff] %v3132
      %3517 = vst [vmem:[#allocation3 + $0x170] sm:$0xff] %v3133
      %3518 = vst [vmem:[#allocation3 + $0x178] sm:$0xff] %v3134
      %3519 = vst [vmem:[#allocation3 + $0x180] sm:$0xff] %v3135
      %3520 = vst [vmem:[#allocation3 + $0x188] sm:$0xff] %v3136
      %3521 = vst [vmem:[#allocation3 + $0x190] sm:$0xff] %v3137
      %3522 = vst [vmem:[#allocation3 + $0x198] sm:$0xff] %v3138
      %3523 = vst [vmem:[#allocation3 + $0x1a0] sm:$0xff] %v3139
      %3524 = vst [vmem:[#allocation3 + $0x1a8] sm:$0xff] %v3140
      %3525 = vst [vmem:[#allocation3 + $0x1b0] sm:$0xff] %v3141
      %3526 = vst [vmem:[#allocation3 + $0x1b8] sm:$0xff] %v3142
      %3527 = vst [vmem:[#allocation3 + $0x1c0] sm:$0xff] %v3143
      %3528 = vst [vmem:[#allocation3 + $0x1c8] sm:$0xff] %v3144
      %3529 = vst [vmem:[#allocation3 + $0x1d0] sm:$0xff] %v3145
      %3530 = vst [vmem:[#allocation3 + $0x1d8] sm:$0xff] %v3146
      %3531 = vst [vmem:[#allocation3 + $0x1e0] sm:$0xff] %v3147
      %3532 = vst [vmem:[#allocation3 + $0x1e8] sm:$0xff] %v3148
      %3533 = vst [vmem:[#allocation3 + $0x1f0] sm:$0xff] %v3149
      %3534 = vst [vmem:[#allocation3 + $0x1f8] sm:$0xff] %v3150
      %v3535 = vpack.c.bf16 %v3088, %v3087
      %v3536 = vpack.c.bf16 %v3090, %v3089
      %v3537 = vpack.c.bf16 %v3092, %v3091
      %v3538 = vpack.c.bf16 %v3094, %v3093
      %v3539 = vpack.c.bf16 %v3096, %v3095
      %v3540 = vpack.c.bf16 %v3098, %v3097
      %v3541 = vpack.c.bf16 %v3100, %v3099
      %v3542 = vpack.c.bf16 %v3102, %v3101
      %v3543 = vpack.c.bf16 %v3104, %v3103
      %v3544 = vpack.c.bf16 %v3106, %v3105
      %v3545 = vpack.c.bf16 %v3108, %v3107
      %v3546 = vpack.c.bf16 %v3110, %v3109
      %v3547 = vpack.c.bf16 %v3112, %v3111
      %v3548 = vpack.c.bf16 %v3114, %v3113
      %v3549 = vpack.c.bf16 %v3116, %v3115
      %v3550 = vpack.c.bf16 %v3118, %v3117
      %v3551 = vpack.c.bf16 %v3120, %v3119
      %v3552 = vpack.c.bf16 %v3122, %v3121
      %v3553 = vpack.c.bf16 %v3124, %v3123
      %v3554 = vpack.c.bf16 %v3126, %v3125
      %v3555 = vpack.c.bf16 %v3128, %v3127
      %v3556 = vpack.c.bf16 %v3130, %v3129
      %v3557 = vpack.c.bf16 %v3132, %v3131
      %v3558 = vpack.c.bf16 %v3134, %v3133
      %v3559 = vpack.c.bf16 %v3136, %v3135
      %v3560 = vpack.c.bf16 %v3138, %v3137
      %v3561 = vpack.c.bf16 %v3140, %v3139
      %v3562 = vpack.c.bf16 %v3142, %v3141
      %v3563 = vpack.c.bf16 %v3144, %v3143
      %v3564 = vpack.c.bf16 %v3146, %v3145
      %v3565 = vpack.c.bf16 %v3148, %v3147
      %v3566 = vpack.c.bf16 %v3150, %v3149
      %v3599 = vunpack.c.l.b16 %v3535
      %v3600 = vunpack.c.h.b16 %v3535
      %v3601 = vunpack.c.l.b16 %v3536
      %v3602 = vunpack.c.h.b16 %v3536
      %v3603 = vunpack.c.l.b16 %v3537
      %v3604 = vunpack.c.h.b16 %v3537
      %v3605 = vunpack.c.l.b16 %v3538
      %v3606 = vunpack.c.h.b16 %v3538
      %v3607 = vunpack.c.l.b16 %v3539
      %v3608 = vunpack.c.h.b16 %v3539
      %v3609 = vunpack.c.l.b16 %v3540
      %v3610 = vunpack.c.h.b16 %v3540
      %v3611 = vunpack.c.l.b16 %v3541
      %v3612 = vunpack.c.h.b16 %v3541
      %v3613 = vunpack.c.l.b16 %v3542
      %v3614 = vunpack.c.h.b16 %v3542
      %v3615 = vunpack.c.l.b16 %v3543
      %v3616 = vunpack.c.h.b16 %v3543
      %v3617 = vunpack.c.l.b16 %v3544
      %v3618 = vunpack.c.h.b16 %v3544
      %v3619 = vunpack.c.l.b16 %v3545
      %v3620 = vunpack.c.h.b16 %v3545
      %v3621 = vunpack.c.l.b16 %v3546
      %v3622 = vunpack.c.h.b16 %v3546
      %v3623 = vunpack.c.l.b16 %v3547
      %v3624 = vunpack.c.h.b16 %v3547
      %v3625 = vunpack.c.l.b16 %v3548
      %v3626 = vunpack.c.h.b16 %v3548
      %v3627 = vunpack.c.l.b16 %v3549
      %v3628 = vunpack.c.h.b16 %v3549
      %v3629 = vunpack.c.l.b16 %v3550
      %v3630 = vunpack.c.h.b16 %v3550
      %v3631 = vunpack.c.l.b16 %v3551
      %v3632 = vunpack.c.h.b16 %v3551
      %v3633 = vunpack.c.l.b16 %v3552
      %v3634 = vunpack.c.h.b16 %v3552
      %v3635 = vunpack.c.l.b16 %v3553
      %v3636 = vunpack.c.h.b16 %v3553
      %v3637 = vunpack.c.l.b16 %v3554
      %v3638 = vunpack.c.h.b16 %v3554
      %v3639 = vunpack.c.l.b16 %v3555
      %v3640 = vunpack.c.h.b16 %v3555
      %v3641 = vunpack.c.l.b16 %v3556
      %v3642 = vunpack.c.h.b16 %v3556
      %v3643 = vunpack.c.l.b16 %v3557
      %v3644 = vunpack.c.h.b16 %v3557
      %v3645 = vunpack.c.l.b16 %v3558
      %v3646 = vunpack.c.h.b16 %v3558
      %v3647 = vunpack.c.l.b16 %v3559
      %v3648 = vunpack.c.h.b16 %v3559
      %v3649 = vunpack.c.l.b16 %v3560
      %v3650 = vunpack.c.h.b16 %v3560
      %v3651 = vunpack.c.l.b16 %v3561
      %v3652 = vunpack.c.h.b16 %v3561
      %v3653 = vunpack.c.l.b16 %v3562
      %v3654 = vunpack.c.h.b16 %v3562
      %v3655 = vunpack.c.l.b16 %v3563
      %v3656 = vunpack.c.h.b16 %v3563
      %v3657 = vunpack.c.l.b16 %v3564
      %v3658 = vunpack.c.h.b16 %v3564
      %v3659 = vunpack.c.l.b16 %v3565
      %v3660 = vunpack.c.h.b16 %v3565
      %v3661 = vunpack.c.l.b16 %v3566
      %v3662 = vunpack.c.h.b16 %v3566
      %v3663 = vpack.c.b16 %v3599, %v3599
      %v3664 = vpack.c.b16 %v3600, %v3600
      %v3665 = vpack.c.b16 %v3601, %v3601
      %v3666 = vpack.c.b16 %v3602, %v3602
      %v3667 = vpack.c.b16 %v3603, %v3603
      %v3668 = vpack.c.b16 %v3604, %v3604
      %v3669 = vpack.c.b16 %v3605, %v3605
      %v3670 = vpack.c.b16 %v3606, %v3606
      %v3671 = vpack.c.b16 %v3607, %v3607
      %v3672 = vpack.c.b16 %v3608, %v3608
      %v3673 = vpack.c.b16 %v3609, %v3609
      %v3674 = vpack.c.b16 %v3610, %v3610
      %v3675 = vpack.c.b16 %v3611, %v3611
      %v3676 = vpack.c.b16 %v3612, %v3612
      %v3677 = vpack.c.b16 %v3613, %v3613
      %v3678 = vpack.c.b16 %v3614, %v3614
      %v3679 = vpack.c.b16 %v3615, %v3615
      %v3680 = vpack.c.b16 %v3616, %v3616
      %v3681 = vpack.c.b16 %v3617, %v3617
      %v3682 = vpack.c.b16 %v3618, %v3618
      %v3683 = vpack.c.b16 %v3619, %v3619
      %v3684 = vpack.c.b16 %v3620, %v3620
      %v3685 = vpack.c.b16 %v3621, %v3621
      %v3686 = vpack.c.b16 %v3622, %v3622
      %v3687 = vpack.c.b16 %v3623, %v3623
      %v3688 = vpack.c.b16 %v3624, %v3624
      %v3689 = vpack.c.b16 %v3625, %v3625
      %v3690 = vpack.c.b16 %v3626, %v3626
      %v3691 = vpack.c.b16 %v3627, %v3627
      %v3692 = vpack.c.b16 %v3628, %v3628
      %v3693 = vpack.c.b16 %v3629, %v3629
      %v3694 = vpack.c.b16 %v3630, %v3630
      %v3695 = vpack.c.b16 %v3631, %v3631
      %v3696 = vpack.c.b16 %v3632, %v3632
      %v3697 = vpack.c.b16 %v3633, %v3633
      %v3698 = vpack.c.b16 %v3634, %v3634
      %v3699 = vpack.c.b16 %v3635, %v3635
      %v3700 = vpack.c.b16 %v3636, %v3636
      %v3701 = vpack.c.b16 %v3637, %v3637
      %v3702 = vpack.c.b16 %v3638, %v3638
      %v3703 = vpack.c.b16 %v3639, %v3639
      %v3704 = vpack.c.b16 %v3640, %v3640
      %v3705 = vpack.c.b16 %v3641, %v3641
      %v3706 = vpack.c.b16 %v3642, %v3642
      %v3707 = vpack.c.b16 %v3643, %v3643
      %v3708 = vpack.c.b16 %v3644, %v3644
      %v3709 = vpack.c.b16 %v3645, %v3645
      %v3710 = vpack.c.b16 %v3646, %v3646
      %v3711 = vpack.c.b16 %v3647, %v3647
      %v3712 = vpack.c.b16 %v3648, %v3648
      %v3713 = vpack.c.b16 %v3649, %v3649
      %v3714 = vpack.c.b16 %v3650, %v3650
      %v3715 = vpack.c.b16 %v3651, %v3651
      %v3716 = vpack.c.b16 %v3652, %v3652
      %v3717 = vpack.c.b16 %v3653, %v3653
      %v3718 = vpack.c.b16 %v3654, %v3654
      %v3719 = vpack.c.b16 %v3655, %v3655
      %v3720 = vpack.c.b16 %v3656, %v3656
      %v3721 = vpack.c.b16 %v3657, %v3657
      %v3722 = vpack.c.b16 %v3658, %v3658
      %v3723 = vpack.c.b16 %v3659, %v3659
      %v3724 = vpack.c.b16 %v3660, %v3660
      %v3725 = vpack.c.b16 %v3661, %v3661
      %v3726 = vpack.c.b16 %v3662, %v3662
      %3791 = vst [vmem:[#allocation5] sm:$0xf] %v3663
      %3792 = vst [vmem:[#allocation5 + $0x4] sm:$0xf] %v3664
      %3793 = vst [vmem:[#allocation5 + $0x8] sm:$0xf] %v3665
      %3794 = vst [vmem:[#allocation5 + $0xc] sm:$0xf] %v3666
      %3795 = vst [vmem:[#allocation5 + $0x10] sm:$0xf] %v3667
      %3796 = vst [vmem:[#allocation5 + $0x14] sm:$0xf] %v3668
      %3797 = vst [vmem:[#allocation5 + $0x18] sm:$0xf] %v3669
      %3798 = vst [vmem:[#allocation5 + $0x1c] sm:$0xf] %v3670
      %3799 = vst [vmem:[#allocation5 + $0x20] sm:$0xf] %v3671
      %3800 = vst [vmem:[#allocation5 + $0x24] sm:$0xf] %v3672
      %3801 = vst [vmem:[#allocation5 + $0x28] sm:$0xf] %v3673
      %3802 = vst [vmem:[#allocation5 + $0x2c] sm:$0xf] %v3674
      %3803 = vst [vmem:[#allocation5 + $0x30] sm:$0xf] %v3675
      %3804 = vst [vmem:[#allocation5 + $0x34] sm:$0xf] %v3676
      %3805 = vst [vmem:[#allocation5 + $0x38] sm:$0xf] %v3677
      %3806 = vst [vmem:[#allocation5 + $0x3c] sm:$0xf] %v3678
      %3807 = vst [vmem:[#allocation5 + $0x40] sm:$0xf] %v3679
      %3808 = vst [vmem:[#allocation5 + $0x44] sm:$0xf] %v3680
      %3809 = vst [vmem:[#allocation5 + $0x48] sm:$0xf] %v3681
      %3810 = vst [vmem:[#allocation5 + $0x4c] sm:$0xf] %v3682
      %3811 = vst [vmem:[#allocation5 + $0x50] sm:$0xf] %v3683
      %3812 = vst [vmem:[#allocation5 + $0x54] sm:$0xf] %v3684
      %3813 = vst [vmem:[#allocation5 + $0x58] sm:$0xf] %v3685
      %3814 = vst [vmem:[#allocation5 + $0x5c] sm:$0xf] %v3686
      %3815 = vst [vmem:[#allocation5 + $0x60] sm:$0xf] %v3687
      %3816 = vst [vmem:[#allocation5 + $0x64] sm:$0xf] %v3688
      %3817 = vst [vmem:[#allocation5 + $0x68] sm:$0xf] %v3689
      %3818 = vst [vmem:[#allocation5 + $0x6c] sm:$0xf] %v3690
      %3819 = vst [vmem:[#allocation5 + $0x70] sm:$0xf] %v3691
      %3820 = vst [vmem:[#allocation5 + $0x74] sm:$0xf] %v3692
      %3821 = vst [vmem:[#allocation5 + $0x78] sm:$0xf] %v3693
      %3822 = vst [vmem:[#allocation5 + $0x7c] sm:$0xf] %v3694
      %3823 = vst [vmem:[#allocation5 + $0x80] sm:$0xf] %v3695
      %3824 = vst [vmem:[#allocation5 + $0x84] sm:$0xf] %v3696
      %3825 = vst [vmem:[#allocation5 + $0x88] sm:$0xf] %v3697
      %3826 = vst [vmem:[#allocation5 + $0x8c] sm:$0xf] %v3698
      %3827 = vst [vmem:[#allocation5 + $0x90] sm:$0xf] %v3699
      %3828 = vst [vmem:[#allocation5 + $0x94] sm:$0xf] %v3700
      %3829 = vst [vmem:[#allocation5 + $0x98] sm:$0xf] %v3701
      %3830 = vst [vmem:[#allocation5 + $0x9c] sm:$0xf] %v3702
      %3831 = vst [vmem:[#allocation5 + $0xa0] sm:$0xf] %v3703
      %3832 = vst [vmem:[#allocation5 + $0xa4] sm:$0xf] %v3704
      %3833 = vst [vmem:[#allocation5 + $0xa8] sm:$0xf] %v3705
      %3834 = vst [vmem:[#allocation5 + $0xac] sm:$0xf] %v3706
      %3835 = vst [vmem:[#allocation5 + $0xb0] sm:$0xf] %v3707
      %3836 = vst [vmem:[#allocation5 + $0xb4] sm:$0xf] %v3708
      %3837 = vst [vmem:[#allocation5 + $0xb8] sm:$0xf] %v3709
      %3838 = vst [vmem:[#allocation5 + $0xbc] sm:$0xf] %v3710
      %3839 = vst [vmem:[#allocation5 + $0xc0] sm:$0xf] %v3711
      %3840 = vst [vmem:[#allocation5 + $0xc4] sm:$0xf] %v3712
      %3841 = vst [vmem:[#allocation5 + $0xc8] sm:$0xf] %v3713
      %3842 = vst [vmem:[#allocation5 + $0xcc] sm:$0xf] %v3714
      %3843 = vst [vmem:[#allocation5 + $0xd0] sm:$0xf] %v3715
      %3844 = vst [vmem:[#allocation5 + $0xd4] sm:$0xf] %v3716
      %3845 = vst [vmem:[#allocation5 + $0xd8] sm:$0xf] %v3717
      %3846 = vst [vmem:[#allocation5 + $0xdc] sm:$0xf] %v3718
      %3847 = vst [vmem:[#allocation5 + $0xe0] sm:$0xf] %v3719
      %3848 = vst [vmem:[#allocation5 + $0xe4] sm:$0xf] %v3720
      %3849 = vst [vmem:[#allocation5 + $0xe8] sm:$0xf] %v3721
      %3850 = vst [vmem:[#allocation5 + $0xec] sm:$0xf] %v3722
      %3851 = vst [vmem:[#allocation5 + $0xf0] sm:$0xf] %v3723
      %3852 = vst [vmem:[#allocation5 + $0xf4] sm:$0xf] %v3724
      %3853 = vst [vmem:[#allocation5 + $0xf8] sm:$0xf] %v3725
      %3854 = vst [vmem:[#allocation5 + $0xfc] sm:$0xf] %v3726
      %v3855 = vmul.f32 %v3087, %v3407
      %v3856 = vmul.f32 %v3088, %v3408
      %v3857 = vmul.f32 %v3089, %v3409
      %v3858 = vmul.f32 %v3090, %v3410
      %v3859 = vmul.f32 %v3091, %v3411
      %v3860 = vmul.f32 %v3092, %v3412
      %v3861 = vmul.f32 %v3093, %v3413
      %v3862 = vmul.f32 %v3094, %v3414
      %v3863 = vmul.f32 %v3095, %v3415
      %v3864 = vmul.f32 %v3096, %v3416
      %v3865 = vmul.f32 %v3097, %v3417
      %v3866 = vmul.f32 %v3098, %v3418
      %v3867 = vmul.f32 %v3099, %v3419
      %v3868 = vmul.f32 %v3100, %v3420
      %v3869 = vmul.f32 %v3101, %v3421
      %v3870 = vmul.f32 %v3102, %v3422
      %v3871 = vmul.f32 %v3103, %v3423
      %v3872 = vmul.f32 %v3104, %v3424
      %v3873 = vmul.f32 %v3105, %v3425
      %v3874 = vmul.f32 %v3106, %v3426
      %v3875 = vmul.f32 %v3107, %v3427
      %v3876 = vmul.f32 %v3108, %v3428
      %v3877 = vmul.f32 %v3109, %v3429
      %v3878 = vmul.f32 %v3110, %v3430
      %v3879 = vmul.f32 %v3111, %v3431
      %v3880 = vmul.f32 %v3112, %v3432
      %v3881 = vmul.f32 %v3113, %v3433
      %v3882 = vmul.f32 %v3114, %v3434
      %v3883 = vmul.f32 %v3115, %v3435
      %v3884 = vmul.f32 %v3116, %v3436
      %v3885 = vmul.f32 %v3117, %v3437
      %v3886 = vmul.f32 %v3118, %v3438
      %v3887 = vmul.f32 %v3119, %v3439
      %v3888 = vmul.f32 %v3120, %v3440
      %v3889 = vmul.f32 %v3121, %v3441
      %v3890 = vmul.f32 %v3122, %v3442
      %v3891 = vmul.f32 %v3123, %v3443
      %v3892 = vmul.f32 %v3124, %v3444
      %v3893 = vmul.f32 %v3125, %v3445
      %v3894 = vmul.f32 %v3126, %v3446
      %v3895 = vmul.f32 %v3127, %v3447
      %v3896 = vmul.f32 %v3128, %v3448
      %v3897 = vmul.f32 %v3129, %v3449
      %v3898 = vmul.f32 %v3130, %v3450
      %v3899 = vmul.f32 %v3131, %v3451
      %v3900 = vmul.f32 %v3132, %v3452
      %v3901 = vmul.f32 %v3133, %v3453
      %v3902 = vmul.f32 %v3134, %v3454
      %v3903 = vmul.f32 %v3135, %v3455
      %v3904 = vmul.f32 %v3136, %v3456
      %v3905 = vmul.f32 %v3137, %v3457
      %v3906 = vmul.f32 %v3138, %v3458
      %v3907 = vmul.f32 %v3139, %v3459
      %v3908 = vmul.f32 %v3140, %v3460
      %v3909 = vmul.f32 %v3141, %v3461
      %v3910 = vmul.f32 %v3142, %v3462
      %v3911 = vmul.f32 %v3143, %v3463
      %v3912 = vmul.f32 %v3144, %v3464
      %v3913 = vmul.f32 %v3145, %v3465
      %v3914 = vmul.f32 %v3146, %v3466
      %v3915 = vmul.f32 %v3147, %v3467
      %v3916 = vmul.f32 %v3148, %v3468
      %v3917 = vmul.f32 %v3149, %v3469
      %v3918 = vmul.f32 %v3150, %v3470
      %3919 = vst [vmem:[%s8] sm:$0xff] %v3855
      %3920 = vst [vmem:[%s8 + $0x8] sm:$0xff] %v3856
      %3921 = vst [vmem:[%s8 + $0x10] sm:$0xff] %v3857
      %3922 = vst [vmem:[%s8 + $0x18] sm:$0xff] %v3858
      %3923 = vst [vmem:[%s8 + $0x20] sm:$0xff] %v3859
      %3924 = vst [vmem:[%s8 + $0x28] sm:$0xff] %v3860
      %3925 = vst [vmem:[%s8 + $0x30] sm:$0xff] %v3861
      %3926 = vst [vmem:[%s8 + $0x38] sm:$0xff] %v3862
      %3927 = vst [vmem:[%s8 + $0x40] sm:$0xff] %v3863
      %3928 = vst [vmem:[%s8 + $0x48] sm:$0xff] %v3864
      %3929 = vst [vmem:[%s8 + $0x50] sm:$0xff] %v3865
      %3930 = vst [vmem:[%s8 + $0x58] sm:$0xff] %v3866
      %3931 = vst [vmem:[%s8 + $0x60] sm:$0xff] %v3867
      %3932 = vst [vmem:[%s8 + $0x68] sm:$0xff] %v3868
      %3933 = vst [vmem:[%s8 + $0x70] sm:$0xff] %v3869
      %3934 = vst [vmem:[%s8 + $0x78] sm:$0xff] %v3870
      %3935 = vst [vmem:[%s8 + $0x80] sm:$0xff] %v3871
      %3936 = vst [vmem:[%s8 + $0x88] sm:$0xff] %v3872
      %3937 = vst [vmem:[%s8 + $0x90] sm:$0xff] %v3873
      %3938 = vst [vmem:[%s8 + $0x98] sm:$0xff] %v3874
      %3939 = vst [vmem:[%s8 + $0xa0] sm:$0xff] %v3875
      %3940 = vst [vmem:[%s8 + $0xa8] sm:$0xff] %v3876
      %3941 = vst [vmem:[%s8 + $0xb0] sm:$0xff] %v3877
      %3942 = vst [vmem:[%s8 + $0xb8] sm:$0xff] %v3878
      %3943 = vst [vmem:[%s8 + $0xc0] sm:$0xff] %v3879
      %3944 = vst [vmem:[%s8 + $0xc8] sm:$0xff] %v3880
      %3945 = vst [vmem:[%s8 + $0xd0] sm:$0xff] %v3881
      %3946 = vst [vmem:[%s8 + $0xd8] sm:$0xff] %v3882
      %3947 = vst [vmem:[%s8 + $0xe0] sm:$0xff] %v3883
      %3948 = vst [vmem:[%s8 + $0xe8] sm:$0xff] %v3884
      %3949 = vst [vmem:[%s8 + $0xf0] sm:$0xff] %v3885
      %3950 = vst [vmem:[%s8 + $0xf8] sm:$0xff] %v3886
      %3951 = vst [vmem:[%s8 + $0x100] sm:$0xff] %v3887
      %3952 = vst [vmem:[%s8 + $0x108] sm:$0xff] %v3888
      %3953 = vst [vmem:[%s8 + $0x110] sm:$0xff] %v3889
      %3954 = vst [vmem:[%s8 + $0x118] sm:$0xff] %v3890
      %3955 = vst [vmem:[%s8 + $0x120] sm:$0xff] %v3891
      %3956 = vst [vmem:[%s8 + $0x128] sm:$0xff] %v3892
      %3957 = vst [vmem:[%s8 + $0x130] sm:$0xff] %v3893
      %3958 = vst [vmem:[%s8 + $0x138] sm:$0xff] %v3894
      %3959 = vst [vmem:[%s8 + $0x140] sm:$0xff] %v3895
      %3960 = vst [vmem:[%s8 + $0x148] sm:$0xff] %v3896
      %3961 = vst [vmem:[%s8 + $0x150] sm:$0xff] %v3897
      %3962 = vst [vmem:[%s8 + $0x158] sm:$0xff] %v3898
      %3963 = vst [vmem:[%s8 + $0x160] sm:$0xff] %v3899
      %3964 = vst [vmem:[%s8 + $0x168] sm:$0xff] %v3900
      %3965 = vst [vmem:[%s8 + $0x170] sm:$0xff] %v3901
      %3966 = vst [vmem:[%s8 + $0x178] sm:$0xff] %v3902
      %3967 = vst [vmem:[%s8 + $0x180] sm:$0xff] %v3903
      %3968 = vst [vmem:[%s8 + $0x188] sm:$0xff] %v3904
      %3969 = vst [vmem:[%s8 + $0x190] sm:$0xff] %v3905
      %3970 = vst [vmem:[%s8 + $0x198] sm:$0xff] %v3906
      %3971 = vst [vmem:[%s8 + $0x1a0] sm:$0xff] %v3907
      %3972 = vst [vmem:[%s8 + $0x1a8] sm:$0xff] %v3908
      %3973 = vst [vmem:[%s8 + $0x1b0] sm:$0xff] %v3909
      %3974 = vst [vmem:[%s8 + $0x1b8] sm:$0xff] %v3910
      %3975 = vst [vmem:[%s8 + $0x1c0] sm:$0xff] %v3911
      %3976 = vst [vmem:[%s8 + $0x1c8] sm:$0xff] %v3912
      %3977 = vst [vmem:[%s8 + $0x1d0] sm:$0xff] %v3913
      %3978 = vst [vmem:[%s8 + $0x1d8] sm:$0xff] %v3914
      %3979 = vst [vmem:[%s8 + $0x1e0] sm:$0xff] %v3915
      %3980 = vst [vmem:[%s8 + $0x1e8] sm:$0xff] %v3916
      %3981 = vst [vmem:[%s8 + $0x1f0] sm:$0xff] %v3917
      %3982 = vst [vmem:[%s8 + $0x1f8] sm:$0xff] %v3918
    $region33: #{ngcf_forward.3} parent=1 // pred_fallthru
      _
    // Predicated region
    $region34: #{ngcf_forward.3} parent=1 // pred_check
      _
    $region35: #{ngcf_forward.3} parent=1 // pred_check_branch
      %3984 = sbr.rel (0) target = $region37
    $region36: #{ngcf_forward.3} parent=1 // pred_region
      %s3986 = ssub.s32 8192, 8192
      %3987 = vsyncadd [#allocation4], %s3986
      %s3988 = sshll.u32 [#allocation3], 4
      %s3989 = int_to_ptr.vmem [resolvable:$true] %s3988
      %3994 = dma.vmem_to_hbm [thread:$0]  %s3989, 8192, %s6, [#allocation4], 128, 128, 8
    $region37: #{ngcf_forward.3} parent=1 // pred_fallthru
      _
    // Predicated region
    $region38: #{ngcf_forward.3} parent=1 // pred_check
      _
    $region39: #{ngcf_forward.3} parent=1 // pred_check_branch
      %3996 = sbr.rel (0) target = $region41
    $region40: #{ngcf_forward.3} parent=1 // pred_region
      %s3998 = ssub.s32 4096, 4096
      %3999 = vsyncadd [#allocation6], %s3998
      %s4000 = sshll.u32 [#allocation5], 4
      %s4001 = int_to_ptr.vmem [resolvable:$true] %s4000
      %4006 = dma.vmem_to_hbm [thread:$0]  %s4001, 4096, %s7, [#allocation6], 64, 64, 4
    $region41: #{ngcf_forward.3} parent=1 // pred_fallthru
      _
    // Predicated region
    $region42: #{ngcf_forward.3} parent=1 // pred_check
      _
    $region43: #{ngcf_forward.3} parent=1 // pred_check_branch
      %4008 = sbr.rel (0) target = $region45
    $region44: #{ngcf_forward.3} parent=1 // pred_region
      _
    $region45: #{ngcf_forward.3} parent=1 // pred_fallthru
      _
    // Predicated region
    $region46: #{ngcf_forward.3} parent=1 // pred_check
      _
    $region47: #{ngcf_forward.3} parent=1 // pred_check_branch
      %4010 = sbr.rel (0) target = $region49
    $region48: #{ngcf_forward.3} parent=1 // pred_region
      %4011 = dma.done [#allocation4], 8192
    $region49: #{ngcf_forward.3} parent=1 // pred_fallthru
      _
    // Predicated region
    $region50: #{ngcf_forward.3} parent=1 // pred_check
      _
    $region51: #{ngcf_forward.3} parent=1 // pred_check_branch
      %4013 = sbr.rel (0) target = $region53
    $region52: #{ngcf_forward.3} parent=1 // pred_region
      %4014 = dma.done [#allocation6], 4096
    $region53: #{ngcf_forward.3} parent=1 // pred_fallthru
      _
    // Predicated region
    $region54: #{ngcf_forward.3} parent=1 // pred_check
      _
    $region55: #{ngcf_forward.3} parent=1 // pred_check_branch
      %4016 = sbr.rel (0) target = $region57
    $region56: #{ngcf_forward.3} parent=1 // pred_region
      _
    $region57: #{ngcf_forward.3} parent=1 // pred_fallthru
      _
    %4017 = vsyncpa [#allocation4], 1
    %4018 = vsyncpa [#allocation6], 1

</llo_original>
